<compile_context>
chip_gen: v6e
topology: v6e:2x2x1
jax: 0.10.0
libtpu: 0.0.40
codegen_flags: <defaults>
</compile_context>

<pallas_src>
import inspect

import numpy as np
import jax
import jax.numpy as jnp
from jax import lax
from jax.experimental import pallas as pl
from jax.experimental.pallas import tpu as pltpu

# ---- static shapes implied by the module (fc1 expects 32*8*8 -> input is 3x32x32) ----
H = W = 32                  # conv1 spatial (stride 1, pad 1)
C_IN, C1, C2 = 3, 16, 32
H2 = W2 = 16                # conv2 output spatial (stride 2)
HP = WP = 8                 # after 2x2 max pool
FC_IN = C2 * HP * WP        # 2048
FC_OUT = 10
FC_PAD = 128                # lane-dense padded FC output width
EPS = 1e-5

KTAP = (W + 2) * C_IN       # 102 lanes per conv1 row tap: 3*w_pad + cin
K1 = 384                    # 3 row taps concatenated (306) zero-padded to a lane multiple
LANE1 = W * C1              # 512 : conv1 out lanes = 16*w + c
LANE2 = W2 * C2             # 512 : conv2 out lanes = 32*j + oc
BBLK_MAX = 32               # max images per grid step


# ----------------------------------- fused kernel ---------------------------------------
def cnn_fused_kernel(x_ref, t1_ref, b1_ref, t2_ref, b2_ref, wfc_ref, bfc_ref, o_ref):
    # x_ref : (32, bblk, 384) bf16 conv1 im2col rows; row = parity*16 + h2 (h = 2*h2+parity),
    #         lanes = padded input rows h, h+1, h+2 concatenated (102 each, padded to 384)
    # t1_ref: (384, 512)     bf16 conv1 block-Toeplitz weight (BN1 scale folded in)
    # b1_ref: (1, 512)       f32  conv1 bias tiled to lane = 16*w + c
    # t2_ref: (3, 512, 512)  bf16 conv2 block-Toeplitz weights per row tap (BN2 scale folded)
    # b2_ref: (1, 512)       f32  conv2 bias tiled to lane = 32*j + oc
    # wfc_ref: (8, 512, 128) bf16 per-pooled-row FC weight (pool lane selection + NCHW
    #          flatten folded in as zero rows / zero output columns)
    # bfc_ref: (1, 128) f32 ; o_ref: (bblk, 128) f32
    bblk = o_ref.shape[0]
    n1 = 2 * H2 * bblk      # conv1 matmul rows = 32 * bblk
    n2 = H2 * bblk          # conv2 matmul rows = 16 * bblk

    # ---- conv1 + folded BN1 + ReLU : one lane-dense bf16 matmul ----
    x1 = x_ref[...].reshape(n1, K1)
    y1 = jnp.maximum(
        jnp.dot(x1, t1_ref[...], preferred_element_type=jnp.float32) + b1_ref[...], 0.0)
    y1 = y1.astype(jnp.bfloat16)                    # (32*bblk, 512), rows (parity, h2, b)
    y1e = y1[:n2]                                   # conv1 even rows, ordered (h2, b)
    y1o = y1[n2:]                                   # conv1 odd rows,  ordered (h2, b)
    # kh=0 tap of conv2 needs odd row (j-1): shift the odd block down by one bblk row-block
    # (tile-aligned concatenate; output row j=0 gets the zero-padding row).
    y1o_shift = jnp.concatenate(
        [jnp.zeros((bblk, LANE1), jnp.bfloat16), y1o[:n2 - bblk]], axis=0)

    # ---- conv2 (3x3, stride 2, pad 1) + folded BN2 + ReLU : 3 bf16 Toeplitz matmuls ----
    acc2 = jnp.dot(y1e, t2_ref[1], preferred_element_type=jnp.float32)
    acc2 = acc2 + jnp.dot(y1o, t2_ref[2], preferred_element_type=jnp.float32)
    acc2 = acc2 + jnp.dot(y1o_shift, t2_ref[0], preferred_element_type=jnp.float32)
    y2 = jnp.maximum(acc2 + b2_ref[...], 0.0)       # (16*bblk, 512), rows (j, b)

    # ---- 2x2 max pool + fc1, fused: HP accumulated matmuls, all slices tile-aligned ----
    acc = jnp.zeros((bblk, FC_PAD), jnp.float32)
    for hp in range(HP):
        # pool over h: conv2 row pairs (2hp, 2hp+1) are adjacent bblk-row blocks
        ph = jnp.maximum(y2[(2 * hp) * bblk:(2 * hp + 1) * bblk],
                         y2[(2 * hp + 1) * bblk:(2 * hp + 2) * bblk])
        # pool over w: column pairs are adjacent 32-lane groups; valid result lands in the
        # even groups, odd groups are ignored by zero rows of the FC weight.
        pw = jnp.maximum(ph, pltpu.roll(ph, LANE2 - C2, axis=1))
        acc = acc + jnp.dot(pw.astype(jnp.bfloat16), wfc_ref[hp],
                            preferred_element_type=jnp.float32)
    o_ref[...] = (acc + bfc_ref[...]).astype(o_ref.dtype)


# -------------------------------------- wrapper -----------------------------------------
def _round_up(v, m):
    return ((v + m - 1) // m) * m


def _pick_bblk(b):
    # biggest block <= BBLK_MAX (multiple of 8), keeping >= 2 grid steps when the batch
    # allows it so a v7x megacore can shard batch blocks across its two TensorCores.
    if b >= 16:
        cand = _round_up(_round_up(b, 8) // 2, 8)
    else:
        cand = _round_up(max(b, 1), 8)
    return max(8, min(BBLK_MAX, cand))


def _supports_single_buffer():
    try:
        if not hasattr(pl, "Buffered"):
            return False
        if "pipeline_mode" not in inspect.signature(pl.BlockSpec).parameters:
            return False
        pl.BlockSpec((8, 128), lambda i: (0, 0), pipeline_mode=pl.Buffered(1))
        return True
    except Exception:
        return False


_SINGLE_BUFFER = _supports_single_buffer()


def _const_spec(block_shape):
    idx = lambda i, _n=len(block_shape): (0,) * _n
    if _SINGLE_BUFFER:
        return pl.BlockSpec(block_shape, idx, pipeline_mode=pl.Buffered(1))
    return pl.BlockSpec(block_shape, idx)


def cnn_forward(x_nchw, params):
    t1, b1t, t2, b2t, wfc, bfc = params
    b = x_nchw.shape[0]
    bblk = _pick_bblk(b)
    b_pad = _round_up(b, bblk)

    # ---- wrapper-side im2col for conv1 (layout plumbing, done once outside the kernel) ----
    x = jnp.transpose(x_nchw, (0, 2, 3, 1)).astype(jnp.float32)       # NCHW -> NHWC
    xpad = jnp.pad(x, ((0, 0), (1, 1), (1, 1), (0, 0)))               # (B, 34, 34, 3)
    xrow = xpad.reshape(b, H + 2, KTAP)                               # lane = 3*w_pad + cin
    taps = jnp.stack([xrow[:, 0:H], xrow[:, 1:H + 1], xrow[:, 2:H + 2]], axis=2)
    lhs = taps.reshape(b, H, 3 * KTAP)                                # (B, 32, 306)
    lhs = jnp.pad(lhs, ((0, 0), (0, 0), (0, K1 - 3 * KTAP)))          # lane-pad to 384
    lhs = lhs.reshape(b, H2, 2, K1)                                   # h = 2*h2 + parity
    lhs = jnp.transpose(lhs, (2, 1, 0, 3)).reshape(2 * H2, b, K1)     # rows (parity, h2)
    lhs = lhs.astype(jnp.bfloat16)
    if b_pad != b:
        lhs = jnp.pad(lhs, ((0, 0), (0, b_pad - b), (0, 0)))

    out = pl.pallas_call(
        cnn_fused_kernel,
        out_shape=jax.ShapeDtypeStruct((b_pad, FC_PAD), jnp.float32),
        grid=(b_pad // bblk,),
        in_specs=[
            pl.BlockSpec((2 * H2, bblk, K1), lambda i: (0, i, 0)),
            _const_spec((K1, LANE1)),
            _const_spec((1, LANE1)),
            _const_spec((3, LANE1, LANE2)),
            _const_spec((1, LANE2)),
            _const_spec((HP, LANE2, FC_PAD)),
            _const_spec((1, FC_PAD)),
        ],
        out_specs=pl.BlockSpec((bblk, FC_PAD), lambda i: (i, 0)),
        compiler_params=pltpu.CompilerParams(
            dimension_semantics=("parallel",),          # batch blocks are independent
            vmem_limit_bytes=48 * 1024 * 1024),
    )(lhs, t1, b1t, t2, b2t, wfc, bfc)
    return out[:b, :FC_OUT]                                            # (B, 10)


# ------------------------------ parameter initialization --------------------------------
def init_params(key):
    ks = jax.random.split(key, 12)
    # conv weights in PyTorch OIHW layout (deterministic synthetic init)
    w1_oihw = jax.random.normal(ks[0], (C1, C_IN, 3, 3), jnp.float32) / np.sqrt(C_IN * 9)
    w2_oihw = jax.random.normal(ks[1], (C2, C1, 3, 3), jnp.float32) / np.sqrt(C1 * 9)
    # BatchNorm params + running stats (eval mode)
    g1 = 1.0 + 0.1 * jax.random.normal(ks[2], (C1,), jnp.float32)
    be1 = 0.1 * jax.random.normal(ks[3], (C1,), jnp.float32)
    rm1 = 0.1 * jax.random.normal(ks[4], (C1,), jnp.float32)
    rv1 = jax.random.uniform(ks[5], (C1,), jnp.float32, minval=0.5, maxval=1.5)
    g2 = 1.0 + 0.1 * jax.random.normal(ks[6], (C2,), jnp.float32)
    be2 = 0.1 * jax.random.normal(ks[7], (C2,), jnp.float32)
    rm2 = 0.1 * jax.random.normal(ks[8], (C2,), jnp.float32)
    rv2 = jax.random.uniform(ks[9], (C2,), jnp.float32, minval=0.5, maxval=1.5)
    # fc1: PyTorch Linear weight (out, in) = (10, 2048) with NCHW flatten ordering
    wfc_pt = jax.random.normal(ks[10], (FC_OUT, FC_IN), jnp.float32) / np.sqrt(FC_IN)
    bfc_v = 0.1 * jax.random.normal(ks[11], (FC_OUT,), jnp.float32)

    raw = (w1_oihw, w2_oihw, g1, be1, rm1, rv1, g2, be2, rm2, rv2, wfc_pt, bfc_v)

    # --- fold the eval-mode BN scale into the conv weights; keep the additive bias apart ---
    sc1 = g1 / jnp.sqrt(rv1 + EPS)
    sc2 = g2 / jnp.sqrt(rv2 + EPS)
    w1_hwio = np.asarray(jnp.transpose(w1_oihw, (2, 3, 1, 0)) * sc1)   # (3,3,3,16)
    w2_hwio = np.asarray(jnp.transpose(w2_oihw, (2, 3, 1, 0)) * sc2)   # (3,3,16,32)
    b1 = np.asarray(be1 - rm1 * sc1)
    b2 = np.asarray(be2 - rm2 * sc2)

    # conv1 block-Toeplitz: K = [row tap dh | padded col w_pad | cin], out lanes = 16*w + cout
    t1 = np.zeros((K1, LANE1), np.float32)
    for dh in range(3):
        for w in range(W):
            for dw in range(3):
                r0 = KTAP * dh + C_IN * (w + dw)
                t1[r0:r0 + C_IN, C1 * w:C1 * w + C1] = w1_hwio[dh, dw]
    # conv2 block-Toeplitz per row tap: in lanes 16*w + cin, out lanes 32*j + cout, w = 2j+dw-1
    t2 = np.zeros((3, LANE1, LANE2), np.float32)
    for dh in range(3):
        for j in range(W2):
            for dw in range(3):
                w = 2 * j + dw - 1
                if 0 <= w < W:
                    t2[dh, C1 * w:C1 * w + C1, C2 * j:C2 * j + C2] = w2_hwio[dh, dw]

    b1t = np.tile(b1, W).reshape(1, LANE1).astype(np.float32)          # lane = 16*w + c
    b2t = np.tile(b2, W2).reshape(1, LANE2).astype(np.float32)         # lane = 32*j + oc

    # FC weight: one (512, 128) slab per pooled row hp.  The w-pooled value for (wp, c) sits
    # at lane 64*wp + c of the conv2 lane layout; odd 32-lane groups and output columns >= 10
    # stay zero.  PyTorch .view() flatten index = c*64 + hp*8 + wp (NCHW).
    wfc_np = np.asarray(wfc_pt).reshape(FC_OUT, C2, HP, WP)
    wfc_k = np.zeros((HP, LANE2, FC_PAD), np.float32)
    for hp in range(HP):
        for wp in range(WP):
            wfc_k[hp, 2 * C2 * wp:2 * C2 * wp + C2, :FC_OUT] = wfc_np[:, :, hp, wp].T
    bfc = np.zeros((1, FC_PAD), np.float32)
    bfc[0, :FC_OUT] = np.asarray(bfc_v)

    params = (jnp.asarray(t1, jnp.bfloat16), jnp.asarray(b1t),
              jnp.asarray(t2, jnp.bfloat16), jnp.asarray(b2t),
              jnp.asarray(wfc_k, jnp.bfloat16), jnp.asarray(bfc))
    return raw, params


# --------------------------------- pure-JAX reference -----------------------------------
def reference_forward(x_nchw, raw):
    (w1_oihw, w2_oihw, g1, be1, rm1, rv1, g2, be2, rm2, rv2, wfc_pt, bfc_v) = raw

    def bn(y, g, b, m, v):
        return (y - m[None, :, None, None]) / jnp.sqrt(v + EPS)[None, :, None, None] \
            * g[None, :, None, None] + b[None, :, None, None]

    dn = ('NCHW', 'OIHW', 'NCHW')
    y = lax.conv_general_dilated(x_nchw, w1_oihw, (1, 1), ((1, 1), (1, 1)),
                                 dimension_numbers=dn, precision=lax.Precision.HIGHEST)
    y = jnp.maximum(bn(y, g1, be1, rm1, rv1), 0.0)
    y = lax.conv_general_dilated(y, w2_oihw, (2, 2), ((1, 1), (1, 1)),
                                 dimension_numbers=dn, precision=lax.Precision.HIGHEST)
    y = jnp.maximum(bn(y, g2, be2, rm2, rv2), 0.0)
    y = lax.reduce_window(y, -jnp.inf, lax.max, (1, 1, 2, 2), (1, 1, 2, 2), 'VALID')
    flat = y.reshape(y.shape[0], -1)                            # NCHW flatten, like .view()
    return jnp.dot(flat, wfc_pt.T, precision=lax.Precision.HIGHEST) + bfc_v


if __name__ == "__main__":
    key = jax.random.PRNGKey(0)
    kx, kp = jax.random.split(key)
    B = 16
    x = jax.random.normal(kx, (B, C_IN, H, W), jnp.float32)     # NCHW, like PyTorch
    raw, params = init_params(kp)

    fwd = jax.jit(cnn_forward)
    out = jax.block_until_ready(fwd(x, params))
    assert out.shape == (B, FC_OUT) and out.dtype == jnp.float32

    ref = jax.block_until_ready(reference_forward(x, raw))
    # bf16 matmul operands (f32 accumulation) vs. the HIGHEST-precision f32 reference
    np.testing.assert_allclose(np.asarray(out), np.asarray(ref), rtol=2e-2, atol=2e-2)

    print("KERNEL_OK")
</pallas_src>

<mosaic_0001>
module attributes {stable_mosaic.version = 11 : i64} {
  func.func @cnn_fused_kernel(%arg0: i32, %arg1: memref<32x8x384xbf16, #tpu.memory_space<vmem>>, %arg2: memref<384x512xbf16, #tpu.memory_space<vmem>>, %arg3: memref<1x512xf32, #tpu.memory_space<vmem>>, %arg4: memref<3x512x512xbf16, #tpu.memory_space<vmem>>, %arg5: memref<1x512xf32, #tpu.memory_space<vmem>>, %arg6: memref<8x512x128xbf16, #tpu.memory_space<vmem>>, %arg7: memref<1x128xf32, #tpu.memory_space<vmem>>, %arg8: memref<8x128xf32, #tpu.memory_space<vmem>>) attributes {dimension_semantics = [#tpu.dimension_semantics<parallel>], iteration_bounds = array<i64: 2>, scalar_prefetch = 0 : i64, scratch_operands = 0 : i64, tpu.core_type = #tpu.core_type<tc>, window_params = [{transform_indices = @transform_0, window_bounds = array<i64: 32, 8, 384>}, {pipeline_mode = #tpu.pipeline_mode<synchronous>, transform_indices = @transform_1, window_bounds = array<i64: 384, 512>}, {pipeline_mode = #tpu.pipeline_mode<synchronous>, transform_indices = @transform_2, window_bounds = array<i64: 1, 512>}, {pipeline_mode = #tpu.pipeline_mode<synchronous>, transform_indices = @transform_3, window_bounds = array<i64: 3, 512, 512>}, {pipeline_mode = #tpu.pipeline_mode<synchronous>, transform_indices = @transform_4, window_bounds = array<i64: 1, 512>}, {pipeline_mode = #tpu.pipeline_mode<synchronous>, transform_indices = @transform_5, window_bounds = array<i64: 8, 512, 128>}, {pipeline_mode = #tpu.pipeline_mode<synchronous>, transform_indices = @transform_6, window_bounds = array<i64: 1, 128>}, {transform_indices = @transform_7, window_bounds = array<i64: 8, 128>}]} {
    %c0 = arith.constant 0 : index
    %c0_0 = arith.constant 0 : index
    %c0_1 = arith.constant 0 : index
    %0 = vector.load %arg1[%c0, %c0_0, %c0_1] : memref<32x8x384xbf16, #tpu.memory_space<vmem>>, vector<32x8x384xbf16>
    %1 = vector.shape_cast %0 : vector<32x8x384xbf16> to vector<256x384xbf16>
    %c0_2 = arith.constant 0 : index
    %c0_3 = arith.constant 0 : index
    %2 = vector.load %arg2[%c0_2, %c0_3] : memref<384x512xbf16, #tpu.memory_space<vmem>>, vector<384x512xbf16>
    %cst = arith.constant dense<0.000000e+00> : vector<256x512xf32>
    %3 = tpu.matmul %1, %2, %cst {dimension_numbers = #tpu.dot_dimension_numbers<[1], [0], [0], [1], [0, 0, 1, 1], [], []>} : vector<256x384xbf16>, vector<384x512xbf16>, vector<256x512xf32> -> vector<256x512xf32>
    %c0_4 = arith.constant 0 : index
    %c0_5 = arith.constant 0 : index
    %4 = vector.load %arg3[%c0_4, %c0_5] : memref<1x512xf32, #tpu.memory_space<vmem>>, vector<1x512xf32>
    %5 = vector.broadcast %4 : vector<1x512xf32> to vector<256x512xf32>
    %6 = arith.addf %3, %5 : vector<256x512xf32>
    %cst_6 = arith.constant 0.000000e+00 : f32
    %7 = vector.broadcast %cst_6 : f32 to vector<256x512xf32>
    %8 = arith.maximumf %6, %7 : vector<256x512xf32>
    %9 = arith.truncf %8 : vector<256x512xf32> to vector<256x512xbf16>
    %10 = vector.extract_strided_slice %9 {offsets = [0, 0], sizes = [128, 512], strides = [1, 1]} : vector<256x512xbf16> to vector<128x512xbf16>
    %11 = vector.extract_strided_slice %9 {offsets = [128, 0], sizes = [128, 512], strides = [1, 1]} : vector<256x512xbf16> to vector<128x512xbf16>
    %cst_7 = arith.constant 0.000000e+00 : bf16
    %12 = vector.broadcast %cst_7 : bf16 to vector<8x512xbf16>
    %13 = vector.extract_strided_slice %11 {offsets = [0, 0], sizes = [120, 512], strides = [1, 1]} : vector<128x512xbf16> to vector<120x512xbf16>
    %14 = tpu.concatenate %12, %13 in 0 : vector<8x512xbf16>, vector<120x512xbf16> -> vector<128x512xbf16>
    %c1 = arith.constant 1 : index
    %c0_8 = arith.constant 0 : index
    %c0_9 = arith.constant 0 : index
    %15 = vector.load %arg4[%c1, %c0_8, %c0_9] : memref<3x512x512xbf16, #tpu.memory_space<vmem>>, vector<1x512x512xbf16>
    %16 = vector.shape_cast %15 : vector<1x512x512xbf16> to vector<512x512xbf16>
    %cst_10 = arith.constant dense<0.000000e+00> : vector<128x512xf32>
    %17 = tpu.matmul %10, %16, %cst_10 {dimension_numbers = #tpu.dot_dimension_numbers<[1], [0], [0], [1], [0, 0, 1, 1], [], []>} : vector<128x512xbf16>, vector<512x512xbf16>, vector<128x512xf32> -> vector<128x512xf32>
    %c2 = arith.constant 2 : index
    %c0_11 = arith.constant 0 : index
    %c0_12 = arith.constant 0 : index
    %18 = vector.load %arg4[%c2, %c0_11, %c0_12] : memref<3x512x512xbf16, #tpu.memory_space<vmem>>, vector<1x512x512xbf16>
    %19 = vector.shape_cast %18 : vector<1x512x512xbf16> to vector<512x512xbf16>
    %cst_13 = arith.constant dense<0.000000e+00> : vector<128x512xf32>
    %20 = tpu.matmul %11, %19, %cst_13 {dimension_numbers = #tpu.dot_dimension_numbers<[1], [0], [0], [1], [0, 0, 1, 1], [], []>} : vector<128x512xbf16>, vector<512x512xbf16>, vector<128x512xf32> -> vector<128x512xf32>
    %21 = arith.addf %17, %20 : vector<128x512xf32>
    %c0_14 = arith.constant 0 : index
    %c0_15 = arith.constant 0 : index
    %c0_16 = arith.constant 0 : index
    %22 = vector.load %arg4[%c0_14, %c0_15, %c0_16] : memref<3x512x512xbf16, #tpu.memory_space<vmem>>, vector<1x512x512xbf16>
    %23 = vector.shape_cast %22 : vector<1x512x512xbf16> to vector<512x512xbf16>
    %cst_17 = arith.constant dense<0.000000e+00> : vector<128x512xf32>
    %24 = tpu.matmul %14, %23, %cst_17 {dimension_numbers = #tpu.dot_dimension_numbers<[1], [0], [0], [1], [0, 0, 1, 1], [], []>} : vector<128x512xbf16>, vector<512x512xbf16>, vector<128x512xf32> -> vector<128x512xf32>
    %25 = arith.addf %21, %24 : vector<128x512xf32>
    %c0_18 = arith.constant 0 : index
    %c0_19 = arith.constant 0 : index
    %26 = vector.load %arg5[%c0_18, %c0_19] : memref<1x512xf32, #tpu.memory_space<vmem>>, vector<1x512xf32>
    %27 = vector.broadcast %26 : vector<1x512xf32> to vector<128x512xf32>
    %28 = arith.addf %25, %27 : vector<128x512xf32>
    %cst_20 = arith.constant 0.000000e+00 : f32
    %29 = vector.broadcast %cst_20 : f32 to vector<128x512xf32>
    %30 = arith.maximumf %28, %29 : vector<128x512xf32>
    %cst_21 = arith.constant 0.000000e+00 : f32
    %31 = vector.broadcast %cst_21 : f32 to vector<8x128xf32>
    %32 = vector.extract_strided_slice %30 {offsets = [0, 0], sizes = [8, 512], strides = [1, 1]} : vector<128x512xf32> to vector<8x512xf32>
    %33 = vector.extract_strided_slice %30 {offsets = [8, 0], sizes = [8, 512], strides = [1, 1]} : vector<128x512xf32> to vector<8x512xf32>
    %34 = arith.maximumf %32, %33 : vector<8x512xf32>
    %c480_i32 = arith.constant 480 : i32
    %35 = tpu.dynamic_rotate %34 by %c480_i32 dim 1 : vector<8x512xf32>, i32 -> vector<8x512xf32>
    %36 = arith.maximumf %34, %35 : vector<8x512xf32>
    %37 = arith.truncf %36 : vector<8x512xf32> to vector<8x512xbf16>
    %c0_22 = arith.constant 0 : index
    %c0_23 = arith.constant 0 : index
    %c0_24 = arith.constant 0 : index
    %38 = vector.load %arg6[%c0_22, %c0_23, %c0_24] : memref<8x512x128xbf16, #tpu.memory_space<vmem>>, vector<1x512x128xbf16>
    %39 = vector.shape_cast %38 : vector<1x512x128xbf16> to vector<512x128xbf16>
    %cst_25 = arith.constant dense<0.000000e+00> : vector<8x128xf32>
    %40 = tpu.matmul %37, %39, %cst_25 {dimension_numbers = #tpu.dot_dimension_numbers<[1], [0], [0], [1], [0, 0, 1, 1], [], []>} : vector<8x512xbf16>, vector<512x128xbf16>, vector<8x128xf32> -> vector<8x128xf32>
    %41 = arith.addf %31, %40 : vector<8x128xf32>
    %42 = vector.extract_strided_slice %30 {offsets = [16, 0], sizes = [8, 512], strides = [1, 1]} : vector<128x512xf32> to vector<8x512xf32>
    %43 = vector.extract_strided_slice %30 {offsets = [24, 0], sizes = [8, 512], strides = [1, 1]} : vector<128x512xf32> to vector<8x512xf32>
    %44 = arith.maximumf %42, %43 : vector<8x512xf32>
    %c480_i32_26 = arith.constant 480 : i32
    %45 = tpu.dynamic_rotate %44 by %c480_i32_26 dim 1 : vector<8x512xf32>, i32 -> vector<8x512xf32>
    %46 = arith.maximumf %44, %45 : vector<8x512xf32>
    %47 = arith.truncf %46 : vector<8x512xf32> to vector<8x512xbf16>
    %c1_27 = arith.constant 1 : index
    %c0_28 = arith.constant 0 : index
    %c0_29 = arith.constant 0 : index
    %48 = vector.load %arg6[%c1_27, %c0_28, %c0_29] : memref<8x512x128xbf16, #tpu.memory_space<vmem>>, vector<1x512x128xbf16>
    %49 = vector.shape_cast %48 : vector<1x512x128xbf16> to vector<512x128xbf16>
    %cst_30 = arith.constant dense<0.000000e+00> : vector<8x128xf32>
    %50 = tpu.matmul %47, %49, %cst_30 {dimension_numbers = #tpu.dot_dimension_numbers<[1], [0], [0], [1], [0, 0, 1, 1], [], []>} : vector<8x512xbf16>, vector<512x128xbf16>, vector<8x128xf32> -> vector<8x128xf32>
    %51 = arith.addf %41, %50 : vector<8x128xf32>
    %52 = vector.extract_strided_slice %30 {offsets = [32, 0], sizes = [8, 512], strides = [1, 1]} : vector<128x512xf32> to vector<8x512xf32>
    %53 = vector.extract_strided_slice %30 {offsets = [40, 0], sizes = [8, 512], strides = [1, 1]} : vector<128x512xf32> to vector<8x512xf32>
    %54 = arith.maximumf %52, %53 : vector<8x512xf32>
    %c480_i32_31 = arith.constant 480 : i32
    %55 = tpu.dynamic_rotate %54 by %c480_i32_31 dim 1 : vector<8x512xf32>, i32 -> vector<8x512xf32>
    %56 = arith.maximumf %54, %55 : vector<8x512xf32>
    %57 = arith.truncf %56 : vector<8x512xf32> to vector<8x512xbf16>
    %c2_32 = arith.constant 2 : index
    %c0_33 = arith.constant 0 : index
    %c0_34 = arith.constant 0 : index
    %58 = vector.load %arg6[%c2_32, %c0_33, %c0_34] : memref<8x512x128xbf16, #tpu.memory_space<vmem>>, vector<1x512x128xbf16>
    %59 = vector.shape_cast %58 : vector<1x512x128xbf16> to vector<512x128xbf16>
    %cst_35 = arith.constant dense<0.000000e+00> : vector<8x128xf32>
    %60 = tpu.matmul %57, %59, %cst_35 {dimension_numbers = #tpu.dot_dimension_numbers<[1], [0], [0], [1], [0, 0, 1, 1], [], []>} : vector<8x512xbf16>, vector<512x128xbf16>, vector<8x128xf32> -> vector<8x128xf32>
    %61 = arith.addf %51, %60 : vector<8x128xf32>
    %62 = vector.extract_strided_slice %30 {offsets = [48, 0], sizes = [8, 512], strides = [1, 1]} : vector<128x512xf32> to vector<8x512xf32>
    %63 = vector.extract_strided_slice %30 {offsets = [56, 0], sizes = [8, 512], strides = [1, 1]} : vector<128x512xf32> to vector<8x512xf32>
    %64 = arith.maximumf %62, %63 : vector<8x512xf32>
    %c480_i32_36 = arith.constant 480 : i32
    %65 = tpu.dynamic_rotate %64 by %c480_i32_36 dim 1 : vector<8x512xf32>, i32 -> vector<8x512xf32>
    %66 = arith.maximumf %64, %65 : vector<8x512xf32>
    %67 = arith.truncf %66 : vector<8x512xf32> to vector<8x512xbf16>
    %c3 = arith.constant 3 : index
    %c0_37 = arith.constant 0 : index
    %c0_38 = arith.constant 0 : index
    %68 = vector.load %arg6[%c3, %c0_37, %c0_38] : memref<8x512x128xbf16, #tpu.memory_space<vmem>>, vector<1x512x128xbf16>
    %69 = vector.shape_cast %68 : vector<1x512x128xbf16> to vector<512x128xbf16>
    %cst_39 = arith.constant dense<0.000000e+00> : vector<8x128xf32>
    %70 = tpu.matmul %67, %69, %cst_39 {dimension_numbers = #tpu.dot_dimension_numbers<[1], [0], [0], [1], [0, 0, 1, 1], [], []>} : vector<8x512xbf16>, vector<512x128xbf16>, vector<8x128xf32> -> vector<8x128xf32>
    %71 = arith.addf %61, %70 : vector<8x128xf32>
    %72 = vector.extract_strided_slice %30 {offsets = [64, 0], sizes = [8, 512], strides = [1, 1]} : vector<128x512xf32> to vector<8x512xf32>
    %73 = vector.extract_strided_slice %30 {offsets = [72, 0], sizes = [8, 512], strides = [1, 1]} : vector<128x512xf32> to vector<8x512xf32>
    %74 = arith.maximumf %72, %73 : vector<8x512xf32>
    %c480_i32_40 = arith.constant 480 : i32
    %75 = tpu.dynamic_rotate %74 by %c480_i32_40 dim 1 : vector<8x512xf32>, i32 -> vector<8x512xf32>
    %76 = arith.maximumf %74, %75 : vector<8x512xf32>
    %77 = arith.truncf %76 : vector<8x512xf32> to vector<8x512xbf16>
    %c4 = arith.constant 4 : index
    %c0_41 = arith.constant 0 : index
    %c0_42 = arith.constant 0 : index
    %78 = vector.load %arg6[%c4, %c0_41, %c0_42] : memref<8x512x128xbf16, #tpu.memory_space<vmem>>, vector<1x512x128xbf16>
    %79 = vector.shape_cast %78 : vector<1x512x128xbf16> to vector<512x128xbf16>
    %cst_43 = arith.constant dense<0.000000e+00> : vector<8x128xf32>
    %80 = tpu.matmul %77, %79, %cst_43 {dimension_numbers = #tpu.dot_dimension_numbers<[1], [0], [0], [1], [0, 0, 1, 1], [], []>} : vector<8x512xbf16>, vector<512x128xbf16>, vector<8x128xf32> -> vector<8x128xf32>
    %81 = arith.addf %71, %80 : vector<8x128xf32>
    %82 = vector.extract_strided_slice %30 {offsets = [80, 0], sizes = [8, 512], strides = [1, 1]} : vector<128x512xf32> to vector<8x512xf32>
    %83 = vector.extract_strided_slice %30 {offsets = [88, 0], sizes = [8, 512], strides = [1, 1]} : vector<128x512xf32> to vector<8x512xf32>
    %84 = arith.maximumf %82, %83 : vector<8x512xf32>
    %c480_i32_44 = arith.constant 480 : i32
    %85 = tpu.dynamic_rotate %84 by %c480_i32_44 dim 1 : vector<8x512xf32>, i32 -> vector<8x512xf32>
    %86 = arith.maximumf %84, %85 : vector<8x512xf32>
    %87 = arith.truncf %86 : vector<8x512xf32> to vector<8x512xbf16>
    %c5 = arith.constant 5 : index
    %c0_45 = arith.constant 0 : index
    %c0_46 = arith.constant 0 : index
    %88 = vector.load %arg6[%c5, %c0_45, %c0_46] : memref<8x512x128xbf16, #tpu.memory_space<vmem>>, vector<1x512x128xbf16>
    %89 = vector.shape_cast %88 : vector<1x512x128xbf16> to vector<512x128xbf16>
    %cst_47 = arith.constant dense<0.000000e+00> : vector<8x128xf32>
    %90 = tpu.matmul %87, %89, %cst_47 {dimension_numbers = #tpu.dot_dimension_numbers<[1], [0], [0], [1], [0, 0, 1, 1], [], []>} : vector<8x512xbf16>, vector<512x128xbf16>, vector<8x128xf32> -> vector<8x128xf32>
    %91 = arith.addf %81, %90 : vector<8x128xf32>
    %92 = vector.extract_strided_slice %30 {offsets = [96, 0], sizes = [8, 512], strides = [1, 1]} : vector<128x512xf32> to vector<8x512xf32>
    %93 = vector.extract_strided_slice %30 {offsets = [104, 0], sizes = [8, 512], strides = [1, 1]} : vector<128x512xf32> to vector<8x512xf32>
    %94 = arith.maximumf %92, %93 : vector<8x512xf32>
    %c480_i32_48 = arith.constant 480 : i32
    %95 = tpu.dynamic_rotate %94 by %c480_i32_48 dim 1 : vector<8x512xf32>, i32 -> vector<8x512xf32>
    %96 = arith.maximumf %94, %95 : vector<8x512xf32>
    %97 = arith.truncf %96 : vector<8x512xf32> to vector<8x512xbf16>
    %c6 = arith.constant 6 : index
    %c0_49 = arith.constant 0 : index
    %c0_50 = arith.constant 0 : index
    %98 = vector.load %arg6[%c6, %c0_49, %c0_50] : memref<8x512x128xbf16, #tpu.memory_space<vmem>>, vector<1x512x128xbf16>
    %99 = vector.shape_cast %98 : vector<1x512x128xbf16> to vector<512x128xbf16>
    %cst_51 = arith.constant dense<0.000000e+00> : vector<8x128xf32>
    %100 = tpu.matmul %97, %99, %cst_51 {dimension_numbers = #tpu.dot_dimension_numbers<[1], [0], [0], [1], [0, 0, 1, 1], [], []>} : vector<8x512xbf16>, vector<512x128xbf16>, vector<8x128xf32> -> vector<8x128xf32>
    %101 = arith.addf %91, %100 : vector<8x128xf32>
    %102 = vector.extract_strided_slice %30 {offsets = [112, 0], sizes = [8, 512], strides = [1, 1]} : vector<128x512xf32> to vector<8x512xf32>
    %103 = vector.extract_strided_slice %30 {offsets = [120, 0], sizes = [8, 512], strides = [1, 1]} : vector<128x512xf32> to vector<8x512xf32>
    %104 = arith.maximumf %102, %103 : vector<8x512xf32>
    %c480_i32_52 = arith.constant 480 : i32
    %105 = tpu.dynamic_rotate %104 by %c480_i32_52 dim 1 : vector<8x512xf32>, i32 -> vector<8x512xf32>
    %106 = arith.maximumf %104, %105 : vector<8x512xf32>
    %107 = arith.truncf %106 : vector<8x512xf32> to vector<8x512xbf16>
    %c7 = arith.constant 7 : index
    %c0_53 = arith.constant 0 : index
    %c0_54 = arith.constant 0 : index
    %108 = vector.load %arg6[%c7, %c0_53, %c0_54] : memref<8x512x128xbf16, #tpu.memory_space<vmem>>, vector<1x512x128xbf16>
    %109 = vector.shape_cast %108 : vector<1x512x128xbf16> to vector<512x128xbf16>
    %cst_55 = arith.constant dense<0.000000e+00> : vector<8x128xf32>
    %110 = tpu.matmul %107, %109, %cst_55 {dimension_numbers = #tpu.dot_dimension_numbers<[1], [0], [0], [1], [0, 0, 1, 1], [], []>} : vector<8x512xbf16>, vector<512x128xbf16>, vector<8x128xf32> -> vector<8x128xf32>
    %111 = arith.addf %101, %110 : vector<8x128xf32>
    %c0_56 = arith.constant 0 : index
    %c0_57 = arith.constant 0 : index
    %112 = vector.load %arg7[%c0_56, %c0_57] : memref<1x128xf32, #tpu.memory_space<vmem>>, vector<1x128xf32>
    %113 = vector.broadcast %112 : vector<1x128xf32> to vector<8x128xf32>
    %114 = arith.addf %111, %113 : vector<8x128xf32>
    %c0_58 = arith.constant 0 : index
    %c0_59 = arith.constant 0 : index
    %115 = vector.load %arg8[%c0_58, %c0_59] : memref<8x128xf32, #tpu.memory_space<vmem>>, vector<8x128xf32>
    tpu.vector_store %arg8[%c0_58, %c0_59], %114 {strides = array<i32>} : memref<8x128xf32, #tpu.memory_space<vmem>>, vector<8x128xf32>,
    return
  }
  func.func @transform_0(%arg0: i32) -> (i32, i32, i32) {
    %c0_i32 = arith.constant 0 : i32
    %c0_i32_0 = arith.constant 0 : i32
    %c0_i32_1 = arith.constant 0 : i32
    return %c0_i32, %arg0, %c0_i32_0 : i32, i32, i32
  }
  func.func @transform_1(%arg0: i32) -> (i32, i32) {
    %c0_i32 = arith.constant 0 : i32
    %c0_i32_0 = arith.constant 0 : i32
    %c0_i32_1 = arith.constant 0 : i32
    return %c0_i32, %c0_i32_0 : i32, i32
  }
  func.func @transform_2(%arg0: i32) -> (i32, i32) {
    %c0_i32 = arith.constant 0 : i32
    %c0_i32_0 = arith.constant 0 : i32
    %c0_i32_1 = arith.constant 0 : i32
    return %c0_i32, %c0_i32_0 : i32, i32
  }
  func.func @transform_3(%arg0: i32) -> (i32, i32, i32) {
    %c0_i32 = arith.constant 0 : i32
    %c0_i32_0 = arith.constant 0 : i32
    %c0_i32_1 = arith.constant 0 : i32
    %c0_i32_2 = arith.constant 0 : i32
    return %c0_i32, %c0_i32_0, %c0_i32_1 : i32, i32, i32
  }
  func.func @transform_4(%arg0: i32) -> (i32, i32) {
    %c0_i32 = arith.constant 0 : i32
    %c0_i32_0 = arith.constant 0 : i32
    %c0_i32_1 = arith.constant 0 : i32
    return %c0_i32, %c0_i32_0 : i32, i32
  }
  func.func @transform_5(%arg0: i32) -> (i32, i32, i32) {
    %c0_i32 = arith.constant 0 : i32
    %c0_i32_0 = arith.constant 0 : i32
    %c0_i32_1 = arith.constant 0 : i32
    %c0_i32_2 = arith.constant 0 : i32
    return %c0_i32, %c0_i32_0, %c0_i32_1 : i32, i32, i32
  }
  func.func @transform_6(%arg0: i32) -> (i32, i32) {
    %c0_i32 = arith.constant 0 : i32
    %c0_i32_0 = arith.constant 0 : i32
    %c0_i32_1 = arith.constant 0 : i32
    return %c0_i32, %c0_i32_0 : i32, i32
  }
  func.func @transform_7(%arg0: i32) -> (i32, i32) {
    %c0_i32 = arith.constant 0 : i32
    %c0_i32_0 = arith.constant 0 : i32
    return %arg0, %c0_i32 : i32, i32
  }
}

</mosaic_0001>

<llo_original>
// kernel: cnn_forward.1
$region0: #{cnn_forward.1}
  #allocation0 [shape = 'u32[]', space=smem, size = 0x4, offset = 0x4, fixed_abs, tag = 'smem constant byte address 0x4 - core index']
  #allocation1 [shape = 'u32[144,128]{1,0:T(1,128)}', space=vmem, size = 0x12000, scoped, tag = 'internal scratch']
  %s0 = inlined_call_operand.vmem [shape: bf16[32,16,384], index: 0, kind: input, shape index: {}]
  %s1 = inlined_call_operand.vmem [shape: bf16[384,512], index: 1, kind: input, shape index: {}]
  %s2 = inlined_call_operand.vmem [shape: f32[1,512], index: 2, kind: input, shape index: {}]
  %s3 = inlined_call_operand.vmem [shape: bf16[3,512,512], index: 3, kind: input, shape index: {}]
  %s4 = inlined_call_operand.vmem [shape: f32[1,512], index: 4, kind: input, shape index: {}]
  %s5 = inlined_call_operand.vmem [shape: bf16[8,512,128], index: 5, kind: input, shape index: {}]
  %s6 = inlined_call_operand.vmem [shape: f32[1,128], index: 6, kind: input, shape index: {}]
  %s7 = inlined_call_operand.hbm [shape: f32[16,128], index: 7, kind: output, shape index: {}]
  %s8 = sld [smem:[#allocation0]]
  $region87: #{cnn_forward.1} parent=0
    _
  %s10 = ssub.s32 1, %s8
  %s11 = scalar_select 0, %s10, %s8
  $region1: #{cnn_forward.1} parent=0
    #allocation2 [shape = 'u8[393216]{0}', space=vmem, size = 0x60000, scoped, tag = 'input window, operand 0']
    #allocation3 [shape = 'u8[8192]{0}', space=vmem, size = 0x2000, scoped, tag = 'output window, operand 0']
    #allocation4 [shape = 's32[2]{0}', space=sflag, size = 0x8, scoped, tag = 'scoped memory for cnn_forward.1']
    %12 = vsyncpa [#allocation4], 0
    %s13 = scalar_lea.sflag [#allocation4], 1
    %14 = vsyncpa %s13, 0
    loop: start=0, step=1, limit=4
    $region2: #{cnn_forward.1} parent=1 // loop_pre_header
      _
    $region3: #{cnn_forward.1} parent=1 // loop_header
      %s16 = sphi 0, %s20
      %p17 = scmp.ge.s32.totalorder %s16, 4
      %s26 = sphi 0, %s28
      %s29 = sphi 0, %s26
      %s30 = sphi 0, %s29
      %s46 = sphi 0, %s30
      %s50 = sphi 0, %s50
      %s52 = sphi 0, %s50
      %s53 = sphi 0, %s52
      %s67 = sphi 0, %s53
      %s71 = sphi 0, %s71
      %s73 = sphi 0, %s71
      %s74 = sphi 0, %s73
      %s88 = sphi 0, %s74
      %s92 = sphi 0, %s92
      %s94 = sphi 0, %s92
      %s95 = sphi 0, %s94
      %s109 = sphi 0, %s95
      %s113 = sphi 0, %s113
      %s115 = sphi 0, %s113
      %s116 = sphi 0, %s115
      %s130 = sphi 0, %s116
      %s134 = sphi 0, %s134
      %s136 = sphi 0, %s134
      %s137 = sphi 0, %s136
      %s151 = sphi 0, %s137
      %s155 = sphi 0, %s155
      %s157 = sphi 0, %s155
      %s158 = sphi 0, %s157
      %s172 = sphi 0, %s158
      %s178 = sphi 0, %s180
      %s181 = sphi 0, %s178
      %s182 = sphi 0, %s181
      %s198 = sphi 0, %s182
    $region4: #{cnn_forward.1} parent=1 // loop_header_branch
      %19 = sbr.rel (%p17) target = $region8
    $region5: #{cnn_forward.1} parent=1 // loop_body
      %s21 = ssub.s32 %s16, 1
      %s22 = ssub.s32 %s16, 2
      %s23 = sadd.s32 %s16, 1
      %s24 = ssub.s32 %s16, %s23
      %p25 = scmp.eq.s32.totalorder %s24, 0
      %s27 = sadd.s32 %s26, 1
      %s28 = scalar_select %p25, %s26, %s27
      %p31 = pneg %p25
      %p32 = scmp.eq.s32.totalorder %s16, 1
      %p33 = por %p31, %p32
      %p34 = scmp.ne.s32.totalorder %s26, %s29
      %p35 = scmp.eq.s32.totalorder %s16, 0
      %p36 = por %p34, %p35
      %p37 = scmp.ne.s32.totalorder %s26, %s29
      %p38 = scmp.eq.s32.totalorder %s21, 1
      %p39 = por %p37, %p38
      %p40 = scmp.ne.s32.totalorder %s29, %s30
      %p41 = scmp.eq.s32.totalorder %s21, 0
      %p42 = por %p40, %p41
      %p43 = scmp.ne.s32.totalorder %s29, %s30
      %p44 = scmp.eq.s32.totalorder %s22, 1
      %p45 = por %p43, %p44
      %p47 = scmp.ne.s32.totalorder %s30, %s46
      %p48 = scmp.eq.s32.totalorder %s22, 0
      %p49 = por %p47, %p48
      %s51 = sadd.s32 %s50, 1
      %p54 = scmp.eq.s32.totalorder %s16, 1
      %p55 = scmp.ne.s32.totalorder %s50, %s52
      %p56 = scmp.eq.s32.totalorder %s16, 0
      %p57 = por %p55, %p56
      %p58 = scmp.ne.s32.totalorder %s50, %s52
      %p59 = scmp.eq.s32.totalorder %s21, 1
      %p60 = por %p58, %p59
      %p61 = scmp.ne.s32.totalorder %s52, %s53
      %p62 = scmp.eq.s32.totalorder %s21, 0
      %p63 = por %p61, %p62
      %p64 = scmp.ne.s32.totalorder %s52, %s53
      %p65 = scmp.eq.s32.totalorder %s22, 1
      %p66 = por %p64, %p65
      %p68 = scmp.ne.s32.totalorder %s53, %s67
      %p69 = scmp.eq.s32.totalorder %s22, 0
      %p70 = por %p68, %p69
      %s72 = sadd.s32 %s71, 1
      %p75 = scmp.eq.s32.totalorder %s16, 1
      %p76 = scmp.ne.s32.totalorder %s71, %s73
      %p77 = scmp.eq.s32.totalorder %s16, 0
      %p78 = por %p76, %p77
      %p79 = scmp.ne.s32.totalorder %s71, %s73
      %p80 = scmp.eq.s32.totalorder %s21, 1
      %p81 = por %p79, %p80
      %p82 = scmp.ne.s32.totalorder %s73, %s74
      %p83 = scmp.eq.s32.totalorder %s21, 0
      %p84 = por %p82, %p83
      %p85 = scmp.ne.s32.totalorder %s73, %s74
      %p86 = scmp.eq.s32.totalorder %s22, 1
      %p87 = por %p85, %p86
      %p89 = scmp.ne.s32.totalorder %s74, %s88
      %p90 = scmp.eq.s32.totalorder %s22, 0
      %p91 = por %p89, %p90
      %s93 = sadd.s32 %s92, 1
      %p96 = scmp.eq.s32.totalorder %s16, 1
      %p97 = scmp.ne.s32.totalorder %s92, %s94
      %p98 = scmp.eq.s32.totalorder %s16, 0
      %p99 = por %p97, %p98
      %p100 = scmp.ne.s32.totalorder %s92, %s94
      %p101 = scmp.eq.s32.totalorder %s21, 1
      %p102 = por %p100, %p101
      %p103 = scmp.ne.s32.totalorder %s94, %s95
      %p104 = scmp.eq.s32.totalorder %s21, 0
      %p105 = por %p103, %p104
      %p106 = scmp.ne.s32.totalorder %s94, %s95
      %p107 = scmp.eq.s32.totalorder %s22, 1
      %p108 = por %p106, %p107
      %p110 = scmp.ne.s32.totalorder %s95, %s109
      %p111 = scmp.eq.s32.totalorder %s22, 0
      %p112 = por %p110, %p111
      %s114 = sadd.s32 %s113, 1
      %p117 = scmp.eq.s32.totalorder %s16, 1
      %p118 = scmp.ne.s32.totalorder %s113, %s115
      %p119 = scmp.eq.s32.totalorder %s16, 0
      %p120 = por %p118, %p119
      %p121 = scmp.ne.s32.totalorder %s113, %s115
      %p122 = scmp.eq.s32.totalorder %s21, 1
      %p123 = por %p121, %p122
      %p124 = scmp.ne.s32.totalorder %s115, %s116
      %p125 = scmp.eq.s32.totalorder %s21, 0
      %p126 = por %p124, %p125
      %p127 = scmp.ne.s32.totalorder %s115, %s116
      %p128 = scmp.eq.s32.totalorder %s22, 1
      %p129 = por %p127, %p128
      %p131 = scmp.ne.s32.totalorder %s116, %s130
      %p132 = scmp.eq.s32.totalorder %s22, 0
      %p133 = por %p131, %p132
      %s135 = sadd.s32 %s134, 1
      %p138 = scmp.eq.s32.totalorder %s16, 1
      %p139 = scmp.ne.s32.totalorder %s134, %s136
      %p140 = scmp.eq.s32.totalorder %s16, 0
      %p141 = por %p139, %p140
      %p142 = scmp.ne.s32.totalorder %s134, %s136
      %p143 = scmp.eq.s32.totalorder %s21, 1
      %p144 = por %p142, %p143
      %p145 = scmp.ne.s32.totalorder %s136, %s137
      %p146 = scmp.eq.s32.totalorder %s21, 0
      %p147 = por %p145, %p146
      %p148 = scmp.ne.s32.totalorder %s136, %s137
      %p149 = scmp.eq.s32.totalorder %s22, 1
      %p150 = por %p148, %p149
      %p152 = scmp.ne.s32.totalorder %s137, %s151
      %p153 = scmp.eq.s32.totalorder %s22, 0
      %p154 = por %p152, %p153
      %s156 = sadd.s32 %s155, 1
      %p159 = scmp.eq.s32.totalorder %s16, 1
      %p160 = scmp.ne.s32.totalorder %s155, %s157
      %p161 = scmp.eq.s32.totalorder %s16, 0
      %p162 = por %p160, %p161
      %p163 = scmp.ne.s32.totalorder %s155, %s157
      %p164 = scmp.eq.s32.totalorder %s21, 1
      %p165 = por %p163, %p164
      %p166 = scmp.ne.s32.totalorder %s157, %s158
      %p167 = scmp.eq.s32.totalorder %s21, 0
      %p168 = por %p166, %p167
      %p169 = scmp.ne.s32.totalorder %s157, %s158
      %p170 = scmp.eq.s32.totalorder %s22, 1
      %p171 = por %p169, %p170
      %p173 = scmp.ne.s32.totalorder %s158, %s172
      %p174 = scmp.eq.s32.totalorder %s22, 0
      %p175 = por %p173, %p174
      %s176 = ssub.s32 %s16, %s23
      %p177 = scmp.eq.s32.totalorder %s176, 0
      %s179 = sadd.s32 %s178, 1
      %s180 = scalar_select %p177, %s178, %s179
      %p183 = pneg %p177
      %p184 = scmp.eq.s32.totalorder %s16, 1
      %p185 = por %p183, %p184
      %p186 = scmp.ne.s32.totalorder %s178, %s181
      %p187 = scmp.eq.s32.totalorder %s16, 0
      %p188 = por %p186, %p187
      %p189 = scmp.ne.s32.totalorder %s178, %s181
      %p190 = scmp.eq.s32.totalorder %s21, 1
      %p191 = por %p189, %p190
      %p192 = scmp.ne.s32.totalorder %s181, %s182
      %p193 = scmp.eq.s32.totalorder %s21, 0
      %p194 = por %p192, %p193
      %p195 = scmp.ne.s32.totalorder %s181, %s182
      %p196 = scmp.eq.s32.totalorder %s22, 1
      %p197 = por %p195, %p196
      %p199 = scmp.ne.s32.totalorder %s182, %s198
      %p200 = scmp.eq.s32.totalorder %s22, 0
      %p201 = por %p199, %p200
      %p202 = scmp.le.s32.totalorder 1, %s16
      %p203 = scmp.lt.s32.totalorder %s16, 3
      %p204 = pnand %p202, %p203
      %p205 = pneg %p204
      // Predicated region
      $region9: #{cnn_forward.1} parent=5 // pred_check
        _
      $region10: #{cnn_forward.1} parent=5 // pred_check_branch
        %207 = sbr.rel (%p204) target = $region12
      $region11: #{cnn_forward.1} parent=5 // pred_region
        %s208 = ssub.s32 %s16, 1
        // Predicated region
        $region13: #{cnn_forward.1} parent=11 // pred_check
          %p209 = pneg %p63
        $region14: #{cnn_forward.1} parent=11 // pred_check_branch
          %211 = sbr.rel (%p209) target = $region16
        $region15: #{cnn_forward.1} parent=11 // pred_region
          _
        $region16: #{cnn_forward.1} parent=11 // pred_fallthru
          _
        // Predicated region
        $region17: #{cnn_forward.1} parent=11 // pred_check
          %p212 = pneg %p84
        $region18: #{cnn_forward.1} parent=11 // pred_check_branch
          %214 = sbr.rel (%p212) target = $region20
        $region19: #{cnn_forward.1} parent=11 // pred_region
          _
        $region20: #{cnn_forward.1} parent=11 // pred_fallthru
          _
        // Predicated region
        $region21: #{cnn_forward.1} parent=11 // pred_check
          %p215 = pneg %p105
        $region22: #{cnn_forward.1} parent=11 // pred_check_branch
          %217 = sbr.rel (%p215) target = $region24
        $region23: #{cnn_forward.1} parent=11 // pred_region
          _
        $region24: #{cnn_forward.1} parent=11 // pred_fallthru
          _
        // Predicated region
        $region25: #{cnn_forward.1} parent=11 // pred_check
          %p218 = pneg %p126
        $region26: #{cnn_forward.1} parent=11 // pred_check_branch
          %220 = sbr.rel (%p218) target = $region28
        $region27: #{cnn_forward.1} parent=11 // pred_region
          _
        $region28: #{cnn_forward.1} parent=11 // pred_fallthru
          _
        // Predicated region
        $region29: #{cnn_forward.1} parent=11 // pred_check
          %p221 = pneg %p147
        $region30: #{cnn_forward.1} parent=11 // pred_check_branch
          %223 = sbr.rel (%p221) target = $region32
        $region31: #{cnn_forward.1} parent=11 // pred_region
          _
        $region32: #{cnn_forward.1} parent=11 // pred_fallthru
          _
        // Predicated region
        $region33: #{cnn_forward.1} parent=11 // pred_check
          %p224 = pneg %p168
        $region34: #{cnn_forward.1} parent=11 // pred_check_branch
          %226 = sbr.rel (%p224) target = $region36
        $region35: #{cnn_forward.1} parent=11 // pred_region
          _
        $region36: #{cnn_forward.1} parent=11 // pred_fallthru
          _
      $region12: #{cnn_forward.1} parent=5 // pred_fallthru
        _
      %p227 = scmp.lt.s32.totalorder %s16, 2
      // Predicated region
      $region37: #{cnn_forward.1} parent=5 // pred_check
        %p228 = pneg %p227
      $region38: #{cnn_forward.1} parent=5 // pred_check_branch
        %230 = sbr.rel (%p228) target = $region40
      $region39: #{cnn_forward.1} parent=5 // pred_region
        // Predicated region
        $region41: #{cnn_forward.1} parent=39 // pred_check
          %p231 = pneg %p36
        $region42: #{cnn_forward.1} parent=39 // pred_check_branch
          %233 = sbr.rel (%p231) target = $region44
        $region43: #{cnn_forward.1} parent=39 // pred_region
          %s234 = sand.u32 %s26, 1
          %s235 = sand.u32 %s26, 1
          %s236 = smul.addr %s235, 384
          %s237 = scalar_lea.vmem [#allocation2], %s236
          %s238 = smul.addr %s16, 3
          %s239 = smul.addr %s238, 4
          %s240 = scalar_lea.vmem %s0, %s239
          // Predicated region
          $region45: #{cnn_forward.1} parent=43 // pred_check
            _
          $region46: #{cnn_forward.1} parent=43 // pred_check_branch
            %242 = sbr.rel (0) target = $region48
          $region47: #{cnn_forward.1} parent=43 // pred_region
            // Predicated region
            $region49: #{cnn_forward.1} parent=47 // pred_check
              _
            $region50: #{cnn_forward.1} parent=47 // pred_check_branch
              %244 = sbr.rel (0) target = $region52
            $region51: #{cnn_forward.1} parent=47 // pred_region
              %s245 = scalar_lea.vmem %s240, 8
              %s246 = scalar_lea.vmem %s237, 8 [#allocation2]
              loop: start=0, step=1, limit=1
              $region53: #{cnn_forward.1} parent=51 // loop_pre_header
                _
              $region54: #{cnn_forward.1} parent=51 // loop_header
                %s248 = sphi 0, %s252
                %p249 = scmp.ge.s32.totalorder %s248, 1
                %s253 = sphi %s240, %s240
                %s254 = sphi %s237, %s237
              $region55: #{cnn_forward.1} parent=51 // loop_header_branch
                %251 = sbr.rel (%p249) target = $region59
              $region56: #{cnn_forward.1} parent=51 // loop_body
                %v255 = vld [vmem:[%s253] sm:$0xff]
                %256 = vst [vmem:[%s254] sm:$0xff] %v255
                %v257 = vld [vmem:[%s253 + $0x18] sm:$0xff]
                %258 = vst [vmem:[%s254 + $0xc] sm:$0xff] %v257
                %v259 = vld [vmem:[%s253 + $0x30] sm:$0xff]
                %260 = vst [vmem:[%s254 + $0x18] sm:$0xff] %v259
                %v261 = vld [vmem:[%s253 + $0x48] sm:$0xff]
                %262 = vst [vmem:[%s254 + $0x24] sm:$0xff] %v261
                %v263 = vld [vmem:[%s253 + $0x60] sm:$0xff]
                %264 = vst [vmem:[%s254 + $0x30] sm:$0xff] %v263
                %v265 = vld [vmem:[%s253 + $0x78] sm:$0xff]
                %266 = vst [vmem:[%s254 + $0x3c] sm:$0xff] %v265
                %v267 = vld [vmem:[%s253 + $0x90] sm:$0xff]
                %268 = vst [vmem:[%s254 + $0x48] sm:$0xff] %v267
                %v269 = vld [vmem:[%s253 + $0xa8] sm:$0xff]
                %270 = vst [vmem:[%s254 + $0x54] sm:$0xff] %v269
                %v271 = vld [vmem:[%s253 + $0xc0] sm:$0xff]
                %272 = vst [vmem:[%s254 + $0x60] sm:$0xff] %v271
                %v273 = vld [vmem:[%s253 + $0xd8] sm:$0xff]
                %274 = vst [vmem:[%s254 + $0x6c] sm:$0xff] %v273
                %v275 = vld [vmem:[%s253 + $0xf0] sm:$0xff]
                %276 = vst [vmem:[%s254 + $0x78] sm:$0xff] %v275
                %v277 = vld [vmem:[%s253 + $0x108] sm:$0xff]
                %278 = vst [vmem:[%s254 + $0x84] sm:$0xff] %v277
                %v279 = vld [vmem:[%s253 + $0x120] sm:$0xff]
                %280 = vst [vmem:[%s254 + $0x90] sm:$0xff] %v279
                %v281 = vld [vmem:[%s253 + $0x138] sm:$0xff]
                %282 = vst [vmem:[%s254 + $0x9c] sm:$0xff] %v281
                %v283 = vld [vmem:[%s253 + $0x150] sm:$0xff]
                %284 = vst [vmem:[%s254 + $0xa8] sm:$0xff] %v283
                %v285 = vld [vmem:[%s253 + $0x168] sm:$0xff]
                %286 = vst [vmem:[%s254 + $0xb4] sm:$0xff] %v285
                %v287 = vld [vmem:[%s253 + $0x180] sm:$0xff]
                %288 = vst [vmem:[%s254 + $0xc0] sm:$0xff] %v287
                %v289 = vld [vmem:[%s253 + $0x198] sm:$0xff]
                %290 = vst [vmem:[%s254 + $0xcc] sm:$0xff] %v289
                %v291 = vld [vmem:[%s253 + $0x1b0] sm:$0xff]
                %292 = vst [vmem:[%s254 + $0xd8] sm:$0xff] %v291
                %v293 = vld [vmem:[%s253 + $0x1c8] sm:$0xff]
                %294 = vst [vmem:[%s254 + $0xe4] sm:$0xff] %v293
                %v295 = vld [vmem:[%s253 + $0x1e0] sm:$0xff]
                %296 = vst [vmem:[%s254 + $0xf0] sm:$0xff] %v295
                %v297 = vld [vmem:[%s253 + $0x1f8] sm:$0xff]
                %298 = vst [vmem:[%s254 + $0xfc] sm:$0xff] %v297
                %v299 = vld [vmem:[%s253 + $0x210] sm:$0xff]
                %300 = vst [vmem:[%s254 + $0x108] sm:$0xff] %v299
                %v301 = vld [vmem:[%s253 + $0x228] sm:$0xff]
                %302 = vst [vmem:[%s254 + $0x114] sm:$0xff] %v301
                %v303 = vld [vmem:[%s253 + $0x240] sm:$0xff]
                %304 = vst [vmem:[%s254 + $0x120] sm:$0xff] %v303
                %v305 = vld [vmem:[%s253 + $0x258] sm:$0xff]
                %306 = vst [vmem:[%s254 + $0x12c] sm:$0xff] %v305
                %v307 = vld [vmem:[%s253 + $0x270] sm:$0xff]
                %308 = vst [vmem:[%s254 + $0x138] sm:$0xff] %v307
                %v309 = vld [vmem:[%s253 + $0x288] sm:$0xff]
                %310 = vst [vmem:[%s254 + $0x144] sm:$0xff] %v309
                %v311 = vld [vmem:[%s253 + $0x2a0] sm:$0xff]
                %312 = vst [vmem:[%s254 + $0x150] sm:$0xff] %v311
                %v313 = vld [vmem:[%s253 + $0x2b8] sm:$0xff]
                %314 = vst [vmem:[%s254 + $0x15c] sm:$0xff] %v313
                %v315 = vld [vmem:[%s253 + $0x2d0] sm:$0xff]
                %316 = vst [vmem:[%s254 + $0x168] sm:$0xff] %v315
                %v317 = vld [vmem:[%s253 + $0x2e8] sm:$0xff]
                %318 = vst [vmem:[%s254 + $0x174] sm:$0xff] %v317
              $region57: #{cnn_forward.1} parent=51 // loop_footer
                %s252 = sadd.s32 1, %s248
              $region58: #{cnn_forward.1} parent=51 // loop_footer_branch
                %247 = sbr.rel target = $region54
              $region59: #{cnn_forward.1} parent=51 // loop_exit
                _
              %s320 = ssub.s32 16, 1
              loop: start=0, step=1, limit=1
              $region60: #{cnn_forward.1} parent=51 // loop_pre_header
                _
              $region61: #{cnn_forward.1} parent=51 // loop_header
                %s322 = sphi 0, %s326
                %p323 = scmp.ge.s32.totalorder %s322, 1
                %s327 = sphi %s245, %s245
                %s328 = sphi %s246, %s246
              $region62: #{cnn_forward.1} parent=51 // loop_header_branch
                %325 = sbr.rel (%p323) target = $region66
              $region63: #{cnn_forward.1} parent=51 // loop_body
                %v329 = vld [vmem:[%s327] sm:%s320]
                %330 = vst [vmem:[%s328] sm:%s320] %v329
                %v331 = vld [vmem:[%s327 + $0x18] sm:%s320]
                %332 = vst [vmem:[%s328 + $0xc] sm:%s320] %v331
                %v333 = vld [vmem:[%s327 + $0x30] sm:%s320]
                %334 = vst [vmem:[%s328 + $0x18] sm:%s320] %v333
                %v335 = vld [vmem:[%s327 + $0x48] sm:%s320]
                %336 = vst [vmem:[%s328 + $0x24] sm:%s320] %v335
                %v337 = vld [vmem:[%s327 + $0x60] sm:%s320]
                %338 = vst [vmem:[%s328 + $0x30] sm:%s320] %v337
                %v339 = vld [vmem:[%s327 + $0x78] sm:%s320]
                %340 = vst [vmem:[%s328 + $0x3c] sm:%s320] %v339
                %v341 = vld [vmem:[%s327 + $0x90] sm:%s320]
                %342 = vst [vmem:[%s328 + $0x48] sm:%s320] %v341
                %v343 = vld [vmem:[%s327 + $0xa8] sm:%s320]
                %344 = vst [vmem:[%s328 + $0x54] sm:%s320] %v343
                %v345 = vld [vmem:[%s327 + $0xc0] sm:%s320]
                %346 = vst [vmem:[%s328 + $0x60] sm:%s320] %v345
                %v347 = vld [vmem:[%s327 + $0xd8] sm:%s320]
                %348 = vst [vmem:[%s328 + $0x6c] sm:%s320] %v347
                %v349 = vld [vmem:[%s327 + $0xf0] sm:%s320]
                %350 = vst [vmem:[%s328 + $0x78] sm:%s320] %v349
                %v351 = vld [vmem:[%s327 + $0x108] sm:%s320]
                %352 = vst [vmem:[%s328 + $0x84] sm:%s320] %v351
                %v353 = vld [vmem:[%s327 + $0x120] sm:%s320]
                %354 = vst [vmem:[%s328 + $0x90] sm:%s320] %v353
                %v355 = vld [vmem:[%s327 + $0x138] sm:%s320]
                %356 = vst [vmem:[%s328 + $0x9c] sm:%s320] %v355
                %v357 = vld [vmem:[%s327 + $0x150] sm:%s320]
                %358 = vst [vmem:[%s328 + $0xa8] sm:%s320] %v357
                %v359 = vld [vmem:[%s327 + $0x168] sm:%s320]
                %360 = vst [vmem:[%s328 + $0xb4] sm:%s320] %v359
                %v361 = vld [vmem:[%s327 + $0x180] sm:%s320]
                %362 = vst [vmem:[%s328 + $0xc0] sm:%s320] %v361
                %v363 = vld [vmem:[%s327 + $0x198] sm:%s320]
                %364 = vst [vmem:[%s328 + $0xcc] sm:%s320] %v363
                %v365 = vld [vmem:[%s327 + $0x1b0] sm:%s320]
                %366 = vst [vmem:[%s328 + $0xd8] sm:%s320] %v365
                %v367 = vld [vmem:[%s327 + $0x1c8] sm:%s320]
                %368 = vst [vmem:[%s328 + $0xe4] sm:%s320] %v367
                %v369 = vld [vmem:[%s327 + $0x1e0] sm:%s320]
                %370 = vst [vmem:[%s328 + $0xf0] sm:%s320] %v369
                %v371 = vld [vmem:[%s327 + $0x1f8] sm:%s320]
                %372 = vst [vmem:[%s328 + $0xfc] sm:%s320] %v371
                %v373 = vld [vmem:[%s327 + $0x210] sm:%s320]
                %374 = vst [vmem:[%s328 + $0x108] sm:%s320] %v373
                %v375 = vld [vmem:[%s327 + $0x228] sm:%s320]
                %376 = vst [vmem:[%s328 + $0x114] sm:%s320] %v375
                %v377 = vld [vmem:[%s327 + $0x240] sm:%s320]
                %378 = vst [vmem:[%s328 + $0x120] sm:%s320] %v377
                %v379 = vld [vmem:[%s327 + $0x258] sm:%s320]
                %380 = vst [vmem:[%s328 + $0x12c] sm:%s320] %v379
                %v381 = vld [vmem:[%s327 + $0x270] sm:%s320]
                %382 = vst [vmem:[%s328 + $0x138] sm:%s320] %v381
                %v383 = vld [vmem:[%s327 + $0x288] sm:%s320]
                %384 = vst [vmem:[%s328 + $0x144] sm:%s320] %v383
                %v385 = vld [vmem:[%s327 + $0x2a0] sm:%s320]
                %386 = vst [vmem:[%s328 + $0x150] sm:%s320] %v385
                %v387 = vld [vmem:[%s327 + $0x2b8] sm:%s320]
                %388 = vst [vmem:[%s328 + $0x15c] sm:%s320] %v387
                %v389 = vld [vmem:[%s327 + $0x2d0] sm:%s320]
                %390 = vst [vmem:[%s328 + $0x168] sm:%s320] %v389
                %v391 = vld [vmem:[%s327 + $0x2e8] sm:%s320]
                %392 = vst [vmem:[%s328 + $0x174] sm:%s320] %v391
              $region64: #{cnn_forward.1} parent=51 // loop_footer
                %s326 = sadd.s32 1, %s322
              $region65: #{cnn_forward.1} parent=51 // loop_footer_branch
                %321 = sbr.rel target = $region61
              $region66: #{cnn_forward.1} parent=51 // loop_exit
                _
            $region52: #{cnn_forward.1} parent=47 // pred_fallthru
              _
          $region48: #{cnn_forward.1} parent=43 // pred_fallthru
            _
          %393 = vnop
        $region44: #{cnn_forward.1} parent=39 // pred_fallthru
          _
      $region40: #{cnn_forward.1} parent=5 // pred_fallthru
        _
      %p394 = scmp.le.s32.totalorder 1, %s16
      %p395 = scmp.lt.s32.totalorder %s16, 3
      %p396 = pnand %p394, %p395
      %p397 = pneg %p396
      // Predicated region
      $region67: #{cnn_forward.1} parent=5 // pred_check
        _
      $region68: #{cnn_forward.1} parent=5 // pred_check_branch
        %399 = sbr.rel (%p396) target = $region70
      $region69: #{cnn_forward.1} parent=5 // pred_region
        %s400 = ssub.s32 %s16, 1
        %s401 = sand.u32 %s29, 1
        %s402 = sand.u32 %s29, 1
        %s403 = smul.addr %s402, 384
        %s404 = scalar_lea.vmem [#allocation2], %s403
        // Predicated region
        $region71: #{cnn_forward.1} parent=69 // pred_check
          %p405 = pneg %p42
        $region72: #{cnn_forward.1} parent=69 // pred_check_branch
          %407 = sbr.rel (%p405) target = $region74
        $region73: #{cnn_forward.1} parent=69 // pred_region
          _
        $region74: #{cnn_forward.1} parent=69 // pred_fallthru
          _
        %s408 = sand.u32 %s29, 1
        %s409 = sand.u32 %s29, 1
        %s410 = smul.addr %s409, 384
        %s411 = scalar_lea.vmem [#allocation2], %s410
        %p412 = pneg %p42
        %p413 = pneg %p39
        %p414 = pneg %p63
        %p415 = pneg %p60
        %p416 = pneg %p84
        %p417 = pneg %p81
        %p418 = pneg %p105
        %p419 = pneg %p102
        %p420 = pneg %p126
        %p421 = pneg %p123
        %p422 = pneg %p147
        %p423 = pneg %p144
        %p424 = pneg %p168
        %p425 = pneg %p165
        %p426 = pneg %p194
        %p427 = pneg %p191
        %s428 = sand.u32 %s181, 1
        %s429 = scalar_lea.sflag [#allocation4], %s428
        %s430 = sand.u32 %s181, 1
        %s431 = smul.addr %s430, 8
        %s432 = scalar_lea.vmem [#allocation3], %s431
        %v434 = vld [vmem:[%s404] sm:$0xff]
        %v435 = vld [vmem:[%s404 + $0x8] sm:$0xf]
        %v436 = vld [vmem:[%s404 + $0xc] sm:$0xff]
        %v437 = vld [vmem:[%s404 + $0x14] sm:$0xf]
        %v438 = vld [vmem:[%s404 + $0x18] sm:$0xff]
        %v439 = vld [vmem:[%s404 + $0x20] sm:$0xf]
        %v440 = vld [vmem:[%s404 + $0x24] sm:$0xff]
        %v441 = vld [vmem:[%s404 + $0x2c] sm:$0xf]
        %v442 = vld [vmem:[%s404 + $0x30] sm:$0xff]
        %v443 = vld [vmem:[%s404 + $0x38] sm:$0xf]
        %v444 = vld [vmem:[%s404 + $0x3c] sm:$0xff]
        %v445 = vld [vmem:[%s404 + $0x44] sm:$0xf]
        %v446 = vld [vmem:[%s404 + $0x48] sm:$0xff]
        %v447 = vld [vmem:[%s404 + $0x50] sm:$0xf]
        %v448 = vld [vmem:[%s404 + $0x54] sm:$0xff]
        %v449 = vld [vmem:[%s404 + $0x5c] sm:$0xf]
        %v450 = vld [vmem:[%s404 + $0x60] sm:$0xff]
        %v451 = vld [vmem:[%s404 + $0x68] sm:$0xf]
        %v452 = vld [vmem:[%s404 + $0x6c] sm:$0xff]
        %v453 = vld [vmem:[%s404 + $0x74] sm:$0xf]
        %v454 = vld [vmem:[%s404 + $0x78] sm:$0xff]
        %v455 = vld [vmem:[%s404 + $0x80] sm:$0xf]
        %v456 = vld [vmem:[%s404 + $0x84] sm:$0xff]
        %v457 = vld [vmem:[%s404 + $0x8c] sm:$0xf]
        %v458 = vld [vmem:[%s404 + $0x90] sm:$0xff]
        %v459 = vld [vmem:[%s404 + $0x98] sm:$0xf]
        %v460 = vld [vmem:[%s404 + $0x9c] sm:$0xff]
        %v461 = vld [vmem:[%s404 + $0xa4] sm:$0xf]
        %v462 = vld [vmem:[%s404 + $0xa8] sm:$0xff]
        %v463 = vld [vmem:[%s404 + $0xb0] sm:$0xf]
        %v464 = vld [vmem:[%s404 + $0xb4] sm:$0xff]
        %v465 = vld [vmem:[%s404 + $0xbc] sm:$0xf]
        %v466 = vld [vmem:[%s404 + $0xc0] sm:$0xff]
        %v467 = vld [vmem:[%s404 + $0xc8] sm:$0xf]
        %v468 = vld [vmem:[%s404 + $0xcc] sm:$0xff]
        %v469 = vld [vmem:[%s404 + $0xd4] sm:$0xf]
        %v470 = vld [vmem:[%s404 + $0xd8] sm:$0xff]
        %v471 = vld [vmem:[%s404 + $0xe0] sm:$0xf]
        %v472 = vld [vmem:[%s404 + $0xe4] sm:$0xff]
        %v473 = vld [vmem:[%s404 + $0xec] sm:$0xf]
        %v474 = vld [vmem:[%s404 + $0xf0] sm:$0xff]
        %v475 = vld [vmem:[%s404 + $0xf8] sm:$0xf]
        %v476 = vld [vmem:[%s404 + $0xfc] sm:$0xff]
        %v477 = vld [vmem:[%s404 + $0x104] sm:$0xf]
        %v478 = vld [vmem:[%s404 + $0x108] sm:$0xff]
        %v479 = vld [vmem:[%s404 + $0x110] sm:$0xf]
        %v480 = vld [vmem:[%s404 + $0x114] sm:$0xff]
        %v481 = vld [vmem:[%s404 + $0x11c] sm:$0xf]
        %v482 = vld [vmem:[%s404 + $0x120] sm:$0xff]
        %v483 = vld [vmem:[%s404 + $0x128] sm:$0xf]
        %v484 = vld [vmem:[%s404 + $0x12c] sm:$0xff]
        %v485 = vld [vmem:[%s404 + $0x134] sm:$0xf]
        %v486 = vld [vmem:[%s404 + $0x138] sm:$0xff]
        %v487 = vld [vmem:[%s404 + $0x140] sm:$0xf]
        %v488 = vld [vmem:[%s404 + $0x144] sm:$0xff]
        %v489 = vld [vmem:[%s404 + $0x14c] sm:$0xf]
        %v490 = vld [vmem:[%s404 + $0x150] sm:$0xff]
        %v491 = vld [vmem:[%s404 + $0x158] sm:$0xf]
        %v492 = vld [vmem:[%s404 + $0x15c] sm:$0xff]
        %v493 = vld [vmem:[%s404 + $0x164] sm:$0xf]
        %v494 = vld [vmem:[%s404 + $0x168] sm:$0xff]
        %v495 = vld [vmem:[%s404 + $0x170] sm:$0xf]
        %v496 = vld [vmem:[%s404 + $0x174] sm:$0xff]
        %v497 = vld [vmem:[%s404 + $0x17c] sm:$0xf]
        %v498 = vld [vmem:[%s1] sm:$0xff]
        %v499 = vld [vmem:[%s1 + $0x8] sm:$0xff]
        %v500 = vld [vmem:[%s1 + $0x10] sm:$0xff]
        %v501 = vld [vmem:[%s1 + $0x18] sm:$0xff]
        %v502 = vld [vmem:[%s1 + $0x20] sm:$0xff]
        %v503 = vld [vmem:[%s1 + $0x28] sm:$0xff]
        %v504 = vld [vmem:[%s1 + $0x30] sm:$0xff]
        %v505 = vld [vmem:[%s1 + $0x38] sm:$0xff]
        %v506 = vld [vmem:[%s1 + $0x40] sm:$0xff]
        %v507 = vld [vmem:[%s1 + $0x48] sm:$0xff]
        %v508 = vld [vmem:[%s1 + $0x50] sm:$0xff]
        %v509 = vld [vmem:[%s1 + $0x58] sm:$0xff]
        %v510 = vld [vmem:[%s1 + $0x60] sm:$0xff]
        %v511 = vld [vmem:[%s1 + $0x68] sm:$0xff]
        %v512 = vld [vmem:[%s1 + $0x70] sm:$0xff]
        %v513 = vld [vmem:[%s1 + $0x78] sm:$0xff]
        %v514 = vld [vmem:[%s1 + $0x80] sm:$0xff]
        %v515 = vld [vmem:[%s1 + $0x88] sm:$0xff]
        %v516 = vld [vmem:[%s1 + $0x90] sm:$0xff]
        %v517 = vld [vmem:[%s1 + $0x98] sm:$0xff]
        %v518 = vld [vmem:[%s1 + $0xa0] sm:$0xff]
        %v519 = vld [vmem:[%s1 + $0xa8] sm:$0xff]
        %v520 = vld [vmem:[%s1 + $0xb0] sm:$0xff]
        %v521 = vld [vmem:[%s1 + $0xb8] sm:$0xff]
        %v522 = vld [vmem:[%s1 + $0xc0] sm:$0xff]
        %v523 = vld [vmem:[%s1 + $0xc8] sm:$0xff]
        %v524 = vld [vmem:[%s1 + $0xd0] sm:$0xff]
        %v525 = vld [vmem:[%s1 + $0xd8] sm:$0xff]
        %v526 = vld [vmem:[%s1 + $0xe0] sm:$0xff]
        %v527 = vld [vmem:[%s1 + $0xe8] sm:$0xff]
        %v528 = vld [vmem:[%s1 + $0xf0] sm:$0xff]
        %v529 = vld [vmem:[%s1 + $0xf8] sm:$0xff]
        %v530 = vld [vmem:[%s1 + $0x100] sm:$0xff]
        %v531 = vld [vmem:[%s1 + $0x108] sm:$0xff]
        %v532 = vld [vmem:[%s1 + $0x110] sm:$0xff]
        %v533 = vld [vmem:[%s1 + $0x118] sm:$0xff]
        %v534 = vld [vmem:[%s1 + $0x120] sm:$0xff]
        %v535 = vld [vmem:[%s1 + $0x128] sm:$0xff]
        %v536 = vld [vmem:[%s1 + $0x130] sm:$0xff]
        %v537 = vld [vmem:[%s1 + $0x138] sm:$0xff]
        %v538 = vld [vmem:[%s1 + $0x140] sm:$0xff]
        %v539 = vld [vmem:[%s1 + $0x148] sm:$0xff]
        %v540 = vld [vmem:[%s1 + $0x150] sm:$0xff]
        %v541 = vld [vmem:[%s1 + $0x158] sm:$0xff]
        %v542 = vld [vmem:[%s1 + $0x160] sm:$0xff]
        %v543 = vld [vmem:[%s1 + $0x168] sm:$0xff]
        %v544 = vld [vmem:[%s1 + $0x170] sm:$0xff]
        %v545 = vld [vmem:[%s1 + $0x178] sm:$0xff]
        %v546 = vld [vmem:[%s1 + $0x180] sm:$0xff]
        %v547 = vld [vmem:[%s1 + $0x188] sm:$0xff]
        %v548 = vld [vmem:[%s1 + $0x190] sm:$0xff]
        %v549 = vld [vmem:[%s1 + $0x198] sm:$0xff]
        %v550 = vld [vmem:[%s1 + $0x1a0] sm:$0xff]
        %v551 = vld [vmem:[%s1 + $0x1a8] sm:$0xff]
        %v552 = vld [vmem:[%s1 + $0x1b0] sm:$0xff]
        %v553 = vld [vmem:[%s1 + $0x1b8] sm:$0xff]
        %v554 = vld [vmem:[%s1 + $0x1c0] sm:$0xff]
        %v555 = vld [vmem:[%s1 + $0x1c8] sm:$0xff]
        %v556 = vld [vmem:[%s1 + $0x1d0] sm:$0xff]
        %v557 = vld [vmem:[%s1 + $0x1d8] sm:$0xff]
        %v558 = vld [vmem:[%s1 + $0x1e0] sm:$0xff]
        %v559 = vld [vmem:[%s1 + $0x1e8] sm:$0xff]
        %v560 = vld [vmem:[%s1 + $0x1f0] sm:$0xff]
        %v561 = vld [vmem:[%s1 + $0x1f8] sm:$0xff]
        %v562 = vld [vmem:[%s1 + $0x200] sm:$0xff]
        %v563 = vld [vmem:[%s1 + $0x208] sm:$0xff]
        %v564 = vld [vmem:[%s1 + $0x210] sm:$0xff]
        %v565 = vld [vmem:[%s1 + $0x218] sm:$0xff]
        %v566 = vld [vmem:[%s1 + $0x220] sm:$0xff]
        %v567 = vld [vmem:[%s1 + $0x228] sm:$0xff]
        %v568 = vld [vmem:[%s1 + $0x230] sm:$0xff]
        %v569 = vld [vmem:[%s1 + $0x238] sm:$0xff]
        %v570 = vld [vmem:[%s1 + $0x240] sm:$0xff]
        %v571 = vld [vmem:[%s1 + $0x248] sm:$0xff]
        %v572 = vld [vmem:[%s1 + $0x250] sm:$0xff]
        %v573 = vld [vmem:[%s1 + $0x258] sm:$0xff]
        %v574 = vld [vmem:[%s1 + $0x260] sm:$0xff]
        %v575 = vld [vmem:[%s1 + $0x268] sm:$0xff]
        %v576 = vld [vmem:[%s1 + $0x270] sm:$0xff]
        %v577 = vld [vmem:[%s1 + $0x278] sm:$0xff]
        %v578 = vld [vmem:[%s1 + $0x280] sm:$0xff]
        %v579 = vld [vmem:[%s1 + $0x288] sm:$0xff]
        %v580 = vld [vmem:[%s1 + $0x290] sm:$0xff]
        %v581 = vld [vmem:[%s1 + $0x298] sm:$0xff]
        %v582 = vld [vmem:[%s1 + $0x2a0] sm:$0xff]
        %v583 = vld [vmem:[%s1 + $0x2a8] sm:$0xff]
        %v584 = vld [vmem:[%s1 + $0x2b0] sm:$0xff]
        %v585 = vld [vmem:[%s1 + $0x2b8] sm:$0xff]
        %v586 = vld [vmem:[%s1 + $0x2c0] sm:$0xff]
        %v587 = vld [vmem:[%s1 + $0x2c8] sm:$0xff]
        %v588 = vld [vmem:[%s1 + $0x2d0] sm:$0xff]
        %v589 = vld [vmem:[%s1 + $0x2d8] sm:$0xff]
        %v590 = vld [vmem:[%s1 + $0x2e0] sm:$0xff]
        %v591 = vld [vmem:[%s1 + $0x2e8] sm:$0xff]
        %v592 = vld [vmem:[%s1 + $0x2f0] sm:$0xff]
        %v593 = vld [vmem:[%s1 + $0x2f8] sm:$0xff]
        %v594 = vld [vmem:[%s2] sm:$0xf]
        %v596 = vlaneseq
        %v597 = vshrl.u32 %v596, 7
        %v598 = vsub.s32 0, %v597
        %v599 = vrot.slane %v594, %v598
        %v600 = vlaneseq
        %v601 = vshrl.u32 %v600, 7
        %v602 = vsub.s32 1, %v601
        %v603 = vrot.slane %v594, %v602
        %v604 = vlaneseq
        %v605 = vshrl.u32 %v604, 7
        %v606 = vsub.s32 2, %v605
        %v607 = vrot.slane %v594, %v606
        %v608 = vlaneseq
        %v609 = vshrl.u32 %v608, 7
        %v610 = vsub.s32 3, %v609
        %v611 = vrot.slane %v594, %v610
        %v680 = vunpack.c.l.b16 %v434
        %v681 = vunpack.c.h.b16 %v434
        %v682 = vunpack.c.l.b16 %v435
        %v683 = vunpack.c.l.b16 %v436
        %v684 = vunpack.c.h.b16 %v436
        %v685 = vunpack.c.l.b16 %v437
        %v686 = vunpack.c.l.b16 %v438
        %v687 = vunpack.c.h.b16 %v438
        %v688 = vunpack.c.l.b16 %v439
        %v689 = vunpack.c.l.b16 %v440
        %v690 = vunpack.c.h.b16 %v440
        %v691 = vunpack.c.l.b16 %v441
        %v692 = vunpack.c.l.b16 %v442
        %v693 = vunpack.c.h.b16 %v442
        %v694 = vunpack.c.l.b16 %v443
        %v695 = vunpack.c.l.b16 %v444
        %v696 = vunpack.c.h.b16 %v444
        %v697 = vunpack.c.l.b16 %v445
        %v698 = vunpack.c.l.b16 %v446
        %v699 = vunpack.c.h.b16 %v446
        %v700 = vunpack.c.l.b16 %v447
        %v701 = vunpack.c.l.b16 %v448
        %v702 = vunpack.c.h.b16 %v448
        %v703 = vunpack.c.l.b16 %v449
        %v704 = vunpack.c.l.b16 %v450
        %v705 = vunpack.c.h.b16 %v450
        %v706 = vunpack.c.l.b16 %v451
        %v707 = vunpack.c.l.b16 %v452
        %v708 = vunpack.c.h.b16 %v452
        %v709 = vunpack.c.l.b16 %v453
        %v710 = vunpack.c.l.b16 %v454
        %v711 = vunpack.c.h.b16 %v454
        %v712 = vunpack.c.l.b16 %v455
        %v713 = vunpack.c.l.b16 %v456
        %v714 = vunpack.c.h.b16 %v456
        %v715 = vunpack.c.l.b16 %v457
        %v716 = vunpack.c.l.b16 %v458
        %v717 = vunpack.c.h.b16 %v458
        %v718 = vunpack.c.l.b16 %v459
        %v719 = vunpack.c.l.b16 %v460
        %v720 = vunpack.c.h.b16 %v460
        %v721 = vunpack.c.l.b16 %v461
        %v722 = vunpack.c.l.b16 %v462
        %v723 = vunpack.c.h.b16 %v462
        %v724 = vunpack.c.l.b16 %v463
        %v725 = vunpack.c.l.b16 %v464
        %v726 = vunpack.c.h.b16 %v464
        %v727 = vunpack.c.l.b16 %v465
        %v728 = vunpack.c.l.b16 %v466
        %v729 = vunpack.c.h.b16 %v466
        %v730 = vunpack.c.l.b16 %v467
        %v731 = vunpack.c.l.b16 %v468
        %v732 = vunpack.c.h.b16 %v468
        %v733 = vunpack.c.l.b16 %v469
        %v734 = vunpack.c.l.b16 %v470
        %v735 = vunpack.c.h.b16 %v470
        %v736 = vunpack.c.l.b16 %v471
        %v737 = vunpack.c.l.b16 %v472
        %v738 = vunpack.c.h.b16 %v472
        %v739 = vunpack.c.l.b16 %v473
        %v740 = vunpack.c.l.b16 %v474
        %v741 = vunpack.c.h.b16 %v474
        %v742 = vunpack.c.l.b16 %v475
        %v743 = vunpack.c.l.b16 %v476
        %v744 = vunpack.c.h.b16 %v476
        %v745 = vunpack.c.l.b16 %v477
        %v746 = vunpack.c.l.b16 %v478
        %v747 = vunpack.c.h.b16 %v478
        %v748 = vunpack.c.l.b16 %v479
        %v749 = vunpack.c.l.b16 %v480
        %v750 = vunpack.c.h.b16 %v480
        %v751 = vunpack.c.l.b16 %v481
        %v752 = vunpack.c.l.b16 %v482
        %v753 = vunpack.c.h.b16 %v482
        %v754 = vunpack.c.l.b16 %v483
        %v755 = vunpack.c.l.b16 %v484
        %v756 = vunpack.c.h.b16 %v484
        %v757 = vunpack.c.l.b16 %v485
        %v758 = vunpack.c.l.b16 %v486
        %v759 = vunpack.c.h.b16 %v486
        %v760 = vunpack.c.l.b16 %v487
        %v761 = vunpack.c.l.b16 %v488
        %v762 = vunpack.c.h.b16 %v488
        %v763 = vunpack.c.l.b16 %v489
        %v764 = vunpack.c.l.b16 %v490
        %v765 = vunpack.c.h.b16 %v490
        %v766 = vunpack.c.l.b16 %v491
        %v767 = vunpack.c.l.b16 %v492
        %v768 = vunpack.c.h.b16 %v492
        %v769 = vunpack.c.l.b16 %v493
        %v770 = vunpack.c.l.b16 %v494
        %v771 = vunpack.c.h.b16 %v494
        %v772 = vunpack.c.l.b16 %v495
        %v773 = vunpack.c.l.b16 %v496
        %v774 = vunpack.c.h.b16 %v496
        %v775 = vunpack.c.l.b16 %v497
        %v776 = vpack.c.b16 %v683, %v680
        %v777 = vpack.c.b16 %v684, %v681
        %v778 = vpack.c.b16 %v685, %v682
        %v779 = vpack.c.b16 %v689, %v686
        %v780 = vpack.c.b16 %v690, %v687
        %v781 = vpack.c.b16 %v691, %v688
        %v782 = vpack.c.b16 %v695, %v692
        %v783 = vpack.c.b16 %v696, %v693
        %v784 = vpack.c.b16 %v697, %v694
        %v785 = vpack.c.b16 %v701, %v698
        %v786 = vpack.c.b16 %v702, %v699
        %v787 = vpack.c.b16 %v703, %v700
        %v788 = vpack.c.b16 %v707, %v704
        %v789 = vpack.c.b16 %v708, %v705
        %v790 = vpack.c.b16 %v709, %v706
        %v791 = vpack.c.b16 %v713, %v710
        %v792 = vpack.c.b16 %v714, %v711
        %v793 = vpack.c.b16 %v715, %v712
        %v794 = vpack.c.b16 %v719, %v716
        %v795 = vpack.c.b16 %v720, %v717
        %v796 = vpack.c.b16 %v721, %v718
        %v797 = vpack.c.b16 %v725, %v722
        %v798 = vpack.c.b16 %v726, %v723
        %v799 = vpack.c.b16 %v727, %v724
        %v800 = vpack.c.b16 %v731, %v728
        %v801 = vpack.c.b16 %v732, %v729
        %v802 = vpack.c.b16 %v733, %v730
        %v803 = vpack.c.b16 %v737, %v734
        %v804 = vpack.c.b16 %v738, %v735
        %v805 = vpack.c.b16 %v739, %v736
        %v806 = vpack.c.b16 %v743, %v740
        %v807 = vpack.c.b16 %v744, %v741
        %v808 = vpack.c.b16 %v745, %v742
        %v809 = vpack.c.b16 %v749, %v746
        %v810 = vpack.c.b16 %v750, %v747
        %v811 = vpack.c.b16 %v751, %v748
        %v812 = vpack.c.b16 %v755, %v752
        %v813 = vpack.c.b16 %v756, %v753
        %v814 = vpack.c.b16 %v757, %v754
        %v815 = vpack.c.b16 %v761, %v758
        %v816 = vpack.c.b16 %v762, %v759
        %v817 = vpack.c.b16 %v763, %v760
        %v818 = vpack.c.b16 %v767, %v764
        %v819 = vpack.c.b16 %v768, %v765
        %v820 = vpack.c.b16 %v769, %v766
        %v821 = vpack.c.b16 %v773, %v770
        %v822 = vpack.c.b16 %v774, %v771
        %v823 = vpack.c.b16 %v775, %v772
        %v968 = vunpack.c.l.b16 %v498
        %v969 = vunpack.c.h.b16 %v498
        %v970 = vunpack.c.l.b16 %v499
        %v971 = vunpack.c.h.b16 %v499
        %v972 = vunpack.c.l.b16 %v500
        %v973 = vunpack.c.h.b16 %v500
        %v974 = vunpack.c.l.b16 %v501
        %v975 = vunpack.c.h.b16 %v501
        %v976 = vunpack.c.l.b16 %v502
        %v977 = vunpack.c.h.b16 %v502
        %v978 = vunpack.c.l.b16 %v503
        %v979 = vunpack.c.h.b16 %v503
        %v980 = vunpack.c.l.b16 %v504
        %v981 = vunpack.c.h.b16 %v504
        %v982 = vunpack.c.l.b16 %v505
        %v983 = vunpack.c.h.b16 %v505
        %v984 = vunpack.c.l.b16 %v506
        %v985 = vunpack.c.h.b16 %v506
        %v986 = vunpack.c.l.b16 %v507
        %v987 = vunpack.c.h.b16 %v507
        %v988 = vunpack.c.l.b16 %v508
        %v989 = vunpack.c.h.b16 %v508
        %v990 = vunpack.c.l.b16 %v509
        %v991 = vunpack.c.h.b16 %v509
        %v992 = vunpack.c.l.b16 %v510
        %v993 = vunpack.c.h.b16 %v510
        %v994 = vunpack.c.l.b16 %v511
        %v995 = vunpack.c.h.b16 %v511
        %v996 = vunpack.c.l.b16 %v512
        %v997 = vunpack.c.h.b16 %v512
        %v998 = vunpack.c.l.b16 %v513
        %v999 = vunpack.c.h.b16 %v513
        %v1000 = vunpack.c.l.b16 %v514
        %v1001 = vunpack.c.h.b16 %v514
        %v1002 = vunpack.c.l.b16 %v515
        %v1003 = vunpack.c.h.b16 %v515
        %v1004 = vunpack.c.l.b16 %v516
        %v1005 = vunpack.c.h.b16 %v516
        %v1006 = vunpack.c.l.b16 %v517
        %v1007 = vunpack.c.h.b16 %v517
        %v1008 = vunpack.c.l.b16 %v518
        %v1009 = vunpack.c.h.b16 %v518
        %v1010 = vunpack.c.l.b16 %v519
        %v1011 = vunpack.c.h.b16 %v519
        %v1012 = vunpack.c.l.b16 %v520
        %v1013 = vunpack.c.h.b16 %v520
        %v1014 = vunpack.c.l.b16 %v521
        %v1015 = vunpack.c.h.b16 %v521
        %v1016 = vunpack.c.l.b16 %v522
        %v1017 = vunpack.c.h.b16 %v522
        %v1018 = vunpack.c.l.b16 %v523
        %v1019 = vunpack.c.h.b16 %v523
        %v1020 = vunpack.c.l.b16 %v524
        %v1021 = vunpack.c.h.b16 %v524
        %v1022 = vunpack.c.l.b16 %v525
        %v1023 = vunpack.c.h.b16 %v525
        %v1024 = vunpack.c.l.b16 %v526
        %v1025 = vunpack.c.h.b16 %v526
        %v1026 = vunpack.c.l.b16 %v527
        %v1027 = vunpack.c.h.b16 %v527
        %v1028 = vunpack.c.l.b16 %v528
        %v1029 = vunpack.c.h.b16 %v528
        %v1030 = vunpack.c.l.b16 %v529
        %v1031 = vunpack.c.h.b16 %v529
        %v1032 = vunpack.c.l.b16 %v530
        %v1033 = vunpack.c.h.b16 %v530
        %v1034 = vunpack.c.l.b16 %v531
        %v1035 = vunpack.c.h.b16 %v531
        %v1036 = vunpack.c.l.b16 %v532
        %v1037 = vunpack.c.h.b16 %v532
        %v1038 = vunpack.c.l.b16 %v533
        %v1039 = vunpack.c.h.b16 %v533
        %v1040 = vunpack.c.l.b16 %v534
        %v1041 = vunpack.c.h.b16 %v534
        %v1042 = vunpack.c.l.b16 %v535
        %v1043 = vunpack.c.h.b16 %v535
        %v1044 = vunpack.c.l.b16 %v536
        %v1045 = vunpack.c.h.b16 %v536
        %v1046 = vunpack.c.l.b16 %v537
        %v1047 = vunpack.c.h.b16 %v537
        %v1048 = vunpack.c.l.b16 %v538
        %v1049 = vunpack.c.h.b16 %v538
        %v1050 = vunpack.c.l.b16 %v539
        %v1051 = vunpack.c.h.b16 %v539
        %v1052 = vunpack.c.l.b16 %v540
        %v1053 = vunpack.c.h.b16 %v540
        %v1054 = vunpack.c.l.b16 %v541
        %v1055 = vunpack.c.h.b16 %v541
        %v1056 = vunpack.c.l.b16 %v542
        %v1057 = vunpack.c.h.b16 %v542
        %v1058 = vunpack.c.l.b16 %v543
        %v1059 = vunpack.c.h.b16 %v543
        %v1060 = vunpack.c.l.b16 %v544
        %v1061 = vunpack.c.h.b16 %v544
        %v1062 = vunpack.c.l.b16 %v545
        %v1063 = vunpack.c.h.b16 %v545
        %v1064 = vunpack.c.l.b16 %v546
        %v1065 = vunpack.c.h.b16 %v546
        %v1066 = vunpack.c.l.b16 %v547
        %v1067 = vunpack.c.h.b16 %v547
        %v1068 = vunpack.c.l.b16 %v548
        %v1069 = vunpack.c.h.b16 %v548
        %v1070 = vunpack.c.l.b16 %v549
        %v1071 = vunpack.c.h.b16 %v549
        %v1072 = vunpack.c.l.b16 %v550
        %v1073 = vunpack.c.h.b16 %v550
        %v1074 = vunpack.c.l.b16 %v551
        %v1075 = vunpack.c.h.b16 %v551
        %v1076 = vunpack.c.l.b16 %v552
        %v1077 = vunpack.c.h.b16 %v552
        %v1078 = vunpack.c.l.b16 %v553
        %v1079 = vunpack.c.h.b16 %v553
        %v1080 = vunpack.c.l.b16 %v554
        %v1081 = vunpack.c.h.b16 %v554
        %v1082 = vunpack.c.l.b16 %v555
        %v1083 = vunpack.c.h.b16 %v555
        %v1084 = vunpack.c.l.b16 %v556
        %v1085 = vunpack.c.h.b16 %v556
        %v1086 = vunpack.c.l.b16 %v557
        %v1087 = vunpack.c.h.b16 %v557
        %v1088 = vunpack.c.l.b16 %v558
        %v1089 = vunpack.c.h.b16 %v558
        %v1090 = vunpack.c.l.b16 %v559
        %v1091 = vunpack.c.h.b16 %v559
        %v1092 = vunpack.c.l.b16 %v560
        %v1093 = vunpack.c.h.b16 %v560
        %v1094 = vunpack.c.l.b16 %v561
        %v1095 = vunpack.c.h.b16 %v561
        %v1096 = vunpack.c.l.b16 %v562
        %v1097 = vunpack.c.h.b16 %v562
        %v1098 = vunpack.c.l.b16 %v563
        %v1099 = vunpack.c.h.b16 %v563
        %v1100 = vunpack.c.l.b16 %v564
        %v1101 = vunpack.c.h.b16 %v564
        %v1102 = vunpack.c.l.b16 %v565
        %v1103 = vunpack.c.h.b16 %v565
        %v1104 = vunpack.c.l.b16 %v566
        %v1105 = vunpack.c.h.b16 %v566
        %v1106 = vunpack.c.l.b16 %v567
        %v1107 = vunpack.c.h.b16 %v567
        %v1108 = vunpack.c.l.b16 %v568
        %v1109 = vunpack.c.h.b16 %v568
        %v1110 = vunpack.c.l.b16 %v569
        %v1111 = vunpack.c.h.b16 %v569
        %v1112 = vunpack.c.l.b16 %v570
        %v1113 = vunpack.c.h.b16 %v570
        %v1114 = vunpack.c.l.b16 %v571
        %v1115 = vunpack.c.h.b16 %v571
        %v1116 = vunpack.c.l.b16 %v572
        %v1117 = vunpack.c.h.b16 %v572
        %v1118 = vunpack.c.l.b16 %v573
        %v1119 = vunpack.c.h.b16 %v573
        %v1120 = vunpack.c.l.b16 %v574
        %v1121 = vunpack.c.h.b16 %v574
        %v1122 = vunpack.c.l.b16 %v575
        %v1123 = vunpack.c.h.b16 %v575
        %v1124 = vunpack.c.l.b16 %v576
        %v1125 = vunpack.c.h.b16 %v576
        %v1126 = vunpack.c.l.b16 %v577
        %v1127 = vunpack.c.h.b16 %v577
        %v1128 = vunpack.c.l.b16 %v578
        %v1129 = vunpack.c.h.b16 %v578
        %v1130 = vunpack.c.l.b16 %v579
        %v1131 = vunpack.c.h.b16 %v579
        %v1132 = vunpack.c.l.b16 %v580
        %v1133 = vunpack.c.h.b16 %v580
        %v1134 = vunpack.c.l.b16 %v581
        %v1135 = vunpack.c.h.b16 %v581
        %v1136 = vunpack.c.l.b16 %v582
        %v1137 = vunpack.c.h.b16 %v582
        %v1138 = vunpack.c.l.b16 %v583
        %v1139 = vunpack.c.h.b16 %v583
        %v1140 = vunpack.c.l.b16 %v584
        %v1141 = vunpack.c.h.b16 %v584
        %v1142 = vunpack.c.l.b16 %v585
        %v1143 = vunpack.c.h.b16 %v585
        %v1144 = vunpack.c.l.b16 %v586
        %v1145 = vunpack.c.h.b16 %v586
        %v1146 = vunpack.c.l.b16 %v587
        %v1147 = vunpack.c.h.b16 %v587
        %v1148 = vunpack.c.l.b16 %v588
        %v1149 = vunpack.c.h.b16 %v588
        %v1150 = vunpack.c.l.b16 %v589
        %v1151 = vunpack.c.h.b16 %v589
        %v1152 = vunpack.c.l.b16 %v590
        %v1153 = vunpack.c.h.b16 %v590
        %v1154 = vunpack.c.l.b16 %v591
        %v1155 = vunpack.c.h.b16 %v591
        %v1156 = vunpack.c.l.b16 %v592
        %v1157 = vunpack.c.h.b16 %v592
        %v1158 = vunpack.c.l.b16 %v593
        %v1159 = vunpack.c.h.b16 %v593
        %v1160 = vpack.c.b16 %v972, %v968
        %v1161 = vpack.c.b16 %v973, %v969
        %v1162 = vpack.c.b16 %v974, %v970
        %v1163 = vpack.c.b16 %v975, %v971
        %v1164 = vpack.c.b16 %v980, %v976
        %v1165 = vpack.c.b16 %v981, %v977
        %v1166 = vpack.c.b16 %v982, %v978
        %v1167 = vpack.c.b16 %v983, %v979
        %v1168 = vpack.c.b16 %v988, %v984
        %v1169 = vpack.c.b16 %v989, %v985
        %v1170 = vpack.c.b16 %v990, %v986
        %v1171 = vpack.c.b16 %v991, %v987
        %v1172 = vpack.c.b16 %v996, %v992
        %v1173 = vpack.c.b16 %v997, %v993
        %v1174 = vpack.c.b16 %v998, %v994
        %v1175 = vpack.c.b16 %v999, %v995
        %v1176 = vpack.c.b16 %v1004, %v1000
        %v1177 = vpack.c.b16 %v1005, %v1001
        %v1178 = vpack.c.b16 %v1006, %v1002
        %v1179 = vpack.c.b16 %v1007, %v1003
        %v1180 = vpack.c.b16 %v1012, %v1008
        %v1181 = vpack.c.b16 %v1013, %v1009
        %v1182 = vpack.c.b16 %v1014, %v1010
        %v1183 = vpack.c.b16 %v1015, %v1011
        %v1184 = vpack.c.b16 %v1020, %v1016
        %v1185 = vpack.c.b16 %v1021, %v1017
        %v1186 = vpack.c.b16 %v1022, %v1018
        %v1187 = vpack.c.b16 %v1023, %v1019
        %v1188 = vpack.c.b16 %v1028, %v1024
        %v1189 = vpack.c.b16 %v1029, %v1025
        %v1190 = vpack.c.b16 %v1030, %v1026
        %v1191 = vpack.c.b16 %v1031, %v1027
        %v1192 = vpack.c.b16 %v1036, %v1032
        %v1193 = vpack.c.b16 %v1037, %v1033
        %v1194 = vpack.c.b16 %v1038, %v1034
        %v1195 = vpack.c.b16 %v1039, %v1035
        %v1196 = vpack.c.b16 %v1044, %v1040
        %v1197 = vpack.c.b16 %v1045, %v1041
        %v1198 = vpack.c.b16 %v1046, %v1042
        %v1199 = vpack.c.b16 %v1047, %v1043
        %v1200 = vpack.c.b16 %v1052, %v1048
        %v1201 = vpack.c.b16 %v1053, %v1049
        %v1202 = vpack.c.b16 %v1054, %v1050
        %v1203 = vpack.c.b16 %v1055, %v1051
        %v1204 = vpack.c.b16 %v1060, %v1056
        %v1205 = vpack.c.b16 %v1061, %v1057
        %v1206 = vpack.c.b16 %v1062, %v1058
        %v1207 = vpack.c.b16 %v1063, %v1059
        %v1208 = vpack.c.b16 %v1068, %v1064
        %v1209 = vpack.c.b16 %v1069, %v1065
        %v1210 = vpack.c.b16 %v1070, %v1066
        %v1211 = vpack.c.b16 %v1071, %v1067
        %v1212 = vpack.c.b16 %v1076, %v1072
        %v1213 = vpack.c.b16 %v1077, %v1073
        %v1214 = vpack.c.b16 %v1078, %v1074
        %v1215 = vpack.c.b16 %v1079, %v1075
        %v1216 = vpack.c.b16 %v1084, %v1080
        %v1217 = vpack.c.b16 %v1085, %v1081
        %v1218 = vpack.c.b16 %v1086, %v1082
        %v1219 = vpack.c.b16 %v1087, %v1083
        %v1220 = vpack.c.b16 %v1092, %v1088
        %v1221 = vpack.c.b16 %v1093, %v1089
        %v1222 = vpack.c.b16 %v1094, %v1090
        %v1223 = vpack.c.b16 %v1095, %v1091
        %v1224 = vpack.c.b16 %v1100, %v1096
        %v1225 = vpack.c.b16 %v1101, %v1097
        %v1226 = vpack.c.b16 %v1102, %v1098
        %v1227 = vpack.c.b16 %v1103, %v1099
        %v1228 = vpack.c.b16 %v1108, %v1104
        %v1229 = vpack.c.b16 %v1109, %v1105
        %v1230 = vpack.c.b16 %v1110, %v1106
        %v1231 = vpack.c.b16 %v1111, %v1107
        %v1232 = vpack.c.b16 %v1116, %v1112
        %v1233 = vpack.c.b16 %v1117, %v1113
        %v1234 = vpack.c.b16 %v1118, %v1114
        %v1235 = vpack.c.b16 %v1119, %v1115
        %v1236 = vpack.c.b16 %v1124, %v1120
        %v1237 = vpack.c.b16 %v1125, %v1121
        %v1238 = vpack.c.b16 %v1126, %v1122
        %v1239 = vpack.c.b16 %v1127, %v1123
        %v1240 = vpack.c.b16 %v1132, %v1128
        %v1241 = vpack.c.b16 %v1133, %v1129
        %v1242 = vpack.c.b16 %v1134, %v1130
        %v1243 = vpack.c.b16 %v1135, %v1131
        %v1244 = vpack.c.b16 %v1140, %v1136
        %v1245 = vpack.c.b16 %v1141, %v1137
        %v1246 = vpack.c.b16 %v1142, %v1138
        %v1247 = vpack.c.b16 %v1143, %v1139
        %v1248 = vpack.c.b16 %v1148, %v1144
        %v1249 = vpack.c.b16 %v1149, %v1145
        %v1250 = vpack.c.b16 %v1150, %v1146
        %v1251 = vpack.c.b16 %v1151, %v1147
        %v1252 = vpack.c.b16 %v1156, %v1152
        %v1253 = vpack.c.b16 %v1157, %v1153
        %v1254 = vpack.c.b16 %v1158, %v1154
        %v1255 = vpack.c.b16 %v1159, %v1155
        %1352 = vmatprep.subr.bf16.mxu0 %v1189
        %1353 = vmatpush1.bf16.msra.mxu0 %v1188
        %1354 = vmatprep.subr.bf16.mxu0 %v1185
        %1355 = vmatpush1.bf16.msra.mxu0 %v1184
        %1356 = vmatprep.subr.bf16.mxu0 %v1181
        %1357 = vmatpush1.bf16.msra.mxu0 %v1180
        %1358 = vmatprep.subr.bf16.mxu0 %v1177
        %1359 = vmatpush1.bf16.msra.mxu0 %v1176
        %1360 = vmatprep.subr.bf16.mxu0 %v1173
        %1361 = vmatpush1.bf16.msra.mxu0 %v1172
        %1362 = vmatprep.subr.bf16.mxu0 %v1169
        %1363 = vmatpush1.bf16.msra.mxu0 %v1168
        %1364 = vmatprep.subr.bf16.mxu0 %v1165
        %1365 = vmatpush1.bf16.msra.mxu0 %v1164
        %1366 = vmatprep.subr.bf16.mxu0 %v1161
        %1367 = vmatpush1.bf16.msra.mxu0 %v1160
        %1368 = vmatprep.subr.bf16.mxu0 %v1221
        %1369 = vmatpush2.bf16.msra.mxu0 %v1220
        %1370 = vmatprep.subr.bf16.mxu0 %v1217
        %1371 = vmatpush2.bf16.msra.mxu0 %v1216
        %1372 = vmatprep.subr.bf16.mxu0 %v1213
        %1373 = vmatpush2.bf16.msra.mxu0 %v1212
        %1374 = vmatprep.subr.bf16.mxu0 %v1209
        %1375 = vmatpush2.bf16.msra.mxu0 %v1208
        %1376 = vmatprep.subr.bf16.mxu0 %v1205
        %1377 = vmatpush2.bf16.msra.mxu0 %v1204
        %1378 = vmatprep.subr.bf16.mxu0 %v1201
        %1379 = vmatpush2.bf16.msra.mxu0 %v1200
        %1380 = vmatprep.subr.bf16.mxu0 %v1197
        %1381 = vmatpush2.bf16.msra.mxu0 %v1196
        %1382 = vmatprep.subr.bf16.mxu0 %v1193
        %1383 = vmatpush2.bf16.msra.mxu0 %v1192
        %1384 = vmatprep.mubr.bf16.mxu0 %v777
        %1385 = vmatmul.mubr.bf16.gmra.mxu0 %v776
        %v1386 = vpop.f32.mrf.mxu0
        %v1387 = vadd.f32 %v599, %v1386
        %v1388 = vpop.f32.mrf.mxu0
        %v1389 = vadd.f32 %v603, %v1388
        %v1390 = vpop.f32.mrf.mxu0
        %v1391 = vadd.f32 %v599, %v1390
        %v1392 = vpop.f32.mrf.mxu0
        %v1393 = vadd.f32 %v603, %v1392
        %1394 = vmatprep.mubr.bf16.mxu0 %v780
        %1395 = vmatmul.mubr.bf16.gmra.mxu0 %v779
        %v1396 = vpop.f32.mrf.mxu0
        %v1397 = vadd.f32 %v599, %v1396
        %v1398 = vpop.f32.mrf.mxu0
        %v1399 = vadd.f32 %v603, %v1398
        %v1400 = vpop.f32.mrf.mxu0
        %v1401 = vadd.f32 %v599, %v1400
        %v1402 = vpop.f32.mrf.mxu0
        %v1403 = vadd.f32 %v603, %v1402
        %1404 = vmatprep.mubr.bf16.mxu0 %v783
        %1405 = vmatmul.mubr.bf16.gmra.mxu0 %v782
        %v1406 = vpop.f32.mrf.mxu0
        %v1407 = vadd.f32 %v599, %v1406
        %v1408 = vpop.f32.mrf.mxu0
        %v1409 = vadd.f32 %v603, %v1408
        %v1410 = vpop.f32.mrf.mxu0
        %v1411 = vadd.f32 %v599, %v1410
        %v1412 = vpop.f32.mrf.mxu0
        %v1413 = vadd.f32 %v603, %v1412
        %1414 = vmatprep.mubr.bf16.mxu0 %v786
        %1415 = vmatmul.mubr.bf16.gmra.mxu0 %v785
        %v1416 = vpop.f32.mrf.mxu0
        %v1417 = vadd.f32 %v599, %v1416
        %v1418 = vpop.f32.mrf.mxu0
        %v1419 = vadd.f32 %v603, %v1418
        %v1420 = vpop.f32.mrf.mxu0
        %v1421 = vadd.f32 %v599, %v1420
        %v1422 = vpop.f32.mrf.mxu0
        %v1423 = vadd.f32 %v603, %v1422
        %1424 = vmatprep.mubr.bf16.mxu0 %v789
        %1425 = vmatmul.mubr.bf16.gmra.mxu0 %v788
        %v1426 = vpop.f32.mrf.mxu0
        %v1427 = vadd.f32 %v599, %v1426
        %v1428 = vpop.f32.mrf.mxu0
        %v1429 = vadd.f32 %v603, %v1428
        %v1430 = vpop.f32.mrf.mxu0
        %v1431 = vadd.f32 %v599, %v1430
        %v1432 = vpop.f32.mrf.mxu0
        %v1433 = vadd.f32 %v603, %v1432
        %1434 = vmatprep.mubr.bf16.mxu0 %v792
        %1435 = vmatmul.mubr.bf16.gmra.mxu0 %v791
        %v1436 = vpop.f32.mrf.mxu0
        %v1437 = vadd.f32 %v599, %v1436
        %v1438 = vpop.f32.mrf.mxu0
        %v1439 = vadd.f32 %v603, %v1438
        %v1440 = vpop.f32.mrf.mxu0
        %v1441 = vadd.f32 %v599, %v1440
        %v1442 = vpop.f32.mrf.mxu0
        %v1443 = vadd.f32 %v603, %v1442
        %1444 = vmatprep.mubr.bf16.mxu0 %v795
        %1445 = vmatmul.mubr.bf16.gmra.mxu0 %v794
        %v1446 = vpop.f32.mrf.mxu0
        %v1447 = vadd.f32 %v599, %v1446
        %v1448 = vpop.f32.mrf.mxu0
        %v1449 = vadd.f32 %v603, %v1448
        %v1450 = vpop.f32.mrf.mxu0
        %v1451 = vadd.f32 %v599, %v1450
        %v1452 = vpop.f32.mrf.mxu0
        %v1453 = vadd.f32 %v603, %v1452
        %1454 = vmatprep.mubr.bf16.mxu0 %v798
        %1455 = vmatmul.mubr.bf16.gmra.mxu0 %v797
        %v1456 = vpop.f32.mrf.mxu0
        %v1457 = vadd.f32 %v599, %v1456
        %v1458 = vpop.f32.mrf.mxu0
        %v1459 = vadd.f32 %v603, %v1458
        %v1460 = vpop.f32.mrf.mxu0
        %v1461 = vadd.f32 %v599, %v1460
        %v1462 = vpop.f32.mrf.mxu0
        %v1463 = vadd.f32 %v603, %v1462
        %1464 = vmatprep.mubr.bf16.mxu0 %v801
        %1465 = vmatmul.mubr.bf16.gmra.mxu0 %v800
        %v1466 = vpop.f32.mrf.mxu0
        %v1467 = vadd.f32 %v599, %v1466
        %v1468 = vpop.f32.mrf.mxu0
        %v1469 = vadd.f32 %v603, %v1468
        %v1470 = vpop.f32.mrf.mxu0
        %v1471 = vadd.f32 %v599, %v1470
        %v1472 = vpop.f32.mrf.mxu0
        %v1473 = vadd.f32 %v603, %v1472
        %1474 = vmatprep.mubr.bf16.mxu0 %v804
        %1475 = vmatmul.mubr.bf16.gmra.mxu0 %v803
        %v1476 = vpop.f32.mrf.mxu0
        %v1477 = vadd.f32 %v599, %v1476
        %v1478 = vpop.f32.mrf.mxu0
        %v1479 = vadd.f32 %v603, %v1478
        %v1480 = vpop.f32.mrf.mxu0
        %v1481 = vadd.f32 %v599, %v1480
        %v1482 = vpop.f32.mrf.mxu0
        %v1483 = vadd.f32 %v603, %v1482
        %1484 = vmatprep.mubr.bf16.mxu0 %v807
        %1485 = vmatmul.mubr.bf16.gmra.mxu0 %v806
        %v1486 = vpop.f32.mrf.mxu0
        %v1487 = vadd.f32 %v599, %v1486
        %v1488 = vpop.f32.mrf.mxu0
        %v1489 = vadd.f32 %v603, %v1488
        %v1490 = vpop.f32.mrf.mxu0
        %v1491 = vadd.f32 %v599, %v1490
        %v1492 = vpop.f32.mrf.mxu0
        %v1493 = vadd.f32 %v603, %v1492
        %1494 = vmatprep.mubr.bf16.mxu0 %v810
        %1495 = vmatmul.mubr.bf16.gmra.mxu0 %v809
        %v1496 = vpop.f32.mrf.mxu0
        %v1497 = vadd.f32 %v599, %v1496
        %v1498 = vpop.f32.mrf.mxu0
        %v1499 = vadd.f32 %v603, %v1498
        %v1500 = vpop.f32.mrf.mxu0
        %v1501 = vadd.f32 %v599, %v1500
        %v1502 = vpop.f32.mrf.mxu0
        %v1503 = vadd.f32 %v603, %v1502
        %1504 = vmatprep.mubr.bf16.mxu0 %v813
        %1505 = vmatmul.mubr.bf16.gmra.mxu0 %v812
        %v1506 = vpop.f32.mrf.mxu0
        %v1507 = vadd.f32 %v599, %v1506
        %v1508 = vpop.f32.mrf.mxu0
        %v1509 = vadd.f32 %v603, %v1508
        %v1510 = vpop.f32.mrf.mxu0
        %v1511 = vadd.f32 %v599, %v1510
        %v1512 = vpop.f32.mrf.mxu0
        %v1513 = vadd.f32 %v603, %v1512
        %1514 = vmatprep.mubr.bf16.mxu0 %v816
        %1515 = vmatmul.mubr.bf16.gmra.mxu0 %v815
        %v1516 = vpop.f32.mrf.mxu0
        %v1517 = vadd.f32 %v599, %v1516
        %v1518 = vpop.f32.mrf.mxu0
        %v1519 = vadd.f32 %v603, %v1518
        %v1520 = vpop.f32.mrf.mxu0
        %v1521 = vadd.f32 %v599, %v1520
        %v1522 = vpop.f32.mrf.mxu0
        %v1523 = vadd.f32 %v603, %v1522
        %1524 = vmatprep.mubr.bf16.mxu0 %v819
        %1525 = vmatmul.mubr.bf16.gmra.mxu0 %v818
        %v1526 = vpop.f32.mrf.mxu0
        %v1527 = vadd.f32 %v599, %v1526
        %v1528 = vpop.f32.mrf.mxu0
        %v1529 = vadd.f32 %v603, %v1528
        %v1530 = vpop.f32.mrf.mxu0
        %v1531 = vadd.f32 %v599, %v1530
        %v1532 = vpop.f32.mrf.mxu0
        %v1533 = vadd.f32 %v603, %v1532
        %1534 = vmatprep.mubr.bf16.mxu0 %v822
        %1535 = vmatmul.mubr.bf16.gmra.mxu0 %v821
        %v1536 = vpop.f32.mrf.mxu0
        %v1537 = vadd.f32 %v599, %v1536
        %v1538 = vpop.f32.mrf.mxu0
        %v1539 = vadd.f32 %v603, %v1538
        %v1540 = vpop.f32.mrf.mxu0
        %v1541 = vadd.f32 %v599, %v1540
        %v1542 = vpop.f32.mrf.mxu0
        %v1543 = vadd.f32 %v603, %v1542
        %1544 = vdwg.mxu0
        %1545 = vmatprep.subr.bf16.mxu0 %v1253
        %1546 = vmatpush1.bf16.msra.mxu0 %v1252
        %1547 = vmatprep.subr.bf16.mxu0 %v1249
        %1548 = vmatpush1.bf16.msra.mxu0 %v1248
        %1549 = vmatprep.subr.bf16.mxu0 %v1245
        %1550 = vmatpush1.bf16.msra.mxu0 %v1244
        %1551 = vmatprep.subr.bf16.mxu0 %v1241
        %1552 = vmatpush1.bf16.msra.mxu0 %v1240
        %1553 = vmatprep.subr.bf16.mxu0 %v1237
        %1554 = vmatpush1.bf16.msra.mxu0 %v1236
        %1555 = vmatprep.subr.bf16.mxu0 %v1233
        %1556 = vmatpush1.bf16.msra.mxu0 %v1232
        %1557 = vmatprep.subr.bf16.mxu0 %v1229
        %1558 = vmatpush1.bf16.msra.mxu0 %v1228
        %1559 = vmatprep.subr.bf16.mxu0 %v1225
        %1560 = vmatpush1.bf16.msra.mxu0 %v1224
        %1561 = vmatprep.subr.bf16.mxu0 0
        %1562 = vmatpush2.bf16.msra.mxu0 0
        %1563 = vmatprep.subr.bf16.mxu0 0
        %1564 = vmatpush2.bf16.msra.mxu0 0
        %1565 = vmatprep.subr.bf16.mxu0 0
        %1566 = vmatpush2.bf16.msra.mxu0 0
        %1567 = vmatprep.subr.bf16.mxu0 0
        %1568 = vmatpush2.bf16.msra.mxu0 0
        %1569 = vmatprep.subr.bf16.mxu0 0
        %1570 = vmatpush2.bf16.msra.mxu0 0
        %1571 = vmatprep.subr.bf16.mxu0 0
        %1572 = vmatpush2.bf16.msra.mxu0 0
        %1573 = vmatprep.subr.bf16.mxu0 0
        %1574 = vmatpush2.bf16.msra.mxu0 0
        %1575 = vmatprep.subr.bf16.mxu0 0
        %1576 = vmatpush2.bf16.msra.mxu0 0
        %1577 = vmatprep.mubr.bf16.mxu0 0
        %1578 = vmatmul.mubr.bf16.gmra.mxu0 %v778
        %v1579 = vpop.f32.mrf.mxu0
        %v1580 = vadd.f32 %v1387, %v1579
        %v1581 = vpop.f32.mrf.mxu0
        %v1582 = vadd.f32 %v1389, %v1581
        %v1583 = vpop.f32.mrf.mxu0
        %v1584 = vadd.f32 %v1391, %v1583
        %v1585 = vpop.f32.mrf.mxu0
        %v1586 = vadd.f32 %v1393, %v1585
        %1587 = vmatprep.mubr.bf16.mxu0 0
        %1588 = vmatmul.mubr.bf16.gmra.mxu0 %v781
        %v1589 = vpop.f32.mrf.mxu0
        %v1590 = vadd.f32 %v1397, %v1589
        %v1591 = vpop.f32.mrf.mxu0
        %v1592 = vadd.f32 %v1399, %v1591
        %v1593 = vpop.f32.mrf.mxu0
        %v1594 = vadd.f32 %v1401, %v1593
        %v1595 = vpop.f32.mrf.mxu0
        %v1596 = vadd.f32 %v1403, %v1595
        %1597 = vmatprep.mubr.bf16.mxu0 0
        %1598 = vmatmul.mubr.bf16.gmra.mxu0 %v784
        %v1599 = vpop.f32.mrf.mxu0
        %v1600 = vadd.f32 %v1407, %v1599
        %v1601 = vpop.f32.mrf.mxu0
        %v1602 = vadd.f32 %v1409, %v1601
        %v1603 = vpop.f32.mrf.mxu0
        %v1604 = vadd.f32 %v1411, %v1603
        %v1605 = vpop.f32.mrf.mxu0
        %v1606 = vadd.f32 %v1413, %v1605
        %1607 = vmatprep.mubr.bf16.mxu0 0
        %1608 = vmatmul.mubr.bf16.gmra.mxu0 %v787
        %v1609 = vpop.f32.mrf.mxu0
        %v1610 = vadd.f32 %v1417, %v1609
        %v1611 = vpop.f32.mrf.mxu0
        %v1612 = vadd.f32 %v1419, %v1611
        %v1613 = vpop.f32.mrf.mxu0
        %v1614 = vadd.f32 %v1421, %v1613
        %v1615 = vpop.f32.mrf.mxu0
        %v1616 = vadd.f32 %v1423, %v1615
        %1617 = vmatprep.mubr.bf16.mxu0 0
        %1618 = vmatmul.mubr.bf16.gmra.mxu0 %v790
        %v1619 = vpop.f32.mrf.mxu0
        %v1620 = vadd.f32 %v1427, %v1619
        %v1621 = vpop.f32.mrf.mxu0
        %v1622 = vadd.f32 %v1429, %v1621
        %v1623 = vpop.f32.mrf.mxu0
        %v1624 = vadd.f32 %v1431, %v1623
        %v1625 = vpop.f32.mrf.mxu0
        %v1626 = vadd.f32 %v1433, %v1625
        %1627 = vmatprep.mubr.bf16.mxu0 0
        %1628 = vmatmul.mubr.bf16.gmra.mxu0 %v793
        %v1629 = vpop.f32.mrf.mxu0
        %v1630 = vadd.f32 %v1437, %v1629
        %v1631 = vpop.f32.mrf.mxu0
        %v1632 = vadd.f32 %v1439, %v1631
        %v1633 = vpop.f32.mrf.mxu0
        %v1634 = vadd.f32 %v1441, %v1633
        %v1635 = vpop.f32.mrf.mxu0
        %v1636 = vadd.f32 %v1443, %v1635
        %1637 = vmatprep.mubr.bf16.mxu0 0
        %1638 = vmatmul.mubr.bf16.gmra.mxu0 %v796
        %v1639 = vpop.f32.mrf.mxu0
        %v1640 = vadd.f32 %v1447, %v1639
        %v1641 = vpop.f32.mrf.mxu0
        %v1642 = vadd.f32 %v1449, %v1641
        %v1643 = vpop.f32.mrf.mxu0
        %v1644 = vadd.f32 %v1451, %v1643
        %v1645 = vpop.f32.mrf.mxu0
        %v1646 = vadd.f32 %v1453, %v1645
        %1647 = vmatprep.mubr.bf16.mxu0 0
        %1648 = vmatmul.mubr.bf16.gmra.mxu0 %v799
        %v1649 = vpop.f32.mrf.mxu0
        %v1650 = vadd.f32 %v1457, %v1649
        %v1651 = vpop.f32.mrf.mxu0
        %v1652 = vadd.f32 %v1459, %v1651
        %v1653 = vpop.f32.mrf.mxu0
        %v1654 = vadd.f32 %v1461, %v1653
        %v1655 = vpop.f32.mrf.mxu0
        %v1656 = vadd.f32 %v1463, %v1655
        %1657 = vmatprep.mubr.bf16.mxu0 0
        %1658 = vmatmul.mubr.bf16.gmra.mxu0 %v802
        %v1659 = vpop.f32.mrf.mxu0
        %v1660 = vadd.f32 %v1467, %v1659
        %v1661 = vpop.f32.mrf.mxu0
        %v1662 = vadd.f32 %v1469, %v1661
        %v1663 = vpop.f32.mrf.mxu0
        %v1664 = vadd.f32 %v1471, %v1663
        %v1665 = vpop.f32.mrf.mxu0
        %v1666 = vadd.f32 %v1473, %v1665
        %1667 = vmatprep.mubr.bf16.mxu0 0
        %1668 = vmatmul.mubr.bf16.gmra.mxu0 %v805
        %v1669 = vpop.f32.mrf.mxu0
        %v1670 = vadd.f32 %v1477, %v1669
        %v1671 = vpop.f32.mrf.mxu0
        %v1672 = vadd.f32 %v1479, %v1671
        %v1673 = vpop.f32.mrf.mxu0
        %v1674 = vadd.f32 %v1481, %v1673
        %v1675 = vpop.f32.mrf.mxu0
        %v1676 = vadd.f32 %v1483, %v1675
        %1677 = vmatprep.mubr.bf16.mxu0 0
        %1678 = vmatmul.mubr.bf16.gmra.mxu0 %v808
        %v1679 = vpop.f32.mrf.mxu0
        %v1680 = vadd.f32 %v1487, %v1679
        %v1681 = vpop.f32.mrf.mxu0
        %v1682 = vadd.f32 %v1489, %v1681
        %v1683 = vpop.f32.mrf.mxu0
        %v1684 = vadd.f32 %v1491, %v1683
        %v1685 = vpop.f32.mrf.mxu0
        %v1686 = vadd.f32 %v1493, %v1685
        %1687 = vmatprep.mubr.bf16.mxu0 0
        %1688 = vmatmul.mubr.bf16.gmra.mxu0 %v811
        %v1689 = vpop.f32.mrf.mxu0
        %v1690 = vadd.f32 %v1497, %v1689
        %v1691 = vpop.f32.mrf.mxu0
        %v1692 = vadd.f32 %v1499, %v1691
        %v1693 = vpop.f32.mrf.mxu0
        %v1694 = vadd.f32 %v1501, %v1693
        %v1695 = vpop.f32.mrf.mxu0
        %v1696 = vadd.f32 %v1503, %v1695
        %1697 = vmatprep.mubr.bf16.mxu0 0
        %1698 = vmatmul.mubr.bf16.gmra.mxu0 %v814
        %v1699 = vpop.f32.mrf.mxu0
        %v1700 = vadd.f32 %v1507, %v1699
        %v1701 = vpop.f32.mrf.mxu0
        %v1702 = vadd.f32 %v1509, %v1701
        %v1703 = vpop.f32.mrf.mxu0
        %v1704 = vadd.f32 %v1511, %v1703
        %v1705 = vpop.f32.mrf.mxu0
        %v1706 = vadd.f32 %v1513, %v1705
        %1707 = vmatprep.mubr.bf16.mxu0 0
        %1708 = vmatmul.mubr.bf16.gmra.mxu0 %v817
        %v1709 = vpop.f32.mrf.mxu0
        %v1710 = vadd.f32 %v1517, %v1709
        %v1711 = vpop.f32.mrf.mxu0
        %v1712 = vadd.f32 %v1519, %v1711
        %v1713 = vpop.f32.mrf.mxu0
        %v1714 = vadd.f32 %v1521, %v1713
        %v1715 = vpop.f32.mrf.mxu0
        %v1716 = vadd.f32 %v1523, %v1715
        %1717 = vmatprep.mubr.bf16.mxu0 0
        %1718 = vmatmul.mubr.bf16.gmra.mxu0 %v820
        %v1719 = vpop.f32.mrf.mxu0
        %v1720 = vadd.f32 %v1527, %v1719
        %v1721 = vpop.f32.mrf.mxu0
        %v1722 = vadd.f32 %v1529, %v1721
        %v1723 = vpop.f32.mrf.mxu0
        %v1724 = vadd.f32 %v1531, %v1723
        %v1725 = vpop.f32.mrf.mxu0
        %v1726 = vadd.f32 %v1533, %v1725
        %1727 = vmatprep.mubr.bf16.mxu0 0
        %1728 = vmatmul.mubr.bf16.gmra.mxu0 %v823
        %v1729 = vpop.f32.mrf.mxu0
        %v1730 = vadd.f32 %v1537, %v1729
        %v1731 = vpop.f32.mrf.mxu0
        %v1732 = vadd.f32 %v1539, %v1731
        %v1733 = vpop.f32.mrf.mxu0
        %v1734 = vadd.f32 %v1541, %v1733
        %v1735 = vpop.f32.mrf.mxu0
        %v1736 = vadd.f32 %v1543, %v1735
        %1737 = vdwg.mxu0
        %1738 = vmatprep.subr.bf16.mxu0 %v1191
        %1739 = vmatpush1.bf16.msra.mxu0 %v1190
        %1740 = vmatprep.subr.bf16.mxu0 %v1187
        %1741 = vmatpush1.bf16.msra.mxu0 %v1186
        %1742 = vmatprep.subr.bf16.mxu0 %v1183
        %1743 = vmatpush1.bf16.msra.mxu0 %v1182
        %1744 = vmatprep.subr.bf16.mxu0 %v1179
        %1745 = vmatpush1.bf16.msra.mxu0 %v1178
        %1746 = vmatprep.subr.bf16.mxu0 %v1175
        %1747 = vmatpush1.bf16.msra.mxu0 %v1174
        %1748 = vmatprep.subr.bf16.mxu0 %v1171
        %1749 = vmatpush1.bf16.msra.mxu0 %v1170
        %1750 = vmatprep.subr.bf16.mxu0 %v1167
        %1751 = vmatpush1.bf16.msra.mxu0 %v1166
        %1752 = vmatprep.subr.bf16.mxu0 %v1163
        %1753 = vmatpush1.bf16.msra.mxu0 %v1162
        %1754 = vmatprep.subr.bf16.mxu0 %v1223
        %1755 = vmatpush2.bf16.msra.mxu0 %v1222
        %1756 = vmatprep.subr.bf16.mxu0 %v1219
        %1757 = vmatpush2.bf16.msra.mxu0 %v1218
        %1758 = vmatprep.subr.bf16.mxu0 %v1215
        %1759 = vmatpush2.bf16.msra.mxu0 %v1214
        %1760 = vmatprep.subr.bf16.mxu0 %v1211
        %1761 = vmatpush2.bf16.msra.mxu0 %v1210
        %1762 = vmatprep.subr.bf16.mxu0 %v1207
        %1763 = vmatpush2.bf16.msra.mxu0 %v1206
        %1764 = vmatprep.subr.bf16.mxu0 %v1203
        %1765 = vmatpush2.bf16.msra.mxu0 %v1202
        %1766 = vmatprep.subr.bf16.mxu0 %v1199
        %1767 = vmatpush2.bf16.msra.mxu0 %v1198
        %1768 = vmatprep.subr.bf16.mxu0 %v1195
        %1769 = vmatpush2.bf16.msra.mxu0 %v1194
        %1770 = vmatprep.mubr.bf16.mxu0 %v777
        %1771 = vmatmul.mubr.bf16.gmra.mxu0 %v776
        %v1772 = vpop.f32.mrf.mxu0
        %v1773 = vadd.f32 %v607, %v1772
        %v1774 = vpop.f32.mrf.mxu0
        %v1775 = vadd.f32 %v611, %v1774
        %v1776 = vpop.f32.mrf.mxu0
        %v1777 = vadd.f32 %v607, %v1776
        %v1778 = vpop.f32.mrf.mxu0
        %v1779 = vadd.f32 %v611, %v1778
        %1780 = vmatprep.mubr.bf16.mxu0 %v780
        %1781 = vmatmul.mubr.bf16.gmra.mxu0 %v779
        %v1782 = vpop.f32.mrf.mxu0
        %v1783 = vadd.f32 %v607, %v1782
        %v1784 = vpop.f32.mrf.mxu0
        %v1785 = vadd.f32 %v611, %v1784
        %v1786 = vpop.f32.mrf.mxu0
        %v1787 = vadd.f32 %v607, %v1786
        %v1788 = vpop.f32.mrf.mxu0
        %v1789 = vadd.f32 %v611, %v1788
        %1790 = vmatprep.mubr.bf16.mxu0 %v783
        %1791 = vmatmul.mubr.bf16.gmra.mxu0 %v782
        %v1792 = vpop.f32.mrf.mxu0
        %v1793 = vadd.f32 %v607, %v1792
        %v1794 = vpop.f32.mrf.mxu0
        %v1795 = vadd.f32 %v611, %v1794
        %v1796 = vpop.f32.mrf.mxu0
        %v1797 = vadd.f32 %v607, %v1796
        %v1798 = vpop.f32.mrf.mxu0
        %v1799 = vadd.f32 %v611, %v1798
        %1800 = vmatprep.mubr.bf16.mxu0 %v786
        %1801 = vmatmul.mubr.bf16.gmra.mxu0 %v785
        %v1802 = vpop.f32.mrf.mxu0
        %v1803 = vadd.f32 %v607, %v1802
        %v1804 = vpop.f32.mrf.mxu0
        %v1805 = vadd.f32 %v611, %v1804
        %v1806 = vpop.f32.mrf.mxu0
        %v1807 = vadd.f32 %v607, %v1806
        %v1808 = vpop.f32.mrf.mxu0
        %v1809 = vadd.f32 %v611, %v1808
        %1810 = vmatprep.mubr.bf16.mxu0 %v789
        %1811 = vmatmul.mubr.bf16.gmra.mxu0 %v788
        %v1812 = vpop.f32.mrf.mxu0
        %v1813 = vadd.f32 %v607, %v1812
        %v1814 = vpop.f32.mrf.mxu0
        %v1815 = vadd.f32 %v611, %v1814
        %v1816 = vpop.f32.mrf.mxu0
        %v1817 = vadd.f32 %v607, %v1816
        %v1818 = vpop.f32.mrf.mxu0
        %v1819 = vadd.f32 %v611, %v1818
        %1820 = vmatprep.mubr.bf16.mxu0 %v792
        %1821 = vmatmul.mubr.bf16.gmra.mxu0 %v791
        %v1822 = vpop.f32.mrf.mxu0
        %v1823 = vadd.f32 %v607, %v1822
        %v1824 = vpop.f32.mrf.mxu0
        %v1825 = vadd.f32 %v611, %v1824
        %v1826 = vpop.f32.mrf.mxu0
        %v1827 = vadd.f32 %v607, %v1826
        %v1828 = vpop.f32.mrf.mxu0
        %v1829 = vadd.f32 %v611, %v1828
        %1830 = vmatprep.mubr.bf16.mxu0 %v795
        %1831 = vmatmul.mubr.bf16.gmra.mxu0 %v794
        %v1832 = vpop.f32.mrf.mxu0
        %v1833 = vadd.f32 %v607, %v1832
        %v1834 = vpop.f32.mrf.mxu0
        %v1835 = vadd.f32 %v611, %v1834
        %v1836 = vpop.f32.mrf.mxu0
        %v1837 = vadd.f32 %v607, %v1836
        %v1838 = vpop.f32.mrf.mxu0
        %v1839 = vadd.f32 %v611, %v1838
        %1840 = vmatprep.mubr.bf16.mxu0 %v798
        %1841 = vmatmul.mubr.bf16.gmra.mxu0 %v797
        %v1842 = vpop.f32.mrf.mxu0
        %v1843 = vadd.f32 %v607, %v1842
        %v1844 = vpop.f32.mrf.mxu0
        %v1845 = vadd.f32 %v611, %v1844
        %v1846 = vpop.f32.mrf.mxu0
        %v1847 = vadd.f32 %v607, %v1846
        %v1848 = vpop.f32.mrf.mxu0
        %v1849 = vadd.f32 %v611, %v1848
        %1850 = vmatprep.mubr.bf16.mxu0 %v801
        %1851 = vmatmul.mubr.bf16.gmra.mxu0 %v800
        %v1852 = vpop.f32.mrf.mxu0
        %v1853 = vadd.f32 %v607, %v1852
        %v1854 = vpop.f32.mrf.mxu0
        %v1855 = vadd.f32 %v611, %v1854
        %v1856 = vpop.f32.mrf.mxu0
        %v1857 = vadd.f32 %v607, %v1856
        %v1858 = vpop.f32.mrf.mxu0
        %v1859 = vadd.f32 %v611, %v1858
        %1860 = vmatprep.mubr.bf16.mxu0 %v804
        %1861 = vmatmul.mubr.bf16.gmra.mxu0 %v803
        %v1862 = vpop.f32.mrf.mxu0
        %v1863 = vadd.f32 %v607, %v1862
        %v1864 = vpop.f32.mrf.mxu0
        %v1865 = vadd.f32 %v611, %v1864
        %v1866 = vpop.f32.mrf.mxu0
        %v1867 = vadd.f32 %v607, %v1866
        %v1868 = vpop.f32.mrf.mxu0
        %v1869 = vadd.f32 %v611, %v1868
        %1870 = vmatprep.mubr.bf16.mxu0 %v807
        %1871 = vmatmul.mubr.bf16.gmra.mxu0 %v806
        %v1872 = vpop.f32.mrf.mxu0
        %v1873 = vadd.f32 %v607, %v1872
        %v1874 = vpop.f32.mrf.mxu0
        %v1875 = vadd.f32 %v611, %v1874
        %v1876 = vpop.f32.mrf.mxu0
        %v1877 = vadd.f32 %v607, %v1876
        %v1878 = vpop.f32.mrf.mxu0
        %v1879 = vadd.f32 %v611, %v1878
        %1880 = vmatprep.mubr.bf16.mxu0 %v810
        %1881 = vmatmul.mubr.bf16.gmra.mxu0 %v809
        %v1882 = vpop.f32.mrf.mxu0
        %v1883 = vadd.f32 %v607, %v1882
        %v1884 = vpop.f32.mrf.mxu0
        %v1885 = vadd.f32 %v611, %v1884
        %v1886 = vpop.f32.mrf.mxu0
        %v1887 = vadd.f32 %v607, %v1886
        %v1888 = vpop.f32.mrf.mxu0
        %v1889 = vadd.f32 %v611, %v1888
        %1890 = vmatprep.mubr.bf16.mxu0 %v813
        %1891 = vmatmul.mubr.bf16.gmra.mxu0 %v812
        %v1892 = vpop.f32.mrf.mxu0
        %v1893 = vadd.f32 %v607, %v1892
        %v1894 = vpop.f32.mrf.mxu0
        %v1895 = vadd.f32 %v611, %v1894
        %v1896 = vpop.f32.mrf.mxu0
        %v1897 = vadd.f32 %v607, %v1896
        %v1898 = vpop.f32.mrf.mxu0
        %v1899 = vadd.f32 %v611, %v1898
        %1900 = vmatprep.mubr.bf16.mxu0 %v816
        %1901 = vmatmul.mubr.bf16.gmra.mxu0 %v815
        %v1902 = vpop.f32.mrf.mxu0
        %v1903 = vadd.f32 %v607, %v1902
        %v1904 = vpop.f32.mrf.mxu0
        %v1905 = vadd.f32 %v611, %v1904
        %v1906 = vpop.f32.mrf.mxu0
        %v1907 = vadd.f32 %v607, %v1906
        %v1908 = vpop.f32.mrf.mxu0
        %v1909 = vadd.f32 %v611, %v1908
        %1910 = vmatprep.mubr.bf16.mxu0 %v819
        %1911 = vmatmul.mubr.bf16.gmra.mxu0 %v818
        %v1912 = vpop.f32.mrf.mxu0
        %v1913 = vadd.f32 %v607, %v1912
        %v1914 = vpop.f32.mrf.mxu0
        %v1915 = vadd.f32 %v611, %v1914
        %v1916 = vpop.f32.mrf.mxu0
        %v1917 = vadd.f32 %v607, %v1916
        %v1918 = vpop.f32.mrf.mxu0
        %v1919 = vadd.f32 %v611, %v1918
        %1920 = vmatprep.mubr.bf16.mxu0 %v822
        %1921 = vmatmul.mubr.bf16.gmra.mxu0 %v821
        %v1922 = vpop.f32.mrf.mxu0
        %v1923 = vadd.f32 %v607, %v1922
        %v1924 = vpop.f32.mrf.mxu0
        %v1925 = vadd.f32 %v611, %v1924
        %v1926 = vpop.f32.mrf.mxu0
        %v1927 = vadd.f32 %v607, %v1926
        %v1928 = vpop.f32.mrf.mxu0
        %v1929 = vadd.f32 %v611, %v1928
        %1930 = vdwg.mxu0
        %1931 = vmatprep.subr.bf16.mxu0 %v1255
        %1932 = vmatpush1.bf16.msra.mxu0 %v1254
        %1933 = vmatprep.subr.bf16.mxu0 %v1251
        %1934 = vmatpush1.bf16.msra.mxu0 %v1250
        %1935 = vmatprep.subr.bf16.mxu0 %v1247
        %1936 = vmatpush1.bf16.msra.mxu0 %v1246
        %1937 = vmatprep.subr.bf16.mxu0 %v1243
        %1938 = vmatpush1.bf16.msra.mxu0 %v1242
        %1939 = vmatprep.subr.bf16.mxu0 %v1239
        %1940 = vmatpush1.bf16.msra.mxu0 %v1238
        %1941 = vmatprep.subr.bf16.mxu0 %v1235
        %1942 = vmatpush1.bf16.msra.mxu0 %v1234
        %1943 = vmatprep.subr.bf16.mxu0 %v1231
        %1944 = vmatpush1.bf16.msra.mxu0 %v1230
        %1945 = vmatprep.subr.bf16.mxu0 %v1227
        %1946 = vmatpush1.bf16.msra.mxu0 %v1226
        %1947 = vmatprep.subr.bf16.mxu0 0
        %1948 = vmatpush2.bf16.msra.mxu0 0
        %1949 = vmatprep.subr.bf16.mxu0 0
        %1950 = vmatpush2.bf16.msra.mxu0 0
        %1951 = vmatprep.subr.bf16.mxu0 0
        %1952 = vmatpush2.bf16.msra.mxu0 0
        %1953 = vmatprep.subr.bf16.mxu0 0
        %1954 = vmatpush2.bf16.msra.mxu0 0
        %1955 = vmatprep.subr.bf16.mxu0 0
        %1956 = vmatpush2.bf16.msra.mxu0 0
        %1957 = vmatprep.subr.bf16.mxu0 0
        %1958 = vmatpush2.bf16.msra.mxu0 0
        %1959 = vmatprep.subr.bf16.mxu0 0
        %1960 = vmatpush2.bf16.msra.mxu0 0
        %1961 = vmatprep.subr.bf16.mxu0 0
        %1962 = vmatpush2.bf16.msra.mxu0 0
        %1963 = vmatprep.mubr.bf16.mxu0 0
        %1964 = vmatmul.mubr.bf16.gmra.mxu0 %v778
        %v1965 = vpop.f32.mrf.mxu0
        %v1966 = vadd.f32 %v1773, %v1965
        %v1967 = vpop.f32.mrf.mxu0
        %v1968 = vadd.f32 %v1775, %v1967
        %v1969 = vpop.f32.mrf.mxu0
        %v1970 = vadd.f32 %v1777, %v1969
        %v1971 = vpop.f32.mrf.mxu0
        %v1972 = vadd.f32 %v1779, %v1971
        %1973 = vmatprep.mubr.bf16.mxu0 0
        %1974 = vmatmul.mubr.bf16.gmra.mxu0 %v781
        %v1975 = vpop.f32.mrf.mxu0
        %v1976 = vadd.f32 %v1783, %v1975
        %v1977 = vpop.f32.mrf.mxu0
        %v1978 = vadd.f32 %v1785, %v1977
        %v1979 = vpop.f32.mrf.mxu0
        %v1980 = vadd.f32 %v1787, %v1979
        %v1981 = vpop.f32.mrf.mxu0
        %v1982 = vadd.f32 %v1789, %v1981
        %1983 = vmatprep.mubr.bf16.mxu0 0
        %1984 = vmatmul.mubr.bf16.gmra.mxu0 %v784
        %v1985 = vpop.f32.mrf.mxu0
        %v1986 = vadd.f32 %v1793, %v1985
        %v1987 = vpop.f32.mrf.mxu0
        %v1988 = vadd.f32 %v1795, %v1987
        %v1989 = vpop.f32.mrf.mxu0
        %v1990 = vadd.f32 %v1797, %v1989
        %v1991 = vpop.f32.mrf.mxu0
        %v1992 = vadd.f32 %v1799, %v1991
        %1993 = vmatprep.mubr.bf16.mxu0 0
        %1994 = vmatmul.mubr.bf16.gmra.mxu0 %v787
        %v1995 = vpop.f32.mrf.mxu0
        %v1996 = vadd.f32 %v1803, %v1995
        %v1997 = vpop.f32.mrf.mxu0
        %v1998 = vadd.f32 %v1805, %v1997
        %v1999 = vpop.f32.mrf.mxu0
        %v2000 = vadd.f32 %v1807, %v1999
        %v2001 = vpop.f32.mrf.mxu0
        %v2002 = vadd.f32 %v1809, %v2001
        %2003 = vmatprep.mubr.bf16.mxu0 0
        %2004 = vmatmul.mubr.bf16.gmra.mxu0 %v790
        %v2005 = vpop.f32.mrf.mxu0
        %v2006 = vadd.f32 %v1813, %v2005
        %v2007 = vpop.f32.mrf.mxu0
        %v2008 = vadd.f32 %v1815, %v2007
        %v2009 = vpop.f32.mrf.mxu0
        %v2010 = vadd.f32 %v1817, %v2009
        %v2011 = vpop.f32.mrf.mxu0
        %v2012 = vadd.f32 %v1819, %v2011
        %2013 = vmatprep.mubr.bf16.mxu0 0
        %2014 = vmatmul.mubr.bf16.gmra.mxu0 %v793
        %v2015 = vpop.f32.mrf.mxu0
        %v2016 = vadd.f32 %v1823, %v2015
        %v2017 = vpop.f32.mrf.mxu0
        %v2018 = vadd.f32 %v1825, %v2017
        %v2019 = vpop.f32.mrf.mxu0
        %v2020 = vadd.f32 %v1827, %v2019
        %v2021 = vpop.f32.mrf.mxu0
        %v2022 = vadd.f32 %v1829, %v2021
        %2023 = vmatprep.mubr.bf16.mxu0 0
        %2024 = vmatmul.mubr.bf16.gmra.mxu0 %v796
        %v2025 = vpop.f32.mrf.mxu0
        %v2026 = vadd.f32 %v1833, %v2025
        %v2027 = vpop.f32.mrf.mxu0
        %v2028 = vadd.f32 %v1835, %v2027
        %v2029 = vpop.f32.mrf.mxu0
        %v2030 = vadd.f32 %v1837, %v2029
        %v2031 = vpop.f32.mrf.mxu0
        %v2032 = vadd.f32 %v1839, %v2031
        %2033 = vmatprep.mubr.bf16.mxu0 0
        %2034 = vmatmul.mubr.bf16.gmra.mxu0 %v799
        %v2035 = vpop.f32.mrf.mxu0
        %v2036 = vadd.f32 %v1843, %v2035
        %v2037 = vpop.f32.mrf.mxu0
        %v2038 = vadd.f32 %v1845, %v2037
        %v2039 = vpop.f32.mrf.mxu0
        %v2040 = vadd.f32 %v1847, %v2039
        %v2041 = vpop.f32.mrf.mxu0
        %v2042 = vadd.f32 %v1849, %v2041
        %2043 = vmatprep.mubr.bf16.mxu0 0
        %2044 = vmatmul.mubr.bf16.gmra.mxu0 %v802
        %v2045 = vpop.f32.mrf.mxu0
        %v2046 = vadd.f32 %v1853, %v2045
        %v2047 = vpop.f32.mrf.mxu0
        %v2048 = vadd.f32 %v1855, %v2047
        %v2049 = vpop.f32.mrf.mxu0
        %v2050 = vadd.f32 %v1857, %v2049
        %v2051 = vpop.f32.mrf.mxu0
        %v2052 = vadd.f32 %v1859, %v2051
        %2053 = vmatprep.mubr.bf16.mxu0 0
        %2054 = vmatmul.mubr.bf16.gmra.mxu0 %v805
        %v2055 = vpop.f32.mrf.mxu0
        %v2056 = vadd.f32 %v1863, %v2055
        %v2057 = vpop.f32.mrf.mxu0
        %v2058 = vadd.f32 %v1865, %v2057
        %v2059 = vpop.f32.mrf.mxu0
        %v2060 = vadd.f32 %v1867, %v2059
        %v2061 = vpop.f32.mrf.mxu0
        %v2062 = vadd.f32 %v1869, %v2061
        %2063 = vmatprep.mubr.bf16.mxu0 0
        %2064 = vmatmul.mubr.bf16.gmra.mxu0 %v808
        %v2065 = vpop.f32.mrf.mxu0
        %v2066 = vadd.f32 %v1873, %v2065
        %v2067 = vpop.f32.mrf.mxu0
        %v2068 = vadd.f32 %v1875, %v2067
        %v2069 = vpop.f32.mrf.mxu0
        %v2070 = vadd.f32 %v1877, %v2069
        %v2071 = vpop.f32.mrf.mxu0
        %v2072 = vadd.f32 %v1879, %v2071
        %2073 = vmatprep.mubr.bf16.mxu0 0
        %2074 = vmatmul.mubr.bf16.gmra.mxu0 %v811
        %v2075 = vpop.f32.mrf.mxu0
        %v2076 = vadd.f32 %v1883, %v2075
        %v2077 = vpop.f32.mrf.mxu0
        %v2078 = vadd.f32 %v1885, %v2077
        %v2079 = vpop.f32.mrf.mxu0
        %v2080 = vadd.f32 %v1887, %v2079
        %v2081 = vpop.f32.mrf.mxu0
        %v2082 = vadd.f32 %v1889, %v2081
        %2083 = vmatprep.mubr.bf16.mxu0 0
        %2084 = vmatmul.mubr.bf16.gmra.mxu0 %v814
        %v2085 = vpop.f32.mrf.mxu0
        %v2086 = vadd.f32 %v1893, %v2085
        %v2087 = vpop.f32.mrf.mxu0
        %v2088 = vadd.f32 %v1895, %v2087
        %v2089 = vpop.f32.mrf.mxu0
        %v2090 = vadd.f32 %v1897, %v2089
        %v2091 = vpop.f32.mrf.mxu0
        %v2092 = vadd.f32 %v1899, %v2091
        %2093 = vmatprep.mubr.bf16.mxu0 0
        %2094 = vmatmul.mubr.bf16.gmra.mxu0 %v817
        %v2095 = vpop.f32.mrf.mxu0
        %v2096 = vadd.f32 %v1903, %v2095
        %v2097 = vpop.f32.mrf.mxu0
        %v2098 = vadd.f32 %v1905, %v2097
        %v2099 = vpop.f32.mrf.mxu0
        %v2100 = vadd.f32 %v1907, %v2099
        %v2101 = vpop.f32.mrf.mxu0
        %v2102 = vadd.f32 %v1909, %v2101
        %2103 = vmatprep.mubr.bf16.mxu0 0
        %2104 = vmatmul.mubr.bf16.gmra.mxu0 %v820
        %v2105 = vpop.f32.mrf.mxu0
        %v2106 = vadd.f32 %v1913, %v2105
        %v2107 = vpop.f32.mrf.mxu0
        %v2108 = vadd.f32 %v1915, %v2107
        %v2109 = vpop.f32.mrf.mxu0
        %v2110 = vadd.f32 %v1917, %v2109
        %v2111 = vpop.f32.mrf.mxu0
        %v2112 = vadd.f32 %v1919, %v2111
        %2113 = vmatprep.mubr.bf16.mxu0 0
        %2114 = vmatmul.mubr.bf16.gmra.mxu0 %v823
        %v2115 = vpop.f32.mrf.mxu0
        %v2116 = vadd.f32 %v1923, %v2115
        %v2117 = vpop.f32.mrf.mxu0
        %v2118 = vadd.f32 %v1925, %v2117
        %v2119 = vpop.f32.mrf.mxu0
        %v2120 = vadd.f32 %v1927, %v2119
        %v2121 = vpop.f32.mrf.mxu0
        %v2122 = vadd.f32 %v1929, %v2121
        %2123 = vdwg.mxu0
        %v2124 = vmax.f32 %v1580, 0.0
        %v2125 = vmax.f32 %v1582, 0.0
        %v2126 = vmax.f32 %v1966, 0.0
        %v2127 = vmax.f32 %v1968, 0.0
        %v2128 = vmax.f32 %v1584, 0.0
        %v2129 = vmax.f32 %v1586, 0.0
        %v2130 = vmax.f32 %v1970, 0.0
        %v2131 = vmax.f32 %v1972, 0.0
        %v2132 = vmax.f32 %v1590, 0.0
        %v2133 = vmax.f32 %v1592, 0.0
        %v2134 = vmax.f32 %v1976, 0.0
        %v2135 = vmax.f32 %v1978, 0.0
        %v2136 = vmax.f32 %v1594, 0.0
        %v2137 = vmax.f32 %v1596, 0.0
        %v2138 = vmax.f32 %v1980, 0.0
        %v2139 = vmax.f32 %v1982, 0.0
        %v2140 = vmax.f32 %v1600, 0.0
        %v2141 = vmax.f32 %v1602, 0.0
        %v2142 = vmax.f32 %v1986, 0.0
        %v2143 = vmax.f32 %v1988, 0.0
        %v2144 = vmax.f32 %v1604, 0.0
        %v2145 = vmax.f32 %v1606, 0.0
        %v2146 = vmax.f32 %v1990, 0.0
        %v2147 = vmax.f32 %v1992, 0.0
        %v2148 = vmax.f32 %v1610, 0.0
        %v2149 = vmax.f32 %v1612, 0.0
        %v2150 = vmax.f32 %v1996, 0.0
        %v2151 = vmax.f32 %v1998, 0.0
        %v2152 = vmax.f32 %v1614, 0.0
        %v2153 = vmax.f32 %v1616, 0.0
        %v2154 = vmax.f32 %v2000, 0.0
        %v2155 = vmax.f32 %v2002, 0.0
        %v2156 = vmax.f32 %v1620, 0.0
        %v2157 = vmax.f32 %v1622, 0.0
        %v2158 = vmax.f32 %v2006, 0.0
        %v2159 = vmax.f32 %v2008, 0.0
        %v2160 = vmax.f32 %v1624, 0.0
        %v2161 = vmax.f32 %v1626, 0.0
        %v2162 = vmax.f32 %v2010, 0.0
        %v2163 = vmax.f32 %v2012, 0.0
        %v2164 = vmax.f32 %v1630, 0.0
        %v2165 = vmax.f32 %v1632, 0.0
        %v2166 = vmax.f32 %v2016, 0.0
        %v2167 = vmax.f32 %v2018, 0.0
        %v2168 = vmax.f32 %v1634, 0.0
        %v2169 = vmax.f32 %v1636, 0.0
        %v2170 = vmax.f32 %v2020, 0.0
        %v2171 = vmax.f32 %v2022, 0.0
        %v2172 = vmax.f32 %v1640, 0.0
        %v2173 = vmax.f32 %v1642, 0.0
        %v2174 = vmax.f32 %v2026, 0.0
        %v2175 = vmax.f32 %v2028, 0.0
        %v2176 = vmax.f32 %v1644, 0.0
        %v2177 = vmax.f32 %v1646, 0.0
        %v2178 = vmax.f32 %v2030, 0.0
        %v2179 = vmax.f32 %v2032, 0.0
        %v2180 = vmax.f32 %v1650, 0.0
        %v2181 = vmax.f32 %v1652, 0.0
        %v2182 = vmax.f32 %v2036, 0.0
        %v2183 = vmax.f32 %v2038, 0.0
        %v2184 = vmax.f32 %v1654, 0.0
        %v2185 = vmax.f32 %v1656, 0.0
        %v2186 = vmax.f32 %v2040, 0.0
        %v2187 = vmax.f32 %v2042, 0.0
        %v2188 = vmax.f32 %v1660, 0.0
        %v2189 = vmax.f32 %v1662, 0.0
        %v2190 = vmax.f32 %v2046, 0.0
        %v2191 = vmax.f32 %v2048, 0.0
        %v2192 = vmax.f32 %v1664, 0.0
        %v2193 = vmax.f32 %v1666, 0.0
        %v2194 = vmax.f32 %v2050, 0.0
        %v2195 = vmax.f32 %v2052, 0.0
        %v2196 = vmax.f32 %v1670, 0.0
        %v2197 = vmax.f32 %v1672, 0.0
        %v2198 = vmax.f32 %v2056, 0.0
        %v2199 = vmax.f32 %v2058, 0.0
        %v2200 = vmax.f32 %v1674, 0.0
        %v2201 = vmax.f32 %v1676, 0.0
        %v2202 = vmax.f32 %v2060, 0.0
        %v2203 = vmax.f32 %v2062, 0.0
        %v2204 = vmax.f32 %v1680, 0.0
        %v2205 = vmax.f32 %v1682, 0.0
        %v2206 = vmax.f32 %v2066, 0.0
        %v2207 = vmax.f32 %v2068, 0.0
        %v2208 = vmax.f32 %v1684, 0.0
        %v2209 = vmax.f32 %v1686, 0.0
        %v2210 = vmax.f32 %v2070, 0.0
        %v2211 = vmax.f32 %v2072, 0.0
        %v2212 = vmax.f32 %v1690, 0.0
        %v2213 = vmax.f32 %v1692, 0.0
        %v2214 = vmax.f32 %v2076, 0.0
        %v2215 = vmax.f32 %v2078, 0.0
        %v2216 = vmax.f32 %v1694, 0.0
        %v2217 = vmax.f32 %v1696, 0.0
        %v2218 = vmax.f32 %v2080, 0.0
        %v2219 = vmax.f32 %v2082, 0.0
        %v2220 = vmax.f32 %v1700, 0.0
        %v2221 = vmax.f32 %v1702, 0.0
        %v2222 = vmax.f32 %v2086, 0.0
        %v2223 = vmax.f32 %v2088, 0.0
        %v2224 = vmax.f32 %v1704, 0.0
        %v2225 = vmax.f32 %v1706, 0.0
        %v2226 = vmax.f32 %v2090, 0.0
        %v2227 = vmax.f32 %v2092, 0.0
        %v2228 = vmax.f32 %v1710, 0.0
        %v2229 = vmax.f32 %v1712, 0.0
        %v2230 = vmax.f32 %v2096, 0.0
        %v2231 = vmax.f32 %v2098, 0.0
        %v2232 = vmax.f32 %v1714, 0.0
        %v2233 = vmax.f32 %v1716, 0.0
        %v2234 = vmax.f32 %v2100, 0.0
        %v2235 = vmax.f32 %v2102, 0.0
        %v2236 = vmax.f32 %v1720, 0.0
        %v2237 = vmax.f32 %v1722, 0.0
        %v2238 = vmax.f32 %v2106, 0.0
        %v2239 = vmax.f32 %v2108, 0.0
        %v2240 = vmax.f32 %v1724, 0.0
        %v2241 = vmax.f32 %v1726, 0.0
        %v2242 = vmax.f32 %v2110, 0.0
        %v2243 = vmax.f32 %v2112, 0.0
        %v2244 = vmax.f32 %v1730, 0.0
        %v2245 = vmax.f32 %v1732, 0.0
        %v2246 = vmax.f32 %v2116, 0.0
        %v2247 = vmax.f32 %v2118, 0.0
        %v2248 = vmax.f32 %v1734, 0.0
        %v2249 = vmax.f32 %v1736, 0.0
        %v2250 = vmax.f32 %v2120, 0.0
        %v2251 = vmax.f32 %v2122, 0.0
        %v2252 = vpack.c.bf16 %v2128, %v2124
        %v2253 = vpack.c.bf16 %v2129, %v2125
        %v2254 = vpack.c.bf16 %v2130, %v2126
        %v2255 = vpack.c.bf16 %v2131, %v2127
        %v2256 = vpack.c.bf16 %v2136, %v2132
        %v2257 = vpack.c.bf16 %v2137, %v2133
        %v2258 = vpack.c.bf16 %v2138, %v2134
        %v2259 = vpack.c.bf16 %v2139, %v2135
        %v2260 = vpack.c.bf16 %v2144, %v2140
        %v2261 = vpack.c.bf16 %v2145, %v2141
        %v2262 = vpack.c.bf16 %v2146, %v2142
        %v2263 = vpack.c.bf16 %v2147, %v2143
        %v2264 = vpack.c.bf16 %v2152, %v2148
        %v2265 = vpack.c.bf16 %v2153, %v2149
        %v2266 = vpack.c.bf16 %v2154, %v2150
        %v2267 = vpack.c.bf16 %v2155, %v2151
        %v2268 = vpack.c.bf16 %v2160, %v2156
        %v2269 = vpack.c.bf16 %v2161, %v2157
        %v2270 = vpack.c.bf16 %v2162, %v2158
        %v2271 = vpack.c.bf16 %v2163, %v2159
        %v2272 = vpack.c.bf16 %v2168, %v2164
        %v2273 = vpack.c.bf16 %v2169, %v2165
        %v2274 = vpack.c.bf16 %v2170, %v2166
        %v2275 = vpack.c.bf16 %v2171, %v2167
        %v2276 = vpack.c.bf16 %v2176, %v2172
        %v2277 = vpack.c.bf16 %v2177, %v2173
        %v2278 = vpack.c.bf16 %v2178, %v2174
        %v2279 = vpack.c.bf16 %v2179, %v2175
        %v2280 = vpack.c.bf16 %v2184, %v2180
        %v2281 = vpack.c.bf16 %v2185, %v2181
        %v2282 = vpack.c.bf16 %v2186, %v2182
        %v2283 = vpack.c.bf16 %v2187, %v2183
        %v2284 = vpack.c.bf16 %v2192, %v2188
        %v2285 = vpack.c.bf16 %v2193, %v2189
        %v2286 = vpack.c.bf16 %v2194, %v2190
        %v2287 = vpack.c.bf16 %v2195, %v2191
        %v2288 = vpack.c.bf16 %v2200, %v2196
        %v2289 = vpack.c.bf16 %v2201, %v2197
        %v2290 = vpack.c.bf16 %v2202, %v2198
        %v2291 = vpack.c.bf16 %v2203, %v2199
        %v2292 = vpack.c.bf16 %v2208, %v2204
        %v2293 = vpack.c.bf16 %v2209, %v2205
        %v2294 = vpack.c.bf16 %v2210, %v2206
        %v2295 = vpack.c.bf16 %v2211, %v2207
        %v2296 = vpack.c.bf16 %v2216, %v2212
        %v2297 = vpack.c.bf16 %v2217, %v2213
        %v2298 = vpack.c.bf16 %v2218, %v2214
        %v2299 = vpack.c.bf16 %v2219, %v2215
        %v2300 = vpack.c.bf16 %v2224, %v2220
        %v2301 = vpack.c.bf16 %v2225, %v2221
        %v2302 = vpack.c.bf16 %v2226, %v2222
        %v2303 = vpack.c.bf16 %v2227, %v2223
        %v2304 = vpack.c.bf16 %v2232, %v2228
        %v2305 = vpack.c.bf16 %v2233, %v2229
        %v2306 = vpack.c.bf16 %v2234, %v2230
        %v2307 = vpack.c.bf16 %v2235, %v2231
        %v2308 = vpack.c.bf16 %v2240, %v2236
        %v2309 = vpack.c.bf16 %v2241, %v2237
        %v2310 = vpack.c.bf16 %v2242, %v2238
        %v2311 = vpack.c.bf16 %v2243, %v2239
        %v2312 = vpack.c.bf16 %v2248, %v2244
        %v2313 = vpack.c.bf16 %v2249, %v2245
        %v2314 = vpack.c.bf16 %v2250, %v2246
        %v2315 = vpack.c.bf16 %v2251, %v2247
        %vm2348 = vcmask 1043456
        %v2349 = vrot.slane %v2284, 4
        %v2350 = vrot.slane %v2285, 4
        %v2351 = vrot.slane %v2286, 4
        %v2352 = vrot.slane %v2287, 4
        %v2353 = vrot.slane %v2288, 4
        %v2354 = vsel %vm2348, %v2349, %v2353
        %v2355 = vrot.slane %v2289, 4
        %v2356 = vsel %vm2348, %v2350, %v2355
        %v2357 = vrot.slane %v2290, 4
        %v2358 = vsel %vm2348, %v2351, %v2357
        %v2359 = vrot.slane %v2291, 4
        %v2360 = vsel %vm2348, %v2352, %v2359
        %v2361 = vrot.slane %v2292, 4
        %v2362 = vsel %vm2348, %v2353, %v2361
        %v2363 = vrot.slane %v2293, 4
        %v2364 = vsel %vm2348, %v2355, %v2363
        %v2365 = vrot.slane %v2294, 4
        %v2366 = vsel %vm2348, %v2357, %v2365
        %v2367 = vrot.slane %v2295, 4
        %v2368 = vsel %vm2348, %v2359, %v2367
        %v2369 = vrot.slane %v2296, 4
        %v2370 = vsel %vm2348, %v2361, %v2369
        %v2371 = vrot.slane %v2297, 4
        %v2372 = vsel %vm2348, %v2363, %v2371
        %v2373 = vrot.slane %v2298, 4
        %v2374 = vsel %vm2348, %v2365, %v2373
        %v2375 = vrot.slane %v2299, 4
        %v2376 = vsel %vm2348, %v2367, %v2375
        %v2377 = vrot.slane %v2300, 4
        %v2378 = vsel %vm2348, %v2369, %v2377
        %v2379 = vrot.slane %v2301, 4
        %v2380 = vsel %vm2348, %v2371, %v2379
        %v2381 = vrot.slane %v2302, 4
        %v2382 = vsel %vm2348, %v2373, %v2381
        %v2383 = vrot.slane %v2303, 4
        %v2384 = vsel %vm2348, %v2375, %v2383
        %v2385 = vrot.slane %v2304, 4
        %v2386 = vsel %vm2348, %v2377, %v2385
        %v2387 = vrot.slane %v2305, 4
        %v2388 = vsel %vm2348, %v2379, %v2387
        %v2389 = vrot.slane %v2306, 4
        %v2390 = vsel %vm2348, %v2381, %v2389
        %v2391 = vrot.slane %v2307, 4
        %v2392 = vsel %vm2348, %v2383, %v2391
        %v2393 = vrot.slane %v2308, 4
        %v2394 = vsel %vm2348, %v2385, %v2393
        %v2395 = vrot.slane %v2309, 4
        %v2396 = vsel %vm2348, %v2387, %v2395
        %v2397 = vrot.slane %v2310, 4
        %v2398 = vsel %vm2348, %v2389, %v2397
        %v2399 = vrot.slane %v2311, 4
        %v2400 = vsel %vm2348, %v2391, %v2399
        %v2401 = vrot.slane %v2312, 4
        %v2402 = vsel %vm2348, %v2393, %v2401
        %v2403 = vrot.slane %v2313, 4
        %v2404 = vsel %vm2348, %v2395, %v2403
        %v2405 = vrot.slane %v2314, 4
        %v2406 = vsel %vm2348, %v2397, %v2405
        %v2407 = vrot.slane %v2315, 4
        %v2408 = vsel %vm2348, %v2399, %v2407
        %vm2437 = vcmask 1043456
        %v2440 = vsel %vm2437, 0, %v2349
        %v2443 = vsel %vm2437, 0, %v2350
        %v2446 = vsel %vm2437, 0, %v2351
        %v2449 = vsel %vm2437, 0, %v2352
        %s2451 = scalar_lea.vmem %s3, 1024
        %v2452 = vld [vmem:[%s2451] sm:$0xff]
        %v2453 = vld [vmem:[%s2451 + $0x8] sm:$0xff]
        %v2454 = vld [vmem:[%s2451 + $0x10] sm:$0xff]
        %v2455 = vld [vmem:[%s2451 + $0x18] sm:$0xff]
        %v2456 = vld [vmem:[%s2451 + $0x20] sm:$0xff]
        %v2457 = vld [vmem:[%s2451 + $0x28] sm:$0xff]
        %v2458 = vld [vmem:[%s2451 + $0x30] sm:$0xff]
        %v2459 = vld [vmem:[%s2451 + $0x38] sm:$0xff]
        %v2460 = vld [vmem:[%s2451 + $0x40] sm:$0xff]
        %v2461 = vld [vmem:[%s2451 + $0x48] sm:$0xff]
        %v2462 = vld [vmem:[%s2451 + $0x50] sm:$0xff]
        %v2463 = vld [vmem:[%s2451 + $0x58] sm:$0xff]
        %v2464 = vld [vmem:[%s2451 + $0x60] sm:$0xff]
        %v2465 = vld [vmem:[%s2451 + $0x68] sm:$0xff]
        %v2466 = vld [vmem:[%s2451 + $0x70] sm:$0xff]
        %v2467 = vld [vmem:[%s2451 + $0x78] sm:$0xff]
        %v2468 = vld [vmem:[%s2451 + $0x80] sm:$0xff]
        %v2469 = vld [vmem:[%s2451 + $0x88] sm:$0xff]
        %v2470 = vld [vmem:[%s2451 + $0x90] sm:$0xff]
        %v2471 = vld [vmem:[%s2451 + $0x98] sm:$0xff]
        %v2472 = vld [vmem:[%s2451 + $0xa0] sm:$0xff]
        %v2473 = vld [vmem:[%s2451 + $0xa8] sm:$0xff]
        %v2474 = vld [vmem:[%s2451 + $0xb0] sm:$0xff]
        %v2475 = vld [vmem:[%s2451 + $0xb8] sm:$0xff]
        %v2476 = vld [vmem:[%s2451 + $0xc0] sm:$0xff]
        %v2477 = vld [vmem:[%s2451 + $0xc8] sm:$0xff]
        %v2478 = vld [vmem:[%s2451 + $0xd0] sm:$0xff]
        %v2479 = vld [vmem:[%s2451 + $0xd8] sm:$0xff]
        %v2480 = vld [vmem:[%s2451 + $0xe0] sm:$0xff]
        %v2481 = vld [vmem:[%s2451 + $0xe8] sm:$0xff]
        %v2482 = vld [vmem:[%s2451 + $0xf0] sm:$0xff]
        %v2483 = vld [vmem:[%s2451 + $0xf8] sm:$0xff]
        %v2484 = vld [vmem:[%s2451 + $0x100] sm:$0xff]
        %v2485 = vld [vmem:[%s2451 + $0x108] sm:$0xff]
        %v2486 = vld [vmem:[%s2451 + $0x110] sm:$0xff]
        %v2487 = vld [vmem:[%s2451 + $0x118] sm:$0xff]
        %v2488 = vld [vmem:[%s2451 + $0x120] sm:$0xff]
        %v2489 = vld [vmem:[%s2451 + $0x128] sm:$0xff]
        %v2490 = vld [vmem:[%s2451 + $0x130] sm:$0xff]
        %v2491 = vld [vmem:[%s2451 + $0x138] sm:$0xff]
        %v2492 = vld [vmem:[%s2451 + $0x140] sm:$0xff]
        %v2493 = vld [vmem:[%s2451 + $0x148] sm:$0xff]
        %v2494 = vld [vmem:[%s2451 + $0x150] sm:$0xff]
        %v2495 = vld [vmem:[%s2451 + $0x158] sm:$0xff]
        %v2496 = vld [vmem:[%s2451 + $0x160] sm:$0xff]
        %v2497 = vld [vmem:[%s2451 + $0x168] sm:$0xff]
        %v2498 = vld [vmem:[%s2451 + $0x170] sm:$0xff]
        %v2499 = vld [vmem:[%s2451 + $0x178] sm:$0xff]
        %v2500 = vld [vmem:[%s2451 + $0x180] sm:$0xff]
        %v2501 = vld [vmem:[%s2451 + $0x188] sm:$0xff]
        %v2502 = vld [vmem:[%s2451 + $0x190] sm:$0xff]
        %v2503 = vld [vmem:[%s2451 + $0x198] sm:$0xff]
        %v2504 = vld [vmem:[%s2451 + $0x1a0] sm:$0xff]
        %v2505 = vld [vmem:[%s2451 + $0x1a8] sm:$0xff]
        %v2506 = vld [vmem:[%s2451 + $0x1b0] sm:$0xff]
        %v2507 = vld [vmem:[%s2451 + $0x1b8] sm:$0xff]
        %v2508 = vld [vmem:[%s2451 + $0x1c0] sm:$0xff]
        %v2509 = vld [vmem:[%s2451 + $0x1c8] sm:$0xff]
        %v2510 = vld [vmem:[%s2451 + $0x1d0] sm:$0xff]
        %v2511 = vld [vmem:[%s2451 + $0x1d8] sm:$0xff]
        %v2512 = vld [vmem:[%s2451 + $0x1e0] sm:$0xff]
        %v2513 = vld [vmem:[%s2451 + $0x1e8] sm:$0xff]
        %v2514 = vld [vmem:[%s2451 + $0x1f0] sm:$0xff]
        %v2515 = vld [vmem:[%s2451 + $0x1f8] sm:$0xff]
        %v2516 = vld [vmem:[%s2451 + $0x200] sm:$0xff]
        %v2517 = vld [vmem:[%s2451 + $0x208] sm:$0xff]
        %v2518 = vld [vmem:[%s2451 + $0x210] sm:$0xff]
        %v2519 = vld [vmem:[%s2451 + $0x218] sm:$0xff]
        %v2520 = vld [vmem:[%s2451 + $0x220] sm:$0xff]
        %v2521 = vld [vmem:[%s2451 + $0x228] sm:$0xff]
        %v2522 = vld [vmem:[%s2451 + $0x230] sm:$0xff]
        %v2523 = vld [vmem:[%s2451 + $0x238] sm:$0xff]
        %v2524 = vld [vmem:[%s2451 + $0x240] sm:$0xff]
        %v2525 = vld [vmem:[%s2451 + $0x248] sm:$0xff]
        %v2526 = vld [vmem:[%s2451 + $0x250] sm:$0xff]
        %v2527 = vld [vmem:[%s2451 + $0x258] sm:$0xff]
        %v2528 = vld [vmem:[%s2451 + $0x260] sm:$0xff]
        %v2529 = vld [vmem:[%s2451 + $0x268] sm:$0xff]
        %v2530 = vld [vmem:[%s2451 + $0x270] sm:$0xff]
        %v2531 = vld [vmem:[%s2451 + $0x278] sm:$0xff]
        %v2532 = vld [vmem:[%s2451 + $0x280] sm:$0xff]
        %v2533 = vld [vmem:[%s2451 + $0x288] sm:$0xff]
        %v2534 = vld [vmem:[%s2451 + $0x290] sm:$0xff]
        %v2535 = vld [vmem:[%s2451 + $0x298] sm:$0xff]
        %v2536 = vld [vmem:[%s2451 + $0x2a0] sm:$0xff]
        %v2537 = vld [vmem:[%s2451 + $0x2a8] sm:$0xff]
        %v2538 = vld [vmem:[%s2451 + $0x2b0] sm:$0xff]
        %v2539 = vld [vmem:[%s2451 + $0x2b8] sm:$0xff]
        %v2540 = vld [vmem:[%s2451 + $0x2c0] sm:$0xff]
        %v2541 = vld [vmem:[%s2451 + $0x2c8] sm:$0xff]
        %v2542 = vld [vmem:[%s2451 + $0x2d0] sm:$0xff]
        %v2543 = vld [vmem:[%s2451 + $0x2d8] sm:$0xff]
        %v2544 = vld [vmem:[%s2451 + $0x2e0] sm:$0xff]
        %v2545 = vld [vmem:[%s2451 + $0x2e8] sm:$0xff]
        %v2546 = vld [vmem:[%s2451 + $0x2f0] sm:$0xff]
        %v2547 = vld [vmem:[%s2451 + $0x2f8] sm:$0xff]
        %v2548 = vld [vmem:[%s2451 + $0x300] sm:$0xff]
        %v2549 = vld [vmem:[%s2451 + $0x308] sm:$0xff]
        %v2550 = vld [vmem:[%s2451 + $0x310] sm:$0xff]
        %v2551 = vld [vmem:[%s2451 + $0x318] sm:$0xff]
        %v2552 = vld [vmem:[%s2451 + $0x320] sm:$0xff]
        %v2553 = vld [vmem:[%s2451 + $0x328] sm:$0xff]
        %v2554 = vld [vmem:[%s2451 + $0x330] sm:$0xff]
        %v2555 = vld [vmem:[%s2451 + $0x338] sm:$0xff]
        %v2556 = vld [vmem:[%s2451 + $0x340] sm:$0xff]
        %v2557 = vld [vmem:[%s2451 + $0x348] sm:$0xff]
        %v2558 = vld [vmem:[%s2451 + $0x350] sm:$0xff]
        %v2559 = vld [vmem:[%s2451 + $0x358] sm:$0xff]
        %v2560 = vld [vmem:[%s2451 + $0x360] sm:$0xff]
        %v2561 = vld [vmem:[%s2451 + $0x368] sm:$0xff]
        %v2562 = vld [vmem:[%s2451 + $0x370] sm:$0xff]
        %v2563 = vld [vmem:[%s2451 + $0x378] sm:$0xff]
        %v2564 = vld [vmem:[%s2451 + $0x380] sm:$0xff]
        %v2565 = vld [vmem:[%s2451 + $0x388] sm:$0xff]
        %v2566 = vld [vmem:[%s2451 + $0x390] sm:$0xff]
        %v2567 = vld [vmem:[%s2451 + $0x398] sm:$0xff]
        %v2568 = vld [vmem:[%s2451 + $0x3a0] sm:$0xff]
        %v2569 = vld [vmem:[%s2451 + $0x3a8] sm:$0xff]
        %v2570 = vld [vmem:[%s2451 + $0x3b0] sm:$0xff]
        %v2571 = vld [vmem:[%s2451 + $0x3b8] sm:$0xff]
        %v2572 = vld [vmem:[%s2451 + $0x3c0] sm:$0xff]
        %v2573 = vld [vmem:[%s2451 + $0x3c8] sm:$0xff]
        %v2574 = vld [vmem:[%s2451 + $0x3d0] sm:$0xff]
        %v2575 = vld [vmem:[%s2451 + $0x3d8] sm:$0xff]
        %v2576 = vld [vmem:[%s2451 + $0x3e0] sm:$0xff]
        %v2577 = vld [vmem:[%s2451 + $0x3e8] sm:$0xff]
        %v2578 = vld [vmem:[%s2451 + $0x3f0] sm:$0xff]
        %v2579 = vld [vmem:[%s2451 + $0x3f8] sm:$0xff]
        %s2580 = scalar_lea.vmem %s3, 2048
        %v2581 = vld [vmem:[%s2580] sm:$0xff]
        %v2582 = vld [vmem:[%s2580 + $0x8] sm:$0xff]
        %v2583 = vld [vmem:[%s2580 + $0x10] sm:$0xff]
        %v2584 = vld [vmem:[%s2580 + $0x18] sm:$0xff]
        %v2585 = vld [vmem:[%s2580 + $0x20] sm:$0xff]
        %v2586 = vld [vmem:[%s2580 + $0x28] sm:$0xff]
        %v2587 = vld [vmem:[%s2580 + $0x30] sm:$0xff]
        %v2588 = vld [vmem:[%s2580 + $0x38] sm:$0xff]
        %v2589 = vld [vmem:[%s2580 + $0x40] sm:$0xff]
        %v2590 = vld [vmem:[%s2580 + $0x48] sm:$0xff]
        %v2591 = vld [vmem:[%s2580 + $0x50] sm:$0xff]
        %v2592 = vld [vmem:[%s2580 + $0x58] sm:$0xff]
        %v2593 = vld [vmem:[%s2580 + $0x60] sm:$0xff]
        %v2594 = vld [vmem:[%s2580 + $0x68] sm:$0xff]
        %v2595 = vld [vmem:[%s2580 + $0x70] sm:$0xff]
        %v2596 = vld [vmem:[%s2580 + $0x78] sm:$0xff]
        %v2597 = vld [vmem:[%s2580 + $0x80] sm:$0xff]
        %v2598 = vld [vmem:[%s2580 + $0x88] sm:$0xff]
        %v2599 = vld [vmem:[%s2580 + $0x90] sm:$0xff]
        %v2600 = vld [vmem:[%s2580 + $0x98] sm:$0xff]
        %v2601 = vld [vmem:[%s2580 + $0xa0] sm:$0xff]
        %v2602 = vld [vmem:[%s2580 + $0xa8] sm:$0xff]
        %v2603 = vld [vmem:[%s2580 + $0xb0] sm:$0xff]
        %v2604 = vld [vmem:[%s2580 + $0xb8] sm:$0xff]
        %v2605 = vld [vmem:[%s2580 + $0xc0] sm:$0xff]
        %v2606 = vld [vmem:[%s2580 + $0xc8] sm:$0xff]
        %v2607 = vld [vmem:[%s2580 + $0xd0] sm:$0xff]
        %v2608 = vld [vmem:[%s2580 + $0xd8] sm:$0xff]
        %v2609 = vld [vmem:[%s2580 + $0xe0] sm:$0xff]
        %v2610 = vld [vmem:[%s2580 + $0xe8] sm:$0xff]
        %v2611 = vld [vmem:[%s2580 + $0xf0] sm:$0xff]
        %v2612 = vld [vmem:[%s2580 + $0xf8] sm:$0xff]
        %v2613 = vld [vmem:[%s2580 + $0x100] sm:$0xff]
        %v2614 = vld [vmem:[%s2580 + $0x108] sm:$0xff]
        %v2615 = vld [vmem:[%s2580 + $0x110] sm:$0xff]
        %v2616 = vld [vmem:[%s2580 + $0x118] sm:$0xff]
        %v2617 = vld [vmem:[%s2580 + $0x120] sm:$0xff]
        %v2618 = vld [vmem:[%s2580 + $0x128] sm:$0xff]
        %v2619 = vld [vmem:[%s2580 + $0x130] sm:$0xff]
        %v2620 = vld [vmem:[%s2580 + $0x138] sm:$0xff]
        %v2621 = vld [vmem:[%s2580 + $0x140] sm:$0xff]
        %v2622 = vld [vmem:[%s2580 + $0x148] sm:$0xff]
        %v2623 = vld [vmem:[%s2580 + $0x150] sm:$0xff]
        %v2624 = vld [vmem:[%s2580 + $0x158] sm:$0xff]
        %v2625 = vld [vmem:[%s2580 + $0x160] sm:$0xff]
        %v2626 = vld [vmem:[%s2580 + $0x168] sm:$0xff]
        %v2627 = vld [vmem:[%s2580 + $0x170] sm:$0xff]
        %v2628 = vld [vmem:[%s2580 + $0x178] sm:$0xff]
        %v2629 = vld [vmem:[%s2580 + $0x180] sm:$0xff]
        %v2630 = vld [vmem:[%s2580 + $0x188] sm:$0xff]
        %v2631 = vld [vmem:[%s2580 + $0x190] sm:$0xff]
        %v2632 = vld [vmem:[%s2580 + $0x198] sm:$0xff]
        %v2633 = vld [vmem:[%s2580 + $0x1a0] sm:$0xff]
        %v2634 = vld [vmem:[%s2580 + $0x1a8] sm:$0xff]
        %v2635 = vld [vmem:[%s2580 + $0x1b0] sm:$0xff]
        %v2636 = vld [vmem:[%s2580 + $0x1b8] sm:$0xff]
        %v2637 = vld [vmem:[%s2580 + $0x1c0] sm:$0xff]
        %v2638 = vld [vmem:[%s2580 + $0x1c8] sm:$0xff]
        %v2639 = vld [vmem:[%s2580 + $0x1d0] sm:$0xff]
        %v2640 = vld [vmem:[%s2580 + $0x1d8] sm:$0xff]
        %v2641 = vld [vmem:[%s2580 + $0x1e0] sm:$0xff]
        %v2642 = vld [vmem:[%s2580 + $0x1e8] sm:$0xff]
        %v2643 = vld [vmem:[%s2580 + $0x1f0] sm:$0xff]
        %v2644 = vld [vmem:[%s2580 + $0x1f8] sm:$0xff]
        %v2645 = vld [vmem:[%s2580 + $0x200] sm:$0xff]
        %v2646 = vld [vmem:[%s2580 + $0x208] sm:$0xff]
        %v2647 = vld [vmem:[%s2580 + $0x210] sm:$0xff]
        %v2648 = vld [vmem:[%s2580 + $0x218] sm:$0xff]
        %v2649 = vld [vmem:[%s2580 + $0x220] sm:$0xff]
        %v2650 = vld [vmem:[%s2580 + $0x228] sm:$0xff]
        %v2651 = vld [vmem:[%s2580 + $0x230] sm:$0xff]
        %v2652 = vld [vmem:[%s2580 + $0x238] sm:$0xff]
        %v2653 = vld [vmem:[%s2580 + $0x240] sm:$0xff]
        %v2654 = vld [vmem:[%s2580 + $0x248] sm:$0xff]
        %v2655 = vld [vmem:[%s2580 + $0x250] sm:$0xff]
        %v2656 = vld [vmem:[%s2580 + $0x258] sm:$0xff]
        %v2657 = vld [vmem:[%s2580 + $0x260] sm:$0xff]
        %v2658 = vld [vmem:[%s2580 + $0x268] sm:$0xff]
        %v2659 = vld [vmem:[%s2580 + $0x270] sm:$0xff]
        %v2660 = vld [vmem:[%s2580 + $0x278] sm:$0xff]
        %v2661 = vld [vmem:[%s2580 + $0x280] sm:$0xff]
        %v2662 = vld [vmem:[%s2580 + $0x288] sm:$0xff]
        %v2663 = vld [vmem:[%s2580 + $0x290] sm:$0xff]
        %v2664 = vld [vmem:[%s2580 + $0x298] sm:$0xff]
        %v2665 = vld [vmem:[%s2580 + $0x2a0] sm:$0xff]
        %v2666 = vld [vmem:[%s2580 + $0x2a8] sm:$0xff]
        %v2667 = vld [vmem:[%s2580 + $0x2b0] sm:$0xff]
        %v2668 = vld [vmem:[%s2580 + $0x2b8] sm:$0xff]
        %v2669 = vld [vmem:[%s2580 + $0x2c0] sm:$0xff]
        %v2670 = vld [vmem:[%s2580 + $0x2c8] sm:$0xff]
        %v2671 = vld [vmem:[%s2580 + $0x2d0] sm:$0xff]
        %v2672 = vld [vmem:[%s2580 + $0x2d8] sm:$0xff]
        %v2673 = vld [vmem:[%s2580 + $0x2e0] sm:$0xff]
        %v2674 = vld [vmem:[%s2580 + $0x2e8] sm:$0xff]
        %v2675 = vld [vmem:[%s2580 + $0x2f0] sm:$0xff]
        %v2676 = vld [vmem:[%s2580 + $0x2f8] sm:$0xff]
        %v2677 = vld [vmem:[%s2580 + $0x300] sm:$0xff]
        %v2678 = vld [vmem:[%s2580 + $0x308] sm:$0xff]
        %v2679 = vld [vmem:[%s2580 + $0x310] sm:$0xff]
        %v2680 = vld [vmem:[%s2580 + $0x318] sm:$0xff]
        %v2681 = vld [vmem:[%s2580 + $0x320] sm:$0xff]
        %v2682 = vld [vmem:[%s2580 + $0x328] sm:$0xff]
        %v2683 = vld [vmem:[%s2580 + $0x330] sm:$0xff]
        %v2684 = vld [vmem:[%s2580 + $0x338] sm:$0xff]
        %v2685 = vld [vmem:[%s2580 + $0x340] sm:$0xff]
        %v2686 = vld [vmem:[%s2580 + $0x348] sm:$0xff]
        %v2687 = vld [vmem:[%s2580 + $0x350] sm:$0xff]
        %v2688 = vld [vmem:[%s2580 + $0x358] sm:$0xff]
        %v2689 = vld [vmem:[%s2580 + $0x360] sm:$0xff]
        %v2690 = vld [vmem:[%s2580 + $0x368] sm:$0xff]
        %v2691 = vld [vmem:[%s2580 + $0x370] sm:$0xff]
        %v2692 = vld [vmem:[%s2580 + $0x378] sm:$0xff]
        %v2693 = vld [vmem:[%s2580 + $0x380] sm:$0xff]
        %v2694 = vld [vmem:[%s2580 + $0x388] sm:$0xff]
        %v2695 = vld [vmem:[%s2580 + $0x390] sm:$0xff]
        %v2696 = vld [vmem:[%s2580 + $0x398] sm:$0xff]
        %v2697 = vld [vmem:[%s2580 + $0x3a0] sm:$0xff]
        %v2698 = vld [vmem:[%s2580 + $0x3a8] sm:$0xff]
        %v2699 = vld [vmem:[%s2580 + $0x3b0] sm:$0xff]
        %v2700 = vld [vmem:[%s2580 + $0x3b8] sm:$0xff]
        %v2701 = vld [vmem:[%s2580 + $0x3c0] sm:$0xff]
        %v2702 = vld [vmem:[%s2580 + $0x3c8] sm:$0xff]
        %v2703 = vld [vmem:[%s2580 + $0x3d0] sm:$0xff]
        %v2704 = vld [vmem:[%s2580 + $0x3d8] sm:$0xff]
        %v2705 = vld [vmem:[%s2580 + $0x3e0] sm:$0xff]
        %v2706 = vld [vmem:[%s2580 + $0x3e8] sm:$0xff]
        %v2707 = vld [vmem:[%s2580 + $0x3f0] sm:$0xff]
        %v2708 = vld [vmem:[%s2580 + $0x3f8] sm:$0xff]
        %v2837 = vunpack.c.l.b16 %v2581
        %v2838 = vunpack.c.h.b16 %v2581
        %v2839 = vunpack.c.l.b16 %v2582
        %v2840 = vunpack.c.h.b16 %v2582
        %v2841 = vunpack.c.l.b16 %v2583
        %v2842 = vunpack.c.h.b16 %v2583
        %v2843 = vunpack.c.l.b16 %v2584
        %v2844 = vunpack.c.h.b16 %v2584
        %v2845 = vunpack.c.l.b16 %v2585
        %v2846 = vunpack.c.h.b16 %v2585
        %v2847 = vunpack.c.l.b16 %v2586
        %v2848 = vunpack.c.h.b16 %v2586
        %v2849 = vunpack.c.l.b16 %v2587
        %v2850 = vunpack.c.h.b16 %v2587
        %v2851 = vunpack.c.l.b16 %v2588
        %v2852 = vunpack.c.h.b16 %v2588
        %v2853 = vunpack.c.l.b16 %v2589
        %v2854 = vunpack.c.h.b16 %v2589
        %v2855 = vunpack.c.l.b16 %v2590
        %v2856 = vunpack.c.h.b16 %v2590
        %v2857 = vunpack.c.l.b16 %v2591
        %v2858 = vunpack.c.h.b16 %v2591
        %v2859 = vunpack.c.l.b16 %v2592
        %v2860 = vunpack.c.h.b16 %v2592
        %v2861 = vunpack.c.l.b16 %v2593
        %v2862 = vunpack.c.h.b16 %v2593
        %v2863 = vunpack.c.l.b16 %v2594
        %v2864 = vunpack.c.h.b16 %v2594
        %v2865 = vunpack.c.l.b16 %v2595
        %v2866 = vunpack.c.h.b16 %v2595
        %v2867 = vunpack.c.l.b16 %v2596
        %v2868 = vunpack.c.h.b16 %v2596
        %v2869 = vunpack.c.l.b16 %v2597
        %v2870 = vunpack.c.h.b16 %v2597
        %v2871 = vunpack.c.l.b16 %v2598
        %v2872 = vunpack.c.h.b16 %v2598
        %v2873 = vunpack.c.l.b16 %v2599
        %v2874 = vunpack.c.h.b16 %v2599
        %v2875 = vunpack.c.l.b16 %v2600
        %v2876 = vunpack.c.h.b16 %v2600
        %v2877 = vunpack.c.l.b16 %v2601
        %v2878 = vunpack.c.h.b16 %v2601
        %v2879 = vunpack.c.l.b16 %v2602
        %v2880 = vunpack.c.h.b16 %v2602
        %v2881 = vunpack.c.l.b16 %v2603
        %v2882 = vunpack.c.h.b16 %v2603
        %v2883 = vunpack.c.l.b16 %v2604
        %v2884 = vunpack.c.h.b16 %v2604
        %v2885 = vunpack.c.l.b16 %v2605
        %v2886 = vunpack.c.h.b16 %v2605
        %v2887 = vunpack.c.l.b16 %v2606
        %v2888 = vunpack.c.h.b16 %v2606
        %v2889 = vunpack.c.l.b16 %v2607
        %v2890 = vunpack.c.h.b16 %v2607
        %v2891 = vunpack.c.l.b16 %v2608
        %v2892 = vunpack.c.h.b16 %v2608
        %v2893 = vunpack.c.l.b16 %v2609
        %v2894 = vunpack.c.h.b16 %v2609
        %v2895 = vunpack.c.l.b16 %v2610
        %v2896 = vunpack.c.h.b16 %v2610
        %v2897 = vunpack.c.l.b16 %v2611
        %v2898 = vunpack.c.h.b16 %v2611
        %v2899 = vunpack.c.l.b16 %v2612
        %v2900 = vunpack.c.h.b16 %v2612
        %v2901 = vunpack.c.l.b16 %v2613
        %v2902 = vunpack.c.h.b16 %v2613
        %v2903 = vunpack.c.l.b16 %v2614
        %v2904 = vunpack.c.h.b16 %v2614
        %v2905 = vunpack.c.l.b16 %v2615
        %v2906 = vunpack.c.h.b16 %v2615
        %v2907 = vunpack.c.l.b16 %v2616
        %v2908 = vunpack.c.h.b16 %v2616
        %v2909 = vunpack.c.l.b16 %v2617
        %v2910 = vunpack.c.h.b16 %v2617
        %v2911 = vunpack.c.l.b16 %v2618
        %v2912 = vunpack.c.h.b16 %v2618
        %v2913 = vunpack.c.l.b16 %v2619
        %v2914 = vunpack.c.h.b16 %v2619
        %v2915 = vunpack.c.l.b16 %v2620
        %v2916 = vunpack.c.h.b16 %v2620
        %v2917 = vunpack.c.l.b16 %v2621
        %v2918 = vunpack.c.h.b16 %v2621
        %v2919 = vunpack.c.l.b16 %v2622
        %v2920 = vunpack.c.h.b16 %v2622
        %v2921 = vunpack.c.l.b16 %v2623
        %v2922 = vunpack.c.h.b16 %v2623
        %v2923 = vunpack.c.l.b16 %v2624
        %v2924 = vunpack.c.h.b16 %v2624
        %v2925 = vunpack.c.l.b16 %v2625
        %v2926 = vunpack.c.h.b16 %v2625
        %v2927 = vunpack.c.l.b16 %v2626
        %v2928 = vunpack.c.h.b16 %v2626
        %v2929 = vunpack.c.l.b16 %v2627
        %v2930 = vunpack.c.h.b16 %v2627
        %v2931 = vunpack.c.l.b16 %v2628
        %v2932 = vunpack.c.h.b16 %v2628
        %v2933 = vunpack.c.l.b16 %v2629
        %v2934 = vunpack.c.h.b16 %v2629
        %v2935 = vunpack.c.l.b16 %v2630
        %v2936 = vunpack.c.h.b16 %v2630
        %v2937 = vunpack.c.l.b16 %v2631
        %v2938 = vunpack.c.h.b16 %v2631
        %v2939 = vunpack.c.l.b16 %v2632
        %v2940 = vunpack.c.h.b16 %v2632
        %v2941 = vunpack.c.l.b16 %v2633
        %v2942 = vunpack.c.h.b16 %v2633
        %v2943 = vunpack.c.l.b16 %v2634
        %v2944 = vunpack.c.h.b16 %v2634
        %v2945 = vunpack.c.l.b16 %v2635
        %v2946 = vunpack.c.h.b16 %v2635
        %v2947 = vunpack.c.l.b16 %v2636
        %v2948 = vunpack.c.h.b16 %v2636
        %v2949 = vunpack.c.l.b16 %v2637
        %v2950 = vunpack.c.h.b16 %v2637
        %v2951 = vunpack.c.l.b16 %v2638
        %v2952 = vunpack.c.h.b16 %v2638
        %v2953 = vunpack.c.l.b16 %v2639
        %v2954 = vunpack.c.h.b16 %v2639
        %v2955 = vunpack.c.l.b16 %v2640
        %v2956 = vunpack.c.h.b16 %v2640
        %v2957 = vunpack.c.l.b16 %v2641
        %v2958 = vunpack.c.h.b16 %v2641
        %v2959 = vunpack.c.l.b16 %v2642
        %v2960 = vunpack.c.h.b16 %v2642
        %v2961 = vunpack.c.l.b16 %v2643
        %v2962 = vunpack.c.h.b16 %v2643
        %v2963 = vunpack.c.l.b16 %v2644
        %v2964 = vunpack.c.h.b16 %v2644
        %v2965 = vunpack.c.l.b16 %v2645
        %v2966 = vunpack.c.h.b16 %v2645
        %v2967 = vunpack.c.l.b16 %v2646
        %v2968 = vunpack.c.h.b16 %v2646
        %v2969 = vunpack.c.l.b16 %v2647
        %v2970 = vunpack.c.h.b16 %v2647
        %v2971 = vunpack.c.l.b16 %v2648
        %v2972 = vunpack.c.h.b16 %v2648
        %v2973 = vunpack.c.l.b16 %v2649
        %v2974 = vunpack.c.h.b16 %v2649
        %v2975 = vunpack.c.l.b16 %v2650
        %v2976 = vunpack.c.h.b16 %v2650
        %v2977 = vunpack.c.l.b16 %v2651
        %v2978 = vunpack.c.h.b16 %v2651
        %v2979 = vunpack.c.l.b16 %v2652
        %v2980 = vunpack.c.h.b16 %v2652
        %v2981 = vunpack.c.l.b16 %v2653
        %v2982 = vunpack.c.h.b16 %v2653
        %v2983 = vunpack.c.l.b16 %v2654
        %v2984 = vunpack.c.h.b16 %v2654
        %v2985 = vunpack.c.l.b16 %v2655
        %v2986 = vunpack.c.h.b16 %v2655
        %v2987 = vunpack.c.l.b16 %v2656
        %v2988 = vunpack.c.h.b16 %v2656
        %v2989 = vunpack.c.l.b16 %v2657
        %v2990 = vunpack.c.h.b16 %v2657
        %v2991 = vunpack.c.l.b16 %v2658
        %v2992 = vunpack.c.h.b16 %v2658
        %v2993 = vunpack.c.l.b16 %v2659
        %v2994 = vunpack.c.h.b16 %v2659
        %v2995 = vunpack.c.l.b16 %v2660
        %v2996 = vunpack.c.h.b16 %v2660
        %v2997 = vunpack.c.l.b16 %v2661
        %v2998 = vunpack.c.h.b16 %v2661
        %v2999 = vunpack.c.l.b16 %v2662
        %v3000 = vunpack.c.h.b16 %v2662
        %v3001 = vunpack.c.l.b16 %v2663
        %v3002 = vunpack.c.h.b16 %v2663
        %v3003 = vunpack.c.l.b16 %v2664
        %v3004 = vunpack.c.h.b16 %v2664
        %v3005 = vunpack.c.l.b16 %v2665
        %v3006 = vunpack.c.h.b16 %v2665
        %v3007 = vunpack.c.l.b16 %v2666
        %v3008 = vunpack.c.h.b16 %v2666
        %v3009 = vunpack.c.l.b16 %v2667
        %v3010 = vunpack.c.h.b16 %v2667
        %v3011 = vunpack.c.l.b16 %v2668
        %v3012 = vunpack.c.h.b16 %v2668
        %v3013 = vunpack.c.l.b16 %v2669
        %v3014 = vunpack.c.h.b16 %v2669
        %v3015 = vunpack.c.l.b16 %v2670
        %v3016 = vunpack.c.h.b16 %v2670
        %v3017 = vunpack.c.l.b16 %v2671
        %v3018 = vunpack.c.h.b16 %v2671
        %v3019 = vunpack.c.l.b16 %v2672
        %v3020 = vunpack.c.h.b16 %v2672
        %v3021 = vunpack.c.l.b16 %v2673
        %v3022 = vunpack.c.h.b16 %v2673
        %v3023 = vunpack.c.l.b16 %v2674
        %v3024 = vunpack.c.h.b16 %v2674
        %v3025 = vunpack.c.l.b16 %v2675
        %v3026 = vunpack.c.h.b16 %v2675
        %v3027 = vunpack.c.l.b16 %v2676
        %v3028 = vunpack.c.h.b16 %v2676
        %v3029 = vunpack.c.l.b16 %v2677
        %v3030 = vunpack.c.h.b16 %v2677
        %v3031 = vunpack.c.l.b16 %v2678
        %v3032 = vunpack.c.h.b16 %v2678
        %v3033 = vunpack.c.l.b16 %v2679
        %v3034 = vunpack.c.h.b16 %v2679
        %v3035 = vunpack.c.l.b16 %v2680
        %v3036 = vunpack.c.h.b16 %v2680
        %v3037 = vunpack.c.l.b16 %v2681
        %v3038 = vunpack.c.h.b16 %v2681
        %v3039 = vunpack.c.l.b16 %v2682
        %v3040 = vunpack.c.h.b16 %v2682
        %v3041 = vunpack.c.l.b16 %v2683
        %v3042 = vunpack.c.h.b16 %v2683
        %v3043 = vunpack.c.l.b16 %v2684
        %v3044 = vunpack.c.h.b16 %v2684
        %v3045 = vunpack.c.l.b16 %v2685
        %v3046 = vunpack.c.h.b16 %v2685
        %v3047 = vunpack.c.l.b16 %v2686
        %v3048 = vunpack.c.h.b16 %v2686
        %v3049 = vunpack.c.l.b16 %v2687
        %v3050 = vunpack.c.h.b16 %v2687
        %v3051 = vunpack.c.l.b16 %v2688
        %v3052 = vunpack.c.h.b16 %v2688
        %v3053 = vunpack.c.l.b16 %v2689
        %v3054 = vunpack.c.h.b16 %v2689
        %v3055 = vunpack.c.l.b16 %v2690
        %v3056 = vunpack.c.h.b16 %v2690
        %v3057 = vunpack.c.l.b16 %v2691
        %v3058 = vunpack.c.h.b16 %v2691
        %v3059 = vunpack.c.l.b16 %v2692
        %v3060 = vunpack.c.h.b16 %v2692
        %v3061 = vunpack.c.l.b16 %v2693
        %v3062 = vunpack.c.h.b16 %v2693
        %v3063 = vunpack.c.l.b16 %v2694
        %v3064 = vunpack.c.h.b16 %v2694
        %v3065 = vunpack.c.l.b16 %v2695
        %v3066 = vunpack.c.h.b16 %v2695
        %v3067 = vunpack.c.l.b16 %v2696
        %v3068 = vunpack.c.h.b16 %v2696
        %v3069 = vunpack.c.l.b16 %v2697
        %v3070 = vunpack.c.h.b16 %v2697
        %v3071 = vunpack.c.l.b16 %v2698
        %v3072 = vunpack.c.h.b16 %v2698
        %v3073 = vunpack.c.l.b16 %v2699
        %v3074 = vunpack.c.h.b16 %v2699
        %v3075 = vunpack.c.l.b16 %v2700
        %v3076 = vunpack.c.h.b16 %v2700
        %v3077 = vunpack.c.l.b16 %v2701
        %v3078 = vunpack.c.h.b16 %v2701
        %v3079 = vunpack.c.l.b16 %v2702
        %v3080 = vunpack.c.h.b16 %v2702
        %v3081 = vunpack.c.l.b16 %v2703
        %v3082 = vunpack.c.h.b16 %v2703
        %v3083 = vunpack.c.l.b16 %v2704
        %v3084 = vunpack.c.h.b16 %v2704
        %v3085 = vunpack.c.l.b16 %v2705
        %v3086 = vunpack.c.h.b16 %v2705
        %v3087 = vunpack.c.l.b16 %v2706
        %v3088 = vunpack.c.h.b16 %v2706
        %v3089 = vunpack.c.l.b16 %v2707
        %v3090 = vunpack.c.h.b16 %v2707
        %v3091 = vunpack.c.l.b16 %v2708
        %v3092 = vunpack.c.h.b16 %v2708
        %v3093 = vpack.c.b16 %v2841, %v2837
        %v3094 = vpack.c.b16 %v2842, %v2838
        %v3095 = vpack.c.b16 %v2843, %v2839
        %v3096 = vpack.c.b16 %v2844, %v2840
        %v3097 = vpack.c.b16 %v2849, %v2845
        %v3098 = vpack.c.b16 %v2850, %v2846
        %v3099 = vpack.c.b16 %v2851, %v2847
        %v3100 = vpack.c.b16 %v2852, %v2848
        %v3101 = vpack.c.b16 %v2857, %v2853
        %v3102 = vpack.c.b16 %v2858, %v2854
        %v3103 = vpack.c.b16 %v2859, %v2855
        %v3104 = vpack.c.b16 %v2860, %v2856
        %v3105 = vpack.c.b16 %v2865, %v2861
        %v3106 = vpack.c.b16 %v2866, %v2862
        %v3107 = vpack.c.b16 %v2867, %v2863
        %v3108 = vpack.c.b16 %v2868, %v2864
        %v3109 = vpack.c.b16 %v2873, %v2869
        %v3110 = vpack.c.b16 %v2874, %v2870
        %v3111 = vpack.c.b16 %v2875, %v2871
        %v3112 = vpack.c.b16 %v2876, %v2872
        %v3113 = vpack.c.b16 %v2881, %v2877
        %v3114 = vpack.c.b16 %v2882, %v2878
        %v3115 = vpack.c.b16 %v2883, %v2879
        %v3116 = vpack.c.b16 %v2884, %v2880
        %v3117 = vpack.c.b16 %v2889, %v2885
        %v3118 = vpack.c.b16 %v2890, %v2886
        %v3119 = vpack.c.b16 %v2891, %v2887
        %v3120 = vpack.c.b16 %v2892, %v2888
        %v3121 = vpack.c.b16 %v2897, %v2893
        %v3122 = vpack.c.b16 %v2898, %v2894
        %v3123 = vpack.c.b16 %v2899, %v2895
        %v3124 = vpack.c.b16 %v2900, %v2896
        %v3125 = vpack.c.b16 %v2905, %v2901
        %v3126 = vpack.c.b16 %v2906, %v2902
        %v3127 = vpack.c.b16 %v2907, %v2903
        %v3128 = vpack.c.b16 %v2908, %v2904
        %v3129 = vpack.c.b16 %v2913, %v2909
        %v3130 = vpack.c.b16 %v2914, %v2910
        %v3131 = vpack.c.b16 %v2915, %v2911
        %v3132 = vpack.c.b16 %v2916, %v2912
        %v3133 = vpack.c.b16 %v2921, %v2917
        %v3134 = vpack.c.b16 %v2922, %v2918
        %v3135 = vpack.c.b16 %v2923, %v2919
        %v3136 = vpack.c.b16 %v2924, %v2920
        %v3137 = vpack.c.b16 %v2929, %v2925
        %v3138 = vpack.c.b16 %v2930, %v2926
        %v3139 = vpack.c.b16 %v2931, %v2927
        %v3140 = vpack.c.b16 %v2932, %v2928
        %v3141 = vpack.c.b16 %v2937, %v2933
        %v3142 = vpack.c.b16 %v2938, %v2934
        %v3143 = vpack.c.b16 %v2939, %v2935
        %v3144 = vpack.c.b16 %v2940, %v2936
        %v3145 = vpack.c.b16 %v2945, %v2941
        %v3146 = vpack.c.b16 %v2946, %v2942
        %v3147 = vpack.c.b16 %v2947, %v2943
        %v3148 = vpack.c.b16 %v2948, %v2944
        %v3149 = vpack.c.b16 %v2953, %v2949
        %v3150 = vpack.c.b16 %v2954, %v2950
        %v3151 = vpack.c.b16 %v2955, %v2951
        %v3152 = vpack.c.b16 %v2956, %v2952
        %v3153 = vpack.c.b16 %v2961, %v2957
        %v3154 = vpack.c.b16 %v2962, %v2958
        %v3155 = vpack.c.b16 %v2963, %v2959
        %v3156 = vpack.c.b16 %v2964, %v2960
        %v3157 = vpack.c.b16 %v2969, %v2965
        %v3158 = vpack.c.b16 %v2970, %v2966
        %v3159 = vpack.c.b16 %v2971, %v2967
        %v3160 = vpack.c.b16 %v2972, %v2968
        %v3161 = vpack.c.b16 %v2977, %v2973
        %v3162 = vpack.c.b16 %v2978, %v2974
        %v3163 = vpack.c.b16 %v2979, %v2975
        %v3164 = vpack.c.b16 %v2980, %v2976
        %v3165 = vpack.c.b16 %v2985, %v2981
        %v3166 = vpack.c.b16 %v2986, %v2982
        %v3167 = vpack.c.b16 %v2987, %v2983
        %v3168 = vpack.c.b16 %v2988, %v2984
        %v3169 = vpack.c.b16 %v2993, %v2989
        %v3170 = vpack.c.b16 %v2994, %v2990
        %v3171 = vpack.c.b16 %v2995, %v2991
        %v3172 = vpack.c.b16 %v2996, %v2992
        %v3173 = vpack.c.b16 %v3001, %v2997
        %v3174 = vpack.c.b16 %v3002, %v2998
        %v3175 = vpack.c.b16 %v3003, %v2999
        %v3176 = vpack.c.b16 %v3004, %v3000
        %v3177 = vpack.c.b16 %v3009, %v3005
        %v3178 = vpack.c.b16 %v3010, %v3006
        %v3179 = vpack.c.b16 %v3011, %v3007
        %v3180 = vpack.c.b16 %v3012, %v3008
        %v3181 = vpack.c.b16 %v3017, %v3013
        %v3182 = vpack.c.b16 %v3018, %v3014
        %v3183 = vpack.c.b16 %v3019, %v3015
        %v3184 = vpack.c.b16 %v3020, %v3016
        %v3185 = vpack.c.b16 %v3025, %v3021
        %v3186 = vpack.c.b16 %v3026, %v3022
        %v3187 = vpack.c.b16 %v3027, %v3023
        %v3188 = vpack.c.b16 %v3028, %v3024
        %v3189 = vpack.c.b16 %v3033, %v3029
        %v3190 = vpack.c.b16 %v3034, %v3030
        %v3191 = vpack.c.b16 %v3035, %v3031
        %v3192 = vpack.c.b16 %v3036, %v3032
        %v3193 = vpack.c.b16 %v3041, %v3037
        %v3194 = vpack.c.b16 %v3042, %v3038
        %v3195 = vpack.c.b16 %v3043, %v3039
        %v3196 = vpack.c.b16 %v3044, %v3040
        %v3197 = vpack.c.b16 %v3049, %v3045
        %v3198 = vpack.c.b16 %v3050, %v3046
        %v3199 = vpack.c.b16 %v3051, %v3047
        %v3200 = vpack.c.b16 %v3052, %v3048
        %v3201 = vpack.c.b16 %v3057, %v3053
        %v3202 = vpack.c.b16 %v3058, %v3054
        %v3203 = vpack.c.b16 %v3059, %v3055
        %v3204 = vpack.c.b16 %v3060, %v3056
        %v3205 = vpack.c.b16 %v3065, %v3061
        %v3206 = vpack.c.b16 %v3066, %v3062
        %v3207 = vpack.c.b16 %v3067, %v3063
        %v3208 = vpack.c.b16 %v3068, %v3064
        %v3209 = vpack.c.b16 %v3073, %v3069
        %v3210 = vpack.c.b16 %v3074, %v3070
        %v3211 = vpack.c.b16 %v3075, %v3071
        %v3212 = vpack.c.b16 %v3076, %v3072
        %v3213 = vpack.c.b16 %v3081, %v3077
        %v3214 = vpack.c.b16 %v3082, %v3078
        %v3215 = vpack.c.b16 %v3083, %v3079
        %v3216 = vpack.c.b16 %v3084, %v3080
        %v3217 = vpack.c.b16 %v3089, %v3085
        %v3218 = vpack.c.b16 %v3090, %v3086
        %v3219 = vpack.c.b16 %v3091, %v3087
        %v3220 = vpack.c.b16 %v3092, %v3088
        %3349 = vmatprep.subr.bf16.mxu0 %v3122
        %3350 = vmatpush1.bf16.msra.mxu0 %v3121
        %3351 = vmatprep.subr.bf16.mxu0 %v3118
        %3352 = vmatpush1.bf16.msra.mxu0 %v3117
        %3353 = vmatprep.subr.bf16.mxu0 %v3114
        %3354 = vmatpush1.bf16.msra.mxu0 %v3113
        %3355 = vmatprep.subr.bf16.mxu0 %v3110
        %3356 = vmatpush1.bf16.msra.mxu0 %v3109
        %3357 = vmatprep.subr.bf16.mxu0 %v3106
        %3358 = vmatpush1.bf16.msra.mxu0 %v3105
        %3359 = vmatprep.subr.bf16.mxu0 %v3102
        %3360 = vmatpush1.bf16.msra.mxu0 %v3101
        %3361 = vmatprep.subr.bf16.mxu0 %v3098
        %3362 = vmatpush1.bf16.msra.mxu0 %v3097
        %3363 = vmatprep.subr.bf16.mxu0 %v3094
        %3364 = vmatpush1.bf16.msra.mxu0 %v3093
        %3365 = vmatprep.subr.bf16.mxu0 %v3154
        %3366 = vmatpush2.bf16.msra.mxu0 %v3153
        %3367 = vmatprep.subr.bf16.mxu0 %v3150
        %3368 = vmatpush2.bf16.msra.mxu0 %v3149
        %3369 = vmatprep.subr.bf16.mxu0 %v3146
        %3370 = vmatpush2.bf16.msra.mxu0 %v3145
        %3371 = vmatprep.subr.bf16.mxu0 %v3142
        %3372 = vmatpush2.bf16.msra.mxu0 %v3141
        %3373 = vmatprep.subr.bf16.mxu0 %v3138
        %3374 = vmatpush2.bf16.msra.mxu0 %v3137
        %3375 = vmatprep.subr.bf16.mxu0 %v3134
        %3376 = vmatpush2.bf16.msra.mxu0 %v3133
        %3377 = vmatprep.subr.bf16.mxu0 %v3130
        %3378 = vmatpush2.bf16.msra.mxu0 %v3129
        %3379 = vmatprep.subr.bf16.mxu0 %v3126
        %3380 = vmatpush2.bf16.msra.mxu0 %v3125
        %3381 = vmatprep.mubr.bf16.mxu0 %v2285
        %3382 = vmatmul.mubr.bf16.gmra.mxu0 %v2284
        %v3383 = vpop.f32.mrf.mxu0
        %v3384 = vadd.f32 0.0, %v3383
        %v3385 = vpop.f32.mrf.mxu0
        %v3386 = vadd.f32 0.0, %v3385
        %v3387 = vpop.f32.mrf.mxu0
        %v3388 = vadd.f32 0.0, %v3387
        %v3389 = vpop.f32.mrf.mxu0
        %v3390 = vadd.f32 0.0, %v3389
        %3391 = vmatprep.mubr.bf16.mxu0 %v2289
        %3392 = vmatmul.mubr.bf16.gmra.mxu0 %v2288
        %v3393 = vpop.f32.mrf.mxu0
        %v3394 = vadd.f32 0.0, %v3393
        %v3395 = vpop.f32.mrf.mxu0
        %v3396 = vadd.f32 0.0, %v3395
        %v3397 = vpop.f32.mrf.mxu0
        %v3398 = vadd.f32 0.0, %v3397
        %v3399 = vpop.f32.mrf.mxu0
        %v3400 = vadd.f32 0.0, %v3399
        %3401 = vmatprep.mubr.bf16.mxu0 %v2293
        %3402 = vmatmul.mubr.bf16.gmra.mxu0 %v2292
        %v3403 = vpop.f32.mrf.mxu0
        %v3404 = vadd.f32 0.0, %v3403
        %v3405 = vpop.f32.mrf.mxu0
        %v3406 = vadd.f32 0.0, %v3405
        %v3407 = vpop.f32.mrf.mxu0
        %v3408 = vadd.f32 0.0, %v3407
        %v3409 = vpop.f32.mrf.mxu0
        %v3410 = vadd.f32 0.0, %v3409
        %3411 = vmatprep.mubr.bf16.mxu0 %v2297
        %3412 = vmatmul.mubr.bf16.gmra.mxu0 %v2296
        %v3413 = vpop.f32.mrf.mxu0
        %v3414 = vadd.f32 0.0, %v3413
        %v3415 = vpop.f32.mrf.mxu0
        %v3416 = vadd.f32 0.0, %v3415
        %v3417 = vpop.f32.mrf.mxu0
        %v3418 = vadd.f32 0.0, %v3417
        %v3419 = vpop.f32.mrf.mxu0
        %v3420 = vadd.f32 0.0, %v3419
        %3421 = vmatprep.mubr.bf16.mxu0 %v2301
        %3422 = vmatmul.mubr.bf16.gmra.mxu0 %v2300
        %v3423 = vpop.f32.mrf.mxu0
        %v3424 = vadd.f32 0.0, %v3423
        %v3425 = vpop.f32.mrf.mxu0
        %v3426 = vadd.f32 0.0, %v3425
        %v3427 = vpop.f32.mrf.mxu0
        %v3428 = vadd.f32 0.0, %v3427
        %v3429 = vpop.f32.mrf.mxu0
        %v3430 = vadd.f32 0.0, %v3429
        %3431 = vmatprep.mubr.bf16.mxu0 %v2305
        %3432 = vmatmul.mubr.bf16.gmra.mxu0 %v2304
        %v3433 = vpop.f32.mrf.mxu0
        %v3434 = vadd.f32 0.0, %v3433
        %v3435 = vpop.f32.mrf.mxu0
        %v3436 = vadd.f32 0.0, %v3435
        %v3437 = vpop.f32.mrf.mxu0
        %v3438 = vadd.f32 0.0, %v3437
        %v3439 = vpop.f32.mrf.mxu0
        %v3440 = vadd.f32 0.0, %v3439
        %3441 = vmatprep.mubr.bf16.mxu0 %v2309
        %3442 = vmatmul.mubr.bf16.gmra.mxu0 %v2308
        %v3443 = vpop.f32.mrf.mxu0
        %v3444 = vadd.f32 0.0, %v3443
        %v3445 = vpop.f32.mrf.mxu0
        %v3446 = vadd.f32 0.0, %v3445
        %v3447 = vpop.f32.mrf.mxu0
        %v3448 = vadd.f32 0.0, %v3447
        %v3449 = vpop.f32.mrf.mxu0
        %v3450 = vadd.f32 0.0, %v3449
        %3451 = vmatprep.mubr.bf16.mxu0 %v2313
        %3452 = vmatmul.mubr.bf16.gmra.mxu0 %v2312
        %v3453 = vpop.f32.mrf.mxu0
        %v3454 = vadd.f32 0.0, %v3453
        %v3455 = vpop.f32.mrf.mxu0
        %v3456 = vadd.f32 0.0, %v3455
        %v3457 = vpop.f32.mrf.mxu0
        %v3458 = vadd.f32 0.0, %v3457
        %v3459 = vpop.f32.mrf.mxu0
        %v3460 = vadd.f32 0.0, %v3459
        %3461 = vdwg.mxu0
        %3462 = vmatprep.subr.bf16.mxu0 %v3186
        %3463 = vmatpush1.bf16.msra.mxu0 %v3185
        %3464 = vmatprep.subr.bf16.mxu0 %v3182
        %3465 = vmatpush1.bf16.msra.mxu0 %v3181
        %3466 = vmatprep.subr.bf16.mxu0 %v3178
        %3467 = vmatpush1.bf16.msra.mxu0 %v3177
        %3468 = vmatprep.subr.bf16.mxu0 %v3174
        %3469 = vmatpush1.bf16.msra.mxu0 %v3173
        %3470 = vmatprep.subr.bf16.mxu0 %v3170
        %3471 = vmatpush1.bf16.msra.mxu0 %v3169
        %3472 = vmatprep.subr.bf16.mxu0 %v3166
        %3473 = vmatpush1.bf16.msra.mxu0 %v3165
        %3474 = vmatprep.subr.bf16.mxu0 %v3162
        %3475 = vmatpush1.bf16.msra.mxu0 %v3161
        %3476 = vmatprep.subr.bf16.mxu0 %v3158
        %3477 = vmatpush1.bf16.msra.mxu0 %v3157
        %3478 = vmatprep.subr.bf16.mxu0 %v3218
        %3479 = vmatpush2.bf16.msra.mxu0 %v3217
        %3480 = vmatprep.subr.bf16.mxu0 %v3214
        %3481 = vmatpush2.bf16.msra.mxu0 %v3213
        %3482 = vmatprep.subr.bf16.mxu0 %v3210
        %3483 = vmatpush2.bf16.msra.mxu0 %v3209
        %3484 = vmatprep.subr.bf16.mxu0 %v3206
        %3485 = vmatpush2.bf16.msra.mxu0 %v3205
        %3486 = vmatprep.subr.bf16.mxu0 %v3202
        %3487 = vmatpush2.bf16.msra.mxu0 %v3201
        %3488 = vmatprep.subr.bf16.mxu0 %v3198
        %3489 = vmatpush2.bf16.msra.mxu0 %v3197
        %3490 = vmatprep.subr.bf16.mxu0 %v3194
        %3491 = vmatpush2.bf16.msra.mxu0 %v3193
        %3492 = vmatprep.subr.bf16.mxu0 %v3190
        %3493 = vmatpush2.bf16.msra.mxu0 %v3189
        %3494 = vmatprep.mubr.bf16.mxu0 %v2287
        %3495 = vmatmul.mubr.bf16.gmra.mxu0 %v2286
        %v3496 = vpop.f32.mrf.mxu0
        %v3497 = vadd.f32 %v3384, %v3496
        %v3498 = vpop.f32.mrf.mxu0
        %v3499 = vadd.f32 %v3386, %v3498
        %v3500 = vpop.f32.mrf.mxu0
        %v3501 = vadd.f32 %v3388, %v3500
        %v3502 = vpop.f32.mrf.mxu0
        %v3503 = vadd.f32 %v3390, %v3502
        %3504 = vmatprep.mubr.bf16.mxu0 %v2291
        %3505 = vmatmul.mubr.bf16.gmra.mxu0 %v2290
        %v3506 = vpop.f32.mrf.mxu0
        %v3507 = vadd.f32 %v3394, %v3506
        %v3508 = vpop.f32.mrf.mxu0
        %v3509 = vadd.f32 %v3396, %v3508
        %v3510 = vpop.f32.mrf.mxu0
        %v3511 = vadd.f32 %v3398, %v3510
        %v3512 = vpop.f32.mrf.mxu0
        %v3513 = vadd.f32 %v3400, %v3512
        %3514 = vmatprep.mubr.bf16.mxu0 %v2295
        %3515 = vmatmul.mubr.bf16.gmra.mxu0 %v2294
        %v3516 = vpop.f32.mrf.mxu0
        %v3517 = vadd.f32 %v3404, %v3516
        %v3518 = vpop.f32.mrf.mxu0
        %v3519 = vadd.f32 %v3406, %v3518
        %v3520 = vpop.f32.mrf.mxu0
        %v3521 = vadd.f32 %v3408, %v3520
        %v3522 = vpop.f32.mrf.mxu0
        %v3523 = vadd.f32 %v3410, %v3522
        %3524 = vmatprep.mubr.bf16.mxu0 %v2299
        %3525 = vmatmul.mubr.bf16.gmra.mxu0 %v2298
        %v3526 = vpop.f32.mrf.mxu0
        %v3527 = vadd.f32 %v3414, %v3526
        %v3528 = vpop.f32.mrf.mxu0
        %v3529 = vadd.f32 %v3416, %v3528
        %v3530 = vpop.f32.mrf.mxu0
        %v3531 = vadd.f32 %v3418, %v3530
        %v3532 = vpop.f32.mrf.mxu0
        %v3533 = vadd.f32 %v3420, %v3532
        %3534 = vmatprep.mubr.bf16.mxu0 %v2303
        %3535 = vmatmul.mubr.bf16.gmra.mxu0 %v2302
        %v3536 = vpop.f32.mrf.mxu0
        %v3537 = vadd.f32 %v3424, %v3536
        %v3538 = vpop.f32.mrf.mxu0
        %v3539 = vadd.f32 %v3426, %v3538
        %v3540 = vpop.f32.mrf.mxu0
        %v3541 = vadd.f32 %v3428, %v3540
        %v3542 = vpop.f32.mrf.mxu0
        %v3543 = vadd.f32 %v3430, %v3542
        %3544 = vmatprep.mubr.bf16.mxu0 %v2307
        %3545 = vmatmul.mubr.bf16.gmra.mxu0 %v2306
        %v3546 = vpop.f32.mrf.mxu0
        %v3547 = vadd.f32 %v3434, %v3546
        %v3548 = vpop.f32.mrf.mxu0
        %v3549 = vadd.f32 %v3436, %v3548
        %v3550 = vpop.f32.mrf.mxu0
        %v3551 = vadd.f32 %v3438, %v3550
        %v3552 = vpop.f32.mrf.mxu0
        %v3553 = vadd.f32 %v3440, %v3552
        %3554 = vmatprep.mubr.bf16.mxu0 %v2311
        %3555 = vmatmul.mubr.bf16.gmra.mxu0 %v2310
        %v3556 = vpop.f32.mrf.mxu0
        %v3557 = vadd.f32 %v3444, %v3556
        %v3558 = vpop.f32.mrf.mxu0
        %v3559 = vadd.f32 %v3446, %v3558
        %v3560 = vpop.f32.mrf.mxu0
        %v3561 = vadd.f32 %v3448, %v3560
        %v3562 = vpop.f32.mrf.mxu0
        %v3563 = vadd.f32 %v3450, %v3562
        %3564 = vmatprep.mubr.bf16.mxu0 %v2315
        %3565 = vmatmul.mubr.bf16.gmra.mxu0 %v2314
        %v3566 = vpop.f32.mrf.mxu0
        %v3567 = vadd.f32 %v3454, %v3566
        %v3568 = vpop.f32.mrf.mxu0
        %v3569 = vadd.f32 %v3456, %v3568
        %v3570 = vpop.f32.mrf.mxu0
        %v3571 = vadd.f32 %v3458, %v3570
        %v3572 = vpop.f32.mrf.mxu0
        %v3573 = vadd.f32 %v3460, %v3572
        %3574 = vdwg.mxu0
        %3575 = vmatprep.subr.bf16.mxu0 %v3124
        %3576 = vmatpush1.bf16.msra.mxu0 %v3123
        %3577 = vmatprep.subr.bf16.mxu0 %v3120
        %3578 = vmatpush1.bf16.msra.mxu0 %v3119
        %3579 = vmatprep.subr.bf16.mxu0 %v3116
        %3580 = vmatpush1.bf16.msra.mxu0 %v3115
        %3581 = vmatprep.subr.bf16.mxu0 %v3112
        %3582 = vmatpush1.bf16.msra.mxu0 %v3111
        %3583 = vmatprep.subr.bf16.mxu0 %v3108
        %3584 = vmatpush1.bf16.msra.mxu0 %v3107
        %3585 = vmatprep.subr.bf16.mxu0 %v3104
        %3586 = vmatpush1.bf16.msra.mxu0 %v3103
        %3587 = vmatprep.subr.bf16.mxu0 %v3100
        %3588 = vmatpush1.bf16.msra.mxu0 %v3099
        %3589 = vmatprep.subr.bf16.mxu0 %v3096
        %3590 = vmatpush1.bf16.msra.mxu0 %v3095
        %3591 = vmatprep.subr.bf16.mxu0 %v3156
        %3592 = vmatpush2.bf16.msra.mxu0 %v3155
        %3593 = vmatprep.subr.bf16.mxu0 %v3152
        %3594 = vmatpush2.bf16.msra.mxu0 %v3151
        %3595 = vmatprep.subr.bf16.mxu0 %v3148
        %3596 = vmatpush2.bf16.msra.mxu0 %v3147
        %3597 = vmatprep.subr.bf16.mxu0 %v3144
        %3598 = vmatpush2.bf16.msra.mxu0 %v3143
        %3599 = vmatprep.subr.bf16.mxu0 %v3140
        %3600 = vmatpush2.bf16.msra.mxu0 %v3139
        %3601 = vmatprep.subr.bf16.mxu0 %v3136
        %3602 = vmatpush2.bf16.msra.mxu0 %v3135
        %3603 = vmatprep.subr.bf16.mxu0 %v3132
        %3604 = vmatpush2.bf16.msra.mxu0 %v3131
        %3605 = vmatprep.subr.bf16.mxu0 %v3128
        %3606 = vmatpush2.bf16.msra.mxu0 %v3127
        %3607 = vmatprep.mubr.bf16.mxu0 %v2285
        %3608 = vmatmul.mubr.bf16.gmra.mxu0 %v2284
        %v3609 = vpop.f32.mrf.mxu0
        %v3610 = vadd.f32 0.0, %v3609
        %v3611 = vpop.f32.mrf.mxu0
        %v3612 = vadd.f32 0.0, %v3611
        %v3613 = vpop.f32.mrf.mxu0
        %v3614 = vadd.f32 0.0, %v3613
        %v3615 = vpop.f32.mrf.mxu0
        %v3616 = vadd.f32 0.0, %v3615
        %3617 = vmatprep.mubr.bf16.mxu0 %v2289
        %3618 = vmatmul.mubr.bf16.gmra.mxu0 %v2288
        %v3619 = vpop.f32.mrf.mxu0
        %v3620 = vadd.f32 0.0, %v3619
        %v3621 = vpop.f32.mrf.mxu0
        %v3622 = vadd.f32 0.0, %v3621
        %v3623 = vpop.f32.mrf.mxu0
        %v3624 = vadd.f32 0.0, %v3623
        %v3625 = vpop.f32.mrf.mxu0
        %v3626 = vadd.f32 0.0, %v3625
        %3627 = vmatprep.mubr.bf16.mxu0 %v2293
        %3628 = vmatmul.mubr.bf16.gmra.mxu0 %v2292
        %v3629 = vpop.f32.mrf.mxu0
        %v3630 = vadd.f32 0.0, %v3629
        %v3631 = vpop.f32.mrf.mxu0
        %v3632 = vadd.f32 0.0, %v3631
        %v3633 = vpop.f32.mrf.mxu0
        %v3634 = vadd.f32 0.0, %v3633
        %v3635 = vpop.f32.mrf.mxu0
        %v3636 = vadd.f32 0.0, %v3635
        %3637 = vmatprep.mubr.bf16.mxu0 %v2297
        %3638 = vmatmul.mubr.bf16.gmra.mxu0 %v2296
        %v3639 = vpop.f32.mrf.mxu0
        %v3640 = vadd.f32 0.0, %v3639
        %v3641 = vpop.f32.mrf.mxu0
        %v3642 = vadd.f32 0.0, %v3641
        %v3643 = vpop.f32.mrf.mxu0
        %v3644 = vadd.f32 0.0, %v3643
        %v3645 = vpop.f32.mrf.mxu0
        %v3646 = vadd.f32 0.0, %v3645
        %3647 = vmatprep.mubr.bf16.mxu0 %v2301
        %3648 = vmatmul.mubr.bf16.gmra.mxu0 %v2300
        %v3649 = vpop.f32.mrf.mxu0
        %v3650 = vadd.f32 0.0, %v3649
        %v3651 = vpop.f32.mrf.mxu0
        %v3652 = vadd.f32 0.0, %v3651
        %v3653 = vpop.f32.mrf.mxu0
        %v3654 = vadd.f32 0.0, %v3653
        %v3655 = vpop.f32.mrf.mxu0
        %v3656 = vadd.f32 0.0, %v3655
        %3657 = vmatprep.mubr.bf16.mxu0 %v2305
        %3658 = vmatmul.mubr.bf16.gmra.mxu0 %v2304
        %v3659 = vpop.f32.mrf.mxu0
        %v3660 = vadd.f32 0.0, %v3659
        %v3661 = vpop.f32.mrf.mxu0
        %v3662 = vadd.f32 0.0, %v3661
        %v3663 = vpop.f32.mrf.mxu0
        %v3664 = vadd.f32 0.0, %v3663
        %v3665 = vpop.f32.mrf.mxu0
        %v3666 = vadd.f32 0.0, %v3665
        %3667 = vmatprep.mubr.bf16.mxu0 %v2309
        %3668 = vmatmul.mubr.bf16.gmra.mxu0 %v2308
        %v3669 = vpop.f32.mrf.mxu0
        %v3670 = vadd.f32 0.0, %v3669
        %v3671 = vpop.f32.mrf.mxu0
        %v3672 = vadd.f32 0.0, %v3671
        %v3673 = vpop.f32.mrf.mxu0
        %v3674 = vadd.f32 0.0, %v3673
        %v3675 = vpop.f32.mrf.mxu0
        %v3676 = vadd.f32 0.0, %v3675
        %3677 = vmatprep.mubr.bf16.mxu0 %v2313
        %3678 = vmatmul.mubr.bf16.gmra.mxu0 %v2312
        %v3679 = vpop.f32.mrf.mxu0
        %v3680 = vadd.f32 0.0, %v3679
        %v3681 = vpop.f32.mrf.mxu0
        %v3682 = vadd.f32 0.0, %v3681
        %v3683 = vpop.f32.mrf.mxu0
        %v3684 = vadd.f32 0.0, %v3683
        %v3685 = vpop.f32.mrf.mxu0
        %v3686 = vadd.f32 0.0, %v3685
        %3687 = vdwg.mxu0
        %3688 = vmatprep.subr.bf16.mxu0 %v3188
        %3689 = vmatpush1.bf16.msra.mxu0 %v3187
        %3690 = vmatprep.subr.bf16.mxu0 %v3184
        %3691 = vmatpush1.bf16.msra.mxu0 %v3183
        %3692 = vmatprep.subr.bf16.mxu0 %v3180
        %3693 = vmatpush1.bf16.msra.mxu0 %v3179
        %3694 = vmatprep.subr.bf16.mxu0 %v3176
        %3695 = vmatpush1.bf16.msra.mxu0 %v3175
        %3696 = vmatprep.subr.bf16.mxu0 %v3172
        %3697 = vmatpush1.bf16.msra.mxu0 %v3171
        %3698 = vmatprep.subr.bf16.mxu0 %v3168
        %3699 = vmatpush1.bf16.msra.mxu0 %v3167
        %3700 = vmatprep.subr.bf16.mxu0 %v3164
        %3701 = vmatpush1.bf16.msra.mxu0 %v3163
        %3702 = vmatprep.subr.bf16.mxu0 %v3160
        %3703 = vmatpush1.bf16.msra.mxu0 %v3159
        %3704 = vmatprep.subr.bf16.mxu0 %v3220
        %3705 = vmatpush2.bf16.msra.mxu0 %v3219
        %3706 = vmatprep.subr.bf16.mxu0 %v3216
        %3707 = vmatpush2.bf16.msra.mxu0 %v3215
        %3708 = vmatprep.subr.bf16.mxu0 %v3212
        %3709 = vmatpush2.bf16.msra.mxu0 %v3211
        %3710 = vmatprep.subr.bf16.mxu0 %v3208
        %3711 = vmatpush2.bf16.msra.mxu0 %v3207
        %3712 = vmatprep.subr.bf16.mxu0 %v3204
        %3713 = vmatpush2.bf16.msra.mxu0 %v3203
        %3714 = vmatprep.subr.bf16.mxu0 %v3200
        %3715 = vmatpush2.bf16.msra.mxu0 %v3199
        %3716 = vmatprep.subr.bf16.mxu0 %v3196
        %3717 = vmatpush2.bf16.msra.mxu0 %v3195
        %3718 = vmatprep.subr.bf16.mxu0 %v3192
        %3719 = vmatpush2.bf16.msra.mxu0 %v3191
        %3720 = vmatprep.mubr.bf16.mxu0 %v2287
        %3721 = vmatmul.mubr.bf16.gmra.mxu0 %v2286
        %v3722 = vpop.f32.mrf.mxu0
        %v3723 = vadd.f32 %v3610, %v3722
        %v3724 = vpop.f32.mrf.mxu0
        %v3725 = vadd.f32 %v3612, %v3724
        %v3726 = vpop.f32.mrf.mxu0
        %v3727 = vadd.f32 %v3614, %v3726
        %v3728 = vpop.f32.mrf.mxu0
        %v3729 = vadd.f32 %v3616, %v3728
        %3730 = vmatprep.mubr.bf16.mxu0 %v2291
        %3731 = vmatmul.mubr.bf16.gmra.mxu0 %v2290
        %v3732 = vpop.f32.mrf.mxu0
        %v3733 = vadd.f32 %v3620, %v3732
        %v3734 = vpop.f32.mrf.mxu0
        %v3735 = vadd.f32 %v3622, %v3734
        %v3736 = vpop.f32.mrf.mxu0
        %v3737 = vadd.f32 %v3624, %v3736
        %v3738 = vpop.f32.mrf.mxu0
        %v3739 = vadd.f32 %v3626, %v3738
        %3740 = vmatprep.mubr.bf16.mxu0 %v2295
        %3741 = vmatmul.mubr.bf16.gmra.mxu0 %v2294
        %v3742 = vpop.f32.mrf.mxu0
        %v3743 = vadd.f32 %v3630, %v3742
        %v3744 = vpop.f32.mrf.mxu0
        %v3745 = vadd.f32 %v3632, %v3744
        %v3746 = vpop.f32.mrf.mxu0
        %v3747 = vadd.f32 %v3634, %v3746
        %v3748 = vpop.f32.mrf.mxu0
        %v3749 = vadd.f32 %v3636, %v3748
        %3750 = vmatprep.mubr.bf16.mxu0 %v2299
        %3751 = vmatmul.mubr.bf16.gmra.mxu0 %v2298
        %v3752 = vpop.f32.mrf.mxu0
        %v3753 = vadd.f32 %v3640, %v3752
        %v3754 = vpop.f32.mrf.mxu0
        %v3755 = vadd.f32 %v3642, %v3754
        %v3756 = vpop.f32.mrf.mxu0
        %v3757 = vadd.f32 %v3644, %v3756
        %v3758 = vpop.f32.mrf.mxu0
        %v3759 = vadd.f32 %v3646, %v3758
        %3760 = vmatprep.mubr.bf16.mxu0 %v2303
        %3761 = vmatmul.mubr.bf16.gmra.mxu0 %v2302
        %v3762 = vpop.f32.mrf.mxu0
        %v3763 = vadd.f32 %v3650, %v3762
        %v3764 = vpop.f32.mrf.mxu0
        %v3765 = vadd.f32 %v3652, %v3764
        %v3766 = vpop.f32.mrf.mxu0
        %v3767 = vadd.f32 %v3654, %v3766
        %v3768 = vpop.f32.mrf.mxu0
        %v3769 = vadd.f32 %v3656, %v3768
        %3770 = vmatprep.mubr.bf16.mxu0 %v2307
        %3771 = vmatmul.mubr.bf16.gmra.mxu0 %v2306
        %v3772 = vpop.f32.mrf.mxu0
        %v3773 = vadd.f32 %v3660, %v3772
        %v3774 = vpop.f32.mrf.mxu0
        %v3775 = vadd.f32 %v3662, %v3774
        %v3776 = vpop.f32.mrf.mxu0
        %v3777 = vadd.f32 %v3664, %v3776
        %v3778 = vpop.f32.mrf.mxu0
        %v3779 = vadd.f32 %v3666, %v3778
        %3780 = vmatprep.mubr.bf16.mxu0 %v2311
        %3781 = vmatmul.mubr.bf16.gmra.mxu0 %v2310
        %v3782 = vpop.f32.mrf.mxu0
        %v3783 = vadd.f32 %v3670, %v3782
        %v3784 = vpop.f32.mrf.mxu0
        %v3785 = vadd.f32 %v3672, %v3784
        %v3786 = vpop.f32.mrf.mxu0
        %v3787 = vadd.f32 %v3674, %v3786
        %v3788 = vpop.f32.mrf.mxu0
        %v3789 = vadd.f32 %v3676, %v3788
        %3790 = vmatprep.mubr.bf16.mxu0 %v2315
        %3791 = vmatmul.mubr.bf16.gmra.mxu0 %v2314
        %v3792 = vpop.f32.mrf.mxu0
        %v3793 = vadd.f32 %v3680, %v3792
        %v3794 = vpop.f32.mrf.mxu0
        %v3795 = vadd.f32 %v3682, %v3794
        %v3796 = vpop.f32.mrf.mxu0
        %v3797 = vadd.f32 %v3684, %v3796
        %v3798 = vpop.f32.mrf.mxu0
        %v3799 = vadd.f32 %v3686, %v3798
        %3800 = vdwg.mxu0
        %v3929 = vunpack.c.l.b16 %v2452
        %v3930 = vunpack.c.h.b16 %v2452
        %v3931 = vunpack.c.l.b16 %v2453
        %v3932 = vunpack.c.h.b16 %v2453
        %v3933 = vunpack.c.l.b16 %v2454
        %v3934 = vunpack.c.h.b16 %v2454
        %v3935 = vunpack.c.l.b16 %v2455
        %v3936 = vunpack.c.h.b16 %v2455
        %v3937 = vunpack.c.l.b16 %v2456
        %v3938 = vunpack.c.h.b16 %v2456
        %v3939 = vunpack.c.l.b16 %v2457
        %v3940 = vunpack.c.h.b16 %v2457
        %v3941 = vunpack.c.l.b16 %v2458
        %v3942 = vunpack.c.h.b16 %v2458
        %v3943 = vunpack.c.l.b16 %v2459
        %v3944 = vunpack.c.h.b16 %v2459
        %v3945 = vunpack.c.l.b16 %v2460
        %v3946 = vunpack.c.h.b16 %v2460
        %v3947 = vunpack.c.l.b16 %v2461
        %v3948 = vunpack.c.h.b16 %v2461
        %v3949 = vunpack.c.l.b16 %v2462
        %v3950 = vunpack.c.h.b16 %v2462
        %v3951 = vunpack.c.l.b16 %v2463
        %v3952 = vunpack.c.h.b16 %v2463
        %v3953 = vunpack.c.l.b16 %v2464
        %v3954 = vunpack.c.h.b16 %v2464
        %v3955 = vunpack.c.l.b16 %v2465
        %v3956 = vunpack.c.h.b16 %v2465
        %v3957 = vunpack.c.l.b16 %v2466
        %v3958 = vunpack.c.h.b16 %v2466
        %v3959 = vunpack.c.l.b16 %v2467
        %v3960 = vunpack.c.h.b16 %v2467
        %v3961 = vunpack.c.l.b16 %v2468
        %v3962 = vunpack.c.h.b16 %v2468
        %v3963 = vunpack.c.l.b16 %v2469
        %v3964 = vunpack.c.h.b16 %v2469
        %v3965 = vunpack.c.l.b16 %v2470
        %v3966 = vunpack.c.h.b16 %v2470
        %v3967 = vunpack.c.l.b16 %v2471
        %v3968 = vunpack.c.h.b16 %v2471
        %v3969 = vunpack.c.l.b16 %v2472
        %v3970 = vunpack.c.h.b16 %v2472
        %v3971 = vunpack.c.l.b16 %v2473
        %v3972 = vunpack.c.h.b16 %v2473
        %v3973 = vunpack.c.l.b16 %v2474
        %v3974 = vunpack.c.h.b16 %v2474
        %v3975 = vunpack.c.l.b16 %v2475
        %v3976 = vunpack.c.h.b16 %v2475
        %v3977 = vunpack.c.l.b16 %v2476
        %v3978 = vunpack.c.h.b16 %v2476
        %v3979 = vunpack.c.l.b16 %v2477
        %v3980 = vunpack.c.h.b16 %v2477
        %v3981 = vunpack.c.l.b16 %v2478
        %v3982 = vunpack.c.h.b16 %v2478
        %v3983 = vunpack.c.l.b16 %v2479
        %v3984 = vunpack.c.h.b16 %v2479
        %v3985 = vunpack.c.l.b16 %v2480
        %v3986 = vunpack.c.h.b16 %v2480
        %v3987 = vunpack.c.l.b16 %v2481
        %v3988 = vunpack.c.h.b16 %v2481
        %v3989 = vunpack.c.l.b16 %v2482
        %v3990 = vunpack.c.h.b16 %v2482
        %v3991 = vunpack.c.l.b16 %v2483
        %v3992 = vunpack.c.h.b16 %v2483
        %v3993 = vunpack.c.l.b16 %v2484
        %v3994 = vunpack.c.h.b16 %v2484
        %v3995 = vunpack.c.l.b16 %v2485
        %v3996 = vunpack.c.h.b16 %v2485
        %v3997 = vunpack.c.l.b16 %v2486
        %v3998 = vunpack.c.h.b16 %v2486
        %v3999 = vunpack.c.l.b16 %v2487
        %v4000 = vunpack.c.h.b16 %v2487
        %v4001 = vunpack.c.l.b16 %v2488
        %v4002 = vunpack.c.h.b16 %v2488
        %v4003 = vunpack.c.l.b16 %v2489
        %v4004 = vunpack.c.h.b16 %v2489
        %v4005 = vunpack.c.l.b16 %v2490
        %v4006 = vunpack.c.h.b16 %v2490
        %v4007 = vunpack.c.l.b16 %v2491
        %v4008 = vunpack.c.h.b16 %v2491
        %v4009 = vunpack.c.l.b16 %v2492
        %v4010 = vunpack.c.h.b16 %v2492
        %v4011 = vunpack.c.l.b16 %v2493
        %v4012 = vunpack.c.h.b16 %v2493
        %v4013 = vunpack.c.l.b16 %v2494
        %v4014 = vunpack.c.h.b16 %v2494
        %v4015 = vunpack.c.l.b16 %v2495
        %v4016 = vunpack.c.h.b16 %v2495
        %v4017 = vunpack.c.l.b16 %v2496
        %v4018 = vunpack.c.h.b16 %v2496
        %v4019 = vunpack.c.l.b16 %v2497
        %v4020 = vunpack.c.h.b16 %v2497
        %v4021 = vunpack.c.l.b16 %v2498
        %v4022 = vunpack.c.h.b16 %v2498
        %v4023 = vunpack.c.l.b16 %v2499
        %v4024 = vunpack.c.h.b16 %v2499
        %v4025 = vunpack.c.l.b16 %v2500
        %v4026 = vunpack.c.h.b16 %v2500
        %v4027 = vunpack.c.l.b16 %v2501
        %v4028 = vunpack.c.h.b16 %v2501
        %v4029 = vunpack.c.l.b16 %v2502
        %v4030 = vunpack.c.h.b16 %v2502
        %v4031 = vunpack.c.l.b16 %v2503
        %v4032 = vunpack.c.h.b16 %v2503
        %v4033 = vunpack.c.l.b16 %v2504
        %v4034 = vunpack.c.h.b16 %v2504
        %v4035 = vunpack.c.l.b16 %v2505
        %v4036 = vunpack.c.h.b16 %v2505
        %v4037 = vunpack.c.l.b16 %v2506
        %v4038 = vunpack.c.h.b16 %v2506
        %v4039 = vunpack.c.l.b16 %v2507
        %v4040 = vunpack.c.h.b16 %v2507
        %v4041 = vunpack.c.l.b16 %v2508
        %v4042 = vunpack.c.h.b16 %v2508
        %v4043 = vunpack.c.l.b16 %v2509
        %v4044 = vunpack.c.h.b16 %v2509
        %v4045 = vunpack.c.l.b16 %v2510
        %v4046 = vunpack.c.h.b16 %v2510
        %v4047 = vunpack.c.l.b16 %v2511
        %v4048 = vunpack.c.h.b16 %v2511
        %v4049 = vunpack.c.l.b16 %v2512
        %v4050 = vunpack.c.h.b16 %v2512
        %v4051 = vunpack.c.l.b16 %v2513
        %v4052 = vunpack.c.h.b16 %v2513
        %v4053 = vunpack.c.l.b16 %v2514
        %v4054 = vunpack.c.h.b16 %v2514
        %v4055 = vunpack.c.l.b16 %v2515
        %v4056 = vunpack.c.h.b16 %v2515
        %v4057 = vunpack.c.l.b16 %v2516
        %v4058 = vunpack.c.h.b16 %v2516
        %v4059 = vunpack.c.l.b16 %v2517
        %v4060 = vunpack.c.h.b16 %v2517
        %v4061 = vunpack.c.l.b16 %v2518
        %v4062 = vunpack.c.h.b16 %v2518
        %v4063 = vunpack.c.l.b16 %v2519
        %v4064 = vunpack.c.h.b16 %v2519
        %v4065 = vunpack.c.l.b16 %v2520
        %v4066 = vunpack.c.h.b16 %v2520
        %v4067 = vunpack.c.l.b16 %v2521
        %v4068 = vunpack.c.h.b16 %v2521
        %v4069 = vunpack.c.l.b16 %v2522
        %v4070 = vunpack.c.h.b16 %v2522
        %v4071 = vunpack.c.l.b16 %v2523
        %v4072 = vunpack.c.h.b16 %v2523
        %v4073 = vunpack.c.l.b16 %v2524
        %v4074 = vunpack.c.h.b16 %v2524
        %v4075 = vunpack.c.l.b16 %v2525
        %v4076 = vunpack.c.h.b16 %v2525
        %v4077 = vunpack.c.l.b16 %v2526
        %v4078 = vunpack.c.h.b16 %v2526
        %v4079 = vunpack.c.l.b16 %v2527
        %v4080 = vunpack.c.h.b16 %v2527
        %v4081 = vunpack.c.l.b16 %v2528
        %v4082 = vunpack.c.h.b16 %v2528
        %v4083 = vunpack.c.l.b16 %v2529
        %v4084 = vunpack.c.h.b16 %v2529
        %v4085 = vunpack.c.l.b16 %v2530
        %v4086 = vunpack.c.h.b16 %v2530
        %v4087 = vunpack.c.l.b16 %v2531
        %v4088 = vunpack.c.h.b16 %v2531
        %v4089 = vunpack.c.l.b16 %v2532
        %v4090 = vunpack.c.h.b16 %v2532
        %v4091 = vunpack.c.l.b16 %v2533
        %v4092 = vunpack.c.h.b16 %v2533
        %v4093 = vunpack.c.l.b16 %v2534
        %v4094 = vunpack.c.h.b16 %v2534
        %v4095 = vunpack.c.l.b16 %v2535
        %v4096 = vunpack.c.h.b16 %v2535
        %v4097 = vunpack.c.l.b16 %v2536
        %v4098 = vunpack.c.h.b16 %v2536
        %v4099 = vunpack.c.l.b16 %v2537
        %v4100 = vunpack.c.h.b16 %v2537
        %v4101 = vunpack.c.l.b16 %v2538
        %v4102 = vunpack.c.h.b16 %v2538
        %v4103 = vunpack.c.l.b16 %v2539
        %v4104 = vunpack.c.h.b16 %v2539
        %v4105 = vunpack.c.l.b16 %v2540
        %v4106 = vunpack.c.h.b16 %v2540
        %v4107 = vunpack.c.l.b16 %v2541
        %v4108 = vunpack.c.h.b16 %v2541
        %v4109 = vunpack.c.l.b16 %v2542
        %v4110 = vunpack.c.h.b16 %v2542
        %v4111 = vunpack.c.l.b16 %v2543
        %v4112 = vunpack.c.h.b16 %v2543
        %v4113 = vunpack.c.l.b16 %v2544
        %v4114 = vunpack.c.h.b16 %v2544
        %v4115 = vunpack.c.l.b16 %v2545
        %v4116 = vunpack.c.h.b16 %v2545
        %v4117 = vunpack.c.l.b16 %v2546
        %v4118 = vunpack.c.h.b16 %v2546
        %v4119 = vunpack.c.l.b16 %v2547
        %v4120 = vunpack.c.h.b16 %v2547
        %v4121 = vunpack.c.l.b16 %v2548
        %v4122 = vunpack.c.h.b16 %v2548
        %v4123 = vunpack.c.l.b16 %v2549
        %v4124 = vunpack.c.h.b16 %v2549
        %v4125 = vunpack.c.l.b16 %v2550
        %v4126 = vunpack.c.h.b16 %v2550
        %v4127 = vunpack.c.l.b16 %v2551
        %v4128 = vunpack.c.h.b16 %v2551
        %v4129 = vunpack.c.l.b16 %v2552
        %v4130 = vunpack.c.h.b16 %v2552
        %v4131 = vunpack.c.l.b16 %v2553
        %v4132 = vunpack.c.h.b16 %v2553
        %v4133 = vunpack.c.l.b16 %v2554
        %v4134 = vunpack.c.h.b16 %v2554
        %v4135 = vunpack.c.l.b16 %v2555
        %v4136 = vunpack.c.h.b16 %v2555
        %v4137 = vunpack.c.l.b16 %v2556
        %v4138 = vunpack.c.h.b16 %v2556
        %v4139 = vunpack.c.l.b16 %v2557
        %v4140 = vunpack.c.h.b16 %v2557
        %v4141 = vunpack.c.l.b16 %v2558
        %v4142 = vunpack.c.h.b16 %v2558
        %v4143 = vunpack.c.l.b16 %v2559
        %v4144 = vunpack.c.h.b16 %v2559
        %v4145 = vunpack.c.l.b16 %v2560
        %v4146 = vunpack.c.h.b16 %v2560
        %v4147 = vunpack.c.l.b16 %v2561
        %v4148 = vunpack.c.h.b16 %v2561
        %v4149 = vunpack.c.l.b16 %v2562
        %v4150 = vunpack.c.h.b16 %v2562
        %v4151 = vunpack.c.l.b16 %v2563
        %v4152 = vunpack.c.h.b16 %v2563
        %v4153 = vunpack.c.l.b16 %v2564
        %v4154 = vunpack.c.h.b16 %v2564
        %v4155 = vunpack.c.l.b16 %v2565
        %v4156 = vunpack.c.h.b16 %v2565
        %v4157 = vunpack.c.l.b16 %v2566
        %v4158 = vunpack.c.h.b16 %v2566
        %v4159 = vunpack.c.l.b16 %v2567
        %v4160 = vunpack.c.h.b16 %v2567
        %v4161 = vunpack.c.l.b16 %v2568
        %v4162 = vunpack.c.h.b16 %v2568
        %v4163 = vunpack.c.l.b16 %v2569
        %v4164 = vunpack.c.h.b16 %v2569
        %v4165 = vunpack.c.l.b16 %v2570
        %v4166 = vunpack.c.h.b16 %v2570
        %v4167 = vunpack.c.l.b16 %v2571
        %v4168 = vunpack.c.h.b16 %v2571
        %v4169 = vunpack.c.l.b16 %v2572
        %v4170 = vunpack.c.h.b16 %v2572
        %v4171 = vunpack.c.l.b16 %v2573
        %v4172 = vunpack.c.h.b16 %v2573
        %v4173 = vunpack.c.l.b16 %v2574
        %v4174 = vunpack.c.h.b16 %v2574
        %v4175 = vunpack.c.l.b16 %v2575
        %v4176 = vunpack.c.h.b16 %v2575
        %v4177 = vunpack.c.l.b16 %v2576
        %v4178 = vunpack.c.h.b16 %v2576
        %v4179 = vunpack.c.l.b16 %v2577
        %v4180 = vunpack.c.h.b16 %v2577
        %v4181 = vunpack.c.l.b16 %v2578
        %v4182 = vunpack.c.h.b16 %v2578
        %v4183 = vunpack.c.l.b16 %v2579
        %v4184 = vunpack.c.h.b16 %v2579
        %v4185 = vpack.c.b16 %v3933, %v3929
        %v4186 = vpack.c.b16 %v3934, %v3930
        %v4187 = vpack.c.b16 %v3935, %v3931
        %v4188 = vpack.c.b16 %v3936, %v3932
        %v4189 = vpack.c.b16 %v3941, %v3937
        %v4190 = vpack.c.b16 %v3942, %v3938
        %v4191 = vpack.c.b16 %v3943, %v3939
        %v4192 = vpack.c.b16 %v3944, %v3940
        %v4193 = vpack.c.b16 %v3949, %v3945
        %v4194 = vpack.c.b16 %v3950, %v3946
        %v4195 = vpack.c.b16 %v3951, %v3947
        %v4196 = vpack.c.b16 %v3952, %v3948
        %v4197 = vpack.c.b16 %v3957, %v3953
        %v4198 = vpack.c.b16 %v3958, %v3954
        %v4199 = vpack.c.b16 %v3959, %v3955
        %v4200 = vpack.c.b16 %v3960, %v3956
        %v4201 = vpack.c.b16 %v3965, %v3961
        %v4202 = vpack.c.b16 %v3966, %v3962
        %v4203 = vpack.c.b16 %v3967, %v3963
        %v4204 = vpack.c.b16 %v3968, %v3964
        %v4205 = vpack.c.b16 %v3973, %v3969
        %v4206 = vpack.c.b16 %v3974, %v3970
        %v4207 = vpack.c.b16 %v3975, %v3971
        %v4208 = vpack.c.b16 %v3976, %v3972
        %v4209 = vpack.c.b16 %v3981, %v3977
        %v4210 = vpack.c.b16 %v3982, %v3978
        %v4211 = vpack.c.b16 %v3983, %v3979
        %v4212 = vpack.c.b16 %v3984, %v3980
        %v4213 = vpack.c.b16 %v3989, %v3985
        %v4214 = vpack.c.b16 %v3990, %v3986
        %v4215 = vpack.c.b16 %v3991, %v3987
        %v4216 = vpack.c.b16 %v3992, %v3988
        %v4217 = vpack.c.b16 %v3997, %v3993
        %v4218 = vpack.c.b16 %v3998, %v3994
        %v4219 = vpack.c.b16 %v3999, %v3995
        %v4220 = vpack.c.b16 %v4000, %v3996
        %v4221 = vpack.c.b16 %v4005, %v4001
        %v4222 = vpack.c.b16 %v4006, %v4002
        %v4223 = vpack.c.b16 %v4007, %v4003
        %v4224 = vpack.c.b16 %v4008, %v4004
        %v4225 = vpack.c.b16 %v4013, %v4009
        %v4226 = vpack.c.b16 %v4014, %v4010
        %v4227 = vpack.c.b16 %v4015, %v4011
        %v4228 = vpack.c.b16 %v4016, %v4012
        %v4229 = vpack.c.b16 %v4021, %v4017
        %v4230 = vpack.c.b16 %v4022, %v4018
        %v4231 = vpack.c.b16 %v4023, %v4019
        %v4232 = vpack.c.b16 %v4024, %v4020
        %v4233 = vpack.c.b16 %v4029, %v4025
        %v4234 = vpack.c.b16 %v4030, %v4026
        %v4235 = vpack.c.b16 %v4031, %v4027
        %v4236 = vpack.c.b16 %v4032, %v4028
        %v4237 = vpack.c.b16 %v4037, %v4033
        %v4238 = vpack.c.b16 %v4038, %v4034
        %v4239 = vpack.c.b16 %v4039, %v4035
        %v4240 = vpack.c.b16 %v4040, %v4036
        %v4241 = vpack.c.b16 %v4045, %v4041
        %v4242 = vpack.c.b16 %v4046, %v4042
        %v4243 = vpack.c.b16 %v4047, %v4043
        %v4244 = vpack.c.b16 %v4048, %v4044
        %v4245 = vpack.c.b16 %v4053, %v4049
        %v4246 = vpack.c.b16 %v4054, %v4050
        %v4247 = vpack.c.b16 %v4055, %v4051
        %v4248 = vpack.c.b16 %v4056, %v4052
        %v4249 = vpack.c.b16 %v4061, %v4057
        %v4250 = vpack.c.b16 %v4062, %v4058
        %v4251 = vpack.c.b16 %v4063, %v4059
        %v4252 = vpack.c.b16 %v4064, %v4060
        %v4253 = vpack.c.b16 %v4069, %v4065
        %v4254 = vpack.c.b16 %v4070, %v4066
        %v4255 = vpack.c.b16 %v4071, %v4067
        %v4256 = vpack.c.b16 %v4072, %v4068
        %v4257 = vpack.c.b16 %v4077, %v4073
        %v4258 = vpack.c.b16 %v4078, %v4074
        %v4259 = vpack.c.b16 %v4079, %v4075
        %v4260 = vpack.c.b16 %v4080, %v4076
        %v4261 = vpack.c.b16 %v4085, %v4081
        %v4262 = vpack.c.b16 %v4086, %v4082
        %v4263 = vpack.c.b16 %v4087, %v4083
        %v4264 = vpack.c.b16 %v4088, %v4084
        %v4265 = vpack.c.b16 %v4093, %v4089
        %v4266 = vpack.c.b16 %v4094, %v4090
        %v4267 = vpack.c.b16 %v4095, %v4091
        %v4268 = vpack.c.b16 %v4096, %v4092
        %v4269 = vpack.c.b16 %v4101, %v4097
        %v4270 = vpack.c.b16 %v4102, %v4098
        %v4271 = vpack.c.b16 %v4103, %v4099
        %v4272 = vpack.c.b16 %v4104, %v4100
        %v4273 = vpack.c.b16 %v4109, %v4105
        %v4274 = vpack.c.b16 %v4110, %v4106
        %v4275 = vpack.c.b16 %v4111, %v4107
        %v4276 = vpack.c.b16 %v4112, %v4108
        %v4277 = vpack.c.b16 %v4117, %v4113
        %v4278 = vpack.c.b16 %v4118, %v4114
        %v4279 = vpack.c.b16 %v4119, %v4115
        %v4280 = vpack.c.b16 %v4120, %v4116
        %v4281 = vpack.c.b16 %v4125, %v4121
        %v4282 = vpack.c.b16 %v4126, %v4122
        %v4283 = vpack.c.b16 %v4127, %v4123
        %v4284 = vpack.c.b16 %v4128, %v4124
        %v4285 = vpack.c.b16 %v4133, %v4129
        %v4286 = vpack.c.b16 %v4134, %v4130
        %v4287 = vpack.c.b16 %v4135, %v4131
        %v4288 = vpack.c.b16 %v4136, %v4132
        %v4289 = vpack.c.b16 %v4141, %v4137
        %v4290 = vpack.c.b16 %v4142, %v4138
        %v4291 = vpack.c.b16 %v4143, %v4139
        %v4292 = vpack.c.b16 %v4144, %v4140
        %v4293 = vpack.c.b16 %v4149, %v4145
        %v4294 = vpack.c.b16 %v4150, %v4146
        %v4295 = vpack.c.b16 %v4151, %v4147
        %v4296 = vpack.c.b16 %v4152, %v4148
        %v4297 = vpack.c.b16 %v4157, %v4153
        %v4298 = vpack.c.b16 %v4158, %v4154
        %v4299 = vpack.c.b16 %v4159, %v4155
        %v4300 = vpack.c.b16 %v4160, %v4156
        %v4301 = vpack.c.b16 %v4165, %v4161
        %v4302 = vpack.c.b16 %v4166, %v4162
        %v4303 = vpack.c.b16 %v4167, %v4163
        %v4304 = vpack.c.b16 %v4168, %v4164
        %v4305 = vpack.c.b16 %v4173, %v4169
        %v4306 = vpack.c.b16 %v4174, %v4170
        %v4307 = vpack.c.b16 %v4175, %v4171
        %v4308 = vpack.c.b16 %v4176, %v4172
        %v4309 = vpack.c.b16 %v4181, %v4177
        %v4310 = vpack.c.b16 %v4182, %v4178
        %v4311 = vpack.c.b16 %v4183, %v4179
        %v4312 = vpack.c.b16 %v4184, %v4180
        %4441 = vmatprep.subr.bf16.mxu0 %v4214
        %4442 = vmatpush1.bf16.msra.mxu0 %v4213
        %4443 = vmatprep.subr.bf16.mxu0 %v4210
        %4444 = vmatpush1.bf16.msra.mxu0 %v4209
        %4445 = vmatprep.subr.bf16.mxu0 %v4206
        %4446 = vmatpush1.bf16.msra.mxu0 %v4205
        %4447 = vmatprep.subr.bf16.mxu0 %v4202
        %4448 = vmatpush1.bf16.msra.mxu0 %v4201
        %4449 = vmatprep.subr.bf16.mxu0 %v4198
        %4450 = vmatpush1.bf16.msra.mxu0 %v4197
        %4451 = vmatprep.subr.bf16.mxu0 %v4194
        %4452 = vmatpush1.bf16.msra.mxu0 %v4193
        %4453 = vmatprep.subr.bf16.mxu0 %v4190
        %4454 = vmatpush1.bf16.msra.mxu0 %v4189
        %4455 = vmatprep.subr.bf16.mxu0 %v4186
        %4456 = vmatpush1.bf16.msra.mxu0 %v4185
        %4457 = vmatprep.subr.bf16.mxu0 %v4246
        %4458 = vmatpush2.bf16.msra.mxu0 %v4245
        %4459 = vmatprep.subr.bf16.mxu0 %v4242
        %4460 = vmatpush2.bf16.msra.mxu0 %v4241
        %4461 = vmatprep.subr.bf16.mxu0 %v4238
        %4462 = vmatpush2.bf16.msra.mxu0 %v4237
        %4463 = vmatprep.subr.bf16.mxu0 %v4234
        %4464 = vmatpush2.bf16.msra.mxu0 %v4233
        %4465 = vmatprep.subr.bf16.mxu0 %v4230
        %4466 = vmatpush2.bf16.msra.mxu0 %v4229
        %4467 = vmatprep.subr.bf16.mxu0 %v4226
        %4468 = vmatpush2.bf16.msra.mxu0 %v4225
        %4469 = vmatprep.subr.bf16.mxu0 %v4222
        %4470 = vmatpush2.bf16.msra.mxu0 %v4221
        %4471 = vmatprep.subr.bf16.mxu0 %v4218
        %4472 = vmatpush2.bf16.msra.mxu0 %v4217
        %4473 = vmatprep.mubr.bf16.mxu0 %v2253
        %4474 = vmatmul.mubr.bf16.gmra.mxu0 %v2252
        %v4475 = vpop.f32.mrf.mxu0
        %v4476 = vadd.f32 %v3497, %v4475
        %v4477 = vpop.f32.mrf.mxu0
        %v4478 = vadd.f32 %v3499, %v4477
        %v4479 = vpop.f32.mrf.mxu0
        %v4480 = vadd.f32 %v3501, %v4479
        %v4481 = vpop.f32.mrf.mxu0
        %v4482 = vadd.f32 %v3503, %v4481
        %4483 = vmatprep.mubr.bf16.mxu0 %v2257
        %4484 = vmatmul.mubr.bf16.gmra.mxu0 %v2256
        %v4485 = vpop.f32.mrf.mxu0
        %v4486 = vadd.f32 %v3507, %v4485
        %v4487 = vpop.f32.mrf.mxu0
        %v4488 = vadd.f32 %v3509, %v4487
        %v4489 = vpop.f32.mrf.mxu0
        %v4490 = vadd.f32 %v3511, %v4489
        %v4491 = vpop.f32.mrf.mxu0
        %v4492 = vadd.f32 %v3513, %v4491
        %4493 = vmatprep.mubr.bf16.mxu0 %v2261
        %4494 = vmatmul.mubr.bf16.gmra.mxu0 %v2260
        %v4495 = vpop.f32.mrf.mxu0
        %v4496 = vadd.f32 %v3517, %v4495
        %v4497 = vpop.f32.mrf.mxu0
        %v4498 = vadd.f32 %v3519, %v4497
        %v4499 = vpop.f32.mrf.mxu0
        %v4500 = vadd.f32 %v3521, %v4499
        %v4501 = vpop.f32.mrf.mxu0
        %v4502 = vadd.f32 %v3523, %v4501
        %4503 = vmatprep.mubr.bf16.mxu0 %v2265
        %4504 = vmatmul.mubr.bf16.gmra.mxu0 %v2264
        %v4505 = vpop.f32.mrf.mxu0
        %v4506 = vadd.f32 %v3527, %v4505
        %v4507 = vpop.f32.mrf.mxu0
        %v4508 = vadd.f32 %v3529, %v4507
        %v4509 = vpop.f32.mrf.mxu0
        %v4510 = vadd.f32 %v3531, %v4509
        %v4511 = vpop.f32.mrf.mxu0
        %v4512 = vadd.f32 %v3533, %v4511
        %4513 = vmatprep.mubr.bf16.mxu0 %v2269
        %4514 = vmatmul.mubr.bf16.gmra.mxu0 %v2268
        %v4515 = vpop.f32.mrf.mxu0
        %v4516 = vadd.f32 %v3537, %v4515
        %v4517 = vpop.f32.mrf.mxu0
        %v4518 = vadd.f32 %v3539, %v4517
        %v4519 = vpop.f32.mrf.mxu0
        %v4520 = vadd.f32 %v3541, %v4519
        %v4521 = vpop.f32.mrf.mxu0
        %v4522 = vadd.f32 %v3543, %v4521
        %4523 = vmatprep.mubr.bf16.mxu0 %v2273
        %4524 = vmatmul.mubr.bf16.gmra.mxu0 %v2272
        %v4525 = vpop.f32.mrf.mxu0
        %v4526 = vadd.f32 %v3547, %v4525
        %v4527 = vpop.f32.mrf.mxu0
        %v4528 = vadd.f32 %v3549, %v4527
        %v4529 = vpop.f32.mrf.mxu0
        %v4530 = vadd.f32 %v3551, %v4529
        %v4531 = vpop.f32.mrf.mxu0
        %v4532 = vadd.f32 %v3553, %v4531
        %4533 = vmatprep.mubr.bf16.mxu0 %v2277
        %4534 = vmatmul.mubr.bf16.gmra.mxu0 %v2276
        %v4535 = vpop.f32.mrf.mxu0
        %v4536 = vadd.f32 %v3557, %v4535
        %v4537 = vpop.f32.mrf.mxu0
        %v4538 = vadd.f32 %v3559, %v4537
        %v4539 = vpop.f32.mrf.mxu0
        %v4540 = vadd.f32 %v3561, %v4539
        %v4541 = vpop.f32.mrf.mxu0
        %v4542 = vadd.f32 %v3563, %v4541
        %4543 = vmatprep.mubr.bf16.mxu0 %v2281
        %4544 = vmatmul.mubr.bf16.gmra.mxu0 %v2280
        %v4545 = vpop.f32.mrf.mxu0
        %v4546 = vadd.f32 %v3567, %v4545
        %v4547 = vpop.f32.mrf.mxu0
        %v4548 = vadd.f32 %v3569, %v4547
        %v4549 = vpop.f32.mrf.mxu0
        %v4550 = vadd.f32 %v3571, %v4549
        %v4551 = vpop.f32.mrf.mxu0
        %v4552 = vadd.f32 %v3573, %v4551
        %4553 = vdwg.mxu0
        %4554 = vmatprep.subr.bf16.mxu0 %v4278
        %4555 = vmatpush1.bf16.msra.mxu0 %v4277
        %4556 = vmatprep.subr.bf16.mxu0 %v4274
        %4557 = vmatpush1.bf16.msra.mxu0 %v4273
        %4558 = vmatprep.subr.bf16.mxu0 %v4270
        %4559 = vmatpush1.bf16.msra.mxu0 %v4269
        %4560 = vmatprep.subr.bf16.mxu0 %v4266
        %4561 = vmatpush1.bf16.msra.mxu0 %v4265
        %4562 = vmatprep.subr.bf16.mxu0 %v4262
        %4563 = vmatpush1.bf16.msra.mxu0 %v4261
        %4564 = vmatprep.subr.bf16.mxu0 %v4258
        %4565 = vmatpush1.bf16.msra.mxu0 %v4257
        %4566 = vmatprep.subr.bf16.mxu0 %v4254
        %4567 = vmatpush1.bf16.msra.mxu0 %v4253
        %4568 = vmatprep.subr.bf16.mxu0 %v4250
        %4569 = vmatpush1.bf16.msra.mxu0 %v4249
        %4570 = vmatprep.subr.bf16.mxu0 %v4310
        %4571 = vmatpush2.bf16.msra.mxu0 %v4309
        %4572 = vmatprep.subr.bf16.mxu0 %v4306
        %4573 = vmatpush2.bf16.msra.mxu0 %v4305
        %4574 = vmatprep.subr.bf16.mxu0 %v4302
        %4575 = vmatpush2.bf16.msra.mxu0 %v4301
        %4576 = vmatprep.subr.bf16.mxu0 %v4298
        %4577 = vmatpush2.bf16.msra.mxu0 %v4297
        %4578 = vmatprep.subr.bf16.mxu0 %v4294
        %4579 = vmatpush2.bf16.msra.mxu0 %v4293
        %4580 = vmatprep.subr.bf16.mxu0 %v4290
        %4581 = vmatpush2.bf16.msra.mxu0 %v4289
        %4582 = vmatprep.subr.bf16.mxu0 %v4286
        %4583 = vmatpush2.bf16.msra.mxu0 %v4285
        %4584 = vmatprep.subr.bf16.mxu0 %v4282
        %4585 = vmatpush2.bf16.msra.mxu0 %v4281
        %4586 = vmatprep.mubr.bf16.mxu0 %v2255
        %4587 = vmatmul.mubr.bf16.gmra.mxu0 %v2254
        %v4588 = vpop.f32.mrf.mxu0
        %v4589 = vadd.f32 %v4476, %v4588
        %v4590 = vpop.f32.mrf.mxu0
        %v4591 = vadd.f32 %v4478, %v4590
        %v4592 = vpop.f32.mrf.mxu0
        %v4593 = vadd.f32 %v4480, %v4592
        %v4594 = vpop.f32.mrf.mxu0
        %v4595 = vadd.f32 %v4482, %v4594
        %4596 = vmatprep.mubr.bf16.mxu0 %v2259
        %4597 = vmatmul.mubr.bf16.gmra.mxu0 %v2258
        %v4598 = vpop.f32.mrf.mxu0
        %v4599 = vadd.f32 %v4486, %v4598
        %v4600 = vpop.f32.mrf.mxu0
        %v4601 = vadd.f32 %v4488, %v4600
        %v4602 = vpop.f32.mrf.mxu0
        %v4603 = vadd.f32 %v4490, %v4602
        %v4604 = vpop.f32.mrf.mxu0
        %v4605 = vadd.f32 %v4492, %v4604
        %4606 = vmatprep.mubr.bf16.mxu0 %v2263
        %4607 = vmatmul.mubr.bf16.gmra.mxu0 %v2262
        %v4608 = vpop.f32.mrf.mxu0
        %v4609 = vadd.f32 %v4496, %v4608
        %v4610 = vpop.f32.mrf.mxu0
        %v4611 = vadd.f32 %v4498, %v4610
        %v4612 = vpop.f32.mrf.mxu0
        %v4613 = vadd.f32 %v4500, %v4612
        %v4614 = vpop.f32.mrf.mxu0
        %v4615 = vadd.f32 %v4502, %v4614
        %4616 = vmatprep.mubr.bf16.mxu0 %v2267
        %4617 = vmatmul.mubr.bf16.gmra.mxu0 %v2266
        %v4618 = vpop.f32.mrf.mxu0
        %v4619 = vadd.f32 %v4506, %v4618
        %v4620 = vpop.f32.mrf.mxu0
        %v4621 = vadd.f32 %v4508, %v4620
        %v4622 = vpop.f32.mrf.mxu0
        %v4623 = vadd.f32 %v4510, %v4622
        %v4624 = vpop.f32.mrf.mxu0
        %v4625 = vadd.f32 %v4512, %v4624
        %4626 = vmatprep.mubr.bf16.mxu0 %v2271
        %4627 = vmatmul.mubr.bf16.gmra.mxu0 %v2270
        %v4628 = vpop.f32.mrf.mxu0
        %v4629 = vadd.f32 %v4516, %v4628
        %v4630 = vpop.f32.mrf.mxu0
        %v4631 = vadd.f32 %v4518, %v4630
        %v4632 = vpop.f32.mrf.mxu0
        %v4633 = vadd.f32 %v4520, %v4632
        %v4634 = vpop.f32.mrf.mxu0
        %v4635 = vadd.f32 %v4522, %v4634
        %4636 = vmatprep.mubr.bf16.mxu0 %v2275
        %4637 = vmatmul.mubr.bf16.gmra.mxu0 %v2274
        %v4638 = vpop.f32.mrf.mxu0
        %v4639 = vadd.f32 %v4526, %v4638
        %v4640 = vpop.f32.mrf.mxu0
        %v4641 = vadd.f32 %v4528, %v4640
        %v4642 = vpop.f32.mrf.mxu0
        %v4643 = vadd.f32 %v4530, %v4642
        %v4644 = vpop.f32.mrf.mxu0
        %v4645 = vadd.f32 %v4532, %v4644
        %4646 = vmatprep.mubr.bf16.mxu0 %v2279
        %4647 = vmatmul.mubr.bf16.gmra.mxu0 %v2278
        %v4648 = vpop.f32.mrf.mxu0
        %v4649 = vadd.f32 %v4536, %v4648
        %v4650 = vpop.f32.mrf.mxu0
        %v4651 = vadd.f32 %v4538, %v4650
        %v4652 = vpop.f32.mrf.mxu0
        %v4653 = vadd.f32 %v4540, %v4652
        %v4654 = vpop.f32.mrf.mxu0
        %v4655 = vadd.f32 %v4542, %v4654
        %4656 = vmatprep.mubr.bf16.mxu0 %v2283
        %4657 = vmatmul.mubr.bf16.gmra.mxu0 %v2282
        %v4658 = vpop.f32.mrf.mxu0
        %v4659 = vadd.f32 %v4546, %v4658
        %v4660 = vpop.f32.mrf.mxu0
        %v4661 = vadd.f32 %v4548, %v4660
        %v4662 = vpop.f32.mrf.mxu0
        %v4663 = vadd.f32 %v4550, %v4662
        %v4664 = vpop.f32.mrf.mxu0
        %v4665 = vadd.f32 %v4552, %v4664
        %4666 = vdwg.mxu0
        %4667 = vmatprep.subr.bf16.mxu0 %v4216
        %4668 = vmatpush1.bf16.msra.mxu0 %v4215
        %4669 = vmatprep.subr.bf16.mxu0 %v4212
        %4670 = vmatpush1.bf16.msra.mxu0 %v4211
        %4671 = vmatprep.subr.bf16.mxu0 %v4208
        %4672 = vmatpush1.bf16.msra.mxu0 %v4207
        %4673 = vmatprep.subr.bf16.mxu0 %v4204
        %4674 = vmatpush1.bf16.msra.mxu0 %v4203
        %4675 = vmatprep.subr.bf16.mxu0 %v4200
        %4676 = vmatpush1.bf16.msra.mxu0 %v4199
        %4677 = vmatprep.subr.bf16.mxu0 %v4196
        %4678 = vmatpush1.bf16.msra.mxu0 %v4195
        %4679 = vmatprep.subr.bf16.mxu0 %v4192
        %4680 = vmatpush1.bf16.msra.mxu0 %v4191
        %4681 = vmatprep.subr.bf16.mxu0 %v4188
        %4682 = vmatpush1.bf16.msra.mxu0 %v4187
        %4683 = vmatprep.subr.bf16.mxu0 %v4248
        %4684 = vmatpush2.bf16.msra.mxu0 %v4247
        %4685 = vmatprep.subr.bf16.mxu0 %v4244
        %4686 = vmatpush2.bf16.msra.mxu0 %v4243
        %4687 = vmatprep.subr.bf16.mxu0 %v4240
        %4688 = vmatpush2.bf16.msra.mxu0 %v4239
        %4689 = vmatprep.subr.bf16.mxu0 %v4236
        %4690 = vmatpush2.bf16.msra.mxu0 %v4235
        %4691 = vmatprep.subr.bf16.mxu0 %v4232
        %4692 = vmatpush2.bf16.msra.mxu0 %v4231
        %4693 = vmatprep.subr.bf16.mxu0 %v4228
        %4694 = vmatpush2.bf16.msra.mxu0 %v4227
        %4695 = vmatprep.subr.bf16.mxu0 %v4224
        %4696 = vmatpush2.bf16.msra.mxu0 %v4223
        %4697 = vmatprep.subr.bf16.mxu0 %v4220
        %4698 = vmatpush2.bf16.msra.mxu0 %v4219
        %4699 = vmatprep.mubr.bf16.mxu0 %v2253
        %4700 = vmatmul.mubr.bf16.gmra.mxu0 %v2252
        %v4701 = vpop.f32.mrf.mxu0
        %v4702 = vadd.f32 %v3723, %v4701
        %v4703 = vpop.f32.mrf.mxu0
        %v4704 = vadd.f32 %v3725, %v4703
        %v4705 = vpop.f32.mrf.mxu0
        %v4706 = vadd.f32 %v3727, %v4705
        %v4707 = vpop.f32.mrf.mxu0
        %v4708 = vadd.f32 %v3729, %v4707
        %4709 = vmatprep.mubr.bf16.mxu0 %v2257
        %4710 = vmatmul.mubr.bf16.gmra.mxu0 %v2256
        %v4711 = vpop.f32.mrf.mxu0
        %v4712 = vadd.f32 %v3733, %v4711
        %v4713 = vpop.f32.mrf.mxu0
        %v4714 = vadd.f32 %v3735, %v4713
        %v4715 = vpop.f32.mrf.mxu0
        %v4716 = vadd.f32 %v3737, %v4715
        %v4717 = vpop.f32.mrf.mxu0
        %v4718 = vadd.f32 %v3739, %v4717
        %4719 = vmatprep.mubr.bf16.mxu0 %v2261
        %4720 = vmatmul.mubr.bf16.gmra.mxu0 %v2260
        %v4721 = vpop.f32.mrf.mxu0
        %v4722 = vadd.f32 %v3743, %v4721
        %v4723 = vpop.f32.mrf.mxu0
        %v4724 = vadd.f32 %v3745, %v4723
        %v4725 = vpop.f32.mrf.mxu0
        %v4726 = vadd.f32 %v3747, %v4725
        %v4727 = vpop.f32.mrf.mxu0
        %v4728 = vadd.f32 %v3749, %v4727
        %4729 = vmatprep.mubr.bf16.mxu0 %v2265
        %4730 = vmatmul.mubr.bf16.gmra.mxu0 %v2264
        %v4731 = vpop.f32.mrf.mxu0
        %v4732 = vadd.f32 %v3753, %v4731
        %v4733 = vpop.f32.mrf.mxu0
        %v4734 = vadd.f32 %v3755, %v4733
        %v4735 = vpop.f32.mrf.mxu0
        %v4736 = vadd.f32 %v3757, %v4735
        %v4737 = vpop.f32.mrf.mxu0
        %v4738 = vadd.f32 %v3759, %v4737
        %4739 = vmatprep.mubr.bf16.mxu0 %v2269
        %4740 = vmatmul.mubr.bf16.gmra.mxu0 %v2268
        %v4741 = vpop.f32.mrf.mxu0
        %v4742 = vadd.f32 %v3763, %v4741
        %v4743 = vpop.f32.mrf.mxu0
        %v4744 = vadd.f32 %v3765, %v4743
        %v4745 = vpop.f32.mrf.mxu0
        %v4746 = vadd.f32 %v3767, %v4745
        %v4747 = vpop.f32.mrf.mxu0
        %v4748 = vadd.f32 %v3769, %v4747
        %4749 = vmatprep.mubr.bf16.mxu0 %v2273
        %4750 = vmatmul.mubr.bf16.gmra.mxu0 %v2272
        %v4751 = vpop.f32.mrf.mxu0
        %v4752 = vadd.f32 %v3773, %v4751
        %v4753 = vpop.f32.mrf.mxu0
        %v4754 = vadd.f32 %v3775, %v4753
        %v4755 = vpop.f32.mrf.mxu0
        %v4756 = vadd.f32 %v3777, %v4755
        %v4757 = vpop.f32.mrf.mxu0
        %v4758 = vadd.f32 %v3779, %v4757
        %4759 = vmatprep.mubr.bf16.mxu0 %v2277
        %4760 = vmatmul.mubr.bf16.gmra.mxu0 %v2276
        %v4761 = vpop.f32.mrf.mxu0
        %v4762 = vadd.f32 %v3783, %v4761
        %v4763 = vpop.f32.mrf.mxu0
        %v4764 = vadd.f32 %v3785, %v4763
        %v4765 = vpop.f32.mrf.mxu0
        %v4766 = vadd.f32 %v3787, %v4765
        %v4767 = vpop.f32.mrf.mxu0
        %v4768 = vadd.f32 %v3789, %v4767
        %4769 = vmatprep.mubr.bf16.mxu0 %v2281
        %4770 = vmatmul.mubr.bf16.gmra.mxu0 %v2280
        %v4771 = vpop.f32.mrf.mxu0
        %v4772 = vadd.f32 %v3793, %v4771
        %v4773 = vpop.f32.mrf.mxu0
        %v4774 = vadd.f32 %v3795, %v4773
        %v4775 = vpop.f32.mrf.mxu0
        %v4776 = vadd.f32 %v3797, %v4775
        %v4777 = vpop.f32.mrf.mxu0
        %v4778 = vadd.f32 %v3799, %v4777
        %4779 = vdwg.mxu0
        %4780 = vmatprep.subr.bf16.mxu0 %v4280
        %4781 = vmatpush1.bf16.msra.mxu0 %v4279
        %4782 = vmatprep.subr.bf16.mxu0 %v4276
        %4783 = vmatpush1.bf16.msra.mxu0 %v4275
        %4784 = vmatprep.subr.bf16.mxu0 %v4272
        %4785 = vmatpush1.bf16.msra.mxu0 %v4271
        %4786 = vmatprep.subr.bf16.mxu0 %v4268
        %4787 = vmatpush1.bf16.msra.mxu0 %v4267
        %4788 = vmatprep.subr.bf16.mxu0 %v4264
        %4789 = vmatpush1.bf16.msra.mxu0 %v4263
        %4790 = vmatprep.subr.bf16.mxu0 %v4260
        %4791 = vmatpush1.bf16.msra.mxu0 %v4259
        %4792 = vmatprep.subr.bf16.mxu0 %v4256
        %4793 = vmatpush1.bf16.msra.mxu0 %v4255
        %4794 = vmatprep.subr.bf16.mxu0 %v4252
        %4795 = vmatpush1.bf16.msra.mxu0 %v4251
        %4796 = vmatprep.subr.bf16.mxu0 %v4312
        %4797 = vmatpush2.bf16.msra.mxu0 %v4311
        %4798 = vmatprep.subr.bf16.mxu0 %v4308
        %4799 = vmatpush2.bf16.msra.mxu0 %v4307
        %4800 = vmatprep.subr.bf16.mxu0 %v4304
        %4801 = vmatpush2.bf16.msra.mxu0 %v4303
        %4802 = vmatprep.subr.bf16.mxu0 %v4300
        %4803 = vmatpush2.bf16.msra.mxu0 %v4299
        %4804 = vmatprep.subr.bf16.mxu0 %v4296
        %4805 = vmatpush2.bf16.msra.mxu0 %v4295
        %4806 = vmatprep.subr.bf16.mxu0 %v4292
        %4807 = vmatpush2.bf16.msra.mxu0 %v4291
        %4808 = vmatprep.subr.bf16.mxu0 %v4288
        %4809 = vmatpush2.bf16.msra.mxu0 %v4287
        %4810 = vmatprep.subr.bf16.mxu0 %v4284
        %4811 = vmatpush2.bf16.msra.mxu0 %v4283
        %4812 = vmatprep.mubr.bf16.mxu0 %v2255
        %4813 = vmatmul.mubr.bf16.gmra.mxu0 %v2254
        %v4814 = vpop.f32.mrf.mxu0
        %v4815 = vadd.f32 %v4702, %v4814
        %v4816 = vpop.f32.mrf.mxu0
        %v4817 = vadd.f32 %v4704, %v4816
        %v4818 = vpop.f32.mrf.mxu0
        %v4819 = vadd.f32 %v4706, %v4818
        %v4820 = vpop.f32.mrf.mxu0
        %v4821 = vadd.f32 %v4708, %v4820
        %4822 = vmatprep.mubr.bf16.mxu0 %v2259
        %4823 = vmatmul.mubr.bf16.gmra.mxu0 %v2258
        %v4824 = vpop.f32.mrf.mxu0
        %v4825 = vadd.f32 %v4712, %v4824
        %v4826 = vpop.f32.mrf.mxu0
        %v4827 = vadd.f32 %v4714, %v4826
        %v4828 = vpop.f32.mrf.mxu0
        %v4829 = vadd.f32 %v4716, %v4828
        %v4830 = vpop.f32.mrf.mxu0
        %v4831 = vadd.f32 %v4718, %v4830
        %4832 = vmatprep.mubr.bf16.mxu0 %v2263
        %4833 = vmatmul.mubr.bf16.gmra.mxu0 %v2262
        %v4834 = vpop.f32.mrf.mxu0
        %v4835 = vadd.f32 %v4722, %v4834
        %v4836 = vpop.f32.mrf.mxu0
        %v4837 = vadd.f32 %v4724, %v4836
        %v4838 = vpop.f32.mrf.mxu0
        %v4839 = vadd.f32 %v4726, %v4838
        %v4840 = vpop.f32.mrf.mxu0
        %v4841 = vadd.f32 %v4728, %v4840
        %4842 = vmatprep.mubr.bf16.mxu0 %v2267
        %4843 = vmatmul.mubr.bf16.gmra.mxu0 %v2266
        %v4844 = vpop.f32.mrf.mxu0
        %v4845 = vadd.f32 %v4732, %v4844
        %v4846 = vpop.f32.mrf.mxu0
        %v4847 = vadd.f32 %v4734, %v4846
        %v4848 = vpop.f32.mrf.mxu0
        %v4849 = vadd.f32 %v4736, %v4848
        %v4850 = vpop.f32.mrf.mxu0
        %v4851 = vadd.f32 %v4738, %v4850
        %4852 = vmatprep.mubr.bf16.mxu0 %v2271
        %4853 = vmatmul.mubr.bf16.gmra.mxu0 %v2270
        %v4854 = vpop.f32.mrf.mxu0
        %v4855 = vadd.f32 %v4742, %v4854
        %v4856 = vpop.f32.mrf.mxu0
        %v4857 = vadd.f32 %v4744, %v4856
        %v4858 = vpop.f32.mrf.mxu0
        %v4859 = vadd.f32 %v4746, %v4858
        %v4860 = vpop.f32.mrf.mxu0
        %v4861 = vadd.f32 %v4748, %v4860
        %4862 = vmatprep.mubr.bf16.mxu0 %v2275
        %4863 = vmatmul.mubr.bf16.gmra.mxu0 %v2274
        %v4864 = vpop.f32.mrf.mxu0
        %v4865 = vadd.f32 %v4752, %v4864
        %v4866 = vpop.f32.mrf.mxu0
        %v4867 = vadd.f32 %v4754, %v4866
        %v4868 = vpop.f32.mrf.mxu0
        %v4869 = vadd.f32 %v4756, %v4868
        %v4870 = vpop.f32.mrf.mxu0
        %v4871 = vadd.f32 %v4758, %v4870
        %4872 = vmatprep.mubr.bf16.mxu0 %v2279
        %4873 = vmatmul.mubr.bf16.gmra.mxu0 %v2278
        %v4874 = vpop.f32.mrf.mxu0
        %v4875 = vadd.f32 %v4762, %v4874
        %v4876 = vpop.f32.mrf.mxu0
        %v4877 = vadd.f32 %v4764, %v4876
        %v4878 = vpop.f32.mrf.mxu0
        %v4879 = vadd.f32 %v4766, %v4878
        %v4880 = vpop.f32.mrf.mxu0
        %v4881 = vadd.f32 %v4768, %v4880
        %4882 = vmatprep.mubr.bf16.mxu0 %v2283
        %4883 = vmatmul.mubr.bf16.gmra.mxu0 %v2282
        %v4884 = vpop.f32.mrf.mxu0
        %v4885 = vadd.f32 %v4772, %v4884
        %v4886 = vpop.f32.mrf.mxu0
        %v4887 = vadd.f32 %v4774, %v4886
        %v4888 = vpop.f32.mrf.mxu0
        %v4889 = vadd.f32 %v4776, %v4888
        %v4890 = vpop.f32.mrf.mxu0
        %v4891 = vadd.f32 %v4778, %v4890
        %4892 = vdwg.mxu0
        %v4893 = vld [vmem:[%s3] sm:$0xff]
        %v4894 = vld [vmem:[%s3 + $0x8] sm:$0xff]
        %v4895 = vld [vmem:[%s3 + $0x10] sm:$0xff]
        %v4896 = vld [vmem:[%s3 + $0x18] sm:$0xff]
        %v4897 = vld [vmem:[%s3 + $0x20] sm:$0xff]
        %v4898 = vld [vmem:[%s3 + $0x28] sm:$0xff]
        %v4899 = vld [vmem:[%s3 + $0x30] sm:$0xff]
        %v4900 = vld [vmem:[%s3 + $0x38] sm:$0xff]
        %v4901 = vld [vmem:[%s3 + $0x40] sm:$0xff]
        %v4902 = vld [vmem:[%s3 + $0x48] sm:$0xff]
        %v4903 = vld [vmem:[%s3 + $0x50] sm:$0xff]
        %v4904 = vld [vmem:[%s3 + $0x58] sm:$0xff]
        %v4905 = vld [vmem:[%s3 + $0x60] sm:$0xff]
        %v4906 = vld [vmem:[%s3 + $0x68] sm:$0xff]
        %v4907 = vld [vmem:[%s3 + $0x70] sm:$0xff]
        %v4908 = vld [vmem:[%s3 + $0x78] sm:$0xff]
        %v4909 = vld [vmem:[%s3 + $0x80] sm:$0xff]
        %v4910 = vld [vmem:[%s3 + $0x88] sm:$0xff]
        %v4911 = vld [vmem:[%s3 + $0x90] sm:$0xff]
        %v4912 = vld [vmem:[%s3 + $0x98] sm:$0xff]
        %v4913 = vld [vmem:[%s3 + $0xa0] sm:$0xff]
        %v4914 = vld [vmem:[%s3 + $0xa8] sm:$0xff]
        %v4915 = vld [vmem:[%s3 + $0xb0] sm:$0xff]
        %v4916 = vld [vmem:[%s3 + $0xb8] sm:$0xff]
        %v4917 = vld [vmem:[%s3 + $0xc0] sm:$0xff]
        %v4918 = vld [vmem:[%s3 + $0xc8] sm:$0xff]
        %v4919 = vld [vmem:[%s3 + $0xd0] sm:$0xff]
        %v4920 = vld [vmem:[%s3 + $0xd8] sm:$0xff]
        %v4921 = vld [vmem:[%s3 + $0xe0] sm:$0xff]
        %v4922 = vld [vmem:[%s3 + $0xe8] sm:$0xff]
        %v4923 = vld [vmem:[%s3 + $0xf0] sm:$0xff]
        %v4924 = vld [vmem:[%s3 + $0xf8] sm:$0xff]
        %v4925 = vld [vmem:[%s3 + $0x100] sm:$0xff]
        %v4926 = vld [vmem:[%s3 + $0x108] sm:$0xff]
        %v4927 = vld [vmem:[%s3 + $0x110] sm:$0xff]
        %v4928 = vld [vmem:[%s3 + $0x118] sm:$0xff]
        %v4929 = vld [vmem:[%s3 + $0x120] sm:$0xff]
        %v4930 = vld [vmem:[%s3 + $0x128] sm:$0xff]
        %v4931 = vld [vmem:[%s3 + $0x130] sm:$0xff]
        %v4932 = vld [vmem:[%s3 + $0x138] sm:$0xff]
        %v4933 = vld [vmem:[%s3 + $0x140] sm:$0xff]
        %v4934 = vld [vmem:[%s3 + $0x148] sm:$0xff]
        %v4935 = vld [vmem:[%s3 + $0x150] sm:$0xff]
        %v4936 = vld [vmem:[%s3 + $0x158] sm:$0xff]
        %v4937 = vld [vmem:[%s3 + $0x160] sm:$0xff]
        %v4938 = vld [vmem:[%s3 + $0x168] sm:$0xff]
        %v4939 = vld [vmem:[%s3 + $0x170] sm:$0xff]
        %v4940 = vld [vmem:[%s3 + $0x178] sm:$0xff]
        %v4941 = vld [vmem:[%s3 + $0x180] sm:$0xff]
        %v4942 = vld [vmem:[%s3 + $0x188] sm:$0xff]
        %v4943 = vld [vmem:[%s3 + $0x190] sm:$0xff]
        %v4944 = vld [vmem:[%s3 + $0x198] sm:$0xff]
        %v4945 = vld [vmem:[%s3 + $0x1a0] sm:$0xff]
        %v4946 = vld [vmem:[%s3 + $0x1a8] sm:$0xff]
        %v4947 = vld [vmem:[%s3 + $0x1b0] sm:$0xff]
        %v4948 = vld [vmem:[%s3 + $0x1b8] sm:$0xff]
        %v4949 = vld [vmem:[%s3 + $0x1c0] sm:$0xff]
        %v4950 = vld [vmem:[%s3 + $0x1c8] sm:$0xff]
        %v4951 = vld [vmem:[%s3 + $0x1d0] sm:$0xff]
        %v4952 = vld [vmem:[%s3 + $0x1d8] sm:$0xff]
        %v4953 = vld [vmem:[%s3 + $0x1e0] sm:$0xff]
        %v4954 = vld [vmem:[%s3 + $0x1e8] sm:$0xff]
        %v4955 = vld [vmem:[%s3 + $0x1f0] sm:$0xff]
        %v4956 = vld [vmem:[%s3 + $0x1f8] sm:$0xff]
        %v4957 = vld [vmem:[%s3 + $0x200] sm:$0xff]
        %v4958 = vld [vmem:[%s3 + $0x208] sm:$0xff]
        %v4959 = vld [vmem:[%s3 + $0x210] sm:$0xff]
        %v4960 = vld [vmem:[%s3 + $0x218] sm:$0xff]
        %v4961 = vld [vmem:[%s3 + $0x220] sm:$0xff]
        %v4962 = vld [vmem:[%s3 + $0x228] sm:$0xff]
        %v4963 = vld [vmem:[%s3 + $0x230] sm:$0xff]
        %v4964 = vld [vmem:[%s3 + $0x238] sm:$0xff]
        %v4965 = vld [vmem:[%s3 + $0x240] sm:$0xff]
        %v4966 = vld [vmem:[%s3 + $0x248] sm:$0xff]
        %v4967 = vld [vmem:[%s3 + $0x250] sm:$0xff]
        %v4968 = vld [vmem:[%s3 + $0x258] sm:$0xff]
        %v4969 = vld [vmem:[%s3 + $0x260] sm:$0xff]
        %v4970 = vld [vmem:[%s3 + $0x268] sm:$0xff]
        %v4971 = vld [vmem:[%s3 + $0x270] sm:$0xff]
        %v4972 = vld [vmem:[%s3 + $0x278] sm:$0xff]
        %v4973 = vld [vmem:[%s3 + $0x280] sm:$0xff]
        %v4974 = vld [vmem:[%s3 + $0x288] sm:$0xff]
        %v4975 = vld [vmem:[%s3 + $0x290] sm:$0xff]
        %v4976 = vld [vmem:[%s3 + $0x298] sm:$0xff]
        %v4977 = vld [vmem:[%s3 + $0x2a0] sm:$0xff]
        %v4978 = vld [vmem:[%s3 + $0x2a8] sm:$0xff]
        %v4979 = vld [vmem:[%s3 + $0x2b0] sm:$0xff]
        %v4980 = vld [vmem:[%s3 + $0x2b8] sm:$0xff]
        %v4981 = vld [vmem:[%s3 + $0x2c0] sm:$0xff]
        %v4982 = vld [vmem:[%s3 + $0x2c8] sm:$0xff]
        %v4983 = vld [vmem:[%s3 + $0x2d0] sm:$0xff]
        %v4984 = vld [vmem:[%s3 + $0x2d8] sm:$0xff]
        %v4985 = vld [vmem:[%s3 + $0x2e0] sm:$0xff]
        %v4986 = vld [vmem:[%s3 + $0x2e8] sm:$0xff]
        %v4987 = vld [vmem:[%s3 + $0x2f0] sm:$0xff]
        %v4988 = vld [vmem:[%s3 + $0x2f8] sm:$0xff]
        %v4989 = vld [vmem:[%s3 + $0x300] sm:$0xff]
        %v4990 = vld [vmem:[%s3 + $0x308] sm:$0xff]
        %v4991 = vld [vmem:[%s3 + $0x310] sm:$0xff]
        %v4992 = vld [vmem:[%s3 + $0x318] sm:$0xff]
        %v4993 = vld [vmem:[%s3 + $0x320] sm:$0xff]
        %v4994 = vld [vmem:[%s3 + $0x328] sm:$0xff]
        %v4995 = vld [vmem:[%s3 + $0x330] sm:$0xff]
        %v4996 = vld [vmem:[%s3 + $0x338] sm:$0xff]
        %v4997 = vld [vmem:[%s3 + $0x340] sm:$0xff]
        %v4998 = vld [vmem:[%s3 + $0x348] sm:$0xff]
        %v4999 = vld [vmem:[%s3 + $0x350] sm:$0xff]
        %v5000 = vld [vmem:[%s3 + $0x358] sm:$0xff]
        %v5001 = vld [vmem:[%s3 + $0x360] sm:$0xff]
        %v5002 = vld [vmem:[%s3 + $0x368] sm:$0xff]
        %v5003 = vld [vmem:[%s3 + $0x370] sm:$0xff]
        %v5004 = vld [vmem:[%s3 + $0x378] sm:$0xff]
        %v5005 = vld [vmem:[%s3 + $0x380] sm:$0xff]
        %v5006 = vld [vmem:[%s3 + $0x388] sm:$0xff]
        %v5007 = vld [vmem:[%s3 + $0x390] sm:$0xff]
        %v5008 = vld [vmem:[%s3 + $0x398] sm:$0xff]
        %v5009 = vld [vmem:[%s3 + $0x3a0] sm:$0xff]
        %v5010 = vld [vmem:[%s3 + $0x3a8] sm:$0xff]
        %v5011 = vld [vmem:[%s3 + $0x3b0] sm:$0xff]
        %v5012 = vld [vmem:[%s3 + $0x3b8] sm:$0xff]
        %v5013 = vld [vmem:[%s3 + $0x3c0] sm:$0xff]
        %v5014 = vld [vmem:[%s3 + $0x3c8] sm:$0xff]
        %v5015 = vld [vmem:[%s3 + $0x3d0] sm:$0xff]
        %v5016 = vld [vmem:[%s3 + $0x3d8] sm:$0xff]
        %v5017 = vld [vmem:[%s3 + $0x3e0] sm:$0xff]
        %v5018 = vld [vmem:[%s3 + $0x3e8] sm:$0xff]
        %v5019 = vld [vmem:[%s3 + $0x3f0] sm:$0xff]
        %v5020 = vld [vmem:[%s3 + $0x3f8] sm:$0xff]
        %v5149 = vunpack.c.l.b16 %v4893
        %v5150 = vunpack.c.h.b16 %v4893
        %v5151 = vunpack.c.l.b16 %v4894
        %v5152 = vunpack.c.h.b16 %v4894
        %v5153 = vunpack.c.l.b16 %v4895
        %v5154 = vunpack.c.h.b16 %v4895
        %v5155 = vunpack.c.l.b16 %v4896
        %v5156 = vunpack.c.h.b16 %v4896
        %v5157 = vunpack.c.l.b16 %v4897
        %v5158 = vunpack.c.h.b16 %v4897
        %v5159 = vunpack.c.l.b16 %v4898
        %v5160 = vunpack.c.h.b16 %v4898
        %v5161 = vunpack.c.l.b16 %v4899
        %v5162 = vunpack.c.h.b16 %v4899
        %v5163 = vunpack.c.l.b16 %v4900
        %v5164 = vunpack.c.h.b16 %v4900
        %v5165 = vunpack.c.l.b16 %v4901
        %v5166 = vunpack.c.h.b16 %v4901
        %v5167 = vunpack.c.l.b16 %v4902
        %v5168 = vunpack.c.h.b16 %v4902
        %v5169 = vunpack.c.l.b16 %v4903
        %v5170 = vunpack.c.h.b16 %v4903
        %v5171 = vunpack.c.l.b16 %v4904
        %v5172 = vunpack.c.h.b16 %v4904
        %v5173 = vunpack.c.l.b16 %v4905
        %v5174 = vunpack.c.h.b16 %v4905
        %v5175 = vunpack.c.l.b16 %v4906
        %v5176 = vunpack.c.h.b16 %v4906
        %v5177 = vunpack.c.l.b16 %v4907
        %v5178 = vunpack.c.h.b16 %v4907
        %v5179 = vunpack.c.l.b16 %v4908
        %v5180 = vunpack.c.h.b16 %v4908
        %v5181 = vunpack.c.l.b16 %v4909
        %v5182 = vunpack.c.h.b16 %v4909
        %v5183 = vunpack.c.l.b16 %v4910
        %v5184 = vunpack.c.h.b16 %v4910
        %v5185 = vunpack.c.l.b16 %v4911
        %v5186 = vunpack.c.h.b16 %v4911
        %v5187 = vunpack.c.l.b16 %v4912
        %v5188 = vunpack.c.h.b16 %v4912
        %v5189 = vunpack.c.l.b16 %v4913
        %v5190 = vunpack.c.h.b16 %v4913
        %v5191 = vunpack.c.l.b16 %v4914
        %v5192 = vunpack.c.h.b16 %v4914
        %v5193 = vunpack.c.l.b16 %v4915
        %v5194 = vunpack.c.h.b16 %v4915
        %v5195 = vunpack.c.l.b16 %v4916
        %v5196 = vunpack.c.h.b16 %v4916
        %v5197 = vunpack.c.l.b16 %v4917
        %v5198 = vunpack.c.h.b16 %v4917
        %v5199 = vunpack.c.l.b16 %v4918
        %v5200 = vunpack.c.h.b16 %v4918
        %v5201 = vunpack.c.l.b16 %v4919
        %v5202 = vunpack.c.h.b16 %v4919
        %v5203 = vunpack.c.l.b16 %v4920
        %v5204 = vunpack.c.h.b16 %v4920
        %v5205 = vunpack.c.l.b16 %v4921
        %v5206 = vunpack.c.h.b16 %v4921
        %v5207 = vunpack.c.l.b16 %v4922
        %v5208 = vunpack.c.h.b16 %v4922
        %v5209 = vunpack.c.l.b16 %v4923
        %v5210 = vunpack.c.h.b16 %v4923
        %v5211 = vunpack.c.l.b16 %v4924
        %v5212 = vunpack.c.h.b16 %v4924
        %v5213 = vunpack.c.l.b16 %v4925
        %v5214 = vunpack.c.h.b16 %v4925
        %v5215 = vunpack.c.l.b16 %v4926
        %v5216 = vunpack.c.h.b16 %v4926
        %v5217 = vunpack.c.l.b16 %v4927
        %v5218 = vunpack.c.h.b16 %v4927
        %v5219 = vunpack.c.l.b16 %v4928
        %v5220 = vunpack.c.h.b16 %v4928
        %v5221 = vunpack.c.l.b16 %v4929
        %v5222 = vunpack.c.h.b16 %v4929
        %v5223 = vunpack.c.l.b16 %v4930
        %v5224 = vunpack.c.h.b16 %v4930
        %v5225 = vunpack.c.l.b16 %v4931
        %v5226 = vunpack.c.h.b16 %v4931
        %v5227 = vunpack.c.l.b16 %v4932
        %v5228 = vunpack.c.h.b16 %v4932
        %v5229 = vunpack.c.l.b16 %v4933
        %v5230 = vunpack.c.h.b16 %v4933
        %v5231 = vunpack.c.l.b16 %v4934
        %v5232 = vunpack.c.h.b16 %v4934
        %v5233 = vunpack.c.l.b16 %v4935
        %v5234 = vunpack.c.h.b16 %v4935
        %v5235 = vunpack.c.l.b16 %v4936
        %v5236 = vunpack.c.h.b16 %v4936
        %v5237 = vunpack.c.l.b16 %v4937
        %v5238 = vunpack.c.h.b16 %v4937
        %v5239 = vunpack.c.l.b16 %v4938
        %v5240 = vunpack.c.h.b16 %v4938
        %v5241 = vunpack.c.l.b16 %v4939
        %v5242 = vunpack.c.h.b16 %v4939
        %v5243 = vunpack.c.l.b16 %v4940
        %v5244 = vunpack.c.h.b16 %v4940
        %v5245 = vunpack.c.l.b16 %v4941
        %v5246 = vunpack.c.h.b16 %v4941
        %v5247 = vunpack.c.l.b16 %v4942
        %v5248 = vunpack.c.h.b16 %v4942
        %v5249 = vunpack.c.l.b16 %v4943
        %v5250 = vunpack.c.h.b16 %v4943
        %v5251 = vunpack.c.l.b16 %v4944
        %v5252 = vunpack.c.h.b16 %v4944
        %v5253 = vunpack.c.l.b16 %v4945
        %v5254 = vunpack.c.h.b16 %v4945
        %v5255 = vunpack.c.l.b16 %v4946
        %v5256 = vunpack.c.h.b16 %v4946
        %v5257 = vunpack.c.l.b16 %v4947
        %v5258 = vunpack.c.h.b16 %v4947
        %v5259 = vunpack.c.l.b16 %v4948
        %v5260 = vunpack.c.h.b16 %v4948
        %v5261 = vunpack.c.l.b16 %v4949
        %v5262 = vunpack.c.h.b16 %v4949
        %v5263 = vunpack.c.l.b16 %v4950
        %v5264 = vunpack.c.h.b16 %v4950
        %v5265 = vunpack.c.l.b16 %v4951
        %v5266 = vunpack.c.h.b16 %v4951
        %v5267 = vunpack.c.l.b16 %v4952
        %v5268 = vunpack.c.h.b16 %v4952
        %v5269 = vunpack.c.l.b16 %v4953
        %v5270 = vunpack.c.h.b16 %v4953
        %v5271 = vunpack.c.l.b16 %v4954
        %v5272 = vunpack.c.h.b16 %v4954
        %v5273 = vunpack.c.l.b16 %v4955
        %v5274 = vunpack.c.h.b16 %v4955
        %v5275 = vunpack.c.l.b16 %v4956
        %v5276 = vunpack.c.h.b16 %v4956
        %v5277 = vunpack.c.l.b16 %v4957
        %v5278 = vunpack.c.h.b16 %v4957
        %v5279 = vunpack.c.l.b16 %v4958
        %v5280 = vunpack.c.h.b16 %v4958
        %v5281 = vunpack.c.l.b16 %v4959
        %v5282 = vunpack.c.h.b16 %v4959
        %v5283 = vunpack.c.l.b16 %v4960
        %v5284 = vunpack.c.h.b16 %v4960
        %v5285 = vunpack.c.l.b16 %v4961
        %v5286 = vunpack.c.h.b16 %v4961
        %v5287 = vunpack.c.l.b16 %v4962
        %v5288 = vunpack.c.h.b16 %v4962
        %v5289 = vunpack.c.l.b16 %v4963
        %v5290 = vunpack.c.h.b16 %v4963
        %v5291 = vunpack.c.l.b16 %v4964
        %v5292 = vunpack.c.h.b16 %v4964
        %v5293 = vunpack.c.l.b16 %v4965
        %v5294 = vunpack.c.h.b16 %v4965
        %v5295 = vunpack.c.l.b16 %v4966
        %v5296 = vunpack.c.h.b16 %v4966
        %v5297 = vunpack.c.l.b16 %v4967
        %v5298 = vunpack.c.h.b16 %v4967
        %v5299 = vunpack.c.l.b16 %v4968
        %v5300 = vunpack.c.h.b16 %v4968
        %v5301 = vunpack.c.l.b16 %v4969
        %v5302 = vunpack.c.h.b16 %v4969
        %v5303 = vunpack.c.l.b16 %v4970
        %v5304 = vunpack.c.h.b16 %v4970
        %v5305 = vunpack.c.l.b16 %v4971
        %v5306 = vunpack.c.h.b16 %v4971
        %v5307 = vunpack.c.l.b16 %v4972
        %v5308 = vunpack.c.h.b16 %v4972
        %v5309 = vunpack.c.l.b16 %v4973
        %v5310 = vunpack.c.h.b16 %v4973
        %v5311 = vunpack.c.l.b16 %v4974
        %v5312 = vunpack.c.h.b16 %v4974
        %v5313 = vunpack.c.l.b16 %v4975
        %v5314 = vunpack.c.h.b16 %v4975
        %v5315 = vunpack.c.l.b16 %v4976
        %v5316 = vunpack.c.h.b16 %v4976
        %v5317 = vunpack.c.l.b16 %v4977
        %v5318 = vunpack.c.h.b16 %v4977
        %v5319 = vunpack.c.l.b16 %v4978
        %v5320 = vunpack.c.h.b16 %v4978
        %v5321 = vunpack.c.l.b16 %v4979
        %v5322 = vunpack.c.h.b16 %v4979
        %v5323 = vunpack.c.l.b16 %v4980
        %v5324 = vunpack.c.h.b16 %v4980
        %v5325 = vunpack.c.l.b16 %v4981
        %v5326 = vunpack.c.h.b16 %v4981
        %v5327 = vunpack.c.l.b16 %v4982
        %v5328 = vunpack.c.h.b16 %v4982
        %v5329 = vunpack.c.l.b16 %v4983
        %v5330 = vunpack.c.h.b16 %v4983
        %v5331 = vunpack.c.l.b16 %v4984
        %v5332 = vunpack.c.h.b16 %v4984
        %v5333 = vunpack.c.l.b16 %v4985
        %v5334 = vunpack.c.h.b16 %v4985
        %v5335 = vunpack.c.l.b16 %v4986
        %v5336 = vunpack.c.h.b16 %v4986
        %v5337 = vunpack.c.l.b16 %v4987
        %v5338 = vunpack.c.h.b16 %v4987
        %v5339 = vunpack.c.l.b16 %v4988
        %v5340 = vunpack.c.h.b16 %v4988
        %v5341 = vunpack.c.l.b16 %v4989
        %v5342 = vunpack.c.h.b16 %v4989
        %v5343 = vunpack.c.l.b16 %v4990
        %v5344 = vunpack.c.h.b16 %v4990
        %v5345 = vunpack.c.l.b16 %v4991
        %v5346 = vunpack.c.h.b16 %v4991
        %v5347 = vunpack.c.l.b16 %v4992
        %v5348 = vunpack.c.h.b16 %v4992
        %v5349 = vunpack.c.l.b16 %v4993
        %v5350 = vunpack.c.h.b16 %v4993
        %v5351 = vunpack.c.l.b16 %v4994
        %v5352 = vunpack.c.h.b16 %v4994
        %v5353 = vunpack.c.l.b16 %v4995
        %v5354 = vunpack.c.h.b16 %v4995
        %v5355 = vunpack.c.l.b16 %v4996
        %v5356 = vunpack.c.h.b16 %v4996
        %v5357 = vunpack.c.l.b16 %v4997
        %v5358 = vunpack.c.h.b16 %v4997
        %v5359 = vunpack.c.l.b16 %v4998
        %v5360 = vunpack.c.h.b16 %v4998
        %v5361 = vunpack.c.l.b16 %v4999
        %v5362 = vunpack.c.h.b16 %v4999
        %v5363 = vunpack.c.l.b16 %v5000
        %v5364 = vunpack.c.h.b16 %v5000
        %v5365 = vunpack.c.l.b16 %v5001
        %v5366 = vunpack.c.h.b16 %v5001
        %v5367 = vunpack.c.l.b16 %v5002
        %v5368 = vunpack.c.h.b16 %v5002
        %v5369 = vunpack.c.l.b16 %v5003
        %v5370 = vunpack.c.h.b16 %v5003
        %v5371 = vunpack.c.l.b16 %v5004
        %v5372 = vunpack.c.h.b16 %v5004
        %v5373 = vunpack.c.l.b16 %v5005
        %v5374 = vunpack.c.h.b16 %v5005
        %v5375 = vunpack.c.l.b16 %v5006
        %v5376 = vunpack.c.h.b16 %v5006
        %v5377 = vunpack.c.l.b16 %v5007
        %v5378 = vunpack.c.h.b16 %v5007
        %v5379 = vunpack.c.l.b16 %v5008
        %v5380 = vunpack.c.h.b16 %v5008
        %v5381 = vunpack.c.l.b16 %v5009
        %v5382 = vunpack.c.h.b16 %v5009
        %v5383 = vunpack.c.l.b16 %v5010
        %v5384 = vunpack.c.h.b16 %v5010
        %v5385 = vunpack.c.l.b16 %v5011
        %v5386 = vunpack.c.h.b16 %v5011
        %v5387 = vunpack.c.l.b16 %v5012
        %v5388 = vunpack.c.h.b16 %v5012
        %v5389 = vunpack.c.l.b16 %v5013
        %v5390 = vunpack.c.h.b16 %v5013
        %v5391 = vunpack.c.l.b16 %v5014
        %v5392 = vunpack.c.h.b16 %v5014
        %v5393 = vunpack.c.l.b16 %v5015
        %v5394 = vunpack.c.h.b16 %v5015
        %v5395 = vunpack.c.l.b16 %v5016
        %v5396 = vunpack.c.h.b16 %v5016
        %v5397 = vunpack.c.l.b16 %v5017
        %v5398 = vunpack.c.h.b16 %v5017
        %v5399 = vunpack.c.l.b16 %v5018
        %v5400 = vunpack.c.h.b16 %v5018
        %v5401 = vunpack.c.l.b16 %v5019
        %v5402 = vunpack.c.h.b16 %v5019
        %v5403 = vunpack.c.l.b16 %v5020
        %v5404 = vunpack.c.h.b16 %v5020
        %v5405 = vpack.c.b16 %v5153, %v5149
        %v5406 = vpack.c.b16 %v5154, %v5150
        %v5407 = vpack.c.b16 %v5155, %v5151
        %v5408 = vpack.c.b16 %v5156, %v5152
        %v5409 = vpack.c.b16 %v5161, %v5157
        %v5410 = vpack.c.b16 %v5162, %v5158
        %v5411 = vpack.c.b16 %v5163, %v5159
        %v5412 = vpack.c.b16 %v5164, %v5160
        %v5413 = vpack.c.b16 %v5169, %v5165
        %v5414 = vpack.c.b16 %v5170, %v5166
        %v5415 = vpack.c.b16 %v5171, %v5167
        %v5416 = vpack.c.b16 %v5172, %v5168
        %v5417 = vpack.c.b16 %v5177, %v5173
        %v5418 = vpack.c.b16 %v5178, %v5174
        %v5419 = vpack.c.b16 %v5179, %v5175
        %v5420 = vpack.c.b16 %v5180, %v5176
        %v5421 = vpack.c.b16 %v5185, %v5181
        %v5422 = vpack.c.b16 %v5186, %v5182
        %v5423 = vpack.c.b16 %v5187, %v5183
        %v5424 = vpack.c.b16 %v5188, %v5184
        %v5425 = vpack.c.b16 %v5193, %v5189
        %v5426 = vpack.c.b16 %v5194, %v5190
        %v5427 = vpack.c.b16 %v5195, %v5191
        %v5428 = vpack.c.b16 %v5196, %v5192
        %v5429 = vpack.c.b16 %v5201, %v5197
        %v5430 = vpack.c.b16 %v5202, %v5198
        %v5431 = vpack.c.b16 %v5203, %v5199
        %v5432 = vpack.c.b16 %v5204, %v5200
        %v5433 = vpack.c.b16 %v5209, %v5205
        %v5434 = vpack.c.b16 %v5210, %v5206
        %v5435 = vpack.c.b16 %v5211, %v5207
        %v5436 = vpack.c.b16 %v5212, %v5208
        %v5437 = vpack.c.b16 %v5217, %v5213
        %v5438 = vpack.c.b16 %v5218, %v5214
        %v5439 = vpack.c.b16 %v5219, %v5215
        %v5440 = vpack.c.b16 %v5220, %v5216
        %v5441 = vpack.c.b16 %v5225, %v5221
        %v5442 = vpack.c.b16 %v5226, %v5222
        %v5443 = vpack.c.b16 %v5227, %v5223
        %v5444 = vpack.c.b16 %v5228, %v5224
        %v5445 = vpack.c.b16 %v5233, %v5229
        %v5446 = vpack.c.b16 %v5234, %v5230
        %v5447 = vpack.c.b16 %v5235, %v5231
        %v5448 = vpack.c.b16 %v5236, %v5232
        %v5449 = vpack.c.b16 %v5241, %v5237
        %v5450 = vpack.c.b16 %v5242, %v5238
        %v5451 = vpack.c.b16 %v5243, %v5239
        %v5452 = vpack.c.b16 %v5244, %v5240
        %v5453 = vpack.c.b16 %v5249, %v5245
        %v5454 = vpack.c.b16 %v5250, %v5246
        %v5455 = vpack.c.b16 %v5251, %v5247
        %v5456 = vpack.c.b16 %v5252, %v5248
        %v5457 = vpack.c.b16 %v5257, %v5253
        %v5458 = vpack.c.b16 %v5258, %v5254
        %v5459 = vpack.c.b16 %v5259, %v5255
        %v5460 = vpack.c.b16 %v5260, %v5256
        %v5461 = vpack.c.b16 %v5265, %v5261
        %v5462 = vpack.c.b16 %v5266, %v5262
        %v5463 = vpack.c.b16 %v5267, %v5263
        %v5464 = vpack.c.b16 %v5268, %v5264
        %v5465 = vpack.c.b16 %v5273, %v5269
        %v5466 = vpack.c.b16 %v5274, %v5270
        %v5467 = vpack.c.b16 %v5275, %v5271
        %v5468 = vpack.c.b16 %v5276, %v5272
        %v5469 = vpack.c.b16 %v5281, %v5277
        %v5470 = vpack.c.b16 %v5282, %v5278
        %v5471 = vpack.c.b16 %v5283, %v5279
        %v5472 = vpack.c.b16 %v5284, %v5280
        %v5473 = vpack.c.b16 %v5289, %v5285
        %v5474 = vpack.c.b16 %v5290, %v5286
        %v5475 = vpack.c.b16 %v5291, %v5287
        %v5476 = vpack.c.b16 %v5292, %v5288
        %v5477 = vpack.c.b16 %v5297, %v5293
        %v5478 = vpack.c.b16 %v5298, %v5294
        %v5479 = vpack.c.b16 %v5299, %v5295
        %v5480 = vpack.c.b16 %v5300, %v5296
        %v5481 = vpack.c.b16 %v5305, %v5301
        %v5482 = vpack.c.b16 %v5306, %v5302
        %v5483 = vpack.c.b16 %v5307, %v5303
        %v5484 = vpack.c.b16 %v5308, %v5304
        %v5485 = vpack.c.b16 %v5313, %v5309
        %v5486 = vpack.c.b16 %v5314, %v5310
        %v5487 = vpack.c.b16 %v5315, %v5311
        %v5488 = vpack.c.b16 %v5316, %v5312
        %v5489 = vpack.c.b16 %v5321, %v5317
        %v5490 = vpack.c.b16 %v5322, %v5318
        %v5491 = vpack.c.b16 %v5323, %v5319
        %v5492 = vpack.c.b16 %v5324, %v5320
        %v5493 = vpack.c.b16 %v5329, %v5325
        %v5494 = vpack.c.b16 %v5330, %v5326
        %v5495 = vpack.c.b16 %v5331, %v5327
        %v5496 = vpack.c.b16 %v5332, %v5328
        %v5497 = vpack.c.b16 %v5337, %v5333
        %v5498 = vpack.c.b16 %v5338, %v5334
        %v5499 = vpack.c.b16 %v5339, %v5335
        %v5500 = vpack.c.b16 %v5340, %v5336
        %v5501 = vpack.c.b16 %v5345, %v5341
        %v5502 = vpack.c.b16 %v5346, %v5342
        %v5503 = vpack.c.b16 %v5347, %v5343
        %v5504 = vpack.c.b16 %v5348, %v5344
        %v5505 = vpack.c.b16 %v5353, %v5349
        %v5506 = vpack.c.b16 %v5354, %v5350
        %v5507 = vpack.c.b16 %v5355, %v5351
        %v5508 = vpack.c.b16 %v5356, %v5352
        %v5509 = vpack.c.b16 %v5361, %v5357
        %v5510 = vpack.c.b16 %v5362, %v5358
        %v5511 = vpack.c.b16 %v5363, %v5359
        %v5512 = vpack.c.b16 %v5364, %v5360
        %v5513 = vpack.c.b16 %v5369, %v5365
        %v5514 = vpack.c.b16 %v5370, %v5366
        %v5515 = vpack.c.b16 %v5371, %v5367
        %v5516 = vpack.c.b16 %v5372, %v5368
        %v5517 = vpack.c.b16 %v5377, %v5373
        %v5518 = vpack.c.b16 %v5378, %v5374
        %v5519 = vpack.c.b16 %v5379, %v5375
        %v5520 = vpack.c.b16 %v5380, %v5376
        %v5521 = vpack.c.b16 %v5385, %v5381
        %v5522 = vpack.c.b16 %v5386, %v5382
        %v5523 = vpack.c.b16 %v5387, %v5383
        %v5524 = vpack.c.b16 %v5388, %v5384
        %v5525 = vpack.c.b16 %v5393, %v5389
        %v5526 = vpack.c.b16 %v5394, %v5390
        %v5527 = vpack.c.b16 %v5395, %v5391
        %v5528 = vpack.c.b16 %v5396, %v5392
        %v5529 = vpack.c.b16 %v5401, %v5397
        %v5530 = vpack.c.b16 %v5402, %v5398
        %v5531 = vpack.c.b16 %v5403, %v5399
        %v5532 = vpack.c.b16 %v5404, %v5400
        %5661 = vmatprep.subr.bf16.mxu0 %v5434
        %5662 = vmatpush1.bf16.msra.mxu0 %v5433
        %5663 = vmatprep.subr.bf16.mxu0 %v5430
        %5664 = vmatpush1.bf16.msra.mxu0 %v5429
        %5665 = vmatprep.subr.bf16.mxu0 %v5426
        %5666 = vmatpush1.bf16.msra.mxu0 %v5425
        %5667 = vmatprep.subr.bf16.mxu0 %v5422
        %5668 = vmatpush1.bf16.msra.mxu0 %v5421
        %5669 = vmatprep.subr.bf16.mxu0 %v5418
        %5670 = vmatpush1.bf16.msra.mxu0 %v5417
        %5671 = vmatprep.subr.bf16.mxu0 %v5414
        %5672 = vmatpush1.bf16.msra.mxu0 %v5413
        %5673 = vmatprep.subr.bf16.mxu0 %v5410
        %5674 = vmatpush1.bf16.msra.mxu0 %v5409
        %5675 = vmatprep.subr.bf16.mxu0 %v5406
        %5676 = vmatpush1.bf16.msra.mxu0 %v5405
        %5677 = vmatprep.subr.bf16.mxu0 %v5466
        %5678 = vmatpush2.bf16.msra.mxu0 %v5465
        %5679 = vmatprep.subr.bf16.mxu0 %v5462
        %5680 = vmatpush2.bf16.msra.mxu0 %v5461
        %5681 = vmatprep.subr.bf16.mxu0 %v5458
        %5682 = vmatpush2.bf16.msra.mxu0 %v5457
        %5683 = vmatprep.subr.bf16.mxu0 %v5454
        %5684 = vmatpush2.bf16.msra.mxu0 %v5453
        %5685 = vmatprep.subr.bf16.mxu0 %v5450
        %5686 = vmatpush2.bf16.msra.mxu0 %v5449
        %5687 = vmatprep.subr.bf16.mxu0 %v5446
        %5688 = vmatpush2.bf16.msra.mxu0 %v5445
        %5689 = vmatprep.subr.bf16.mxu0 %v5442
        %5690 = vmatpush2.bf16.msra.mxu0 %v5441
        %5691 = vmatprep.subr.bf16.mxu0 %v5438
        %5692 = vmatpush2.bf16.msra.mxu0 %v5437
        %5693 = vmatprep.mubr.bf16.mxu0 %v2443
        %5694 = vmatmul.mubr.bf16.gmra.mxu0 %v2440
        %v5695 = vpop.f32.mrf.mxu0
        %v5696 = vadd.f32 0.0, %v5695
        %v5697 = vpop.f32.mrf.mxu0
        %v5698 = vadd.f32 0.0, %v5697
        %v5699 = vpop.f32.mrf.mxu0
        %v5700 = vadd.f32 0.0, %v5699
        %v5701 = vpop.f32.mrf.mxu0
        %v5702 = vadd.f32 0.0, %v5701
        %5703 = vmatprep.mubr.bf16.mxu0 %v2356
        %5704 = vmatmul.mubr.bf16.gmra.mxu0 %v2354
        %v5705 = vpop.f32.mrf.mxu0
        %v5706 = vadd.f32 0.0, %v5705
        %v5707 = vpop.f32.mrf.mxu0
        %v5708 = vadd.f32 0.0, %v5707
        %v5709 = vpop.f32.mrf.mxu0
        %v5710 = vadd.f32 0.0, %v5709
        %v5711 = vpop.f32.mrf.mxu0
        %v5712 = vadd.f32 0.0, %v5711
        %5713 = vmatprep.mubr.bf16.mxu0 %v2364
        %5714 = vmatmul.mubr.bf16.gmra.mxu0 %v2362
        %v5715 = vpop.f32.mrf.mxu0
        %v5716 = vadd.f32 0.0, %v5715
        %v5717 = vpop.f32.mrf.mxu0
        %v5718 = vadd.f32 0.0, %v5717
        %v5719 = vpop.f32.mrf.mxu0
        %v5720 = vadd.f32 0.0, %v5719
        %v5721 = vpop.f32.mrf.mxu0
        %v5722 = vadd.f32 0.0, %v5721
        %5723 = vmatprep.mubr.bf16.mxu0 %v2372
        %5724 = vmatmul.mubr.bf16.gmra.mxu0 %v2370
        %v5725 = vpop.f32.mrf.mxu0
        %v5726 = vadd.f32 0.0, %v5725
        %v5727 = vpop.f32.mrf.mxu0
        %v5728 = vadd.f32 0.0, %v5727
        %v5729 = vpop.f32.mrf.mxu0
        %v5730 = vadd.f32 0.0, %v5729
        %v5731 = vpop.f32.mrf.mxu0
        %v5732 = vadd.f32 0.0, %v5731
        %5733 = vmatprep.mubr.bf16.mxu0 %v2380
        %5734 = vmatmul.mubr.bf16.gmra.mxu0 %v2378
        %v5735 = vpop.f32.mrf.mxu0
        %v5736 = vadd.f32 0.0, %v5735
        %v5737 = vpop.f32.mrf.mxu0
        %v5738 = vadd.f32 0.0, %v5737
        %v5739 = vpop.f32.mrf.mxu0
        %v5740 = vadd.f32 0.0, %v5739
        %v5741 = vpop.f32.mrf.mxu0
        %v5742 = vadd.f32 0.0, %v5741
        %5743 = vmatprep.mubr.bf16.mxu0 %v2388
        %5744 = vmatmul.mubr.bf16.gmra.mxu0 %v2386
        %v5745 = vpop.f32.mrf.mxu0
        %v5746 = vadd.f32 0.0, %v5745
        %v5747 = vpop.f32.mrf.mxu0
        %v5748 = vadd.f32 0.0, %v5747
        %v5749 = vpop.f32.mrf.mxu0
        %v5750 = vadd.f32 0.0, %v5749
        %v5751 = vpop.f32.mrf.mxu0
        %v5752 = vadd.f32 0.0, %v5751
        %5753 = vmatprep.mubr.bf16.mxu0 %v2396
        %5754 = vmatmul.mubr.bf16.gmra.mxu0 %v2394
        %v5755 = vpop.f32.mrf.mxu0
        %v5756 = vadd.f32 0.0, %v5755
        %v5757 = vpop.f32.mrf.mxu0
        %v5758 = vadd.f32 0.0, %v5757
        %v5759 = vpop.f32.mrf.mxu0
        %v5760 = vadd.f32 0.0, %v5759
        %v5761 = vpop.f32.mrf.mxu0
        %v5762 = vadd.f32 0.0, %v5761
        %5763 = vmatprep.mubr.bf16.mxu0 %v2404
        %5764 = vmatmul.mubr.bf16.gmra.mxu0 %v2402
        %v5765 = vpop.f32.mrf.mxu0
        %v5766 = vadd.f32 0.0, %v5765
        %v5767 = vpop.f32.mrf.mxu0
        %v5768 = vadd.f32 0.0, %v5767
        %v5769 = vpop.f32.mrf.mxu0
        %v5770 = vadd.f32 0.0, %v5769
        %v5771 = vpop.f32.mrf.mxu0
        %v5772 = vadd.f32 0.0, %v5771
        %5773 = vdwg.mxu0
        %5774 = vmatprep.subr.bf16.mxu0 %v5498
        %5775 = vmatpush1.bf16.msra.mxu0 %v5497
        %5776 = vmatprep.subr.bf16.mxu0 %v5494
        %5777 = vmatpush1.bf16.msra.mxu0 %v5493
        %5778 = vmatprep.subr.bf16.mxu0 %v5490
        %5779 = vmatpush1.bf16.msra.mxu0 %v5489
        %5780 = vmatprep.subr.bf16.mxu0 %v5486
        %5781 = vmatpush1.bf16.msra.mxu0 %v5485
        %5782 = vmatprep.subr.bf16.mxu0 %v5482
        %5783 = vmatpush1.bf16.msra.mxu0 %v5481
        %5784 = vmatprep.subr.bf16.mxu0 %v5478
        %5785 = vmatpush1.bf16.msra.mxu0 %v5477
        %5786 = vmatprep.subr.bf16.mxu0 %v5474
        %5787 = vmatpush1.bf16.msra.mxu0 %v5473
        %5788 = vmatprep.subr.bf16.mxu0 %v5470
        %5789 = vmatpush1.bf16.msra.mxu0 %v5469
        %5790 = vmatprep.subr.bf16.mxu0 %v5530
        %5791 = vmatpush2.bf16.msra.mxu0 %v5529
        %5792 = vmatprep.subr.bf16.mxu0 %v5526
        %5793 = vmatpush2.bf16.msra.mxu0 %v5525
        %5794 = vmatprep.subr.bf16.mxu0 %v5522
        %5795 = vmatpush2.bf16.msra.mxu0 %v5521
        %5796 = vmatprep.subr.bf16.mxu0 %v5518
        %5797 = vmatpush2.bf16.msra.mxu0 %v5517
        %5798 = vmatprep.subr.bf16.mxu0 %v5514
        %5799 = vmatpush2.bf16.msra.mxu0 %v5513
        %5800 = vmatprep.subr.bf16.mxu0 %v5510
        %5801 = vmatpush2.bf16.msra.mxu0 %v5509
        %5802 = vmatprep.subr.bf16.mxu0 %v5506
        %5803 = vmatpush2.bf16.msra.mxu0 %v5505
        %5804 = vmatprep.subr.bf16.mxu0 %v5502
        %5805 = vmatpush2.bf16.msra.mxu0 %v5501
        %5806 = vmatprep.mubr.bf16.mxu0 %v2449
        %5807 = vmatmul.mubr.bf16.gmra.mxu0 %v2446
        %v5808 = vpop.f32.mrf.mxu0
        %v5809 = vadd.f32 %v5696, %v5808
        %v5810 = vpop.f32.mrf.mxu0
        %v5811 = vadd.f32 %v5698, %v5810
        %v5812 = vpop.f32.mrf.mxu0
        %v5813 = vadd.f32 %v5700, %v5812
        %v5814 = vpop.f32.mrf.mxu0
        %v5815 = vadd.f32 %v5702, %v5814
        %5816 = vmatprep.mubr.bf16.mxu0 %v2360
        %5817 = vmatmul.mubr.bf16.gmra.mxu0 %v2358
        %v5818 = vpop.f32.mrf.mxu0
        %v5819 = vadd.f32 %v5706, %v5818
        %v5820 = vpop.f32.mrf.mxu0
        %v5821 = vadd.f32 %v5708, %v5820
        %v5822 = vpop.f32.mrf.mxu0
        %v5823 = vadd.f32 %v5710, %v5822
        %v5824 = vpop.f32.mrf.mxu0
        %v5825 = vadd.f32 %v5712, %v5824
        %5826 = vmatprep.mubr.bf16.mxu0 %v2368
        %5827 = vmatmul.mubr.bf16.gmra.mxu0 %v2366
        %v5828 = vpop.f32.mrf.mxu0
        %v5829 = vadd.f32 %v5716, %v5828
        %v5830 = vpop.f32.mrf.mxu0
        %v5831 = vadd.f32 %v5718, %v5830
        %v5832 = vpop.f32.mrf.mxu0
        %v5833 = vadd.f32 %v5720, %v5832
        %v5834 = vpop.f32.mrf.mxu0
        %v5835 = vadd.f32 %v5722, %v5834
        %5836 = vmatprep.mubr.bf16.mxu0 %v2376
        %5837 = vmatmul.mubr.bf16.gmra.mxu0 %v2374
        %v5838 = vpop.f32.mrf.mxu0
        %v5839 = vadd.f32 %v5726, %v5838
        %v5840 = vpop.f32.mrf.mxu0
        %v5841 = vadd.f32 %v5728, %v5840
        %v5842 = vpop.f32.mrf.mxu0
        %v5843 = vadd.f32 %v5730, %v5842
        %v5844 = vpop.f32.mrf.mxu0
        %v5845 = vadd.f32 %v5732, %v5844
        %5846 = vmatprep.mubr.bf16.mxu0 %v2384
        %5847 = vmatmul.mubr.bf16.gmra.mxu0 %v2382
        %v5848 = vpop.f32.mrf.mxu0
        %v5849 = vadd.f32 %v5736, %v5848
        %v5850 = vpop.f32.mrf.mxu0
        %v5851 = vadd.f32 %v5738, %v5850
        %v5852 = vpop.f32.mrf.mxu0
        %v5853 = vadd.f32 %v5740, %v5852
        %v5854 = vpop.f32.mrf.mxu0
        %v5855 = vadd.f32 %v5742, %v5854
        %5856 = vmatprep.mubr.bf16.mxu0 %v2392
        %5857 = vmatmul.mubr.bf16.gmra.mxu0 %v2390
        %v5858 = vpop.f32.mrf.mxu0
        %v5859 = vadd.f32 %v5746, %v5858
        %v5860 = vpop.f32.mrf.mxu0
        %v5861 = vadd.f32 %v5748, %v5860
        %v5862 = vpop.f32.mrf.mxu0
        %v5863 = vadd.f32 %v5750, %v5862
        %v5864 = vpop.f32.mrf.mxu0
        %v5865 = vadd.f32 %v5752, %v5864
        %5866 = vmatprep.mubr.bf16.mxu0 %v2400
        %5867 = vmatmul.mubr.bf16.gmra.mxu0 %v2398
        %v5868 = vpop.f32.mrf.mxu0
        %v5869 = vadd.f32 %v5756, %v5868
        %v5870 = vpop.f32.mrf.mxu0
        %v5871 = vadd.f32 %v5758, %v5870
        %v5872 = vpop.f32.mrf.mxu0
        %v5873 = vadd.f32 %v5760, %v5872
        %v5874 = vpop.f32.mrf.mxu0
        %v5875 = vadd.f32 %v5762, %v5874
        %5876 = vmatprep.mubr.bf16.mxu0 %v2408
        %5877 = vmatmul.mubr.bf16.gmra.mxu0 %v2406
        %v5878 = vpop.f32.mrf.mxu0
        %v5879 = vadd.f32 %v5766, %v5878
        %v5880 = vpop.f32.mrf.mxu0
        %v5881 = vadd.f32 %v5768, %v5880
        %v5882 = vpop.f32.mrf.mxu0
        %v5883 = vadd.f32 %v5770, %v5882
        %v5884 = vpop.f32.mrf.mxu0
        %v5885 = vadd.f32 %v5772, %v5884
        %5886 = vdwg.mxu0
        %5887 = vmatprep.subr.bf16.mxu0 %v5436
        %5888 = vmatpush1.bf16.msra.mxu0 %v5435
        %5889 = vmatprep.subr.bf16.mxu0 %v5432
        %5890 = vmatpush1.bf16.msra.mxu0 %v5431
        %5891 = vmatprep.subr.bf16.mxu0 %v5428
        %5892 = vmatpush1.bf16.msra.mxu0 %v5427
        %5893 = vmatprep.subr.bf16.mxu0 %v5424
        %5894 = vmatpush1.bf16.msra.mxu0 %v5423
        %5895 = vmatprep.subr.bf16.mxu0 %v5420
        %5896 = vmatpush1.bf16.msra.mxu0 %v5419
        %5897 = vmatprep.subr.bf16.mxu0 %v5416
        %5898 = vmatpush1.bf16.msra.mxu0 %v5415
        %5899 = vmatprep.subr.bf16.mxu0 %v5412
        %5900 = vmatpush1.bf16.msra.mxu0 %v5411
        %5901 = vmatprep.subr.bf16.mxu0 %v5408
        %5902 = vmatpush1.bf16.msra.mxu0 %v5407
        %5903 = vmatprep.subr.bf16.mxu0 %v5468
        %5904 = vmatpush2.bf16.msra.mxu0 %v5467
        %5905 = vmatprep.subr.bf16.mxu0 %v5464
        %5906 = vmatpush2.bf16.msra.mxu0 %v5463
        %5907 = vmatprep.subr.bf16.mxu0 %v5460
        %5908 = vmatpush2.bf16.msra.mxu0 %v5459
        %5909 = vmatprep.subr.bf16.mxu0 %v5456
        %5910 = vmatpush2.bf16.msra.mxu0 %v5455
        %5911 = vmatprep.subr.bf16.mxu0 %v5452
        %5912 = vmatpush2.bf16.msra.mxu0 %v5451
        %5913 = vmatprep.subr.bf16.mxu0 %v5448
        %5914 = vmatpush2.bf16.msra.mxu0 %v5447
        %5915 = vmatprep.subr.bf16.mxu0 %v5444
        %5916 = vmatpush2.bf16.msra.mxu0 %v5443
        %5917 = vmatprep.subr.bf16.mxu0 %v5440
        %5918 = vmatpush2.bf16.msra.mxu0 %v5439
        %5919 = vmatprep.mubr.bf16.mxu0 %v2443
        %5920 = vmatmul.mubr.bf16.gmra.mxu0 %v2440
        %v5921 = vpop.f32.mrf.mxu0
        %v5922 = vadd.f32 0.0, %v5921
        %v5923 = vpop.f32.mrf.mxu0
        %v5924 = vadd.f32 0.0, %v5923
        %v5925 = vpop.f32.mrf.mxu0
        %v5926 = vadd.f32 0.0, %v5925
        %v5927 = vpop.f32.mrf.mxu0
        %v5928 = vadd.f32 0.0, %v5927
        %5929 = vmatprep.mubr.bf16.mxu0 %v2356
        %5930 = vmatmul.mubr.bf16.gmra.mxu0 %v2354
        %v5931 = vpop.f32.mrf.mxu0
        %v5932 = vadd.f32 0.0, %v5931
        %v5933 = vpop.f32.mrf.mxu0
        %v5934 = vadd.f32 0.0, %v5933
        %v5935 = vpop.f32.mrf.mxu0
        %v5936 = vadd.f32 0.0, %v5935
        %v5937 = vpop.f32.mrf.mxu0
        %v5938 = vadd.f32 0.0, %v5937
        %5939 = vmatprep.mubr.bf16.mxu0 %v2364
        %5940 = vmatmul.mubr.bf16.gmra.mxu0 %v2362
        %v5941 = vpop.f32.mrf.mxu0
        %v5942 = vadd.f32 0.0, %v5941
        %v5943 = vpop.f32.mrf.mxu0
        %v5944 = vadd.f32 0.0, %v5943
        %v5945 = vpop.f32.mrf.mxu0
        %v5946 = vadd.f32 0.0, %v5945
        %v5947 = vpop.f32.mrf.mxu0
        %v5948 = vadd.f32 0.0, %v5947
        %5949 = vmatprep.mubr.bf16.mxu0 %v2372
        %5950 = vmatmul.mubr.bf16.gmra.mxu0 %v2370
        %v5951 = vpop.f32.mrf.mxu0
        %v5952 = vadd.f32 0.0, %v5951
        %v5953 = vpop.f32.mrf.mxu0
        %v5954 = vadd.f32 0.0, %v5953
        %v5955 = vpop.f32.mrf.mxu0
        %v5956 = vadd.f32 0.0, %v5955
        %v5957 = vpop.f32.mrf.mxu0
        %v5958 = vadd.f32 0.0, %v5957
        %5959 = vmatprep.mubr.bf16.mxu0 %v2380
        %5960 = vmatmul.mubr.bf16.gmra.mxu0 %v2378
        %v5961 = vpop.f32.mrf.mxu0
        %v5962 = vadd.f32 0.0, %v5961
        %v5963 = vpop.f32.mrf.mxu0
        %v5964 = vadd.f32 0.0, %v5963
        %v5965 = vpop.f32.mrf.mxu0
        %v5966 = vadd.f32 0.0, %v5965
        %v5967 = vpop.f32.mrf.mxu0
        %v5968 = vadd.f32 0.0, %v5967
        %5969 = vmatprep.mubr.bf16.mxu0 %v2388
        %5970 = vmatmul.mubr.bf16.gmra.mxu0 %v2386
        %v5971 = vpop.f32.mrf.mxu0
        %v5972 = vadd.f32 0.0, %v5971
        %v5973 = vpop.f32.mrf.mxu0
        %v5974 = vadd.f32 0.0, %v5973
        %v5975 = vpop.f32.mrf.mxu0
        %v5976 = vadd.f32 0.0, %v5975
        %v5977 = vpop.f32.mrf.mxu0
        %v5978 = vadd.f32 0.0, %v5977
        %5979 = vmatprep.mubr.bf16.mxu0 %v2396
        %5980 = vmatmul.mubr.bf16.gmra.mxu0 %v2394
        %v5981 = vpop.f32.mrf.mxu0
        %v5982 = vadd.f32 0.0, %v5981
        %v5983 = vpop.f32.mrf.mxu0
        %v5984 = vadd.f32 0.0, %v5983
        %v5985 = vpop.f32.mrf.mxu0
        %v5986 = vadd.f32 0.0, %v5985
        %v5987 = vpop.f32.mrf.mxu0
        %v5988 = vadd.f32 0.0, %v5987
        %5989 = vmatprep.mubr.bf16.mxu0 %v2404
        %5990 = vmatmul.mubr.bf16.gmra.mxu0 %v2402
        %v5991 = vpop.f32.mrf.mxu0
        %v5992 = vadd.f32 0.0, %v5991
        %v5993 = vpop.f32.mrf.mxu0
        %v5994 = vadd.f32 0.0, %v5993
        %v5995 = vpop.f32.mrf.mxu0
        %v5996 = vadd.f32 0.0, %v5995
        %v5997 = vpop.f32.mrf.mxu0
        %v5998 = vadd.f32 0.0, %v5997
        %5999 = vdwg.mxu0
        %6000 = vmatprep.subr.bf16.mxu0 %v5500
        %6001 = vmatpush1.bf16.msra.mxu0 %v5499
        %6002 = vmatprep.subr.bf16.mxu0 %v5496
        %6003 = vmatpush1.bf16.msra.mxu0 %v5495
        %6004 = vmatprep.subr.bf16.mxu0 %v5492
        %6005 = vmatpush1.bf16.msra.mxu0 %v5491
        %6006 = vmatprep.subr.bf16.mxu0 %v5488
        %6007 = vmatpush1.bf16.msra.mxu0 %v5487
        %6008 = vmatprep.subr.bf16.mxu0 %v5484
        %6009 = vmatpush1.bf16.msra.mxu0 %v5483
        %6010 = vmatprep.subr.bf16.mxu0 %v5480
        %6011 = vmatpush1.bf16.msra.mxu0 %v5479
        %6012 = vmatprep.subr.bf16.mxu0 %v5476
        %6013 = vmatpush1.bf16.msra.mxu0 %v5475
        %6014 = vmatprep.subr.bf16.mxu0 %v5472
        %6015 = vmatpush1.bf16.msra.mxu0 %v5471
        %6016 = vmatprep.subr.bf16.mxu0 %v5532
        %6017 = vmatpush2.bf16.msra.mxu0 %v5531
        %6018 = vmatprep.subr.bf16.mxu0 %v5528
        %6019 = vmatpush2.bf16.msra.mxu0 %v5527
        %6020 = vmatprep.subr.bf16.mxu0 %v5524
        %6021 = vmatpush2.bf16.msra.mxu0 %v5523
        %6022 = vmatprep.subr.bf16.mxu0 %v5520
        %6023 = vmatpush2.bf16.msra.mxu0 %v5519
        %6024 = vmatprep.subr.bf16.mxu0 %v5516
        %6025 = vmatpush2.bf16.msra.mxu0 %v5515
        %6026 = vmatprep.subr.bf16.mxu0 %v5512
        %6027 = vmatpush2.bf16.msra.mxu0 %v5511
        %6028 = vmatprep.subr.bf16.mxu0 %v5508
        %6029 = vmatpush2.bf16.msra.mxu0 %v5507
        %6030 = vmatprep.subr.bf16.mxu0 %v5504
        %6031 = vmatpush2.bf16.msra.mxu0 %v5503
        %6032 = vmatprep.mubr.bf16.mxu0 %v2449
        %6033 = vmatmul.mubr.bf16.gmra.mxu0 %v2446
        %v6034 = vpop.f32.mrf.mxu0
        %v6035 = vadd.f32 %v5922, %v6034
        %v6036 = vpop.f32.mrf.mxu0
        %v6037 = vadd.f32 %v5924, %v6036
        %v6038 = vpop.f32.mrf.mxu0
        %v6039 = vadd.f32 %v5926, %v6038
        %v6040 = vpop.f32.mrf.mxu0
        %v6041 = vadd.f32 %v5928, %v6040
        %6042 = vmatprep.mubr.bf16.mxu0 %v2360
        %6043 = vmatmul.mubr.bf16.gmra.mxu0 %v2358
        %v6044 = vpop.f32.mrf.mxu0
        %v6045 = vadd.f32 %v5932, %v6044
        %v6046 = vpop.f32.mrf.mxu0
        %v6047 = vadd.f32 %v5934, %v6046
        %v6048 = vpop.f32.mrf.mxu0
        %v6049 = vadd.f32 %v5936, %v6048
        %v6050 = vpop.f32.mrf.mxu0
        %v6051 = vadd.f32 %v5938, %v6050
        %6052 = vmatprep.mubr.bf16.mxu0 %v2368
        %6053 = vmatmul.mubr.bf16.gmra.mxu0 %v2366
        %v6054 = vpop.f32.mrf.mxu0
        %v6055 = vadd.f32 %v5942, %v6054
        %v6056 = vpop.f32.mrf.mxu0
        %v6057 = vadd.f32 %v5944, %v6056
        %v6058 = vpop.f32.mrf.mxu0
        %v6059 = vadd.f32 %v5946, %v6058
        %v6060 = vpop.f32.mrf.mxu0
        %v6061 = vadd.f32 %v5948, %v6060
        %6062 = vmatprep.mubr.bf16.mxu0 %v2376
        %6063 = vmatmul.mubr.bf16.gmra.mxu0 %v2374
        %v6064 = vpop.f32.mrf.mxu0
        %v6065 = vadd.f32 %v5952, %v6064
        %v6066 = vpop.f32.mrf.mxu0
        %v6067 = vadd.f32 %v5954, %v6066
        %v6068 = vpop.f32.mrf.mxu0
        %v6069 = vadd.f32 %v5956, %v6068
        %v6070 = vpop.f32.mrf.mxu0
        %v6071 = vadd.f32 %v5958, %v6070
        %6072 = vmatprep.mubr.bf16.mxu0 %v2384
        %6073 = vmatmul.mubr.bf16.gmra.mxu0 %v2382
        %v6074 = vpop.f32.mrf.mxu0
        %v6075 = vadd.f32 %v5962, %v6074
        %v6076 = vpop.f32.mrf.mxu0
        %v6077 = vadd.f32 %v5964, %v6076
        %v6078 = vpop.f32.mrf.mxu0
        %v6079 = vadd.f32 %v5966, %v6078
        %v6080 = vpop.f32.mrf.mxu0
        %v6081 = vadd.f32 %v5968, %v6080
        %6082 = vmatprep.mubr.bf16.mxu0 %v2392
        %6083 = vmatmul.mubr.bf16.gmra.mxu0 %v2390
        %v6084 = vpop.f32.mrf.mxu0
        %v6085 = vadd.f32 %v5972, %v6084
        %v6086 = vpop.f32.mrf.mxu0
        %v6087 = vadd.f32 %v5974, %v6086
        %v6088 = vpop.f32.mrf.mxu0
        %v6089 = vadd.f32 %v5976, %v6088
        %v6090 = vpop.f32.mrf.mxu0
        %v6091 = vadd.f32 %v5978, %v6090
        %6092 = vmatprep.mubr.bf16.mxu0 %v2400
        %6093 = vmatmul.mubr.bf16.gmra.mxu0 %v2398
        %v6094 = vpop.f32.mrf.mxu0
        %v6095 = vadd.f32 %v5982, %v6094
        %v6096 = vpop.f32.mrf.mxu0
        %v6097 = vadd.f32 %v5984, %v6096
        %v6098 = vpop.f32.mrf.mxu0
        %v6099 = vadd.f32 %v5986, %v6098
        %v6100 = vpop.f32.mrf.mxu0
        %v6101 = vadd.f32 %v5988, %v6100
        %6102 = vmatprep.mubr.bf16.mxu0 %v2408
        %6103 = vmatmul.mubr.bf16.gmra.mxu0 %v2406
        %v6104 = vpop.f32.mrf.mxu0
        %v6105 = vadd.f32 %v5992, %v6104
        %v6106 = vpop.f32.mrf.mxu0
        %v6107 = vadd.f32 %v5994, %v6106
        %v6108 = vpop.f32.mrf.mxu0
        %v6109 = vadd.f32 %v5996, %v6108
        %v6110 = vpop.f32.mrf.mxu0
        %v6111 = vadd.f32 %v5998, %v6110
        %6112 = vdwg.mxu0
        %v6113 = vadd.f32 %v4589, %v5809
        %v6114 = vadd.f32 %v4591, %v5811
        %v6115 = vadd.f32 %v4815, %v6035
        %v6116 = vadd.f32 %v4817, %v6037
        %v6117 = vadd.f32 %v4593, %v5813
        %v6118 = vadd.f32 %v4595, %v5815
        %v6119 = vadd.f32 %v4819, %v6039
        %v6120 = vadd.f32 %v4821, %v6041
        %v6121 = vadd.f32 %v4599, %v5819
        %v6122 = vadd.f32 %v4601, %v5821
        %v6123 = vadd.f32 %v4825, %v6045
        %v6124 = vadd.f32 %v4827, %v6047
        %v6125 = vadd.f32 %v4603, %v5823
        %v6126 = vadd.f32 %v4605, %v5825
        %v6127 = vadd.f32 %v4829, %v6049
        %v6128 = vadd.f32 %v4831, %v6051
        %v6129 = vadd.f32 %v4609, %v5829
        %v6130 = vadd.f32 %v4611, %v5831
        %v6131 = vadd.f32 %v4835, %v6055
        %v6132 = vadd.f32 %v4837, %v6057
        %v6133 = vadd.f32 %v4613, %v5833
        %v6134 = vadd.f32 %v4615, %v5835
        %v6135 = vadd.f32 %v4839, %v6059
        %v6136 = vadd.f32 %v4841, %v6061
        %v6137 = vadd.f32 %v4619, %v5839
        %v6138 = vadd.f32 %v4621, %v5841
        %v6139 = vadd.f32 %v4845, %v6065
        %v6140 = vadd.f32 %v4847, %v6067
        %v6141 = vadd.f32 %v4623, %v5843
        %v6142 = vadd.f32 %v4625, %v5845
        %v6143 = vadd.f32 %v4849, %v6069
        %v6144 = vadd.f32 %v4851, %v6071
        %v6145 = vadd.f32 %v4629, %v5849
        %v6146 = vadd.f32 %v4631, %v5851
        %v6147 = vadd.f32 %v4855, %v6075
        %v6148 = vadd.f32 %v4857, %v6077
        %v6149 = vadd.f32 %v4633, %v5853
        %v6150 = vadd.f32 %v4635, %v5855
        %v6151 = vadd.f32 %v4859, %v6079
        %v6152 = vadd.f32 %v4861, %v6081
        %v6153 = vadd.f32 %v4639, %v5859
        %v6154 = vadd.f32 %v4641, %v5861
        %v6155 = vadd.f32 %v4865, %v6085
        %v6156 = vadd.f32 %v4867, %v6087
        %v6157 = vadd.f32 %v4643, %v5863
        %v6158 = vadd.f32 %v4645, %v5865
        %v6159 = vadd.f32 %v4869, %v6089
        %v6160 = vadd.f32 %v4871, %v6091
        %v6161 = vadd.f32 %v4649, %v5869
        %v6162 = vadd.f32 %v4651, %v5871
        %v6163 = vadd.f32 %v4875, %v6095
        %v6164 = vadd.f32 %v4877, %v6097
        %v6165 = vadd.f32 %v4653, %v5873
        %v6166 = vadd.f32 %v4655, %v5875
        %v6167 = vadd.f32 %v4879, %v6099
        %v6168 = vadd.f32 %v4881, %v6101
        %v6169 = vadd.f32 %v4659, %v5879
        %v6170 = vadd.f32 %v4661, %v5881
        %v6171 = vadd.f32 %v4885, %v6105
        %v6172 = vadd.f32 %v4887, %v6107
        %v6173 = vadd.f32 %v4663, %v5883
        %v6174 = vadd.f32 %v4665, %v5885
        %v6175 = vadd.f32 %v4889, %v6109
        %v6176 = vadd.f32 %v4891, %v6111
        %v6177 = vld [vmem:[%s4] sm:$0xf]
        %v6179 = vlaneseq
        %v6180 = vshrl.u32 %v6179, 7
        %v6181 = vsub.s32 0, %v6180
        %v6182 = vrot.slane %v6177, %v6181
        %v6183 = vlaneseq
        %v6184 = vshrl.u32 %v6183, 7
        %v6185 = vsub.s32 1, %v6184
        %v6186 = vrot.slane %v6177, %v6185
        %v6187 = vlaneseq
        %v6188 = vshrl.u32 %v6187, 7
        %v6189 = vsub.s32 2, %v6188
        %v6190 = vrot.slane %v6177, %v6189
        %v6191 = vlaneseq
        %v6192 = vshrl.u32 %v6191, 7
        %v6193 = vsub.s32 3, %v6192
        %v6194 = vrot.slane %v6177, %v6193
        %v6199 = vadd.f32 %v6113, %v6182
        %v6200 = vadd.f32 %v6114, %v6186
        %v6201 = vadd.f32 %v6115, %v6190
        %v6202 = vadd.f32 %v6116, %v6194
        %v6203 = vadd.f32 %v6117, %v6182
        %v6204 = vadd.f32 %v6118, %v6186
        %v6205 = vadd.f32 %v6119, %v6190
        %v6206 = vadd.f32 %v6120, %v6194
        %v6207 = vadd.f32 %v6121, %v6182
        %v6208 = vadd.f32 %v6122, %v6186
        %v6209 = vadd.f32 %v6123, %v6190
        %v6210 = vadd.f32 %v6124, %v6194
        %v6211 = vadd.f32 %v6125, %v6182
        %v6212 = vadd.f32 %v6126, %v6186
        %v6213 = vadd.f32 %v6127, %v6190
        %v6214 = vadd.f32 %v6128, %v6194
        %v6215 = vadd.f32 %v6129, %v6182
        %v6216 = vadd.f32 %v6130, %v6186
        %v6217 = vadd.f32 %v6131, %v6190
        %v6218 = vadd.f32 %v6132, %v6194
        %v6219 = vadd.f32 %v6133, %v6182
        %v6220 = vadd.f32 %v6134, %v6186
        %v6221 = vadd.f32 %v6135, %v6190
        %v6222 = vadd.f32 %v6136, %v6194
        %v6223 = vadd.f32 %v6137, %v6182
        %v6224 = vadd.f32 %v6138, %v6186
        %v6225 = vadd.f32 %v6139, %v6190
        %v6226 = vadd.f32 %v6140, %v6194
        %v6227 = vadd.f32 %v6141, %v6182
        %v6228 = vadd.f32 %v6142, %v6186
        %v6229 = vadd.f32 %v6143, %v6190
        %v6230 = vadd.f32 %v6144, %v6194
        %v6231 = vadd.f32 %v6145, %v6182
        %v6232 = vadd.f32 %v6146, %v6186
        %v6233 = vadd.f32 %v6147, %v6190
        %v6234 = vadd.f32 %v6148, %v6194
        %v6235 = vadd.f32 %v6149, %v6182
        %v6236 = vadd.f32 %v6150, %v6186
        %v6237 = vadd.f32 %v6151, %v6190
        %v6238 = vadd.f32 %v6152, %v6194
        %v6239 = vadd.f32 %v6153, %v6182
        %v6240 = vadd.f32 %v6154, %v6186
        %v6241 = vadd.f32 %v6155, %v6190
        %v6242 = vadd.f32 %v6156, %v6194
        %v6243 = vadd.f32 %v6157, %v6182
        %v6244 = vadd.f32 %v6158, %v6186
        %v6245 = vadd.f32 %v6159, %v6190
        %v6246 = vadd.f32 %v6160, %v6194
        %v6247 = vadd.f32 %v6161, %v6182
        %v6248 = vadd.f32 %v6162, %v6186
        %v6249 = vadd.f32 %v6163, %v6190
        %v6250 = vadd.f32 %v6164, %v6194
        %v6251 = vadd.f32 %v6165, %v6182
        %v6252 = vadd.f32 %v6166, %v6186
        %v6253 = vadd.f32 %v6167, %v6190
        %v6254 = vadd.f32 %v6168, %v6194
        %v6255 = vadd.f32 %v6169, %v6182
        %v6256 = vadd.f32 %v6170, %v6186
        %v6257 = vadd.f32 %v6171, %v6190
        %v6258 = vadd.f32 %v6172, %v6194
        %v6259 = vadd.f32 %v6173, %v6182
        %v6260 = vadd.f32 %v6174, %v6186
        %v6261 = vadd.f32 %v6175, %v6190
        %v6262 = vadd.f32 %v6176, %v6194
        %v6263 = vmax.f32 %v6199, 0.0
        %v6264 = vmax.f32 %v6200, 0.0
        %v6265 = vmax.f32 %v6201, 0.0
        %v6266 = vmax.f32 %v6202, 0.0
        %v6267 = vmax.f32 %v6203, 0.0
        %v6268 = vmax.f32 %v6204, 0.0
        %v6269 = vmax.f32 %v6205, 0.0
        %v6270 = vmax.f32 %v6206, 0.0
        %v6271 = vmax.f32 %v6207, 0.0
        %v6272 = vmax.f32 %v6208, 0.0
        %v6273 = vmax.f32 %v6209, 0.0
        %v6274 = vmax.f32 %v6210, 0.0
        %v6275 = vmax.f32 %v6211, 0.0
        %v6276 = vmax.f32 %v6212, 0.0
        %v6277 = vmax.f32 %v6213, 0.0
        %v6278 = vmax.f32 %v6214, 0.0
        %v6279 = vmax.f32 %v6215, 0.0
        %v6280 = vmax.f32 %v6216, 0.0
        %v6281 = vmax.f32 %v6217, 0.0
        %v6282 = vmax.f32 %v6218, 0.0
        %v6283 = vmax.f32 %v6219, 0.0
        %v6284 = vmax.f32 %v6220, 0.0
        %v6285 = vmax.f32 %v6221, 0.0
        %v6286 = vmax.f32 %v6222, 0.0
        %v6287 = vmax.f32 %v6223, 0.0
        %v6288 = vmax.f32 %v6224, 0.0
        %v6289 = vmax.f32 %v6225, 0.0
        %v6290 = vmax.f32 %v6226, 0.0
        %v6291 = vmax.f32 %v6227, 0.0
        %v6292 = vmax.f32 %v6228, 0.0
        %v6293 = vmax.f32 %v6229, 0.0
        %v6294 = vmax.f32 %v6230, 0.0
        %v6295 = vmax.f32 %v6231, 0.0
        %v6296 = vmax.f32 %v6232, 0.0
        %v6297 = vmax.f32 %v6233, 0.0
        %v6298 = vmax.f32 %v6234, 0.0
        %v6299 = vmax.f32 %v6235, 0.0
        %v6300 = vmax.f32 %v6236, 0.0
        %v6301 = vmax.f32 %v6237, 0.0
        %v6302 = vmax.f32 %v6238, 0.0
        %v6303 = vmax.f32 %v6239, 0.0
        %v6304 = vmax.f32 %v6240, 0.0
        %v6305 = vmax.f32 %v6241, 0.0
        %v6306 = vmax.f32 %v6242, 0.0
        %v6307 = vmax.f32 %v6243, 0.0
        %v6308 = vmax.f32 %v6244, 0.0
        %v6309 = vmax.f32 %v6245, 0.0
        %v6310 = vmax.f32 %v6246, 0.0
        %v6311 = vmax.f32 %v6247, 0.0
        %v6312 = vmax.f32 %v6248, 0.0
        %v6313 = vmax.f32 %v6249, 0.0
        %v6314 = vmax.f32 %v6250, 0.0
        %v6315 = vmax.f32 %v6251, 0.0
        %v6316 = vmax.f32 %v6252, 0.0
        %v6317 = vmax.f32 %v6253, 0.0
        %v6318 = vmax.f32 %v6254, 0.0
        %v6319 = vmax.f32 %v6255, 0.0
        %v6320 = vmax.f32 %v6256, 0.0
        %v6321 = vmax.f32 %v6257, 0.0
        %v6322 = vmax.f32 %v6258, 0.0
        %v6323 = vmax.f32 %v6259, 0.0
        %v6324 = vmax.f32 %v6260, 0.0
        %v6325 = vmax.f32 %v6261, 0.0
        %v6326 = vmax.f32 %v6262, 0.0
        %v6327 = vmax.f32 %v6263, %v6267
        %v6328 = vmax.f32 %v6264, %v6268
        %v6329 = vmax.f32 %v6265, %v6269
        %v6330 = vmax.f32 %v6266, %v6270
        %6331 = vrot.lane.b32.xlu0 %v6327, 96
        %v6332 = vpop.permute.xlu0 %6331
        %6333 = vrot.lane.b32.xlu0 %v6328, 96
        %v6334 = vpop.permute.xlu0 %6333
        %6335 = vrot.lane.b32.xlu0 %v6329, 96
        %v6336 = vpop.permute.xlu0 %6335
        %6337 = vrot.lane.b32.xlu0 %v6330, 96
        %v6338 = vpop.permute.xlu0 %6337
        %v6339 = vlaneseq
        %v6340 = vand.u32 %v6339, 127
        %vm6341 = vcmp.lt.s32.totalorder %v6340, 96
        %v6342 = vsel %vm6341, %v6336, %v6338
        %v6343 = vsel %vm6341, %v6334, %v6336
        %v6344 = vsel %vm6341, %v6332, %v6334
        %v6345 = vsel %vm6341, %v6338, %v6332
        %v6346 = vmax.f32 %v6327, %v6344
        %v6347 = vmax.f32 %v6328, %v6343
        %v6348 = vmax.f32 %v6329, %v6342
        %v6349 = vmax.f32 %v6330, %v6345
        %v6350 = vpack.c.bf16 %v6346, %v6346
        %v6351 = vpack.c.bf16 %v6347, %v6347
        %v6352 = vpack.c.bf16 %v6348, %v6348
        %v6353 = vpack.c.bf16 %v6349, %v6349
        %v6354 = vld [vmem:[%s5] sm:$0xf]
        %v6355 = vld [vmem:[%s5 + $0x4] sm:$0xf]
        %v6356 = vld [vmem:[%s5 + $0x8] sm:$0xf]
        %v6357 = vld [vmem:[%s5 + $0xc] sm:$0xf]
        %v6358 = vld [vmem:[%s5 + $0x10] sm:$0xf]
        %v6359 = vld [vmem:[%s5 + $0x14] sm:$0xf]
        %v6360 = vld [vmem:[%s5 + $0x18] sm:$0xf]
        %v6361 = vld [vmem:[%s5 + $0x1c] sm:$0xf]
        %v6362 = vld [vmem:[%s5 + $0x20] sm:$0xf]
        %v6363 = vld [vmem:[%s5 + $0x24] sm:$0xf]
        %v6364 = vld [vmem:[%s5 + $0x28] sm:$0xf]
        %v6365 = vld [vmem:[%s5 + $0x2c] sm:$0xf]
        %v6366 = vld [vmem:[%s5 + $0x30] sm:$0xf]
        %v6367 = vld [vmem:[%s5 + $0x34] sm:$0xf]
        %v6368 = vld [vmem:[%s5 + $0x38] sm:$0xf]
        %v6369 = vld [vmem:[%s5 + $0x3c] sm:$0xf]
        %v6370 = vld [vmem:[%s5 + $0x40] sm:$0xf]
        %v6371 = vld [vmem:[%s5 + $0x44] sm:$0xf]
        %v6372 = vld [vmem:[%s5 + $0x48] sm:$0xf]
        %v6373 = vld [vmem:[%s5 + $0x4c] sm:$0xf]
        %v6374 = vld [vmem:[%s5 + $0x50] sm:$0xf]
        %v6375 = vld [vmem:[%s5 + $0x54] sm:$0xf]
        %v6376 = vld [vmem:[%s5 + $0x58] sm:$0xf]
        %v6377 = vld [vmem:[%s5 + $0x5c] sm:$0xf]
        %v6378 = vld [vmem:[%s5 + $0x60] sm:$0xf]
        %v6379 = vld [vmem:[%s5 + $0x64] sm:$0xf]
        %v6380 = vld [vmem:[%s5 + $0x68] sm:$0xf]
        %v6381 = vld [vmem:[%s5 + $0x6c] sm:$0xf]
        %v6382 = vld [vmem:[%s5 + $0x70] sm:$0xf]
        %v6383 = vld [vmem:[%s5 + $0x74] sm:$0xf]
        %v6384 = vld [vmem:[%s5 + $0x78] sm:$0xf]
        %v6385 = vld [vmem:[%s5 + $0x7c] sm:$0xf]
        %v6386 = vld [vmem:[%s5 + $0x80] sm:$0xf]
        %v6387 = vld [vmem:[%s5 + $0x84] sm:$0xf]
        %v6388 = vld [vmem:[%s5 + $0x88] sm:$0xf]
        %v6389 = vld [vmem:[%s5 + $0x8c] sm:$0xf]
        %v6390 = vld [vmem:[%s5 + $0x90] sm:$0xf]
        %v6391 = vld [vmem:[%s5 + $0x94] sm:$0xf]
        %v6392 = vld [vmem:[%s5 + $0x98] sm:$0xf]
        %v6393 = vld [vmem:[%s5 + $0x9c] sm:$0xf]
        %v6394 = vld [vmem:[%s5 + $0xa0] sm:$0xf]
        %v6395 = vld [vmem:[%s5 + $0xa4] sm:$0xf]
        %v6396 = vld [vmem:[%s5 + $0xa8] sm:$0xf]
        %v6397 = vld [vmem:[%s5 + $0xac] sm:$0xf]
        %v6398 = vld [vmem:[%s5 + $0xb0] sm:$0xf]
        %v6399 = vld [vmem:[%s5 + $0xb4] sm:$0xf]
        %v6400 = vld [vmem:[%s5 + $0xb8] sm:$0xf]
        %v6401 = vld [vmem:[%s5 + $0xbc] sm:$0xf]
        %v6402 = vld [vmem:[%s5 + $0xc0] sm:$0xf]
        %v6403 = vld [vmem:[%s5 + $0xc4] sm:$0xf]
        %v6404 = vld [vmem:[%s5 + $0xc8] sm:$0xf]
        %v6405 = vld [vmem:[%s5 + $0xcc] sm:$0xf]
        %v6406 = vld [vmem:[%s5 + $0xd0] sm:$0xf]
        %v6407 = vld [vmem:[%s5 + $0xd4] sm:$0xf]
        %v6408 = vld [vmem:[%s5 + $0xd8] sm:$0xf]
        %v6409 = vld [vmem:[%s5 + $0xdc] sm:$0xf]
        %v6410 = vld [vmem:[%s5 + $0xe0] sm:$0xf]
        %v6411 = vld [vmem:[%s5 + $0xe4] sm:$0xf]
        %v6412 = vld [vmem:[%s5 + $0xe8] sm:$0xf]
        %v6413 = vld [vmem:[%s5 + $0xec] sm:$0xf]
        %v6414 = vld [vmem:[%s5 + $0xf0] sm:$0xf]
        %v6415 = vld [vmem:[%s5 + $0xf4] sm:$0xf]
        %v6416 = vld [vmem:[%s5 + $0xf8] sm:$0xf]
        %v6417 = vld [vmem:[%s5 + $0xfc] sm:$0xf]
        %v6418 = vmax.f32 %v6271, %v6275
        %v6419 = vmax.f32 %v6272, %v6276
        %v6420 = vmax.f32 %v6273, %v6277
        %v6421 = vmax.f32 %v6274, %v6278
        %6422 = vrot.lane.b32.xlu0 %v6418, 96
        %v6423 = vpop.permute.xlu0 %6422
        %6424 = vrot.lane.b32.xlu0 %v6419, 96
        %v6425 = vpop.permute.xlu0 %6424
        %6426 = vrot.lane.b32.xlu0 %v6420, 96
        %v6427 = vpop.permute.xlu0 %6426
        %6428 = vrot.lane.b32.xlu0 %v6421, 96
        %v6429 = vpop.permute.xlu0 %6428
        %v6430 = vsel %vm6341, %v6427, %v6429
        %v6431 = vsel %vm6341, %v6425, %v6427
        %v6432 = vsel %vm6341, %v6423, %v6425
        %v6433 = vsel %vm6341, %v6429, %v6423
        %v6434 = vmax.f32 %v6418, %v6432
        %v6435 = vmax.f32 %v6419, %v6431
        %v6436 = vmax.f32 %v6420, %v6430
        %v6437 = vmax.f32 %v6421, %v6433
        %v6438 = vpack.c.bf16 %v6434, %v6434
        %v6439 = vpack.c.bf16 %v6435, %v6435
        %v6440 = vpack.c.bf16 %v6436, %v6436
        %v6441 = vpack.c.bf16 %v6437, %v6437
        %s6442 = scalar_lea.vmem %s5, 256
        %v6443 = vld [vmem:[%s6442] sm:$0xf]
        %v6444 = vld [vmem:[%s6442 + $0x4] sm:$0xf]
        %v6445 = vld [vmem:[%s6442 + $0x8] sm:$0xf]
        %v6446 = vld [vmem:[%s6442 + $0xc] sm:$0xf]
        %v6447 = vld [vmem:[%s6442 + $0x10] sm:$0xf]
        %v6448 = vld [vmem:[%s6442 + $0x14] sm:$0xf]
        %v6449 = vld [vmem:[%s6442 + $0x18] sm:$0xf]
        %v6450 = vld [vmem:[%s6442 + $0x1c] sm:$0xf]
        %v6451 = vld [vmem:[%s6442 + $0x20] sm:$0xf]
        %v6452 = vld [vmem:[%s6442 + $0x24] sm:$0xf]
        %v6453 = vld [vmem:[%s6442 + $0x28] sm:$0xf]
        %v6454 = vld [vmem:[%s6442 + $0x2c] sm:$0xf]
        %v6455 = vld [vmem:[%s6442 + $0x30] sm:$0xf]
        %v6456 = vld [vmem:[%s6442 + $0x34] sm:$0xf]
        %v6457 = vld [vmem:[%s6442 + $0x38] sm:$0xf]
        %v6458 = vld [vmem:[%s6442 + $0x3c] sm:$0xf]
        %v6459 = vld [vmem:[%s6442 + $0x40] sm:$0xf]
        %v6460 = vld [vmem:[%s6442 + $0x44] sm:$0xf]
        %v6461 = vld [vmem:[%s6442 + $0x48] sm:$0xf]
        %v6462 = vld [vmem:[%s6442 + $0x4c] sm:$0xf]
        %v6463 = vld [vmem:[%s6442 + $0x50] sm:$0xf]
        %v6464 = vld [vmem:[%s6442 + $0x54] sm:$0xf]
        %v6465 = vld [vmem:[%s6442 + $0x58] sm:$0xf]
        %v6466 = vld [vmem:[%s6442 + $0x5c] sm:$0xf]
        %v6467 = vld [vmem:[%s6442 + $0x60] sm:$0xf]
        %v6468 = vld [vmem:[%s6442 + $0x64] sm:$0xf]
        %v6469 = vld [vmem:[%s6442 + $0x68] sm:$0xf]
        %v6470 = vld [vmem:[%s6442 + $0x6c] sm:$0xf]
        %v6471 = vld [vmem:[%s6442 + $0x70] sm:$0xf]
        %v6472 = vld [vmem:[%s6442 + $0x74] sm:$0xf]
        %v6473 = vld [vmem:[%s6442 + $0x78] sm:$0xf]
        %v6474 = vld [vmem:[%s6442 + $0x7c] sm:$0xf]
        %v6475 = vld [vmem:[%s6442 + $0x80] sm:$0xf]
        %v6476 = vld [vmem:[%s6442 + $0x84] sm:$0xf]
        %v6477 = vld [vmem:[%s6442 + $0x88] sm:$0xf]
        %v6478 = vld [vmem:[%s6442 + $0x8c] sm:$0xf]
        %v6479 = vld [vmem:[%s6442 + $0x90] sm:$0xf]
        %v6480 = vld [vmem:[%s6442 + $0x94] sm:$0xf]
        %v6481 = vld [vmem:[%s6442 + $0x98] sm:$0xf]
        %v6482 = vld [vmem:[%s6442 + $0x9c] sm:$0xf]
        %v6483 = vld [vmem:[%s6442 + $0xa0] sm:$0xf]
        %v6484 = vld [vmem:[%s6442 + $0xa4] sm:$0xf]
        %v6485 = vld [vmem:[%s6442 + $0xa8] sm:$0xf]
        %v6486 = vld [vmem:[%s6442 + $0xac] sm:$0xf]
        %v6487 = vld [vmem:[%s6442 + $0xb0] sm:$0xf]
        %v6488 = vld [vmem:[%s6442 + $0xb4] sm:$0xf]
        %v6489 = vld [vmem:[%s6442 + $0xb8] sm:$0xf]
        %v6490 = vld [vmem:[%s6442 + $0xbc] sm:$0xf]
        %v6491 = vld [vmem:[%s6442 + $0xc0] sm:$0xf]
        %v6492 = vld [vmem:[%s6442 + $0xc4] sm:$0xf]
        %v6493 = vld [vmem:[%s6442 + $0xc8] sm:$0xf]
        %v6494 = vld [vmem:[%s6442 + $0xcc] sm:$0xf]
        %v6495 = vld [vmem:[%s6442 + $0xd0] sm:$0xf]
        %v6496 = vld [vmem:[%s6442 + $0xd4] sm:$0xf]
        %v6497 = vld [vmem:[%s6442 + $0xd8] sm:$0xf]
        %v6498 = vld [vmem:[%s6442 + $0xdc] sm:$0xf]
        %v6499 = vld [vmem:[%s6442 + $0xe0] sm:$0xf]
        %v6500 = vld [vmem:[%s6442 + $0xe4] sm:$0xf]
        %v6501 = vld [vmem:[%s6442 + $0xe8] sm:$0xf]
        %v6502 = vld [vmem:[%s6442 + $0xec] sm:$0xf]
        %v6503 = vld [vmem:[%s6442 + $0xf0] sm:$0xf]
        %v6504 = vld [vmem:[%s6442 + $0xf4] sm:$0xf]
        %v6505 = vld [vmem:[%s6442 + $0xf8] sm:$0xf]
        %v6506 = vld [vmem:[%s6442 + $0xfc] sm:$0xf]
        %v6571 = vunpack.c.l.b16 %v6443
        %v6572 = vunpack.c.l.b16 %v6444
        %v6573 = vunpack.c.l.b16 %v6445
        %v6574 = vunpack.c.l.b16 %v6446
        %v6575 = vunpack.c.l.b16 %v6447
        %v6576 = vunpack.c.l.b16 %v6448
        %v6577 = vunpack.c.l.b16 %v6449
        %v6578 = vunpack.c.l.b16 %v6450
        %v6579 = vunpack.c.l.b16 %v6451
        %v6580 = vunpack.c.l.b16 %v6452
        %v6581 = vunpack.c.l.b16 %v6453
        %v6582 = vunpack.c.l.b16 %v6454
        %v6583 = vunpack.c.l.b16 %v6455
        %v6584 = vunpack.c.l.b16 %v6456
        %v6585 = vunpack.c.l.b16 %v6457
        %v6586 = vunpack.c.l.b16 %v6458
        %v6587 = vunpack.c.l.b16 %v6459
        %v6588 = vunpack.c.l.b16 %v6460
        %v6589 = vunpack.c.l.b16 %v6461
        %v6590 = vunpack.c.l.b16 %v6462
        %v6591 = vunpack.c.l.b16 %v6463
        %v6592 = vunpack.c.l.b16 %v6464
        %v6593 = vunpack.c.l.b16 %v6465
        %v6594 = vunpack.c.l.b16 %v6466
        %v6595 = vunpack.c.l.b16 %v6467
        %v6596 = vunpack.c.l.b16 %v6468
        %v6597 = vunpack.c.l.b16 %v6469
        %v6598 = vunpack.c.l.b16 %v6470
        %v6599 = vunpack.c.l.b16 %v6471
        %v6600 = vunpack.c.l.b16 %v6472
        %v6601 = vunpack.c.l.b16 %v6473
        %v6602 = vunpack.c.l.b16 %v6474
        %v6603 = vunpack.c.l.b16 %v6475
        %v6604 = vunpack.c.l.b16 %v6476
        %v6605 = vunpack.c.l.b16 %v6477
        %v6606 = vunpack.c.l.b16 %v6478
        %v6607 = vunpack.c.l.b16 %v6479
        %v6608 = vunpack.c.l.b16 %v6480
        %v6609 = vunpack.c.l.b16 %v6481
        %v6610 = vunpack.c.l.b16 %v6482
        %v6611 = vunpack.c.l.b16 %v6483
        %v6612 = vunpack.c.l.b16 %v6484
        %v6613 = vunpack.c.l.b16 %v6485
        %v6614 = vunpack.c.l.b16 %v6486
        %v6615 = vunpack.c.l.b16 %v6487
        %v6616 = vunpack.c.l.b16 %v6488
        %v6617 = vunpack.c.l.b16 %v6489
        %v6618 = vunpack.c.l.b16 %v6490
        %v6619 = vunpack.c.l.b16 %v6491
        %v6620 = vunpack.c.l.b16 %v6492
        %v6621 = vunpack.c.l.b16 %v6493
        %v6622 = vunpack.c.l.b16 %v6494
        %v6623 = vunpack.c.l.b16 %v6495
        %v6624 = vunpack.c.l.b16 %v6496
        %v6625 = vunpack.c.l.b16 %v6497
        %v6626 = vunpack.c.l.b16 %v6498
        %v6627 = vunpack.c.l.b16 %v6499
        %v6628 = vunpack.c.l.b16 %v6500
        %v6629 = vunpack.c.l.b16 %v6501
        %v6630 = vunpack.c.l.b16 %v6502
        %v6631 = vunpack.c.l.b16 %v6503
        %v6632 = vunpack.c.l.b16 %v6504
        %v6633 = vunpack.c.l.b16 %v6505
        %v6634 = vunpack.c.l.b16 %v6506
        %v6635 = vpack.c.b16 %v6572, %v6571
        %v6636 = vpack.c.b16 %v6574, %v6573
        %v6637 = vpack.c.b16 %v6576, %v6575
        %v6638 = vpack.c.b16 %v6578, %v6577
        %v6639 = vpack.c.b16 %v6580, %v6579
        %v6640 = vpack.c.b16 %v6582, %v6581
        %v6641 = vpack.c.b16 %v6584, %v6583
        %v6642 = vpack.c.b16 %v6586, %v6585
        %v6643 = vpack.c.b16 %v6588, %v6587
        %v6644 = vpack.c.b16 %v6590, %v6589
        %v6645 = vpack.c.b16 %v6592, %v6591
        %v6646 = vpack.c.b16 %v6594, %v6593
        %v6647 = vpack.c.b16 %v6596, %v6595
        %v6648 = vpack.c.b16 %v6598, %v6597
        %v6649 = vpack.c.b16 %v6600, %v6599
        %v6650 = vpack.c.b16 %v6602, %v6601
        %v6651 = vpack.c.b16 %v6604, %v6603
        %v6652 = vpack.c.b16 %v6606, %v6605
        %v6653 = vpack.c.b16 %v6608, %v6607
        %v6654 = vpack.c.b16 %v6610, %v6609
        %v6655 = vpack.c.b16 %v6612, %v6611
        %v6656 = vpack.c.b16 %v6614, %v6613
        %v6657 = vpack.c.b16 %v6616, %v6615
        %v6658 = vpack.c.b16 %v6618, %v6617
        %v6659 = vpack.c.b16 %v6620, %v6619
        %v6660 = vpack.c.b16 %v6622, %v6621
        %v6661 = vpack.c.b16 %v6624, %v6623
        %v6662 = vpack.c.b16 %v6626, %v6625
        %v6663 = vpack.c.b16 %v6628, %v6627
        %v6664 = vpack.c.b16 %v6630, %v6629
        %v6665 = vpack.c.b16 %v6632, %v6631
        %v6666 = vpack.c.b16 %v6634, %v6633
        %6699 = vmatprep.subr.bf16.mxu0 0
        %6700 = vmatpush1.bf16.msra.mxu0 %v6642
        %6701 = vmatprep.subr.bf16.mxu0 0
        %6702 = vmatpush1.bf16.msra.mxu0 %v6641
        %6703 = vmatprep.subr.bf16.mxu0 0
        %6704 = vmatpush1.bf16.msra.mxu0 %v6640
        %6705 = vmatprep.subr.bf16.mxu0 0
        %6706 = vmatpush1.bf16.msra.mxu0 %v6639
        %6707 = vmatprep.subr.bf16.mxu0 0
        %6708 = vmatpush1.bf16.msra.mxu0 %v6638
        %6709 = vmatprep.subr.bf16.mxu0 0
        %6710 = vmatpush1.bf16.msra.mxu0 %v6637
        %6711 = vmatprep.subr.bf16.mxu0 0
        %6712 = vmatpush1.bf16.msra.mxu0 %v6636
        %6713 = vmatprep.subr.bf16.mxu0 0
        %6714 = vmatpush1.bf16.msra.mxu0 %v6635
        %6715 = vmatprep.subr.bf16.mxu0 0
        %6716 = vmatpush2.bf16.msra.mxu0 %v6650
        %6717 = vmatprep.subr.bf16.mxu0 0
        %6718 = vmatpush2.bf16.msra.mxu0 %v6649
        %6719 = vmatprep.subr.bf16.mxu0 0
        %6720 = vmatpush2.bf16.msra.mxu0 %v6648
        %6721 = vmatprep.subr.bf16.mxu0 0
        %6722 = vmatpush2.bf16.msra.mxu0 %v6647
        %6723 = vmatprep.subr.bf16.mxu0 0
        %6724 = vmatpush2.bf16.msra.mxu0 %v6646
        %6725 = vmatprep.subr.bf16.mxu0 0
        %6726 = vmatpush2.bf16.msra.mxu0 %v6645
        %6727 = vmatprep.subr.bf16.mxu0 0
        %6728 = vmatpush2.bf16.msra.mxu0 %v6644
        %6729 = vmatprep.subr.bf16.mxu0 0
        %6730 = vmatpush2.bf16.msra.mxu0 %v6643
        %6731 = vmatprep.mubr.bf16.mxu0 %v6439
        %6732 = vmatmul.mubr.bf16.gmra.mxu0 %v6438
        %v6733 = vpop.f32.mrf.mxu0
        %v6734 = vadd.f32 0.0, %v6733
        %v6735 = vpop.f32.mrf.mxu0
        %v6736 = vpop.f32.mrf.mxu0
        %v6737 = vpop.f32.mrf.mxu0
        %6738 = vdwg.mxu0
        %6739 = vmatprep.subr.bf16.mxu0 0
        %6740 = vmatpush1.bf16.msra.mxu0 %v6658
        %6741 = vmatprep.subr.bf16.mxu0 0
        %6742 = vmatpush1.bf16.msra.mxu0 %v6657
        %6743 = vmatprep.subr.bf16.mxu0 0
        %6744 = vmatpush1.bf16.msra.mxu0 %v6656
        %6745 = vmatprep.subr.bf16.mxu0 0
        %6746 = vmatpush1.bf16.msra.mxu0 %v6655
        %6747 = vmatprep.subr.bf16.mxu0 0
        %6748 = vmatpush1.bf16.msra.mxu0 %v6654
        %6749 = vmatprep.subr.bf16.mxu0 0
        %6750 = vmatpush1.bf16.msra.mxu0 %v6653
        %6751 = vmatprep.subr.bf16.mxu0 0
        %6752 = vmatpush1.bf16.msra.mxu0 %v6652
        %6753 = vmatprep.subr.bf16.mxu0 0
        %6754 = vmatpush1.bf16.msra.mxu0 %v6651
        %6755 = vmatprep.subr.bf16.mxu0 0
        %6756 = vmatpush2.bf16.msra.mxu0 %v6666
        %6757 = vmatprep.subr.bf16.mxu0 0
        %6758 = vmatpush2.bf16.msra.mxu0 %v6665
        %6759 = vmatprep.subr.bf16.mxu0 0
        %6760 = vmatpush2.bf16.msra.mxu0 %v6664
        %6761 = vmatprep.subr.bf16.mxu0 0
        %6762 = vmatpush2.bf16.msra.mxu0 %v6663
        %6763 = vmatprep.subr.bf16.mxu0 0
        %6764 = vmatpush2.bf16.msra.mxu0 %v6662
        %6765 = vmatprep.subr.bf16.mxu0 0
        %6766 = vmatpush2.bf16.msra.mxu0 %v6661
        %6767 = vmatprep.subr.bf16.mxu0 0
        %6768 = vmatpush2.bf16.msra.mxu0 %v6660
        %6769 = vmatprep.subr.bf16.mxu0 0
        %6770 = vmatpush2.bf16.msra.mxu0 %v6659
        %6771 = vmatprep.mubr.bf16.mxu0 %v6441
        %6772 = vmatmul.mubr.bf16.gmra.mxu0 %v6440
        %v6773 = vpop.f32.mrf.mxu0
        %v6774 = vadd.f32 %v6734, %v6773
        %v6775 = vpop.f32.mrf.mxu0
        %v6776 = vpop.f32.mrf.mxu0
        %v6777 = vpop.f32.mrf.mxu0
        %6778 = vdwg.mxu0
        %v6843 = vunpack.c.l.b16 %v6354
        %v6844 = vunpack.c.l.b16 %v6355
        %v6845 = vunpack.c.l.b16 %v6356
        %v6846 = vunpack.c.l.b16 %v6357
        %v6847 = vunpack.c.l.b16 %v6358
        %v6848 = vunpack.c.l.b16 %v6359
        %v6849 = vunpack.c.l.b16 %v6360
        %v6850 = vunpack.c.l.b16 %v6361
        %v6851 = vunpack.c.l.b16 %v6362
        %v6852 = vunpack.c.l.b16 %v6363
        %v6853 = vunpack.c.l.b16 %v6364
        %v6854 = vunpack.c.l.b16 %v6365
        %v6855 = vunpack.c.l.b16 %v6366
        %v6856 = vunpack.c.l.b16 %v6367
        %v6857 = vunpack.c.l.b16 %v6368
        %v6858 = vunpack.c.l.b16 %v6369
        %v6859 = vunpack.c.l.b16 %v6370
        %v6860 = vunpack.c.l.b16 %v6371
        %v6861 = vunpack.c.l.b16 %v6372
        %v6862 = vunpack.c.l.b16 %v6373
        %v6863 = vunpack.c.l.b16 %v6374
        %v6864 = vunpack.c.l.b16 %v6375
        %v6865 = vunpack.c.l.b16 %v6376
        %v6866 = vunpack.c.l.b16 %v6377
        %v6867 = vunpack.c.l.b16 %v6378
        %v6868 = vunpack.c.l.b16 %v6379
        %v6869 = vunpack.c.l.b16 %v6380
        %v6870 = vunpack.c.l.b16 %v6381
        %v6871 = vunpack.c.l.b16 %v6382
        %v6872 = vunpack.c.l.b16 %v6383
        %v6873 = vunpack.c.l.b16 %v6384
        %v6874 = vunpack.c.l.b16 %v6385
        %v6875 = vunpack.c.l.b16 %v6386
        %v6876 = vunpack.c.l.b16 %v6387
        %v6877 = vunpack.c.l.b16 %v6388
        %v6878 = vunpack.c.l.b16 %v6389
        %v6879 = vunpack.c.l.b16 %v6390
        %v6880 = vunpack.c.l.b16 %v6391
        %v6881 = vunpack.c.l.b16 %v6392
        %v6882 = vunpack.c.l.b16 %v6393
        %v6883 = vunpack.c.l.b16 %v6394
        %v6884 = vunpack.c.l.b16 %v6395
        %v6885 = vunpack.c.l.b16 %v6396
        %v6886 = vunpack.c.l.b16 %v6397
        %v6887 = vunpack.c.l.b16 %v6398
        %v6888 = vunpack.c.l.b16 %v6399
        %v6889 = vunpack.c.l.b16 %v6400
        %v6890 = vunpack.c.l.b16 %v6401
        %v6891 = vunpack.c.l.b16 %v6402
        %v6892 = vunpack.c.l.b16 %v6403
        %v6893 = vunpack.c.l.b16 %v6404
        %v6894 = vunpack.c.l.b16 %v6405
        %v6895 = vunpack.c.l.b16 %v6406
        %v6896 = vunpack.c.l.b16 %v6407
        %v6897 = vunpack.c.l.b16 %v6408
        %v6898 = vunpack.c.l.b16 %v6409
        %v6899 = vunpack.c.l.b16 %v6410
        %v6900 = vunpack.c.l.b16 %v6411
        %v6901 = vunpack.c.l.b16 %v6412
        %v6902 = vunpack.c.l.b16 %v6413
        %v6903 = vunpack.c.l.b16 %v6414
        %v6904 = vunpack.c.l.b16 %v6415
        %v6905 = vunpack.c.l.b16 %v6416
        %v6906 = vunpack.c.l.b16 %v6417
        %v6907 = vpack.c.b16 %v6844, %v6843
        %v6908 = vpack.c.b16 %v6846, %v6845
        %v6909 = vpack.c.b16 %v6848, %v6847
        %v6910 = vpack.c.b16 %v6850, %v6849
        %v6911 = vpack.c.b16 %v6852, %v6851
        %v6912 = vpack.c.b16 %v6854, %v6853
        %v6913 = vpack.c.b16 %v6856, %v6855
        %v6914 = vpack.c.b16 %v6858, %v6857
        %v6915 = vpack.c.b16 %v6860, %v6859
        %v6916 = vpack.c.b16 %v6862, %v6861
        %v6917 = vpack.c.b16 %v6864, %v6863
        %v6918 = vpack.c.b16 %v6866, %v6865
        %v6919 = vpack.c.b16 %v6868, %v6867
        %v6920 = vpack.c.b16 %v6870, %v6869
        %v6921 = vpack.c.b16 %v6872, %v6871
        %v6922 = vpack.c.b16 %v6874, %v6873
        %v6923 = vpack.c.b16 %v6876, %v6875
        %v6924 = vpack.c.b16 %v6878, %v6877
        %v6925 = vpack.c.b16 %v6880, %v6879
        %v6926 = vpack.c.b16 %v6882, %v6881
        %v6927 = vpack.c.b16 %v6884, %v6883
        %v6928 = vpack.c.b16 %v6886, %v6885
        %v6929 = vpack.c.b16 %v6888, %v6887
        %v6930 = vpack.c.b16 %v6890, %v6889
        %v6931 = vpack.c.b16 %v6892, %v6891
        %v6932 = vpack.c.b16 %v6894, %v6893
        %v6933 = vpack.c.b16 %v6896, %v6895
        %v6934 = vpack.c.b16 %v6898, %v6897
        %v6935 = vpack.c.b16 %v6900, %v6899
        %v6936 = vpack.c.b16 %v6902, %v6901
        %v6937 = vpack.c.b16 %v6904, %v6903
        %v6938 = vpack.c.b16 %v6906, %v6905
        %6971 = vmatprep.subr.bf16.mxu0 0
        %6972 = vmatpush1.bf16.msra.mxu0 %v6914
        %6973 = vmatprep.subr.bf16.mxu0 0
        %6974 = vmatpush1.bf16.msra.mxu0 %v6913
        %6975 = vmatprep.subr.bf16.mxu0 0
        %6976 = vmatpush1.bf16.msra.mxu0 %v6912
        %6977 = vmatprep.subr.bf16.mxu0 0
        %6978 = vmatpush1.bf16.msra.mxu0 %v6911
        %6979 = vmatprep.subr.bf16.mxu0 0
        %6980 = vmatpush1.bf16.msra.mxu0 %v6910
        %6981 = vmatprep.subr.bf16.mxu0 0
        %6982 = vmatpush1.bf16.msra.mxu0 %v6909
        %6983 = vmatprep.subr.bf16.mxu0 0
        %6984 = vmatpush1.bf16.msra.mxu0 %v6908
        %6985 = vmatprep.subr.bf16.mxu0 0
        %6986 = vmatpush1.bf16.msra.mxu0 %v6907
        %6987 = vmatprep.subr.bf16.mxu0 0
        %6988 = vmatpush2.bf16.msra.mxu0 %v6922
        %6989 = vmatprep.subr.bf16.mxu0 0
        %6990 = vmatpush2.bf16.msra.mxu0 %v6921
        %6991 = vmatprep.subr.bf16.mxu0 0
        %6992 = vmatpush2.bf16.msra.mxu0 %v6920
        %6993 = vmatprep.subr.bf16.mxu0 0
        %6994 = vmatpush2.bf16.msra.mxu0 %v6919
        %6995 = vmatprep.subr.bf16.mxu0 0
        %6996 = vmatpush2.bf16.msra.mxu0 %v6918
        %6997 = vmatprep.subr.bf16.mxu0 0
        %6998 = vmatpush2.bf16.msra.mxu0 %v6917
        %6999 = vmatprep.subr.bf16.mxu0 0
        %7000 = vmatpush2.bf16.msra.mxu0 %v6916
        %7001 = vmatprep.subr.bf16.mxu0 0
        %7002 = vmatpush2.bf16.msra.mxu0 %v6915
        %7003 = vmatprep.mubr.bf16.mxu0 %v6351
        %7004 = vmatmul.mubr.bf16.gmra.mxu0 %v6350
        %v7005 = vpop.f32.mrf.mxu0
        %v7006 = vadd.f32 %v6774, %v7005
        %v7007 = vpop.f32.mrf.mxu0
        %v7008 = vpop.f32.mrf.mxu0
        %v7009 = vpop.f32.mrf.mxu0
        %7010 = vdwg.mxu0
        %7011 = vmatprep.subr.bf16.mxu0 0
        %7012 = vmatpush1.bf16.msra.mxu0 %v6930
        %7013 = vmatprep.subr.bf16.mxu0 0
        %7014 = vmatpush1.bf16.msra.mxu0 %v6929
        %7015 = vmatprep.subr.bf16.mxu0 0
        %7016 = vmatpush1.bf16.msra.mxu0 %v6928
        %7017 = vmatprep.subr.bf16.mxu0 0
        %7018 = vmatpush1.bf16.msra.mxu0 %v6927
        %7019 = vmatprep.subr.bf16.mxu0 0
        %7020 = vmatpush1.bf16.msra.mxu0 %v6926
        %7021 = vmatprep.subr.bf16.mxu0 0
        %7022 = vmatpush1.bf16.msra.mxu0 %v6925
        %7023 = vmatprep.subr.bf16.mxu0 0
        %7024 = vmatpush1.bf16.msra.mxu0 %v6924
        %7025 = vmatprep.subr.bf16.mxu0 0
        %7026 = vmatpush1.bf16.msra.mxu0 %v6923
        %7027 = vmatprep.subr.bf16.mxu0 0
        %7028 = vmatpush2.bf16.msra.mxu0 %v6938
        %7029 = vmatprep.subr.bf16.mxu0 0
        %7030 = vmatpush2.bf16.msra.mxu0 %v6937
        %7031 = vmatprep.subr.bf16.mxu0 0
        %7032 = vmatpush2.bf16.msra.mxu0 %v6936
        %7033 = vmatprep.subr.bf16.mxu0 0
        %7034 = vmatpush2.bf16.msra.mxu0 %v6935
        %7035 = vmatprep.subr.bf16.mxu0 0
        %7036 = vmatpush2.bf16.msra.mxu0 %v6934
        %7037 = vmatprep.subr.bf16.mxu0 0
        %7038 = vmatpush2.bf16.msra.mxu0 %v6933
        %7039 = vmatprep.subr.bf16.mxu0 0
        %7040 = vmatpush2.bf16.msra.mxu0 %v6932
        %7041 = vmatprep.subr.bf16.mxu0 0
        %7042 = vmatpush2.bf16.msra.mxu0 %v6931
        %7043 = vmatprep.mubr.bf16.mxu0 %v6353
        %7044 = vmatmul.mubr.bf16.gmra.mxu0 %v6352
        %v7045 = vpop.f32.mrf.mxu0
        %v7046 = vadd.f32 %v7006, %v7045
        %v7047 = vpop.f32.mrf.mxu0
        %v7048 = vpop.f32.mrf.mxu0
        %v7049 = vpop.f32.mrf.mxu0
        %7050 = vdwg.mxu0
        %v7051 = vmax.f32 %v6279, %v6283
        %v7052 = vmax.f32 %v6280, %v6284
        %v7053 = vmax.f32 %v6281, %v6285
        %v7054 = vmax.f32 %v6282, %v6286
        %7055 = vrot.lane.b32.xlu0 %v7051, 96
        %v7056 = vpop.permute.xlu0 %7055
        %7057 = vrot.lane.b32.xlu0 %v7052, 96
        %v7058 = vpop.permute.xlu0 %7057
        %7059 = vrot.lane.b32.xlu0 %v7053, 96
        %v7060 = vpop.permute.xlu0 %7059
        %7061 = vrot.lane.b32.xlu0 %v7054, 96
        %v7062 = vpop.permute.xlu0 %7061
        %v7063 = vsel %vm6341, %v7060, %v7062
        %v7064 = vsel %vm6341, %v7058, %v7060
        %v7065 = vsel %vm6341, %v7056, %v7058
        %v7066 = vsel %vm6341, %v7062, %v7056
        %v7067 = vmax.f32 %v7051, %v7065
        %v7068 = vmax.f32 %v7052, %v7064
        %v7069 = vmax.f32 %v7053, %v7063
        %v7070 = vmax.f32 %v7054, %v7066
        %v7071 = vpack.c.bf16 %v7067, %v7067
        %v7072 = vpack.c.bf16 %v7068, %v7068
        %v7073 = vpack.c.bf16 %v7069, %v7069
        %v7074 = vpack.c.bf16 %v7070, %v7070
        %s7075 = scalar_lea.vmem %s5, 512
        %v7076 = vld [vmem:[%s7075] sm:$0xf]
        %v7077 = vld [vmem:[%s7075 + $0x4] sm:$0xf]
        %v7078 = vld [vmem:[%s7075 + $0x8] sm:$0xf]
        %v7079 = vld [vmem:[%s7075 + $0xc] sm:$0xf]
        %v7080 = vld [vmem:[%s7075 + $0x10] sm:$0xf]
        %v7081 = vld [vmem:[%s7075 + $0x14] sm:$0xf]
        %v7082 = vld [vmem:[%s7075 + $0x18] sm:$0xf]
        %v7083 = vld [vmem:[%s7075 + $0x1c] sm:$0xf]
        %v7084 = vld [vmem:[%s7075 + $0x20] sm:$0xf]
        %v7085 = vld [vmem:[%s7075 + $0x24] sm:$0xf]
        %v7086 = vld [vmem:[%s7075 + $0x28] sm:$0xf]
        %v7087 = vld [vmem:[%s7075 + $0x2c] sm:$0xf]
        %v7088 = vld [vmem:[%s7075 + $0x30] sm:$0xf]
        %v7089 = vld [vmem:[%s7075 + $0x34] sm:$0xf]
        %v7090 = vld [vmem:[%s7075 + $0x38] sm:$0xf]
        %v7091 = vld [vmem:[%s7075 + $0x3c] sm:$0xf]
        %v7092 = vld [vmem:[%s7075 + $0x40] sm:$0xf]
        %v7093 = vld [vmem:[%s7075 + $0x44] sm:$0xf]
        %v7094 = vld [vmem:[%s7075 + $0x48] sm:$0xf]
        %v7095 = vld [vmem:[%s7075 + $0x4c] sm:$0xf]
        %v7096 = vld [vmem:[%s7075 + $0x50] sm:$0xf]
        %v7097 = vld [vmem:[%s7075 + $0x54] sm:$0xf]
        %v7098 = vld [vmem:[%s7075 + $0x58] sm:$0xf]
        %v7099 = vld [vmem:[%s7075 + $0x5c] sm:$0xf]
        %v7100 = vld [vmem:[%s7075 + $0x60] sm:$0xf]
        %v7101 = vld [vmem:[%s7075 + $0x64] sm:$0xf]
        %v7102 = vld [vmem:[%s7075 + $0x68] sm:$0xf]
        %v7103 = vld [vmem:[%s7075 + $0x6c] sm:$0xf]
        %v7104 = vld [vmem:[%s7075 + $0x70] sm:$0xf]
        %v7105 = vld [vmem:[%s7075 + $0x74] sm:$0xf]
        %v7106 = vld [vmem:[%s7075 + $0x78] sm:$0xf]
        %v7107 = vld [vmem:[%s7075 + $0x7c] sm:$0xf]
        %v7108 = vld [vmem:[%s7075 + $0x80] sm:$0xf]
        %v7109 = vld [vmem:[%s7075 + $0x84] sm:$0xf]
        %v7110 = vld [vmem:[%s7075 + $0x88] sm:$0xf]
        %v7111 = vld [vmem:[%s7075 + $0x8c] sm:$0xf]
        %v7112 = vld [vmem:[%s7075 + $0x90] sm:$0xf]
        %v7113 = vld [vmem:[%s7075 + $0x94] sm:$0xf]
        %v7114 = vld [vmem:[%s7075 + $0x98] sm:$0xf]
        %v7115 = vld [vmem:[%s7075 + $0x9c] sm:$0xf]
        %v7116 = vld [vmem:[%s7075 + $0xa0] sm:$0xf]
        %v7117 = vld [vmem:[%s7075 + $0xa4] sm:$0xf]
        %v7118 = vld [vmem:[%s7075 + $0xa8] sm:$0xf]
        %v7119 = vld [vmem:[%s7075 + $0xac] sm:$0xf]
        %v7120 = vld [vmem:[%s7075 + $0xb0] sm:$0xf]
        %v7121 = vld [vmem:[%s7075 + $0xb4] sm:$0xf]
        %v7122 = vld [vmem:[%s7075 + $0xb8] sm:$0xf]
        %v7123 = vld [vmem:[%s7075 + $0xbc] sm:$0xf]
        %v7124 = vld [vmem:[%s7075 + $0xc0] sm:$0xf]
        %v7125 = vld [vmem:[%s7075 + $0xc4] sm:$0xf]
        %v7126 = vld [vmem:[%s7075 + $0xc8] sm:$0xf]
        %v7127 = vld [vmem:[%s7075 + $0xcc] sm:$0xf]
        %v7128 = vld [vmem:[%s7075 + $0xd0] sm:$0xf]
        %v7129 = vld [vmem:[%s7075 + $0xd4] sm:$0xf]
        %v7130 = vld [vmem:[%s7075 + $0xd8] sm:$0xf]
        %v7131 = vld [vmem:[%s7075 + $0xdc] sm:$0xf]
        %v7132 = vld [vmem:[%s7075 + $0xe0] sm:$0xf]
        %v7133 = vld [vmem:[%s7075 + $0xe4] sm:$0xf]
        %v7134 = vld [vmem:[%s7075 + $0xe8] sm:$0xf]
        %v7135 = vld [vmem:[%s7075 + $0xec] sm:$0xf]
        %v7136 = vld [vmem:[%s7075 + $0xf0] sm:$0xf]
        %v7137 = vld [vmem:[%s7075 + $0xf4] sm:$0xf]
        %v7138 = vld [vmem:[%s7075 + $0xf8] sm:$0xf]
        %v7139 = vld [vmem:[%s7075 + $0xfc] sm:$0xf]
        %v7204 = vunpack.c.l.b16 %v7076
        %v7205 = vunpack.c.l.b16 %v7077
        %v7206 = vunpack.c.l.b16 %v7078
        %v7207 = vunpack.c.l.b16 %v7079
        %v7208 = vunpack.c.l.b16 %v7080
        %v7209 = vunpack.c.l.b16 %v7081
        %v7210 = vunpack.c.l.b16 %v7082
        %v7211 = vunpack.c.l.b16 %v7083
        %v7212 = vunpack.c.l.b16 %v7084
        %v7213 = vunpack.c.l.b16 %v7085
        %v7214 = vunpack.c.l.b16 %v7086
        %v7215 = vunpack.c.l.b16 %v7087
        %v7216 = vunpack.c.l.b16 %v7088
        %v7217 = vunpack.c.l.b16 %v7089
        %v7218 = vunpack.c.l.b16 %v7090
        %v7219 = vunpack.c.l.b16 %v7091
        %v7220 = vunpack.c.l.b16 %v7092
        %v7221 = vunpack.c.l.b16 %v7093
        %v7222 = vunpack.c.l.b16 %v7094
        %v7223 = vunpack.c.l.b16 %v7095
        %v7224 = vunpack.c.l.b16 %v7096
        %v7225 = vunpack.c.l.b16 %v7097
        %v7226 = vunpack.c.l.b16 %v7098
        %v7227 = vunpack.c.l.b16 %v7099
        %v7228 = vunpack.c.l.b16 %v7100
        %v7229 = vunpack.c.l.b16 %v7101
        %v7230 = vunpack.c.l.b16 %v7102
        %v7231 = vunpack.c.l.b16 %v7103
        %v7232 = vunpack.c.l.b16 %v7104
        %v7233 = vunpack.c.l.b16 %v7105
        %v7234 = vunpack.c.l.b16 %v7106
        %v7235 = vunpack.c.l.b16 %v7107
        %v7236 = vunpack.c.l.b16 %v7108
        %v7237 = vunpack.c.l.b16 %v7109
        %v7238 = vunpack.c.l.b16 %v7110
        %v7239 = vunpack.c.l.b16 %v7111
        %v7240 = vunpack.c.l.b16 %v7112
        %v7241 = vunpack.c.l.b16 %v7113
        %v7242 = vunpack.c.l.b16 %v7114
        %v7243 = vunpack.c.l.b16 %v7115
        %v7244 = vunpack.c.l.b16 %v7116
        %v7245 = vunpack.c.l.b16 %v7117
        %v7246 = vunpack.c.l.b16 %v7118
        %v7247 = vunpack.c.l.b16 %v7119
        %v7248 = vunpack.c.l.b16 %v7120
        %v7249 = vunpack.c.l.b16 %v7121
        %v7250 = vunpack.c.l.b16 %v7122
        %v7251 = vunpack.c.l.b16 %v7123
        %v7252 = vunpack.c.l.b16 %v7124
        %v7253 = vunpack.c.l.b16 %v7125
        %v7254 = vunpack.c.l.b16 %v7126
        %v7255 = vunpack.c.l.b16 %v7127
        %v7256 = vunpack.c.l.b16 %v7128
        %v7257 = vunpack.c.l.b16 %v7129
        %v7258 = vunpack.c.l.b16 %v7130
        %v7259 = vunpack.c.l.b16 %v7131
        %v7260 = vunpack.c.l.b16 %v7132
        %v7261 = vunpack.c.l.b16 %v7133
        %v7262 = vunpack.c.l.b16 %v7134
        %v7263 = vunpack.c.l.b16 %v7135
        %v7264 = vunpack.c.l.b16 %v7136
        %v7265 = vunpack.c.l.b16 %v7137
        %v7266 = vunpack.c.l.b16 %v7138
        %v7267 = vunpack.c.l.b16 %v7139
        %v7268 = vpack.c.b16 %v7205, %v7204
        %v7269 = vpack.c.b16 %v7207, %v7206
        %v7270 = vpack.c.b16 %v7209, %v7208
        %v7271 = vpack.c.b16 %v7211, %v7210
        %v7272 = vpack.c.b16 %v7213, %v7212
        %v7273 = vpack.c.b16 %v7215, %v7214
        %v7274 = vpack.c.b16 %v7217, %v7216
        %v7275 = vpack.c.b16 %v7219, %v7218
        %v7276 = vpack.c.b16 %v7221, %v7220
        %v7277 = vpack.c.b16 %v7223, %v7222
        %v7278 = vpack.c.b16 %v7225, %v7224
        %v7279 = vpack.c.b16 %v7227, %v7226
        %v7280 = vpack.c.b16 %v7229, %v7228
        %v7281 = vpack.c.b16 %v7231, %v7230
        %v7282 = vpack.c.b16 %v7233, %v7232
        %v7283 = vpack.c.b16 %v7235, %v7234
        %v7284 = vpack.c.b16 %v7237, %v7236
        %v7285 = vpack.c.b16 %v7239, %v7238
        %v7286 = vpack.c.b16 %v7241, %v7240
        %v7287 = vpack.c.b16 %v7243, %v7242
        %v7288 = vpack.c.b16 %v7245, %v7244
        %v7289 = vpack.c.b16 %v7247, %v7246
        %v7290 = vpack.c.b16 %v7249, %v7248
        %v7291 = vpack.c.b16 %v7251, %v7250
        %v7292 = vpack.c.b16 %v7253, %v7252
        %v7293 = vpack.c.b16 %v7255, %v7254
        %v7294 = vpack.c.b16 %v7257, %v7256
        %v7295 = vpack.c.b16 %v7259, %v7258
        %v7296 = vpack.c.b16 %v7261, %v7260
        %v7297 = vpack.c.b16 %v7263, %v7262
        %v7298 = vpack.c.b16 %v7265, %v7264
        %v7299 = vpack.c.b16 %v7267, %v7266
        %7332 = vmatprep.subr.bf16.mxu0 0
        %7333 = vmatpush1.bf16.msra.mxu0 %v7275
        %7334 = vmatprep.subr.bf16.mxu0 0
        %7335 = vmatpush1.bf16.msra.mxu0 %v7274
        %7336 = vmatprep.subr.bf16.mxu0 0
        %7337 = vmatpush1.bf16.msra.mxu0 %v7273
        %7338 = vmatprep.subr.bf16.mxu0 0
        %7339 = vmatpush1.bf16.msra.mxu0 %v7272
        %7340 = vmatprep.subr.bf16.mxu0 0
        %7341 = vmatpush1.bf16.msra.mxu0 %v7271
        %7342 = vmatprep.subr.bf16.mxu0 0
        %7343 = vmatpush1.bf16.msra.mxu0 %v7270
        %7344 = vmatprep.subr.bf16.mxu0 0
        %7345 = vmatpush1.bf16.msra.mxu0 %v7269
        %7346 = vmatprep.subr.bf16.mxu0 0
        %7347 = vmatpush1.bf16.msra.mxu0 %v7268
        %7348 = vmatprep.subr.bf16.mxu0 0
        %7349 = vmatpush2.bf16.msra.mxu0 %v7283
        %7350 = vmatprep.subr.bf16.mxu0 0
        %7351 = vmatpush2.bf16.msra.mxu0 %v7282
        %7352 = vmatprep.subr.bf16.mxu0 0
        %7353 = vmatpush2.bf16.msra.mxu0 %v7281
        %7354 = vmatprep.subr.bf16.mxu0 0
        %7355 = vmatpush2.bf16.msra.mxu0 %v7280
        %7356 = vmatprep.subr.bf16.mxu0 0
        %7357 = vmatpush2.bf16.msra.mxu0 %v7279
        %7358 = vmatprep.subr.bf16.mxu0 0
        %7359 = vmatpush2.bf16.msra.mxu0 %v7278
        %7360 = vmatprep.subr.bf16.mxu0 0
        %7361 = vmatpush2.bf16.msra.mxu0 %v7277
        %7362 = vmatprep.subr.bf16.mxu0 0
        %7363 = vmatpush2.bf16.msra.mxu0 %v7276
        %7364 = vmatprep.mubr.bf16.mxu0 %v7072
        %7365 = vmatmul.mubr.bf16.gmra.mxu0 %v7071
        %v7366 = vpop.f32.mrf.mxu0
        %v7367 = vadd.f32 0.0, %v7366
        %v7368 = vpop.f32.mrf.mxu0
        %v7369 = vpop.f32.mrf.mxu0
        %v7370 = vpop.f32.mrf.mxu0
        %7371 = vdwg.mxu0
        %7372 = vmatprep.subr.bf16.mxu0 0
        %7373 = vmatpush1.bf16.msra.mxu0 %v7291
        %7374 = vmatprep.subr.bf16.mxu0 0
        %7375 = vmatpush1.bf16.msra.mxu0 %v7290
        %7376 = vmatprep.subr.bf16.mxu0 0
        %7377 = vmatpush1.bf16.msra.mxu0 %v7289
        %7378 = vmatprep.subr.bf16.mxu0 0
        %7379 = vmatpush1.bf16.msra.mxu0 %v7288
        %7380 = vmatprep.subr.bf16.mxu0 0
        %7381 = vmatpush1.bf16.msra.mxu0 %v7287
        %7382 = vmatprep.subr.bf16.mxu0 0
        %7383 = vmatpush1.bf16.msra.mxu0 %v7286
        %7384 = vmatprep.subr.bf16.mxu0 0
        %7385 = vmatpush1.bf16.msra.mxu0 %v7285
        %7386 = vmatprep.subr.bf16.mxu0 0
        %7387 = vmatpush1.bf16.msra.mxu0 %v7284
        %7388 = vmatprep.subr.bf16.mxu0 0
        %7389 = vmatpush2.bf16.msra.mxu0 %v7299
        %7390 = vmatprep.subr.bf16.mxu0 0
        %7391 = vmatpush2.bf16.msra.mxu0 %v7298
        %7392 = vmatprep.subr.bf16.mxu0 0
        %7393 = vmatpush2.bf16.msra.mxu0 %v7297
        %7394 = vmatprep.subr.bf16.mxu0 0
        %7395 = vmatpush2.bf16.msra.mxu0 %v7296
        %7396 = vmatprep.subr.bf16.mxu0 0
        %7397 = vmatpush2.bf16.msra.mxu0 %v7295
        %7398 = vmatprep.subr.bf16.mxu0 0
        %7399 = vmatpush2.bf16.msra.mxu0 %v7294
        %7400 = vmatprep.subr.bf16.mxu0 0
        %7401 = vmatpush2.bf16.msra.mxu0 %v7293
        %7402 = vmatprep.subr.bf16.mxu0 0
        %7403 = vmatpush2.bf16.msra.mxu0 %v7292
        %7404 = vmatprep.mubr.bf16.mxu0 %v7074
        %7405 = vmatmul.mubr.bf16.gmra.mxu0 %v7073
        %v7406 = vpop.f32.mrf.mxu0
        %v7407 = vadd.f32 %v7367, %v7406
        %v7408 = vpop.f32.mrf.mxu0
        %v7409 = vpop.f32.mrf.mxu0
        %v7410 = vpop.f32.mrf.mxu0
        %7411 = vdwg.mxu0
        %v7412 = vadd.f32 %v7046, %v7407
        %v7413 = vmax.f32 %v6287, %v6291
        %v7414 = vmax.f32 %v6288, %v6292
        %v7415 = vmax.f32 %v6289, %v6293
        %v7416 = vmax.f32 %v6290, %v6294
        %7417 = vrot.lane.b32.xlu0 %v7413, 96
        %v7418 = vpop.permute.xlu0 %7417
        %7419 = vrot.lane.b32.xlu0 %v7414, 96
        %v7420 = vpop.permute.xlu0 %7419
        %7421 = vrot.lane.b32.xlu0 %v7415, 96
        %v7422 = vpop.permute.xlu0 %7421
        %7423 = vrot.lane.b32.xlu0 %v7416, 96
        %v7424 = vpop.permute.xlu0 %7423
        %v7425 = vsel %vm6341, %v7422, %v7424
        %v7426 = vsel %vm6341, %v7420, %v7422
        %v7427 = vsel %vm6341, %v7418, %v7420
        %v7428 = vsel %vm6341, %v7424, %v7418
        %v7429 = vmax.f32 %v7413, %v7427
        %v7430 = vmax.f32 %v7414, %v7426
        %v7431 = vmax.f32 %v7415, %v7425
        %v7432 = vmax.f32 %v7416, %v7428
        %v7433 = vpack.c.bf16 %v7429, %v7429
        %v7434 = vpack.c.bf16 %v7430, %v7430
        %v7435 = vpack.c.bf16 %v7431, %v7431
        %v7436 = vpack.c.bf16 %v7432, %v7432
        %s7437 = scalar_lea.vmem %s5, 768
        %v7438 = vld [vmem:[%s7437] sm:$0xf]
        %v7439 = vld [vmem:[%s7437 + $0x4] sm:$0xf]
        %v7440 = vld [vmem:[%s7437 + $0x8] sm:$0xf]
        %v7441 = vld [vmem:[%s7437 + $0xc] sm:$0xf]
        %v7442 = vld [vmem:[%s7437 + $0x10] sm:$0xf]
        %v7443 = vld [vmem:[%s7437 + $0x14] sm:$0xf]
        %v7444 = vld [vmem:[%s7437 + $0x18] sm:$0xf]
        %v7445 = vld [vmem:[%s7437 + $0x1c] sm:$0xf]
        %v7446 = vld [vmem:[%s7437 + $0x20] sm:$0xf]
        %v7447 = vld [vmem:[%s7437 + $0x24] sm:$0xf]
        %v7448 = vld [vmem:[%s7437 + $0x28] sm:$0xf]
        %v7449 = vld [vmem:[%s7437 + $0x2c] sm:$0xf]
        %v7450 = vld [vmem:[%s7437 + $0x30] sm:$0xf]
        %v7451 = vld [vmem:[%s7437 + $0x34] sm:$0xf]
        %v7452 = vld [vmem:[%s7437 + $0x38] sm:$0xf]
        %v7453 = vld [vmem:[%s7437 + $0x3c] sm:$0xf]
        %v7454 = vld [vmem:[%s7437 + $0x40] sm:$0xf]
        %v7455 = vld [vmem:[%s7437 + $0x44] sm:$0xf]
        %v7456 = vld [vmem:[%s7437 + $0x48] sm:$0xf]
        %v7457 = vld [vmem:[%s7437 + $0x4c] sm:$0xf]
        %v7458 = vld [vmem:[%s7437 + $0x50] sm:$0xf]
        %v7459 = vld [vmem:[%s7437 + $0x54] sm:$0xf]
        %v7460 = vld [vmem:[%s7437 + $0x58] sm:$0xf]
        %v7461 = vld [vmem:[%s7437 + $0x5c] sm:$0xf]
        %v7462 = vld [vmem:[%s7437 + $0x60] sm:$0xf]
        %v7463 = vld [vmem:[%s7437 + $0x64] sm:$0xf]
        %v7464 = vld [vmem:[%s7437 + $0x68] sm:$0xf]
        %v7465 = vld [vmem:[%s7437 + $0x6c] sm:$0xf]
        %v7466 = vld [vmem:[%s7437 + $0x70] sm:$0xf]
        %v7467 = vld [vmem:[%s7437 + $0x74] sm:$0xf]
        %v7468 = vld [vmem:[%s7437 + $0x78] sm:$0xf]
        %v7469 = vld [vmem:[%s7437 + $0x7c] sm:$0xf]
        %v7470 = vld [vmem:[%s7437 + $0x80] sm:$0xf]
        %v7471 = vld [vmem:[%s7437 + $0x84] sm:$0xf]
        %v7472 = vld [vmem:[%s7437 + $0x88] sm:$0xf]
        %v7473 = vld [vmem:[%s7437 + $0x8c] sm:$0xf]
        %v7474 = vld [vmem:[%s7437 + $0x90] sm:$0xf]
        %v7475 = vld [vmem:[%s7437 + $0x94] sm:$0xf]
        %v7476 = vld [vmem:[%s7437 + $0x98] sm:$0xf]
        %v7477 = vld [vmem:[%s7437 + $0x9c] sm:$0xf]
        %v7478 = vld [vmem:[%s7437 + $0xa0] sm:$0xf]
        %v7479 = vld [vmem:[%s7437 + $0xa4] sm:$0xf]
        %v7480 = vld [vmem:[%s7437 + $0xa8] sm:$0xf]
        %v7481 = vld [vmem:[%s7437 + $0xac] sm:$0xf]
        %v7482 = vld [vmem:[%s7437 + $0xb0] sm:$0xf]
        %v7483 = vld [vmem:[%s7437 + $0xb4] sm:$0xf]
        %v7484 = vld [vmem:[%s7437 + $0xb8] sm:$0xf]
        %v7485 = vld [vmem:[%s7437 + $0xbc] sm:$0xf]
        %v7486 = vld [vmem:[%s7437 + $0xc0] sm:$0xf]
        %v7487 = vld [vmem:[%s7437 + $0xc4] sm:$0xf]
        %v7488 = vld [vmem:[%s7437 + $0xc8] sm:$0xf]
        %v7489 = vld [vmem:[%s7437 + $0xcc] sm:$0xf]
        %v7490 = vld [vmem:[%s7437 + $0xd0] sm:$0xf]
        %v7491 = vld [vmem:[%s7437 + $0xd4] sm:$0xf]
        %v7492 = vld [vmem:[%s7437 + $0xd8] sm:$0xf]
        %v7493 = vld [vmem:[%s7437 + $0xdc] sm:$0xf]
        %v7494 = vld [vmem:[%s7437 + $0xe0] sm:$0xf]
        %v7495 = vld [vmem:[%s7437 + $0xe4] sm:$0xf]
        %v7496 = vld [vmem:[%s7437 + $0xe8] sm:$0xf]
        %v7497 = vld [vmem:[%s7437 + $0xec] sm:$0xf]
        %v7498 = vld [vmem:[%s7437 + $0xf0] sm:$0xf]
        %v7499 = vld [vmem:[%s7437 + $0xf4] sm:$0xf]
        %v7500 = vld [vmem:[%s7437 + $0xf8] sm:$0xf]
        %v7501 = vld [vmem:[%s7437 + $0xfc] sm:$0xf]
        %v7566 = vunpack.c.l.b16 %v7438
        %v7567 = vunpack.c.l.b16 %v7439
        %v7568 = vunpack.c.l.b16 %v7440
        %v7569 = vunpack.c.l.b16 %v7441
        %v7570 = vunpack.c.l.b16 %v7442
        %v7571 = vunpack.c.l.b16 %v7443
        %v7572 = vunpack.c.l.b16 %v7444
        %v7573 = vunpack.c.l.b16 %v7445
        %v7574 = vunpack.c.l.b16 %v7446
        %v7575 = vunpack.c.l.b16 %v7447
        %v7576 = vunpack.c.l.b16 %v7448
        %v7577 = vunpack.c.l.b16 %v7449
        %v7578 = vunpack.c.l.b16 %v7450
        %v7579 = vunpack.c.l.b16 %v7451
        %v7580 = vunpack.c.l.b16 %v7452
        %v7581 = vunpack.c.l.b16 %v7453
        %v7582 = vunpack.c.l.b16 %v7454
        %v7583 = vunpack.c.l.b16 %v7455
        %v7584 = vunpack.c.l.b16 %v7456
        %v7585 = vunpack.c.l.b16 %v7457
        %v7586 = vunpack.c.l.b16 %v7458
        %v7587 = vunpack.c.l.b16 %v7459
        %v7588 = vunpack.c.l.b16 %v7460
        %v7589 = vunpack.c.l.b16 %v7461
        %v7590 = vunpack.c.l.b16 %v7462
        %v7591 = vunpack.c.l.b16 %v7463
        %v7592 = vunpack.c.l.b16 %v7464
        %v7593 = vunpack.c.l.b16 %v7465
        %v7594 = vunpack.c.l.b16 %v7466
        %v7595 = vunpack.c.l.b16 %v7467
        %v7596 = vunpack.c.l.b16 %v7468
        %v7597 = vunpack.c.l.b16 %v7469
        %v7598 = vunpack.c.l.b16 %v7470
        %v7599 = vunpack.c.l.b16 %v7471
        %v7600 = vunpack.c.l.b16 %v7472
        %v7601 = vunpack.c.l.b16 %v7473
        %v7602 = vunpack.c.l.b16 %v7474
        %v7603 = vunpack.c.l.b16 %v7475
        %v7604 = vunpack.c.l.b16 %v7476
        %v7605 = vunpack.c.l.b16 %v7477
        %v7606 = vunpack.c.l.b16 %v7478
        %v7607 = vunpack.c.l.b16 %v7479
        %v7608 = vunpack.c.l.b16 %v7480
        %v7609 = vunpack.c.l.b16 %v7481
        %v7610 = vunpack.c.l.b16 %v7482
        %v7611 = vunpack.c.l.b16 %v7483
        %v7612 = vunpack.c.l.b16 %v7484
        %v7613 = vunpack.c.l.b16 %v7485
        %v7614 = vunpack.c.l.b16 %v7486
        %v7615 = vunpack.c.l.b16 %v7487
        %v7616 = vunpack.c.l.b16 %v7488
        %v7617 = vunpack.c.l.b16 %v7489
        %v7618 = vunpack.c.l.b16 %v7490
        %v7619 = vunpack.c.l.b16 %v7491
        %v7620 = vunpack.c.l.b16 %v7492
        %v7621 = vunpack.c.l.b16 %v7493
        %v7622 = vunpack.c.l.b16 %v7494
        %v7623 = vunpack.c.l.b16 %v7495
        %v7624 = vunpack.c.l.b16 %v7496
        %v7625 = vunpack.c.l.b16 %v7497
        %v7626 = vunpack.c.l.b16 %v7498
        %v7627 = vunpack.c.l.b16 %v7499
        %v7628 = vunpack.c.l.b16 %v7500
        %v7629 = vunpack.c.l.b16 %v7501
        %v7630 = vpack.c.b16 %v7567, %v7566
        %v7631 = vpack.c.b16 %v7569, %v7568
        %v7632 = vpack.c.b16 %v7571, %v7570
        %v7633 = vpack.c.b16 %v7573, %v7572
        %v7634 = vpack.c.b16 %v7575, %v7574
        %v7635 = vpack.c.b16 %v7577, %v7576
        %v7636 = vpack.c.b16 %v7579, %v7578
        %v7637 = vpack.c.b16 %v7581, %v7580
        %v7638 = vpack.c.b16 %v7583, %v7582
        %v7639 = vpack.c.b16 %v7585, %v7584
        %v7640 = vpack.c.b16 %v7587, %v7586
        %v7641 = vpack.c.b16 %v7589, %v7588
        %v7642 = vpack.c.b16 %v7591, %v7590
        %v7643 = vpack.c.b16 %v7593, %v7592
        %v7644 = vpack.c.b16 %v7595, %v7594
        %v7645 = vpack.c.b16 %v7597, %v7596
        %v7646 = vpack.c.b16 %v7599, %v7598
        %v7647 = vpack.c.b16 %v7601, %v7600
        %v7648 = vpack.c.b16 %v7603, %v7602
        %v7649 = vpack.c.b16 %v7605, %v7604
        %v7650 = vpack.c.b16 %v7607, %v7606
        %v7651 = vpack.c.b16 %v7609, %v7608
        %v7652 = vpack.c.b16 %v7611, %v7610
        %v7653 = vpack.c.b16 %v7613, %v7612
        %v7654 = vpack.c.b16 %v7615, %v7614
        %v7655 = vpack.c.b16 %v7617, %v7616
        %v7656 = vpack.c.b16 %v7619, %v7618
        %v7657 = vpack.c.b16 %v7621, %v7620
        %v7658 = vpack.c.b16 %v7623, %v7622
        %v7659 = vpack.c.b16 %v7625, %v7624
        %v7660 = vpack.c.b16 %v7627, %v7626
        %v7661 = vpack.c.b16 %v7629, %v7628
        %7694 = vmatprep.subr.bf16.mxu0 0
        %7695 = vmatpush1.bf16.msra.mxu0 %v7637
        %7696 = vmatprep.subr.bf16.mxu0 0
        %7697 = vmatpush1.bf16.msra.mxu0 %v7636
        %7698 = vmatprep.subr.bf16.mxu0 0
        %7699 = vmatpush1.bf16.msra.mxu0 %v7635
        %7700 = vmatprep.subr.bf16.mxu0 0
        %7701 = vmatpush1.bf16.msra.mxu0 %v7634
        %7702 = vmatprep.subr.bf16.mxu0 0
        %7703 = vmatpush1.bf16.msra.mxu0 %v7633
        %7704 = vmatprep.subr.bf16.mxu0 0
        %7705 = vmatpush1.bf16.msra.mxu0 %v7632
        %7706 = vmatprep.subr.bf16.mxu0 0
        %7707 = vmatpush1.bf16.msra.mxu0 %v7631
        %7708 = vmatprep.subr.bf16.mxu0 0
        %7709 = vmatpush1.bf16.msra.mxu0 %v7630
        %7710 = vmatprep.subr.bf16.mxu0 0
        %7711 = vmatpush2.bf16.msra.mxu0 %v7645
        %7712 = vmatprep.subr.bf16.mxu0 0
        %7713 = vmatpush2.bf16.msra.mxu0 %v7644
        %7714 = vmatprep.subr.bf16.mxu0 0
        %7715 = vmatpush2.bf16.msra.mxu0 %v7643
        %7716 = vmatprep.subr.bf16.mxu0 0
        %7717 = vmatpush2.bf16.msra.mxu0 %v7642
        %7718 = vmatprep.subr.bf16.mxu0 0
        %7719 = vmatpush2.bf16.msra.mxu0 %v7641
        %7720 = vmatprep.subr.bf16.mxu0 0
        %7721 = vmatpush2.bf16.msra.mxu0 %v7640
        %7722 = vmatprep.subr.bf16.mxu0 0
        %7723 = vmatpush2.bf16.msra.mxu0 %v7639
        %7724 = vmatprep.subr.bf16.mxu0 0
        %7725 = vmatpush2.bf16.msra.mxu0 %v7638
        %7726 = vmatprep.mubr.bf16.mxu0 %v7434
        %7727 = vmatmul.mubr.bf16.gmra.mxu0 %v7433
        %v7728 = vpop.f32.mrf.mxu0
        %v7729 = vadd.f32 0.0, %v7728
        %v7730 = vpop.f32.mrf.mxu0
        %v7731 = vpop.f32.mrf.mxu0
        %v7732 = vpop.f32.mrf.mxu0
        %7733 = vdwg.mxu0
        %7734 = vmatprep.subr.bf16.mxu0 0
        %7735 = vmatpush1.bf16.msra.mxu0 %v7653
        %7736 = vmatprep.subr.bf16.mxu0 0
        %7737 = vmatpush1.bf16.msra.mxu0 %v7652
        %7738 = vmatprep.subr.bf16.mxu0 0
        %7739 = vmatpush1.bf16.msra.mxu0 %v7651
        %7740 = vmatprep.subr.bf16.mxu0 0
        %7741 = vmatpush1.bf16.msra.mxu0 %v7650
        %7742 = vmatprep.subr.bf16.mxu0 0
        %7743 = vmatpush1.bf16.msra.mxu0 %v7649
        %7744 = vmatprep.subr.bf16.mxu0 0
        %7745 = vmatpush1.bf16.msra.mxu0 %v7648
        %7746 = vmatprep.subr.bf16.mxu0 0
        %7747 = vmatpush1.bf16.msra.mxu0 %v7647
        %7748 = vmatprep.subr.bf16.mxu0 0
        %7749 = vmatpush1.bf16.msra.mxu0 %v7646
        %7750 = vmatprep.subr.bf16.mxu0 0
        %7751 = vmatpush2.bf16.msra.mxu0 %v7661
        %7752 = vmatprep.subr.bf16.mxu0 0
        %7753 = vmatpush2.bf16.msra.mxu0 %v7660
        %7754 = vmatprep.subr.bf16.mxu0 0
        %7755 = vmatpush2.bf16.msra.mxu0 %v7659
        %7756 = vmatprep.subr.bf16.mxu0 0
        %7757 = vmatpush2.bf16.msra.mxu0 %v7658
        %7758 = vmatprep.subr.bf16.mxu0 0
        %7759 = vmatpush2.bf16.msra.mxu0 %v7657
        %7760 = vmatprep.subr.bf16.mxu0 0
        %7761 = vmatpush2.bf16.msra.mxu0 %v7656
        %7762 = vmatprep.subr.bf16.mxu0 0
        %7763 = vmatpush2.bf16.msra.mxu0 %v7655
        %7764 = vmatprep.subr.bf16.mxu0 0
        %7765 = vmatpush2.bf16.msra.mxu0 %v7654
        %7766 = vmatprep.mubr.bf16.mxu0 %v7436
        %7767 = vmatmul.mubr.bf16.gmra.mxu0 %v7435
        %v7768 = vpop.f32.mrf.mxu0
        %v7769 = vadd.f32 %v7729, %v7768
        %v7770 = vpop.f32.mrf.mxu0
        %v7771 = vpop.f32.mrf.mxu0
        %v7772 = vpop.f32.mrf.mxu0
        %7773 = vdwg.mxu0
        %v7774 = vadd.f32 %v7412, %v7769
        %v7775 = vmax.f32 %v6295, %v6299
        %v7776 = vmax.f32 %v6296, %v6300
        %v7777 = vmax.f32 %v6297, %v6301
        %v7778 = vmax.f32 %v6298, %v6302
        %7779 = vrot.lane.b32.xlu0 %v7775, 96
        %v7780 = vpop.permute.xlu0 %7779
        %7781 = vrot.lane.b32.xlu0 %v7776, 96
        %v7782 = vpop.permute.xlu0 %7781
        %7783 = vrot.lane.b32.xlu0 %v7777, 96
        %v7784 = vpop.permute.xlu0 %7783
        %7785 = vrot.lane.b32.xlu0 %v7778, 96
        %v7786 = vpop.permute.xlu0 %7785
        %v7787 = vsel %vm6341, %v7784, %v7786
        %v7788 = vsel %vm6341, %v7782, %v7784
        %v7789 = vsel %vm6341, %v7780, %v7782
        %v7790 = vsel %vm6341, %v7786, %v7780
        %v7791 = vmax.f32 %v7775, %v7789
        %v7792 = vmax.f32 %v7776, %v7788
        %v7793 = vmax.f32 %v7777, %v7787
        %v7794 = vmax.f32 %v7778, %v7790
        %v7795 = vpack.c.bf16 %v7791, %v7791
        %v7796 = vpack.c.bf16 %v7792, %v7792
        %v7797 = vpack.c.bf16 %v7793, %v7793
        %v7798 = vpack.c.bf16 %v7794, %v7794
        %s7799 = scalar_lea.vmem %s5, 1024
        %v7800 = vld [vmem:[%s7799] sm:$0xf]
        %v7801 = vld [vmem:[%s7799 + $0x4] sm:$0xf]
        %v7802 = vld [vmem:[%s7799 + $0x8] sm:$0xf]
        %v7803 = vld [vmem:[%s7799 + $0xc] sm:$0xf]
        %v7804 = vld [vmem:[%s7799 + $0x10] sm:$0xf]
        %v7805 = vld [vmem:[%s7799 + $0x14] sm:$0xf]
        %v7806 = vld [vmem:[%s7799 + $0x18] sm:$0xf]
        %v7807 = vld [vmem:[%s7799 + $0x1c] sm:$0xf]
        %v7808 = vld [vmem:[%s7799 + $0x20] sm:$0xf]
        %v7809 = vld [vmem:[%s7799 + $0x24] sm:$0xf]
        %v7810 = vld [vmem:[%s7799 + $0x28] sm:$0xf]
        %v7811 = vld [vmem:[%s7799 + $0x2c] sm:$0xf]
        %v7812 = vld [vmem:[%s7799 + $0x30] sm:$0xf]
        %v7813 = vld [vmem:[%s7799 + $0x34] sm:$0xf]
        %v7814 = vld [vmem:[%s7799 + $0x38] sm:$0xf]
        %v7815 = vld [vmem:[%s7799 + $0x3c] sm:$0xf]
        %v7816 = vld [vmem:[%s7799 + $0x40] sm:$0xf]
        %v7817 = vld [vmem:[%s7799 + $0x44] sm:$0xf]
        %v7818 = vld [vmem:[%s7799 + $0x48] sm:$0xf]
        %v7819 = vld [vmem:[%s7799 + $0x4c] sm:$0xf]
        %v7820 = vld [vmem:[%s7799 + $0x50] sm:$0xf]
        %v7821 = vld [vmem:[%s7799 + $0x54] sm:$0xf]
        %v7822 = vld [vmem:[%s7799 + $0x58] sm:$0xf]
        %v7823 = vld [vmem:[%s7799 + $0x5c] sm:$0xf]
        %v7824 = vld [vmem:[%s7799 + $0x60] sm:$0xf]
        %v7825 = vld [vmem:[%s7799 + $0x64] sm:$0xf]
        %v7826 = vld [vmem:[%s7799 + $0x68] sm:$0xf]
        %v7827 = vld [vmem:[%s7799 + $0x6c] sm:$0xf]
        %v7828 = vld [vmem:[%s7799 + $0x70] sm:$0xf]
        %v7829 = vld [vmem:[%s7799 + $0x74] sm:$0xf]
        %v7830 = vld [vmem:[%s7799 + $0x78] sm:$0xf]
        %v7831 = vld [vmem:[%s7799 + $0x7c] sm:$0xf]
        %v7832 = vld [vmem:[%s7799 + $0x80] sm:$0xf]
        %v7833 = vld [vmem:[%s7799 + $0x84] sm:$0xf]
        %v7834 = vld [vmem:[%s7799 + $0x88] sm:$0xf]
        %v7835 = vld [vmem:[%s7799 + $0x8c] sm:$0xf]
        %v7836 = vld [vmem:[%s7799 + $0x90] sm:$0xf]
        %v7837 = vld [vmem:[%s7799 + $0x94] sm:$0xf]
        %v7838 = vld [vmem:[%s7799 + $0x98] sm:$0xf]
        %v7839 = vld [vmem:[%s7799 + $0x9c] sm:$0xf]
        %v7840 = vld [vmem:[%s7799 + $0xa0] sm:$0xf]
        %v7841 = vld [vmem:[%s7799 + $0xa4] sm:$0xf]
        %v7842 = vld [vmem:[%s7799 + $0xa8] sm:$0xf]
        %v7843 = vld [vmem:[%s7799 + $0xac] sm:$0xf]
        %v7844 = vld [vmem:[%s7799 + $0xb0] sm:$0xf]
        %v7845 = vld [vmem:[%s7799 + $0xb4] sm:$0xf]
        %v7846 = vld [vmem:[%s7799 + $0xb8] sm:$0xf]
        %v7847 = vld [vmem:[%s7799 + $0xbc] sm:$0xf]
        %v7848 = vld [vmem:[%s7799 + $0xc0] sm:$0xf]
        %v7849 = vld [vmem:[%s7799 + $0xc4] sm:$0xf]
        %v7850 = vld [vmem:[%s7799 + $0xc8] sm:$0xf]
        %v7851 = vld [vmem:[%s7799 + $0xcc] sm:$0xf]
        %v7852 = vld [vmem:[%s7799 + $0xd0] sm:$0xf]
        %v7853 = vld [vmem:[%s7799 + $0xd4] sm:$0xf]
        %v7854 = vld [vmem:[%s7799 + $0xd8] sm:$0xf]
        %v7855 = vld [vmem:[%s7799 + $0xdc] sm:$0xf]
        %v7856 = vld [vmem:[%s7799 + $0xe0] sm:$0xf]
        %v7857 = vld [vmem:[%s7799 + $0xe4] sm:$0xf]
        %v7858 = vld [vmem:[%s7799 + $0xe8] sm:$0xf]
        %v7859 = vld [vmem:[%s7799 + $0xec] sm:$0xf]
        %v7860 = vld [vmem:[%s7799 + $0xf0] sm:$0xf]
        %v7861 = vld [vmem:[%s7799 + $0xf4] sm:$0xf]
        %v7862 = vld [vmem:[%s7799 + $0xf8] sm:$0xf]
        %v7863 = vld [vmem:[%s7799 + $0xfc] sm:$0xf]
        %v7928 = vunpack.c.l.b16 %v7800
        %v7929 = vunpack.c.l.b16 %v7801
        %v7930 = vunpack.c.l.b16 %v7802
        %v7931 = vunpack.c.l.b16 %v7803
        %v7932 = vunpack.c.l.b16 %v7804
        %v7933 = vunpack.c.l.b16 %v7805
        %v7934 = vunpack.c.l.b16 %v7806
        %v7935 = vunpack.c.l.b16 %v7807
        %v7936 = vunpack.c.l.b16 %v7808
        %v7937 = vunpack.c.l.b16 %v7809
        %v7938 = vunpack.c.l.b16 %v7810
        %v7939 = vunpack.c.l.b16 %v7811
        %v7940 = vunpack.c.l.b16 %v7812
        %v7941 = vunpack.c.l.b16 %v7813
        %v7942 = vunpack.c.l.b16 %v7814
        %v7943 = vunpack.c.l.b16 %v7815
        %v7944 = vunpack.c.l.b16 %v7816
        %v7945 = vunpack.c.l.b16 %v7817
        %v7946 = vunpack.c.l.b16 %v7818
        %v7947 = vunpack.c.l.b16 %v7819
        %v7948 = vunpack.c.l.b16 %v7820
        %v7949 = vunpack.c.l.b16 %v7821
        %v7950 = vunpack.c.l.b16 %v7822
        %v7951 = vunpack.c.l.b16 %v7823
        %v7952 = vunpack.c.l.b16 %v7824
        %v7953 = vunpack.c.l.b16 %v7825
        %v7954 = vunpack.c.l.b16 %v7826
        %v7955 = vunpack.c.l.b16 %v7827
        %v7956 = vunpack.c.l.b16 %v7828
        %v7957 = vunpack.c.l.b16 %v7829
        %v7958 = vunpack.c.l.b16 %v7830
        %v7959 = vunpack.c.l.b16 %v7831
        %v7960 = vunpack.c.l.b16 %v7832
        %v7961 = vunpack.c.l.b16 %v7833
        %v7962 = vunpack.c.l.b16 %v7834
        %v7963 = vunpack.c.l.b16 %v7835
        %v7964 = vunpack.c.l.b16 %v7836
        %v7965 = vunpack.c.l.b16 %v7837
        %v7966 = vunpack.c.l.b16 %v7838
        %v7967 = vunpack.c.l.b16 %v7839
        %v7968 = vunpack.c.l.b16 %v7840
        %v7969 = vunpack.c.l.b16 %v7841
        %v7970 = vunpack.c.l.b16 %v7842
        %v7971 = vunpack.c.l.b16 %v7843
        %v7972 = vunpack.c.l.b16 %v7844
        %v7973 = vunpack.c.l.b16 %v7845
        %v7974 = vunpack.c.l.b16 %v7846
        %v7975 = vunpack.c.l.b16 %v7847
        %v7976 = vunpack.c.l.b16 %v7848
        %v7977 = vunpack.c.l.b16 %v7849
        %v7978 = vunpack.c.l.b16 %v7850
        %v7979 = vunpack.c.l.b16 %v7851
        %v7980 = vunpack.c.l.b16 %v7852
        %v7981 = vunpack.c.l.b16 %v7853
        %v7982 = vunpack.c.l.b16 %v7854
        %v7983 = vunpack.c.l.b16 %v7855
        %v7984 = vunpack.c.l.b16 %v7856
        %v7985 = vunpack.c.l.b16 %v7857
        %v7986 = vunpack.c.l.b16 %v7858
        %v7987 = vunpack.c.l.b16 %v7859
        %v7988 = vunpack.c.l.b16 %v7860
        %v7989 = vunpack.c.l.b16 %v7861
        %v7990 = vunpack.c.l.b16 %v7862
        %v7991 = vunpack.c.l.b16 %v7863
        %v7992 = vpack.c.b16 %v7929, %v7928
        %v7993 = vpack.c.b16 %v7931, %v7930
        %v7994 = vpack.c.b16 %v7933, %v7932
        %v7995 = vpack.c.b16 %v7935, %v7934
        %v7996 = vpack.c.b16 %v7937, %v7936
        %v7997 = vpack.c.b16 %v7939, %v7938
        %v7998 = vpack.c.b16 %v7941, %v7940
        %v7999 = vpack.c.b16 %v7943, %v7942
        %v8000 = vpack.c.b16 %v7945, %v7944
        %v8001 = vpack.c.b16 %v7947, %v7946
        %v8002 = vpack.c.b16 %v7949, %v7948
        %v8003 = vpack.c.b16 %v7951, %v7950
        %v8004 = vpack.c.b16 %v7953, %v7952
        %v8005 = vpack.c.b16 %v7955, %v7954
        %v8006 = vpack.c.b16 %v7957, %v7956
        %v8007 = vpack.c.b16 %v7959, %v7958
        %v8008 = vpack.c.b16 %v7961, %v7960
        %v8009 = vpack.c.b16 %v7963, %v7962
        %v8010 = vpack.c.b16 %v7965, %v7964
        %v8011 = vpack.c.b16 %v7967, %v7966
        %v8012 = vpack.c.b16 %v7969, %v7968
        %v8013 = vpack.c.b16 %v7971, %v7970
        %v8014 = vpack.c.b16 %v7973, %v7972
        %v8015 = vpack.c.b16 %v7975, %v7974
        %v8016 = vpack.c.b16 %v7977, %v7976
        %v8017 = vpack.c.b16 %v7979, %v7978
        %v8018 = vpack.c.b16 %v7981, %v7980
        %v8019 = vpack.c.b16 %v7983, %v7982
        %v8020 = vpack.c.b16 %v7985, %v7984
        %v8021 = vpack.c.b16 %v7987, %v7986
        %v8022 = vpack.c.b16 %v7989, %v7988
        %v8023 = vpack.c.b16 %v7991, %v7990
        %8056 = vmatprep.subr.bf16.mxu0 0
        %8057 = vmatpush1.bf16.msra.mxu0 %v7999
        %8058 = vmatprep.subr.bf16.mxu0 0
        %8059 = vmatpush1.bf16.msra.mxu0 %v7998
        %8060 = vmatprep.subr.bf16.mxu0 0
        %8061 = vmatpush1.bf16.msra.mxu0 %v7997
        %8062 = vmatprep.subr.bf16.mxu0 0
        %8063 = vmatpush1.bf16.msra.mxu0 %v7996
        %8064 = vmatprep.subr.bf16.mxu0 0
        %8065 = vmatpush1.bf16.msra.mxu0 %v7995
        %8066 = vmatprep.subr.bf16.mxu0 0
        %8067 = vmatpush1.bf16.msra.mxu0 %v7994
        %8068 = vmatprep.subr.bf16.mxu0 0
        %8069 = vmatpush1.bf16.msra.mxu0 %v7993
        %8070 = vmatprep.subr.bf16.mxu0 0
        %8071 = vmatpush1.bf16.msra.mxu0 %v7992
        %8072 = vmatprep.subr.bf16.mxu0 0
        %8073 = vmatpush2.bf16.msra.mxu0 %v8007
        %8074 = vmatprep.subr.bf16.mxu0 0
        %8075 = vmatpush2.bf16.msra.mxu0 %v8006
        %8076 = vmatprep.subr.bf16.mxu0 0
        %8077 = vmatpush2.bf16.msra.mxu0 %v8005
        %8078 = vmatprep.subr.bf16.mxu0 0
        %8079 = vmatpush2.bf16.msra.mxu0 %v8004
        %8080 = vmatprep.subr.bf16.mxu0 0
        %8081 = vmatpush2.bf16.msra.mxu0 %v8003
        %8082 = vmatprep.subr.bf16.mxu0 0
        %8083 = vmatpush2.bf16.msra.mxu0 %v8002
        %8084 = vmatprep.subr.bf16.mxu0 0
        %8085 = vmatpush2.bf16.msra.mxu0 %v8001
        %8086 = vmatprep.subr.bf16.mxu0 0
        %8087 = vmatpush2.bf16.msra.mxu0 %v8000
        %8088 = vmatprep.mubr.bf16.mxu0 %v7796
        %8089 = vmatmul.mubr.bf16.gmra.mxu0 %v7795
        %v8090 = vpop.f32.mrf.mxu0
        %v8091 = vadd.f32 0.0, %v8090
        %v8092 = vpop.f32.mrf.mxu0
        %v8093 = vpop.f32.mrf.mxu0
        %v8094 = vpop.f32.mrf.mxu0
        %8095 = vdwg.mxu0
        %8096 = vmatprep.subr.bf16.mxu0 0
        %8097 = vmatpush1.bf16.msra.mxu0 %v8015
        %8098 = vmatprep.subr.bf16.mxu0 0
        %8099 = vmatpush1.bf16.msra.mxu0 %v8014
        %8100 = vmatprep.subr.bf16.mxu0 0
        %8101 = vmatpush1.bf16.msra.mxu0 %v8013
        %8102 = vmatprep.subr.bf16.mxu0 0
        %8103 = vmatpush1.bf16.msra.mxu0 %v8012
        %8104 = vmatprep.subr.bf16.mxu0 0
        %8105 = vmatpush1.bf16.msra.mxu0 %v8011
        %8106 = vmatprep.subr.bf16.mxu0 0
        %8107 = vmatpush1.bf16.msra.mxu0 %v8010
        %8108 = vmatprep.subr.bf16.mxu0 0
        %8109 = vmatpush1.bf16.msra.mxu0 %v8009
        %8110 = vmatprep.subr.bf16.mxu0 0
        %8111 = vmatpush1.bf16.msra.mxu0 %v8008
        %8112 = vmatprep.subr.bf16.mxu0 0
        %8113 = vmatpush2.bf16.msra.mxu0 %v8023
        %8114 = vmatprep.subr.bf16.mxu0 0
        %8115 = vmatpush2.bf16.msra.mxu0 %v8022
        %8116 = vmatprep.subr.bf16.mxu0 0
        %8117 = vmatpush2.bf16.msra.mxu0 %v8021
        %8118 = vmatprep.subr.bf16.mxu0 0
        %8119 = vmatpush2.bf16.msra.mxu0 %v8020
        %8120 = vmatprep.subr.bf16.mxu0 0
        %8121 = vmatpush2.bf16.msra.mxu0 %v8019
        %8122 = vmatprep.subr.bf16.mxu0 0
        %8123 = vmatpush2.bf16.msra.mxu0 %v8018
        %8124 = vmatprep.subr.bf16.mxu0 0
        %8125 = vmatpush2.bf16.msra.mxu0 %v8017
        %8126 = vmatprep.subr.bf16.mxu0 0
        %8127 = vmatpush2.bf16.msra.mxu0 %v8016
        %8128 = vmatprep.mubr.bf16.mxu0 %v7798
        %8129 = vmatmul.mubr.bf16.gmra.mxu0 %v7797
        %v8130 = vpop.f32.mrf.mxu0
        %v8131 = vadd.f32 %v8091, %v8130
        %v8132 = vpop.f32.mrf.mxu0
        %v8133 = vpop.f32.mrf.mxu0
        %v8134 = vpop.f32.mrf.mxu0
        %8135 = vdwg.mxu0
        %v8136 = vadd.f32 %v7774, %v8131
        %v8137 = vmax.f32 %v6303, %v6307
        %v8138 = vmax.f32 %v6304, %v6308
        %v8139 = vmax.f32 %v6305, %v6309
        %v8140 = vmax.f32 %v6306, %v6310
        %8141 = vrot.lane.b32.xlu0 %v8137, 96
        %v8142 = vpop.permute.xlu0 %8141
        %8143 = vrot.lane.b32.xlu0 %v8138, 96
        %v8144 = vpop.permute.xlu0 %8143
        %8145 = vrot.lane.b32.xlu0 %v8139, 96
        %v8146 = vpop.permute.xlu0 %8145
        %8147 = vrot.lane.b32.xlu0 %v8140, 96
        %v8148 = vpop.permute.xlu0 %8147
        %v8149 = vsel %vm6341, %v8146, %v8148
        %v8150 = vsel %vm6341, %v8144, %v8146
        %v8151 = vsel %vm6341, %v8142, %v8144
        %v8152 = vsel %vm6341, %v8148, %v8142
        %v8153 = vmax.f32 %v8137, %v8151
        %v8154 = vmax.f32 %v8138, %v8150
        %v8155 = vmax.f32 %v8139, %v8149
        %v8156 = vmax.f32 %v8140, %v8152
        %v8157 = vpack.c.bf16 %v8153, %v8153
        %v8158 = vpack.c.bf16 %v8154, %v8154
        %v8159 = vpack.c.bf16 %v8155, %v8155
        %v8160 = vpack.c.bf16 %v8156, %v8156
        %s8161 = scalar_lea.vmem %s5, 1280
        %v8162 = vld [vmem:[%s8161] sm:$0xf]
        %v8163 = vld [vmem:[%s8161 + $0x4] sm:$0xf]
        %v8164 = vld [vmem:[%s8161 + $0x8] sm:$0xf]
        %v8165 = vld [vmem:[%s8161 + $0xc] sm:$0xf]
        %v8166 = vld [vmem:[%s8161 + $0x10] sm:$0xf]
        %v8167 = vld [vmem:[%s8161 + $0x14] sm:$0xf]
        %v8168 = vld [vmem:[%s8161 + $0x18] sm:$0xf]
        %v8169 = vld [vmem:[%s8161 + $0x1c] sm:$0xf]
        %v8170 = vld [vmem:[%s8161 + $0x20] sm:$0xf]
        %v8171 = vld [vmem:[%s8161 + $0x24] sm:$0xf]
        %v8172 = vld [vmem:[%s8161 + $0x28] sm:$0xf]
        %v8173 = vld [vmem:[%s8161 + $0x2c] sm:$0xf]
        %v8174 = vld [vmem:[%s8161 + $0x30] sm:$0xf]
        %v8175 = vld [vmem:[%s8161 + $0x34] sm:$0xf]
        %v8176 = vld [vmem:[%s8161 + $0x38] sm:$0xf]
        %v8177 = vld [vmem:[%s8161 + $0x3c] sm:$0xf]
        %v8178 = vld [vmem:[%s8161 + $0x40] sm:$0xf]
        %v8179 = vld [vmem:[%s8161 + $0x44] sm:$0xf]
        %v8180 = vld [vmem:[%s8161 + $0x48] sm:$0xf]
        %v8181 = vld [vmem:[%s8161 + $0x4c] sm:$0xf]
        %v8182 = vld [vmem:[%s8161 + $0x50] sm:$0xf]
        %v8183 = vld [vmem:[%s8161 + $0x54] sm:$0xf]
        %v8184 = vld [vmem:[%s8161 + $0x58] sm:$0xf]
        %v8185 = vld [vmem:[%s8161 + $0x5c] sm:$0xf]
        %v8186 = vld [vmem:[%s8161 + $0x60] sm:$0xf]
        %v8187 = vld [vmem:[%s8161 + $0x64] sm:$0xf]
        %v8188 = vld [vmem:[%s8161 + $0x68] sm:$0xf]
        %v8189 = vld [vmem:[%s8161 + $0x6c] sm:$0xf]
        %v8190 = vld [vmem:[%s8161 + $0x70] sm:$0xf]
        %v8191 = vld [vmem:[%s8161 + $0x74] sm:$0xf]
        %v8192 = vld [vmem:[%s8161 + $0x78] sm:$0xf]
        %v8193 = vld [vmem:[%s8161 + $0x7c] sm:$0xf]
        %v8194 = vld [vmem:[%s8161 + $0x80] sm:$0xf]
        %v8195 = vld [vmem:[%s8161 + $0x84] sm:$0xf]
        %v8196 = vld [vmem:[%s8161 + $0x88] sm:$0xf]
        %v8197 = vld [vmem:[%s8161 + $0x8c] sm:$0xf]
        %v8198 = vld [vmem:[%s8161 + $0x90] sm:$0xf]
        %v8199 = vld [vmem:[%s8161 + $0x94] sm:$0xf]
        %v8200 = vld [vmem:[%s8161 + $0x98] sm:$0xf]
        %v8201 = vld [vmem:[%s8161 + $0x9c] sm:$0xf]
        %v8202 = vld [vmem:[%s8161 + $0xa0] sm:$0xf]
        %v8203 = vld [vmem:[%s8161 + $0xa4] sm:$0xf]
        %v8204 = vld [vmem:[%s8161 + $0xa8] sm:$0xf]
        %v8205 = vld [vmem:[%s8161 + $0xac] sm:$0xf]
        %v8206 = vld [vmem:[%s8161 + $0xb0] sm:$0xf]
        %v8207 = vld [vmem:[%s8161 + $0xb4] sm:$0xf]
        %v8208 = vld [vmem:[%s8161 + $0xb8] sm:$0xf]
        %v8209 = vld [vmem:[%s8161 + $0xbc] sm:$0xf]
        %v8210 = vld [vmem:[%s8161 + $0xc0] sm:$0xf]
        %v8211 = vld [vmem:[%s8161 + $0xc4] sm:$0xf]
        %v8212 = vld [vmem:[%s8161 + $0xc8] sm:$0xf]
        %v8213 = vld [vmem:[%s8161 + $0xcc] sm:$0xf]
        %v8214 = vld [vmem:[%s8161 + $0xd0] sm:$0xf]
        %v8215 = vld [vmem:[%s8161 + $0xd4] sm:$0xf]
        %v8216 = vld [vmem:[%s8161 + $0xd8] sm:$0xf]
        %v8217 = vld [vmem:[%s8161 + $0xdc] sm:$0xf]
        %v8218 = vld [vmem:[%s8161 + $0xe0] sm:$0xf]
        %v8219 = vld [vmem:[%s8161 + $0xe4] sm:$0xf]
        %v8220 = vld [vmem:[%s8161 + $0xe8] sm:$0xf]
        %v8221 = vld [vmem:[%s8161 + $0xec] sm:$0xf]
        %v8222 = vld [vmem:[%s8161 + $0xf0] sm:$0xf]
        %v8223 = vld [vmem:[%s8161 + $0xf4] sm:$0xf]
        %v8224 = vld [vmem:[%s8161 + $0xf8] sm:$0xf]
        %v8225 = vld [vmem:[%s8161 + $0xfc] sm:$0xf]
        %v8290 = vunpack.c.l.b16 %v8162
        %v8291 = vunpack.c.l.b16 %v8163
        %v8292 = vunpack.c.l.b16 %v8164
        %v8293 = vunpack.c.l.b16 %v8165
        %v8294 = vunpack.c.l.b16 %v8166
        %v8295 = vunpack.c.l.b16 %v8167
        %v8296 = vunpack.c.l.b16 %v8168
        %v8297 = vunpack.c.l.b16 %v8169
        %v8298 = vunpack.c.l.b16 %v8170
        %v8299 = vunpack.c.l.b16 %v8171
        %v8300 = vunpack.c.l.b16 %v8172
        %v8301 = vunpack.c.l.b16 %v8173
        %v8302 = vunpack.c.l.b16 %v8174
        %v8303 = vunpack.c.l.b16 %v8175
        %v8304 = vunpack.c.l.b16 %v8176
        %v8305 = vunpack.c.l.b16 %v8177
        %v8306 = vunpack.c.l.b16 %v8178
        %v8307 = vunpack.c.l.b16 %v8179
        %v8308 = vunpack.c.l.b16 %v8180
        %v8309 = vunpack.c.l.b16 %v8181
        %v8310 = vunpack.c.l.b16 %v8182
        %v8311 = vunpack.c.l.b16 %v8183
        %v8312 = vunpack.c.l.b16 %v8184
        %v8313 = vunpack.c.l.b16 %v8185
        %v8314 = vunpack.c.l.b16 %v8186
        %v8315 = vunpack.c.l.b16 %v8187
        %v8316 = vunpack.c.l.b16 %v8188
        %v8317 = vunpack.c.l.b16 %v8189
        %v8318 = vunpack.c.l.b16 %v8190
        %v8319 = vunpack.c.l.b16 %v8191
        %v8320 = vunpack.c.l.b16 %v8192
        %v8321 = vunpack.c.l.b16 %v8193
        %v8322 = vunpack.c.l.b16 %v8194
        %v8323 = vunpack.c.l.b16 %v8195
        %v8324 = vunpack.c.l.b16 %v8196
        %v8325 = vunpack.c.l.b16 %v8197
        %v8326 = vunpack.c.l.b16 %v8198
        %v8327 = vunpack.c.l.b16 %v8199
        %v8328 = vunpack.c.l.b16 %v8200
        %v8329 = vunpack.c.l.b16 %v8201
        %v8330 = vunpack.c.l.b16 %v8202
        %v8331 = vunpack.c.l.b16 %v8203
        %v8332 = vunpack.c.l.b16 %v8204
        %v8333 = vunpack.c.l.b16 %v8205
        %v8334 = vunpack.c.l.b16 %v8206
        %v8335 = vunpack.c.l.b16 %v8207
        %v8336 = vunpack.c.l.b16 %v8208
        %v8337 = vunpack.c.l.b16 %v8209
        %v8338 = vunpack.c.l.b16 %v8210
        %v8339 = vunpack.c.l.b16 %v8211
        %v8340 = vunpack.c.l.b16 %v8212
        %v8341 = vunpack.c.l.b16 %v8213
        %v8342 = vunpack.c.l.b16 %v8214
        %v8343 = vunpack.c.l.b16 %v8215
        %v8344 = vunpack.c.l.b16 %v8216
        %v8345 = vunpack.c.l.b16 %v8217
        %v8346 = vunpack.c.l.b16 %v8218
        %v8347 = vunpack.c.l.b16 %v8219
        %v8348 = vunpack.c.l.b16 %v8220
        %v8349 = vunpack.c.l.b16 %v8221
        %v8350 = vunpack.c.l.b16 %v8222
        %v8351 = vunpack.c.l.b16 %v8223
        %v8352 = vunpack.c.l.b16 %v8224
        %v8353 = vunpack.c.l.b16 %v8225
        %v8354 = vpack.c.b16 %v8291, %v8290
        %v8355 = vpack.c.b16 %v8293, %v8292
        %v8356 = vpack.c.b16 %v8295, %v8294
        %v8357 = vpack.c.b16 %v8297, %v8296
        %v8358 = vpack.c.b16 %v8299, %v8298
        %v8359 = vpack.c.b16 %v8301, %v8300
        %v8360 = vpack.c.b16 %v8303, %v8302
        %v8361 = vpack.c.b16 %v8305, %v8304
        %v8362 = vpack.c.b16 %v8307, %v8306
        %v8363 = vpack.c.b16 %v8309, %v8308
        %v8364 = vpack.c.b16 %v8311, %v8310
        %v8365 = vpack.c.b16 %v8313, %v8312
        %v8366 = vpack.c.b16 %v8315, %v8314
        %v8367 = vpack.c.b16 %v8317, %v8316
        %v8368 = vpack.c.b16 %v8319, %v8318
        %v8369 = vpack.c.b16 %v8321, %v8320
        %v8370 = vpack.c.b16 %v8323, %v8322
        %v8371 = vpack.c.b16 %v8325, %v8324
        %v8372 = vpack.c.b16 %v8327, %v8326
        %v8373 = vpack.c.b16 %v8329, %v8328
        %v8374 = vpack.c.b16 %v8331, %v8330
        %v8375 = vpack.c.b16 %v8333, %v8332
        %v8376 = vpack.c.b16 %v8335, %v8334
        %v8377 = vpack.c.b16 %v8337, %v8336
        %v8378 = vpack.c.b16 %v8339, %v8338
        %v8379 = vpack.c.b16 %v8341, %v8340
        %v8380 = vpack.c.b16 %v8343, %v8342
        %v8381 = vpack.c.b16 %v8345, %v8344
        %v8382 = vpack.c.b16 %v8347, %v8346
        %v8383 = vpack.c.b16 %v8349, %v8348
        %v8384 = vpack.c.b16 %v8351, %v8350
        %v8385 = vpack.c.b16 %v8353, %v8352
        %8418 = vmatprep.subr.bf16.mxu0 0
        %8419 = vmatpush1.bf16.msra.mxu0 %v8361
        %8420 = vmatprep.subr.bf16.mxu0 0
        %8421 = vmatpush1.bf16.msra.mxu0 %v8360
        %8422 = vmatprep.subr.bf16.mxu0 0
        %8423 = vmatpush1.bf16.msra.mxu0 %v8359
        %8424 = vmatprep.subr.bf16.mxu0 0
        %8425 = vmatpush1.bf16.msra.mxu0 %v8358
        %8426 = vmatprep.subr.bf16.mxu0 0
        %8427 = vmatpush1.bf16.msra.mxu0 %v8357
        %8428 = vmatprep.subr.bf16.mxu0 0
        %8429 = vmatpush1.bf16.msra.mxu0 %v8356
        %8430 = vmatprep.subr.bf16.mxu0 0
        %8431 = vmatpush1.bf16.msra.mxu0 %v8355
        %8432 = vmatprep.subr.bf16.mxu0 0
        %8433 = vmatpush1.bf16.msra.mxu0 %v8354
        %8434 = vmatprep.subr.bf16.mxu0 0
        %8435 = vmatpush2.bf16.msra.mxu0 %v8369
        %8436 = vmatprep.subr.bf16.mxu0 0
        %8437 = vmatpush2.bf16.msra.mxu0 %v8368
        %8438 = vmatprep.subr.bf16.mxu0 0
        %8439 = vmatpush2.bf16.msra.mxu0 %v8367
        %8440 = vmatprep.subr.bf16.mxu0 0
        %8441 = vmatpush2.bf16.msra.mxu0 %v8366
        %8442 = vmatprep.subr.bf16.mxu0 0
        %8443 = vmatpush2.bf16.msra.mxu0 %v8365
        %8444 = vmatprep.subr.bf16.mxu0 0
        %8445 = vmatpush2.bf16.msra.mxu0 %v8364
        %8446 = vmatprep.subr.bf16.mxu0 0
        %8447 = vmatpush2.bf16.msra.mxu0 %v8363
        %8448 = vmatprep.subr.bf16.mxu0 0
        %8449 = vmatpush2.bf16.msra.mxu0 %v8362
        %8450 = vmatprep.mubr.bf16.mxu0 %v8158
        %8451 = vmatmul.mubr.bf16.gmra.mxu0 %v8157
        %v8452 = vpop.f32.mrf.mxu0
        %v8453 = vadd.f32 0.0, %v8452
        %v8454 = vpop.f32.mrf.mxu0
        %v8455 = vpop.f32.mrf.mxu0
        %v8456 = vpop.f32.mrf.mxu0
        %8457 = vdwg.mxu0
        %8458 = vmatprep.subr.bf16.mxu0 0
        %8459 = vmatpush1.bf16.msra.mxu0 %v8377
        %8460 = vmatprep.subr.bf16.mxu0 0
        %8461 = vmatpush1.bf16.msra.mxu0 %v8376
        %8462 = vmatprep.subr.bf16.mxu0 0
        %8463 = vmatpush1.bf16.msra.mxu0 %v8375
        %8464 = vmatprep.subr.bf16.mxu0 0
        %8465 = vmatpush1.bf16.msra.mxu0 %v8374
        %8466 = vmatprep.subr.bf16.mxu0 0
        %8467 = vmatpush1.bf16.msra.mxu0 %v8373
        %8468 = vmatprep.subr.bf16.mxu0 0
        %8469 = vmatpush1.bf16.msra.mxu0 %v8372
        %8470 = vmatprep.subr.bf16.mxu0 0
        %8471 = vmatpush1.bf16.msra.mxu0 %v8371
        %8472 = vmatprep.subr.bf16.mxu0 0
        %8473 = vmatpush1.bf16.msra.mxu0 %v8370
        %8474 = vmatprep.subr.bf16.mxu0 0
        %8475 = vmatpush2.bf16.msra.mxu0 %v8385
        %8476 = vmatprep.subr.bf16.mxu0 0
        %8477 = vmatpush2.bf16.msra.mxu0 %v8384
        %8478 = vmatprep.subr.bf16.mxu0 0
        %8479 = vmatpush2.bf16.msra.mxu0 %v8383
        %8480 = vmatprep.subr.bf16.mxu0 0
        %8481 = vmatpush2.bf16.msra.mxu0 %v8382
        %8482 = vmatprep.subr.bf16.mxu0 0
        %8483 = vmatpush2.bf16.msra.mxu0 %v8381
        %8484 = vmatprep.subr.bf16.mxu0 0
        %8485 = vmatpush2.bf16.msra.mxu0 %v8380
        %8486 = vmatprep.subr.bf16.mxu0 0
        %8487 = vmatpush2.bf16.msra.mxu0 %v8379
        %8488 = vmatprep.subr.bf16.mxu0 0
        %8489 = vmatpush2.bf16.msra.mxu0 %v8378
        %8490 = vmatprep.mubr.bf16.mxu0 %v8160
        %8491 = vmatmul.mubr.bf16.gmra.mxu0 %v8159
        %v8492 = vpop.f32.mrf.mxu0
        %v8493 = vadd.f32 %v8453, %v8492
        %v8494 = vpop.f32.mrf.mxu0
        %v8495 = vpop.f32.mrf.mxu0
        %v8496 = vpop.f32.mrf.mxu0
        %8497 = vdwg.mxu0
        %v8498 = vadd.f32 %v8136, %v8493
        %v8499 = vmax.f32 %v6311, %v6315
        %v8500 = vmax.f32 %v6312, %v6316
        %v8501 = vmax.f32 %v6313, %v6317
        %v8502 = vmax.f32 %v6314, %v6318
        %8503 = vrot.lane.b32.xlu0 %v8499, 96
        %v8504 = vpop.permute.xlu0 %8503
        %8505 = vrot.lane.b32.xlu0 %v8500, 96
        %v8506 = vpop.permute.xlu0 %8505
        %8507 = vrot.lane.b32.xlu0 %v8501, 96
        %v8508 = vpop.permute.xlu0 %8507
        %8509 = vrot.lane.b32.xlu0 %v8502, 96
        %v8510 = vpop.permute.xlu0 %8509
        %v8511 = vsel %vm6341, %v8508, %v8510
        %v8512 = vsel %vm6341, %v8506, %v8508
        %v8513 = vsel %vm6341, %v8504, %v8506
        %v8514 = vsel %vm6341, %v8510, %v8504
        %v8515 = vmax.f32 %v8499, %v8513
        %v8516 = vmax.f32 %v8500, %v8512
        %v8517 = vmax.f32 %v8501, %v8511
        %v8518 = vmax.f32 %v8502, %v8514
        %v8519 = vpack.c.bf16 %v8515, %v8515
        %v8520 = vpack.c.bf16 %v8516, %v8516
        %v8521 = vpack.c.bf16 %v8517, %v8517
        %v8522 = vpack.c.bf16 %v8518, %v8518
        %s8523 = scalar_lea.vmem %s5, 1536
        %v8524 = vld [vmem:[%s8523] sm:$0xf]
        %v8525 = vld [vmem:[%s8523 + $0x4] sm:$0xf]
        %v8526 = vld [vmem:[%s8523 + $0x8] sm:$0xf]
        %v8527 = vld [vmem:[%s8523 + $0xc] sm:$0xf]
        %v8528 = vld [vmem:[%s8523 + $0x10] sm:$0xf]
        %v8529 = vld [vmem:[%s8523 + $0x14] sm:$0xf]
        %v8530 = vld [vmem:[%s8523 + $0x18] sm:$0xf]
        %v8531 = vld [vmem:[%s8523 + $0x1c] sm:$0xf]
        %v8532 = vld [vmem:[%s8523 + $0x20] sm:$0xf]
        %v8533 = vld [vmem:[%s8523 + $0x24] sm:$0xf]
        %v8534 = vld [vmem:[%s8523 + $0x28] sm:$0xf]
        %v8535 = vld [vmem:[%s8523 + $0x2c] sm:$0xf]
        %v8536 = vld [vmem:[%s8523 + $0x30] sm:$0xf]
        %v8537 = vld [vmem:[%s8523 + $0x34] sm:$0xf]
        %v8538 = vld [vmem:[%s8523 + $0x38] sm:$0xf]
        %v8539 = vld [vmem:[%s8523 + $0x3c] sm:$0xf]
        %v8540 = vld [vmem:[%s8523 + $0x40] sm:$0xf]
        %v8541 = vld [vmem:[%s8523 + $0x44] sm:$0xf]
        %v8542 = vld [vmem:[%s8523 + $0x48] sm:$0xf]
        %v8543 = vld [vmem:[%s8523 + $0x4c] sm:$0xf]
        %v8544 = vld [vmem:[%s8523 + $0x50] sm:$0xf]
        %v8545 = vld [vmem:[%s8523 + $0x54] sm:$0xf]
        %v8546 = vld [vmem:[%s8523 + $0x58] sm:$0xf]
        %v8547 = vld [vmem:[%s8523 + $0x5c] sm:$0xf]
        %v8548 = vld [vmem:[%s8523 + $0x60] sm:$0xf]
        %v8549 = vld [vmem:[%s8523 + $0x64] sm:$0xf]
        %v8550 = vld [vmem:[%s8523 + $0x68] sm:$0xf]
        %v8551 = vld [vmem:[%s8523 + $0x6c] sm:$0xf]
        %v8552 = vld [vmem:[%s8523 + $0x70] sm:$0xf]
        %v8553 = vld [vmem:[%s8523 + $0x74] sm:$0xf]
        %v8554 = vld [vmem:[%s8523 + $0x78] sm:$0xf]
        %v8555 = vld [vmem:[%s8523 + $0x7c] sm:$0xf]
        %v8556 = vld [vmem:[%s8523 + $0x80] sm:$0xf]
        %v8557 = vld [vmem:[%s8523 + $0x84] sm:$0xf]
        %v8558 = vld [vmem:[%s8523 + $0x88] sm:$0xf]
        %v8559 = vld [vmem:[%s8523 + $0x8c] sm:$0xf]
        %v8560 = vld [vmem:[%s8523 + $0x90] sm:$0xf]
        %v8561 = vld [vmem:[%s8523 + $0x94] sm:$0xf]
        %v8562 = vld [vmem:[%s8523 + $0x98] sm:$0xf]
        %v8563 = vld [vmem:[%s8523 + $0x9c] sm:$0xf]
        %v8564 = vld [vmem:[%s8523 + $0xa0] sm:$0xf]
        %v8565 = vld [vmem:[%s8523 + $0xa4] sm:$0xf]
        %v8566 = vld [vmem:[%s8523 + $0xa8] sm:$0xf]
        %v8567 = vld [vmem:[%s8523 + $0xac] sm:$0xf]
        %v8568 = vld [vmem:[%s8523 + $0xb0] sm:$0xf]
        %v8569 = vld [vmem:[%s8523 + $0xb4] sm:$0xf]
        %v8570 = vld [vmem:[%s8523 + $0xb8] sm:$0xf]
        %v8571 = vld [vmem:[%s8523 + $0xbc] sm:$0xf]
        %v8572 = vld [vmem:[%s8523 + $0xc0] sm:$0xf]
        %v8573 = vld [vmem:[%s8523 + $0xc4] sm:$0xf]
        %v8574 = vld [vmem:[%s8523 + $0xc8] sm:$0xf]
        %v8575 = vld [vmem:[%s8523 + $0xcc] sm:$0xf]
        %v8576 = vld [vmem:[%s8523 + $0xd0] sm:$0xf]
        %v8577 = vld [vmem:[%s8523 + $0xd4] sm:$0xf]
        %v8578 = vld [vmem:[%s8523 + $0xd8] sm:$0xf]
        %v8579 = vld [vmem:[%s8523 + $0xdc] sm:$0xf]
        %v8580 = vld [vmem:[%s8523 + $0xe0] sm:$0xf]
        %v8581 = vld [vmem:[%s8523 + $0xe4] sm:$0xf]
        %v8582 = vld [vmem:[%s8523 + $0xe8] sm:$0xf]
        %v8583 = vld [vmem:[%s8523 + $0xec] sm:$0xf]
        %v8584 = vld [vmem:[%s8523 + $0xf0] sm:$0xf]
        %v8585 = vld [vmem:[%s8523 + $0xf4] sm:$0xf]
        %v8586 = vld [vmem:[%s8523 + $0xf8] sm:$0xf]
        %v8587 = vld [vmem:[%s8523 + $0xfc] sm:$0xf]
        %v8652 = vunpack.c.l.b16 %v8524
        %v8653 = vunpack.c.l.b16 %v8525
        %v8654 = vunpack.c.l.b16 %v8526
        %v8655 = vunpack.c.l.b16 %v8527
        %v8656 = vunpack.c.l.b16 %v8528
        %v8657 = vunpack.c.l.b16 %v8529
        %v8658 = vunpack.c.l.b16 %v8530
        %v8659 = vunpack.c.l.b16 %v8531
        %v8660 = vunpack.c.l.b16 %v8532
        %v8661 = vunpack.c.l.b16 %v8533
        %v8662 = vunpack.c.l.b16 %v8534
        %v8663 = vunpack.c.l.b16 %v8535
        %v8664 = vunpack.c.l.b16 %v8536
        %v8665 = vunpack.c.l.b16 %v8537
        %v8666 = vunpack.c.l.b16 %v8538
        %v8667 = vunpack.c.l.b16 %v8539
        %v8668 = vunpack.c.l.b16 %v8540
        %v8669 = vunpack.c.l.b16 %v8541
        %v8670 = vunpack.c.l.b16 %v8542
        %v8671 = vunpack.c.l.b16 %v8543
        %v8672 = vunpack.c.l.b16 %v8544
        %v8673 = vunpack.c.l.b16 %v8545
        %v8674 = vunpack.c.l.b16 %v8546
        %v8675 = vunpack.c.l.b16 %v8547
        %v8676 = vunpack.c.l.b16 %v8548
        %v8677 = vunpack.c.l.b16 %v8549
        %v8678 = vunpack.c.l.b16 %v8550
        %v8679 = vunpack.c.l.b16 %v8551
        %v8680 = vunpack.c.l.b16 %v8552
        %v8681 = vunpack.c.l.b16 %v8553
        %v8682 = vunpack.c.l.b16 %v8554
        %v8683 = vunpack.c.l.b16 %v8555
        %v8684 = vunpack.c.l.b16 %v8556
        %v8685 = vunpack.c.l.b16 %v8557
        %v8686 = vunpack.c.l.b16 %v8558
        %v8687 = vunpack.c.l.b16 %v8559
        %v8688 = vunpack.c.l.b16 %v8560
        %v8689 = vunpack.c.l.b16 %v8561
        %v8690 = vunpack.c.l.b16 %v8562
        %v8691 = vunpack.c.l.b16 %v8563
        %v8692 = vunpack.c.l.b16 %v8564
        %v8693 = vunpack.c.l.b16 %v8565
        %v8694 = vunpack.c.l.b16 %v8566
        %v8695 = vunpack.c.l.b16 %v8567
        %v8696 = vunpack.c.l.b16 %v8568
        %v8697 = vunpack.c.l.b16 %v8569
        %v8698 = vunpack.c.l.b16 %v8570
        %v8699 = vunpack.c.l.b16 %v8571
        %v8700 = vunpack.c.l.b16 %v8572
        %v8701 = vunpack.c.l.b16 %v8573
        %v8702 = vunpack.c.l.b16 %v8574
        %v8703 = vunpack.c.l.b16 %v8575
        %v8704 = vunpack.c.l.b16 %v8576
        %v8705 = vunpack.c.l.b16 %v8577
        %v8706 = vunpack.c.l.b16 %v8578
        %v8707 = vunpack.c.l.b16 %v8579
        %v8708 = vunpack.c.l.b16 %v8580
        %v8709 = vunpack.c.l.b16 %v8581
        %v8710 = vunpack.c.l.b16 %v8582
        %v8711 = vunpack.c.l.b16 %v8583
        %v8712 = vunpack.c.l.b16 %v8584
        %v8713 = vunpack.c.l.b16 %v8585
        %v8714 = vunpack.c.l.b16 %v8586
        %v8715 = vunpack.c.l.b16 %v8587
        %v8716 = vpack.c.b16 %v8653, %v8652
        %v8717 = vpack.c.b16 %v8655, %v8654
        %v8718 = vpack.c.b16 %v8657, %v8656
        %v8719 = vpack.c.b16 %v8659, %v8658
        %v8720 = vpack.c.b16 %v8661, %v8660
        %v8721 = vpack.c.b16 %v8663, %v8662
        %v8722 = vpack.c.b16 %v8665, %v8664
        %v8723 = vpack.c.b16 %v8667, %v8666
        %v8724 = vpack.c.b16 %v8669, %v8668
        %v8725 = vpack.c.b16 %v8671, %v8670
        %v8726 = vpack.c.b16 %v8673, %v8672
        %v8727 = vpack.c.b16 %v8675, %v8674
        %v8728 = vpack.c.b16 %v8677, %v8676
        %v8729 = vpack.c.b16 %v8679, %v8678
        %v8730 = vpack.c.b16 %v8681, %v8680
        %v8731 = vpack.c.b16 %v8683, %v8682
        %v8732 = vpack.c.b16 %v8685, %v8684
        %v8733 = vpack.c.b16 %v8687, %v8686
        %v8734 = vpack.c.b16 %v8689, %v8688
        %v8735 = vpack.c.b16 %v8691, %v8690
        %v8736 = vpack.c.b16 %v8693, %v8692
        %v8737 = vpack.c.b16 %v8695, %v8694
        %v8738 = vpack.c.b16 %v8697, %v8696
        %v8739 = vpack.c.b16 %v8699, %v8698
        %v8740 = vpack.c.b16 %v8701, %v8700
        %v8741 = vpack.c.b16 %v8703, %v8702
        %v8742 = vpack.c.b16 %v8705, %v8704
        %v8743 = vpack.c.b16 %v8707, %v8706
        %v8744 = vpack.c.b16 %v8709, %v8708
        %v8745 = vpack.c.b16 %v8711, %v8710
        %v8746 = vpack.c.b16 %v8713, %v8712
        %v8747 = vpack.c.b16 %v8715, %v8714
        %8780 = vmatprep.subr.bf16.mxu0 0
        %8781 = vmatpush1.bf16.msra.mxu0 %v8723
        %8782 = vmatprep.subr.bf16.mxu0 0
        %8783 = vmatpush1.bf16.msra.mxu0 %v8722
        %8784 = vmatprep.subr.bf16.mxu0 0
        %8785 = vmatpush1.bf16.msra.mxu0 %v8721
        %8786 = vmatprep.subr.bf16.mxu0 0
        %8787 = vmatpush1.bf16.msra.mxu0 %v8720
        %8788 = vmatprep.subr.bf16.mxu0 0
        %8789 = vmatpush1.bf16.msra.mxu0 %v8719
        %8790 = vmatprep.subr.bf16.mxu0 0
        %8791 = vmatpush1.bf16.msra.mxu0 %v8718
        %8792 = vmatprep.subr.bf16.mxu0 0
        %8793 = vmatpush1.bf16.msra.mxu0 %v8717
        %8794 = vmatprep.subr.bf16.mxu0 0
        %8795 = vmatpush1.bf16.msra.mxu0 %v8716
        %8796 = vmatprep.subr.bf16.mxu0 0
        %8797 = vmatpush2.bf16.msra.mxu0 %v8731
        %8798 = vmatprep.subr.bf16.mxu0 0
        %8799 = vmatpush2.bf16.msra.mxu0 %v8730
        %8800 = vmatprep.subr.bf16.mxu0 0
        %8801 = vmatpush2.bf16.msra.mxu0 %v8729
        %8802 = vmatprep.subr.bf16.mxu0 0
        %8803 = vmatpush2.bf16.msra.mxu0 %v8728
        %8804 = vmatprep.subr.bf16.mxu0 0
        %8805 = vmatpush2.bf16.msra.mxu0 %v8727
        %8806 = vmatprep.subr.bf16.mxu0 0
        %8807 = vmatpush2.bf16.msra.mxu0 %v8726
        %8808 = vmatprep.subr.bf16.mxu0 0
        %8809 = vmatpush2.bf16.msra.mxu0 %v8725
        %8810 = vmatprep.subr.bf16.mxu0 0
        %8811 = vmatpush2.bf16.msra.mxu0 %v8724
        %8812 = vmatprep.mubr.bf16.mxu0 %v8520
        %8813 = vmatmul.mubr.bf16.gmra.mxu0 %v8519
        %v8814 = vpop.f32.mrf.mxu0
        %v8815 = vadd.f32 0.0, %v8814
        %v8816 = vpop.f32.mrf.mxu0
        %v8817 = vpop.f32.mrf.mxu0
        %v8818 = vpop.f32.mrf.mxu0
        %8819 = vdwg.mxu0
        %8820 = vmatprep.subr.bf16.mxu0 0
        %8821 = vmatpush1.bf16.msra.mxu0 %v8739
        %8822 = vmatprep.subr.bf16.mxu0 0
        %8823 = vmatpush1.bf16.msra.mxu0 %v8738
        %8824 = vmatprep.subr.bf16.mxu0 0
        %8825 = vmatpush1.bf16.msra.mxu0 %v8737
        %8826 = vmatprep.subr.bf16.mxu0 0
        %8827 = vmatpush1.bf16.msra.mxu0 %v8736
        %8828 = vmatprep.subr.bf16.mxu0 0
        %8829 = vmatpush1.bf16.msra.mxu0 %v8735
        %8830 = vmatprep.subr.bf16.mxu0 0
        %8831 = vmatpush1.bf16.msra.mxu0 %v8734
        %8832 = vmatprep.subr.bf16.mxu0 0
        %8833 = vmatpush1.bf16.msra.mxu0 %v8733
        %8834 = vmatprep.subr.bf16.mxu0 0
        %8835 = vmatpush1.bf16.msra.mxu0 %v8732
        %8836 = vmatprep.subr.bf16.mxu0 0
        %8837 = vmatpush2.bf16.msra.mxu0 %v8747
        %8838 = vmatprep.subr.bf16.mxu0 0
        %8839 = vmatpush2.bf16.msra.mxu0 %v8746
        %8840 = vmatprep.subr.bf16.mxu0 0
        %8841 = vmatpush2.bf16.msra.mxu0 %v8745
        %8842 = vmatprep.subr.bf16.mxu0 0
        %8843 = vmatpush2.bf16.msra.mxu0 %v8744
        %8844 = vmatprep.subr.bf16.mxu0 0
        %8845 = vmatpush2.bf16.msra.mxu0 %v8743
        %8846 = vmatprep.subr.bf16.mxu0 0
        %8847 = vmatpush2.bf16.msra.mxu0 %v8742
        %8848 = vmatprep.subr.bf16.mxu0 0
        %8849 = vmatpush2.bf16.msra.mxu0 %v8741
        %8850 = vmatprep.subr.bf16.mxu0 0
        %8851 = vmatpush2.bf16.msra.mxu0 %v8740
        %8852 = vmatprep.mubr.bf16.mxu0 %v8522
        %8853 = vmatmul.mubr.bf16.gmra.mxu0 %v8521
        %v8854 = vpop.f32.mrf.mxu0
        %v8855 = vadd.f32 %v8815, %v8854
        %v8856 = vpop.f32.mrf.mxu0
        %v8857 = vpop.f32.mrf.mxu0
        %v8858 = vpop.f32.mrf.mxu0
        %8859 = vdwg.mxu0
        %v8860 = vadd.f32 %v8498, %v8855
        %v8861 = vmax.f32 %v6319, %v6323
        %v8862 = vmax.f32 %v6320, %v6324
        %v8863 = vmax.f32 %v6321, %v6325
        %v8864 = vmax.f32 %v6322, %v6326
        %8865 = vrot.lane.b32.xlu0 %v8861, 96
        %v8866 = vpop.permute.xlu0 %8865
        %8867 = vrot.lane.b32.xlu0 %v8862, 96
        %v8868 = vpop.permute.xlu0 %8867
        %8869 = vrot.lane.b32.xlu0 %v8863, 96
        %v8870 = vpop.permute.xlu0 %8869
        %8871 = vrot.lane.b32.xlu0 %v8864, 96
        %v8872 = vpop.permute.xlu0 %8871
        %v8873 = vsel %vm6341, %v8870, %v8872
        %v8874 = vsel %vm6341, %v8868, %v8870
        %v8875 = vsel %vm6341, %v8866, %v8868
        %v8876 = vsel %vm6341, %v8872, %v8866
        %v8877 = vmax.f32 %v8861, %v8875
        %v8878 = vmax.f32 %v8862, %v8874
        %v8879 = vmax.f32 %v8863, %v8873
        %v8880 = vmax.f32 %v8864, %v8876
        %v8881 = vpack.c.bf16 %v8877, %v8877
        %v8882 = vpack.c.bf16 %v8878, %v8878
        %v8883 = vpack.c.bf16 %v8879, %v8879
        %v8884 = vpack.c.bf16 %v8880, %v8880
        %s8885 = scalar_lea.vmem %s5, 1792
        %v8886 = vld [vmem:[%s8885] sm:$0xf]
        %v8887 = vld [vmem:[%s8885 + $0x4] sm:$0xf]
        %v8888 = vld [vmem:[%s8885 + $0x8] sm:$0xf]
        %v8889 = vld [vmem:[%s8885 + $0xc] sm:$0xf]
        %v8890 = vld [vmem:[%s8885 + $0x10] sm:$0xf]
        %v8891 = vld [vmem:[%s8885 + $0x14] sm:$0xf]
        %v8892 = vld [vmem:[%s8885 + $0x18] sm:$0xf]
        %v8893 = vld [vmem:[%s8885 + $0x1c] sm:$0xf]
        %v8894 = vld [vmem:[%s8885 + $0x20] sm:$0xf]
        %v8895 = vld [vmem:[%s8885 + $0x24] sm:$0xf]
        %v8896 = vld [vmem:[%s8885 + $0x28] sm:$0xf]
        %v8897 = vld [vmem:[%s8885 + $0x2c] sm:$0xf]
        %v8898 = vld [vmem:[%s8885 + $0x30] sm:$0xf]
        %v8899 = vld [vmem:[%s8885 + $0x34] sm:$0xf]
        %v8900 = vld [vmem:[%s8885 + $0x38] sm:$0xf]
        %v8901 = vld [vmem:[%s8885 + $0x3c] sm:$0xf]
        %v8902 = vld [vmem:[%s8885 + $0x40] sm:$0xf]
        %v8903 = vld [vmem:[%s8885 + $0x44] sm:$0xf]
        %v8904 = vld [vmem:[%s8885 + $0x48] sm:$0xf]
        %v8905 = vld [vmem:[%s8885 + $0x4c] sm:$0xf]
        %v8906 = vld [vmem:[%s8885 + $0x50] sm:$0xf]
        %v8907 = vld [vmem:[%s8885 + $0x54] sm:$0xf]
        %v8908 = vld [vmem:[%s8885 + $0x58] sm:$0xf]
        %v8909 = vld [vmem:[%s8885 + $0x5c] sm:$0xf]
        %v8910 = vld [vmem:[%s8885 + $0x60] sm:$0xf]
        %v8911 = vld [vmem:[%s8885 + $0x64] sm:$0xf]
        %v8912 = vld [vmem:[%s8885 + $0x68] sm:$0xf]
        %v8913 = vld [vmem:[%s8885 + $0x6c] sm:$0xf]
        %v8914 = vld [vmem:[%s8885 + $0x70] sm:$0xf]
        %v8915 = vld [vmem:[%s8885 + $0x74] sm:$0xf]
        %v8916 = vld [vmem:[%s8885 + $0x78] sm:$0xf]
        %v8917 = vld [vmem:[%s8885 + $0x7c] sm:$0xf]
        %v8918 = vld [vmem:[%s8885 + $0x80] sm:$0xf]
        %v8919 = vld [vmem:[%s8885 + $0x84] sm:$0xf]
        %v8920 = vld [vmem:[%s8885 + $0x88] sm:$0xf]
        %v8921 = vld [vmem:[%s8885 + $0x8c] sm:$0xf]
        %v8922 = vld [vmem:[%s8885 + $0x90] sm:$0xf]
        %v8923 = vld [vmem:[%s8885 + $0x94] sm:$0xf]
        %v8924 = vld [vmem:[%s8885 + $0x98] sm:$0xf]
        %v8925 = vld [vmem:[%s8885 + $0x9c] sm:$0xf]
        %v8926 = vld [vmem:[%s8885 + $0xa0] sm:$0xf]
        %v8927 = vld [vmem:[%s8885 + $0xa4] sm:$0xf]
        %v8928 = vld [vmem:[%s8885 + $0xa8] sm:$0xf]
        %v8929 = vld [vmem:[%s8885 + $0xac] sm:$0xf]
        %v8930 = vld [vmem:[%s8885 + $0xb0] sm:$0xf]
        %v8931 = vld [vmem:[%s8885 + $0xb4] sm:$0xf]
        %v8932 = vld [vmem:[%s8885 + $0xb8] sm:$0xf]
        %v8933 = vld [vmem:[%s8885 + $0xbc] sm:$0xf]
        %v8934 = vld [vmem:[%s8885 + $0xc0] sm:$0xf]
        %v8935 = vld [vmem:[%s8885 + $0xc4] sm:$0xf]
        %v8936 = vld [vmem:[%s8885 + $0xc8] sm:$0xf]
        %v8937 = vld [vmem:[%s8885 + $0xcc] sm:$0xf]
        %v8938 = vld [vmem:[%s8885 + $0xd0] sm:$0xf]
        %v8939 = vld [vmem:[%s8885 + $0xd4] sm:$0xf]
        %v8940 = vld [vmem:[%s8885 + $0xd8] sm:$0xf]
        %v8941 = vld [vmem:[%s8885 + $0xdc] sm:$0xf]
        %v8942 = vld [vmem:[%s8885 + $0xe0] sm:$0xf]
        %v8943 = vld [vmem:[%s8885 + $0xe4] sm:$0xf]
        %v8944 = vld [vmem:[%s8885 + $0xe8] sm:$0xf]
        %v8945 = vld [vmem:[%s8885 + $0xec] sm:$0xf]
        %v8946 = vld [vmem:[%s8885 + $0xf0] sm:$0xf]
        %v8947 = vld [vmem:[%s8885 + $0xf4] sm:$0xf]
        %v8948 = vld [vmem:[%s8885 + $0xf8] sm:$0xf]
        %v8949 = vld [vmem:[%s8885 + $0xfc] sm:$0xf]
        %v9014 = vunpack.c.l.b16 %v8886
        %v9015 = vunpack.c.l.b16 %v8887
        %v9016 = vunpack.c.l.b16 %v8888
        %v9017 = vunpack.c.l.b16 %v8889
        %v9018 = vunpack.c.l.b16 %v8890
        %v9019 = vunpack.c.l.b16 %v8891
        %v9020 = vunpack.c.l.b16 %v8892
        %v9021 = vunpack.c.l.b16 %v8893
        %v9022 = vunpack.c.l.b16 %v8894
        %v9023 = vunpack.c.l.b16 %v8895
        %v9024 = vunpack.c.l.b16 %v8896
        %v9025 = vunpack.c.l.b16 %v8897
        %v9026 = vunpack.c.l.b16 %v8898
        %v9027 = vunpack.c.l.b16 %v8899
        %v9028 = vunpack.c.l.b16 %v8900
        %v9029 = vunpack.c.l.b16 %v8901
        %v9030 = vunpack.c.l.b16 %v8902
        %v9031 = vunpack.c.l.b16 %v8903
        %v9032 = vunpack.c.l.b16 %v8904
        %v9033 = vunpack.c.l.b16 %v8905
        %v9034 = vunpack.c.l.b16 %v8906
        %v9035 = vunpack.c.l.b16 %v8907
        %v9036 = vunpack.c.l.b16 %v8908
        %v9037 = vunpack.c.l.b16 %v8909
        %v9038 = vunpack.c.l.b16 %v8910
        %v9039 = vunpack.c.l.b16 %v8911
        %v9040 = vunpack.c.l.b16 %v8912
        %v9041 = vunpack.c.l.b16 %v8913
        %v9042 = vunpack.c.l.b16 %v8914
        %v9043 = vunpack.c.l.b16 %v8915
        %v9044 = vunpack.c.l.b16 %v8916
        %v9045 = vunpack.c.l.b16 %v8917
        %v9046 = vunpack.c.l.b16 %v8918
        %v9047 = vunpack.c.l.b16 %v8919
        %v9048 = vunpack.c.l.b16 %v8920
        %v9049 = vunpack.c.l.b16 %v8921
        %v9050 = vunpack.c.l.b16 %v8922
        %v9051 = vunpack.c.l.b16 %v8923
        %v9052 = vunpack.c.l.b16 %v8924
        %v9053 = vunpack.c.l.b16 %v8925
        %v9054 = vunpack.c.l.b16 %v8926
        %v9055 = vunpack.c.l.b16 %v8927
        %v9056 = vunpack.c.l.b16 %v8928
        %v9057 = vunpack.c.l.b16 %v8929
        %v9058 = vunpack.c.l.b16 %v8930
        %v9059 = vunpack.c.l.b16 %v8931
        %v9060 = vunpack.c.l.b16 %v8932
        %v9061 = vunpack.c.l.b16 %v8933
        %v9062 = vunpack.c.l.b16 %v8934
        %v9063 = vunpack.c.l.b16 %v8935
        %v9064 = vunpack.c.l.b16 %v8936
        %v9065 = vunpack.c.l.b16 %v8937
        %v9066 = vunpack.c.l.b16 %v8938
        %v9067 = vunpack.c.l.b16 %v8939
        %v9068 = vunpack.c.l.b16 %v8940
        %v9069 = vunpack.c.l.b16 %v8941
        %v9070 = vunpack.c.l.b16 %v8942
        %v9071 = vunpack.c.l.b16 %v8943
        %v9072 = vunpack.c.l.b16 %v8944
        %v9073 = vunpack.c.l.b16 %v8945
        %v9074 = vunpack.c.l.b16 %v8946
        %v9075 = vunpack.c.l.b16 %v8947
        %v9076 = vunpack.c.l.b16 %v8948
        %v9077 = vunpack.c.l.b16 %v8949
        %v9078 = vpack.c.b16 %v9015, %v9014
        %v9079 = vpack.c.b16 %v9017, %v9016
        %v9080 = vpack.c.b16 %v9019, %v9018
        %v9081 = vpack.c.b16 %v9021, %v9020
        %v9082 = vpack.c.b16 %v9023, %v9022
        %v9083 = vpack.c.b16 %v9025, %v9024
        %v9084 = vpack.c.b16 %v9027, %v9026
        %v9085 = vpack.c.b16 %v9029, %v9028
        %v9086 = vpack.c.b16 %v9031, %v9030
        %v9087 = vpack.c.b16 %v9033, %v9032
        %v9088 = vpack.c.b16 %v9035, %v9034
        %v9089 = vpack.c.b16 %v9037, %v9036
        %v9090 = vpack.c.b16 %v9039, %v9038
        %v9091 = vpack.c.b16 %v9041, %v9040
        %v9092 = vpack.c.b16 %v9043, %v9042
        %v9093 = vpack.c.b16 %v9045, %v9044
        %v9094 = vpack.c.b16 %v9047, %v9046
        %v9095 = vpack.c.b16 %v9049, %v9048
        %v9096 = vpack.c.b16 %v9051, %v9050
        %v9097 = vpack.c.b16 %v9053, %v9052
        %v9098 = vpack.c.b16 %v9055, %v9054
        %v9099 = vpack.c.b16 %v9057, %v9056
        %v9100 = vpack.c.b16 %v9059, %v9058
        %v9101 = vpack.c.b16 %v9061, %v9060
        %v9102 = vpack.c.b16 %v9063, %v9062
        %v9103 = vpack.c.b16 %v9065, %v9064
        %v9104 = vpack.c.b16 %v9067, %v9066
        %v9105 = vpack.c.b16 %v9069, %v9068
        %v9106 = vpack.c.b16 %v9071, %v9070
        %v9107 = vpack.c.b16 %v9073, %v9072
        %v9108 = vpack.c.b16 %v9075, %v9074
        %v9109 = vpack.c.b16 %v9077, %v9076
        %9142 = vmatprep.subr.bf16.mxu0 0
        %9143 = vmatpush1.bf16.msra.mxu0 %v9085
        %9144 = vmatprep.subr.bf16.mxu0 0
        %9145 = vmatpush1.bf16.msra.mxu0 %v9084
        %9146 = vmatprep.subr.bf16.mxu0 0
        %9147 = vmatpush1.bf16.msra.mxu0 %v9083
        %9148 = vmatprep.subr.bf16.mxu0 0
        %9149 = vmatpush1.bf16.msra.mxu0 %v9082
        %9150 = vmatprep.subr.bf16.mxu0 0
        %9151 = vmatpush1.bf16.msra.mxu0 %v9081
        %9152 = vmatprep.subr.bf16.mxu0 0
        %9153 = vmatpush1.bf16.msra.mxu0 %v9080
        %9154 = vmatprep.subr.bf16.mxu0 0
        %9155 = vmatpush1.bf16.msra.mxu0 %v9079
        %9156 = vmatprep.subr.bf16.mxu0 0
        %9157 = vmatpush1.bf16.msra.mxu0 %v9078
        %9158 = vmatprep.subr.bf16.mxu0 0
        %9159 = vmatpush2.bf16.msra.mxu0 %v9093
        %9160 = vmatprep.subr.bf16.mxu0 0
        %9161 = vmatpush2.bf16.msra.mxu0 %v9092
        %9162 = vmatprep.subr.bf16.mxu0 0
        %9163 = vmatpush2.bf16.msra.mxu0 %v9091
        %9164 = vmatprep.subr.bf16.mxu0 0
        %9165 = vmatpush2.bf16.msra.mxu0 %v9090
        %9166 = vmatprep.subr.bf16.mxu0 0
        %9167 = vmatpush2.bf16.msra.mxu0 %v9089
        %9168 = vmatprep.subr.bf16.mxu0 0
        %9169 = vmatpush2.bf16.msra.mxu0 %v9088
        %9170 = vmatprep.subr.bf16.mxu0 0
        %9171 = vmatpush2.bf16.msra.mxu0 %v9087
        %9172 = vmatprep.subr.bf16.mxu0 0
        %9173 = vmatpush2.bf16.msra.mxu0 %v9086
        %9174 = vmatprep.mubr.bf16.mxu0 %v8882
        %9175 = vmatmul.mubr.bf16.gmra.mxu0 %v8881
        %v9176 = vpop.f32.mrf.mxu0
        %v9177 = vadd.f32 0.0, %v9176
        %v9178 = vpop.f32.mrf.mxu0
        %v9179 = vpop.f32.mrf.mxu0
        %v9180 = vpop.f32.mrf.mxu0
        %9181 = vdwg.mxu0
        %9182 = vmatprep.subr.bf16.mxu0 0
        %9183 = vmatpush1.bf16.msra.mxu0 %v9101
        %9184 = vmatprep.subr.bf16.mxu0 0
        %9185 = vmatpush1.bf16.msra.mxu0 %v9100
        %9186 = vmatprep.subr.bf16.mxu0 0
        %9187 = vmatpush1.bf16.msra.mxu0 %v9099
        %9188 = vmatprep.subr.bf16.mxu0 0
        %9189 = vmatpush1.bf16.msra.mxu0 %v9098
        %9190 = vmatprep.subr.bf16.mxu0 0
        %9191 = vmatpush1.bf16.msra.mxu0 %v9097
        %9192 = vmatprep.subr.bf16.mxu0 0
        %9193 = vmatpush1.bf16.msra.mxu0 %v9096
        %9194 = vmatprep.subr.bf16.mxu0 0
        %9195 = vmatpush1.bf16.msra.mxu0 %v9095
        %9196 = vmatprep.subr.bf16.mxu0 0
        %9197 = vmatpush1.bf16.msra.mxu0 %v9094
        %9198 = vmatprep.subr.bf16.mxu0 0
        %9199 = vmatpush2.bf16.msra.mxu0 %v9109
        %9200 = vmatprep.subr.bf16.mxu0 0
        %9201 = vmatpush2.bf16.msra.mxu0 %v9108
        %9202 = vmatprep.subr.bf16.mxu0 0
        %9203 = vmatpush2.bf16.msra.mxu0 %v9107
        %9204 = vmatprep.subr.bf16.mxu0 0
        %9205 = vmatpush2.bf16.msra.mxu0 %v9106
        %9206 = vmatprep.subr.bf16.mxu0 0
        %9207 = vmatpush2.bf16.msra.mxu0 %v9105
        %9208 = vmatprep.subr.bf16.mxu0 0
        %9209 = vmatpush2.bf16.msra.mxu0 %v9104
        %9210 = vmatprep.subr.bf16.mxu0 0
        %9211 = vmatpush2.bf16.msra.mxu0 %v9103
        %9212 = vmatprep.subr.bf16.mxu0 0
        %9213 = vmatpush2.bf16.msra.mxu0 %v9102
        %9214 = vmatprep.mubr.bf16.mxu0 %v8884
        %9215 = vmatmul.mubr.bf16.gmra.mxu0 %v8883
        %v9216 = vpop.f32.mrf.mxu0
        %v9217 = vadd.f32 %v9177, %v9216
        %v9218 = vpop.f32.mrf.mxu0
        %v9219 = vpop.f32.mrf.mxu0
        %v9220 = vpop.f32.mrf.mxu0
        %9221 = vdwg.mxu0
        %v9222 = vadd.f32 %v8860, %v9217
        %v9223 = vld [vmem:[%s6] sm:$0x1]
        %v9225 = vlaneseq
        %v9226 = vshrl.u32 %v9225, 7
        %v9227 = vsub.s32 0, %v9226
        %v9228 = vrot.slane %v9223, %v9227
        %v9230 = vadd.f32 %v9222, %v9228
        %9231 = vst [vmem:[%s432] sm:$0xff] %v9230
        %s9232 = sand.u32 %s181, 1
        %s9233 = scalar_lea.sflag [#allocation4], %s9232
        %s9234 = sand.u32 %s181, 1
        %s9235 = smul.addr %s9234, 8
        %s9236 = scalar_lea.vmem [#allocation3], %s9235
        // Predicated region
        $region75: #{cnn_forward.1} parent=69 // pred_check
          %p9237 = pneg %p191
        $region76: #{cnn_forward.1} parent=69 // pred_check_branch
          %9239 = sbr.rel (%p9237) target = $region78
        $region77: #{cnn_forward.1} parent=69 // pred_region
          %s9241 = ssub.s32 128, 128
          %9242 = vsyncadd %s9233, %s9241
          %s9243 = smul.addr %s21, 128
          %s9244 = scalar_lea.hbm %s7, %s9243
          %s9246 = sshll.u32 %s9236, 4
          %s9247 = int_to_ptr.vmem [resolvable:$true] %s9246
          %9249 = dma.vmem_to_hbm [thread:$0]  %s9247, 128, %s9244, %s9233
        $region78: #{cnn_forward.1} parent=69 // pred_fallthru
          _
      $region70: #{cnn_forward.1} parent=5 // pred_fallthru
        _
      %p9250 = scmp.le.s32.totalorder 2, %s16
      // Predicated region
      $region79: #{cnn_forward.1} parent=5 // pred_check
        %p9251 = pneg %p9250
      $region80: #{cnn_forward.1} parent=5 // pred_check_branch
        %9253 = sbr.rel (%p9251) target = $region82
      $region81: #{cnn_forward.1} parent=5 // pred_region
        %s9254 = ssub.s32 %s16, 2
        // Predicated region
        $region83: #{cnn_forward.1} parent=81 // pred_check
          %p9255 = pneg %p197
        $region84: #{cnn_forward.1} parent=81 // pred_check_branch
          %9257 = sbr.rel (%p9255) target = $region86
        $region85: #{cnn_forward.1} parent=81 // pred_region
          %s9258 = sand.u32 %s182, 1
          %s9259 = scalar_lea.sflag [#allocation4], %s9258
          %s9260 = sand.u32 %s182, 1
          %s9261 = smul.addr %s9260, 8
          %s9262 = scalar_lea.vmem [#allocation3], %s9261
          %9263 = dma.done %s9259, 128
        $region86: #{cnn_forward.1} parent=81 // pred_fallthru
          _
      $region82: #{cnn_forward.1} parent=5 // pred_fallthru
        _
    $region6: #{cnn_forward.1} parent=1 // loop_footer
      %s20 = sadd.s32 1, %s16
    $region7: #{cnn_forward.1} parent=1 // loop_footer_branch
      %15 = sbr.rel target = $region3
    $region8: #{cnn_forward.1} parent=1 // loop_exit
      _
    %9264 = vsyncpa [#allocation4], 1
    %s9265 = scalar_lea.sflag [#allocation4], 1
    %9266 = vsyncpa %s9265, 1

</llo_original>
